<compile_context>
chip_gen: v7x
topology: tpu7x:2x2x1
jax: 0.10.0
libtpu: 0.0.40
codegen_flags: <defaults>
</compile_context>

<pallas_src>
import functools

import jax
import jax.numpy as jnp
from jax.experimental import pallas as pl
from jax.experimental.pallas import tpu as pltpu


# Lane-padded widths.
C1P = 128          # conv1 out channels: 20  -> 128
C2P = 128          # conv2 out channels: 50  -> 128
F1P = 512          # fc1 out features:  500 -> 512
F2P = 128          # fc2 out features:   10 -> 128
W1PAD = 16         # conv1 pooled width: 12 -> 16 rows (keeps reshapes tile-aligned)
ROWS1 = 12 * W1PAD # conv1 pooled rows per image in the patch matrix (192)
K2 = 25 * C1P      # conv2 in-VMEM im2col contraction width (3200)
FLAT = 16 * C2P    # flattened conv2 features per image (2048)


# ---------------------------------------------------------------------------
# Fused whole-network Pallas kernel (one batch tile of `ipt` images per step)
# ---------------------------------------------------------------------------

def _lenet_kernel(p1_ref, w1_ref, b1_ref, w2_ref, b2_ref,
                  wf1_ref, bf1_ref, wf2_ref, bf2_ref, out_ref, *, ipt):
    """p1_ref : (ipt*192, 128) bf16   conv1 patches, rows (n, h1, w1pad16),
                                      cols = 4 pool quadrants x 25 taps (pad 32)
       w1_ref : (128, 512)     bf16   block-diagonal quadrant-replicated conv1 W
       b1_ref : (1, 128)       f32
       w2_ref : (3200, 128)    bf16   conv2 W, rows (ki, kj, cin_pad128)
       b2_ref : (1, 128)       f32
       wf1_ref: (2048, 512)    bf16   fc1 W, rows (h, w, c_pad128) (matches flatten)
       bf1_ref: (1, 512)       f32
       wf2_ref: (512, 128)     bf16
       bf2_ref: (1, 128)       f32
       out_ref: (1, ipt, 128)  f32    lane-padded logits
    """
    # ---- conv1 (im2col matmul; 4 pool quadrants packed along lanes) ----
    z = jnp.dot(p1_ref[...], w1_ref[...],
                preferred_element_type=jnp.float32)          # (ipt*192, 4*C1P)
    # 2x2 maxpool = lane-block max over the 4 quadrants (pool BEFORE bias/relu;
    # per-channel bias + monotone relu commute with max -> 4x less VPU work).
    z = jnp.maximum(jnp.maximum(z[:, 0:C1P], z[:, C1P:2 * C1P]),
                    jnp.maximum(z[:, 2 * C1P:3 * C1P], z[:, 3 * C1P:4 * C1P]))
    y1 = jnp.maximum(z + b1_ref[...], 0.0)                   # (ipt*192, C1P) f32
    y1 = y1.reshape(ipt, 12, W1PAD, C1P)                     # tile-aligned split

    # ---- conv2: im2col built IN VMEM (25 shifted slabs), one K=3200 matmul ----
    slabs = []
    for ki in range(5):
        for kj in range(5):
            s = y1[:, ki:ki + 8, kj:kj + 8, :]               # (ipt, 8, 8, C1P)
            slabs.append(s.reshape(ipt * 64, C1P).astype(jnp.bfloat16))
    p2 = jnp.concatenate(slabs, axis=-1)                     # (ipt*64, 3200) bf16
    z2 = jnp.dot(p2, w2_ref[...],
                 preferred_element_type=jnp.float32)         # (ipt*64, C2P)
    z2 = z2.reshape(ipt, 8, 8, C2P)                          # tile-aligned split

    # ---- 2x2 maxpool + bias + relu + NCHW-compatible flatten (lane concat) ----
    pieces = []
    for hp in range(4):
        for wp in range(4):
            v = jnp.maximum(
                jnp.maximum(z2[:, 2 * hp, 2 * wp, :], z2[:, 2 * hp, 2 * wp + 1, :]),
                jnp.maximum(z2[:, 2 * hp + 1, 2 * wp, :], z2[:, 2 * hp + 1, 2 * wp + 1, :]))
            v = jnp.maximum(v + b2_ref[...], 0.0)            # bias+relu after pool
            pieces.append(v.astype(jnp.bfloat16))
    flat = jnp.concatenate(pieces, axis=-1)                  # (ipt, 2048) bf16

    # ---- fc1 + dropout(eval: identity) + relu + fc2 (hidden stays in VMEM) ----
    h = jnp.dot(flat, wf1_ref[...], preferred_element_type=jnp.float32)
    h = jnp.maximum(h + bf1_ref[...], 0.0)
    # TODO(synk): training-mode dropout (pltpu.prng_* masking + 2x rescale) not
    # implemented; eval-mode (identity) semantics used, matching model.eval().
    o = jnp.dot(h.astype(jnp.bfloat16), wf2_ref[...],
                preferred_element_type=jnp.float32)
    out_ref[0] = o + bf2_ref[...]


def _vmem_limit_bytes(ipt):
    """Right-sized VMEM limit (review item): pipeline buffers + kernel temps."""
    weights = (128 * 4 * C1P + K2 * C2P + FLAT * F1P + F1P * F2P) * 2   # bf16
    biases = (C1P + C2P + F1P + F2P) * 4
    blocks = ipt * ROWS1 * 128 * 2 + ipt * F2P * 4
    pipeline = 2 * (weights + biases + blocks)                          # double-buffered
    temps = ipt * (ROWS1 * 4 * C1P * 4      # conv1 pre-pool accumulator (f32)
                   + ROWS1 * C1P * 4        # y1 (f32)
                   + 64 * K2 * 2            # in-VMEM conv2 patches (bf16)
                   + 64 * C2P * 4           # conv2 accumulator (f32)
                   + FLAT * 2 + F1P * 4)    # flatten + fc1 hidden
    need = pipeline + temps + 4 * 1024 * 1024
    return max(16 * 1024 * 1024, min(32 * 1024 * 1024, int(1.25 * need)))


def _fused_lenet_call(p1, kp, *, n_pad, ipt):
    t = n_pad // ipt
    flops_per_img = 2 * (ROWS1 * 128 * 4 * C1P + 64 * K2 * C2P
                         + FLAT * F1P + F1P * F2P)
    weight_bytes = sum(int(v.size) * v.dtype.itemsize for v in kp.values())
    cost = pl.CostEstimate(
        flops=flops_per_img * n_pad,
        transcendentals=0,
        bytes_accessed=int(p1.size) * 2 + weight_bytes + n_pad * F2P * 4,
    )
    out = pl.pallas_call(
        functools.partial(_lenet_kernel, ipt=ipt),
        out_shape=jax.ShapeDtypeStruct((t, ipt, F2P), jnp.float32),
        grid=(t,),
        in_specs=[
            pl.BlockSpec((ipt * ROWS1, 128), lambda i: (i, 0)),   # conv1 patches
            pl.BlockSpec((128, 4 * C1P), lambda i: (0, 0)),       # w1 (invariant)
            pl.BlockSpec((1, C1P), lambda i: (0, 0)),             # b1
            pl.BlockSpec((K2, C2P), lambda i: (0, 0)),            # w2
            pl.BlockSpec((1, C2P), lambda i: (0, 0)),             # b2
            pl.BlockSpec((FLAT, F1P), lambda i: (0, 0)),          # wfc1
            pl.BlockSpec((1, F1P), lambda i: (0, 0)),             # bfc1
            pl.BlockSpec((F1P, F2P), lambda i: (0, 0)),           # wfc2
            pl.BlockSpec((1, F2P), lambda i: (0, 0)),             # bfc2
        ],
        out_specs=pl.BlockSpec((1, ipt, F2P), lambda i: (i, 0, 0)),
        compiler_params=pltpu.CompilerParams(
            dimension_semantics=("parallel",),
            vmem_limit_bytes=_vmem_limit_bytes(ipt)),
        cost_estimate=cost,
    )(p1, kp["w1"], kp["b1"], kp["w2"], kp["b2"],
      kp["wf1"], kp["bf1"], kp["wf2"], kp["bf2"])
    return out.reshape(n_pad, F2P)


# ---------------------------------------------------------------------------
# Glue: conv1 patch construction (lane-dense, pool quadrants packed in columns)
# ---------------------------------------------------------------------------
# TODO(synk): build these patches in-kernel from the raw 28x28 image to remove
# the remaining ~23x HBM expansion of the network input (rows are already
# lane-dense 256 B, so this is a much smaller win than the conv2 fusion was).

def _build_conv1_patches(x):
    """x: (N, 28, 28) bf16 -> (N*192, 128) bf16.

    Row order (n, h1, w1pad16) over the 12x12 pooled-output grid (w1 rows
    12..15 are zero padding, never consumed).  Columns: 4 pool quadrants
    (di, dj) x 25 taps (ki, kj) padded to 32, i.e. patch[n, h1, w1,
    q*32 + ki*5 + kj] = x[n, 2*h1 + di + ki, 2*w1 + dj + kj].
    """
    n = x.shape[0]
    quads = []
    for di in (0, 1):
        for dj in (0, 1):
            taps = [x[:, di + ki: di + ki + 23: 2, dj + kj: dj + kj + 23: 2]
                    for ki in range(5) for kj in range(5)]
            q = jnp.stack(taps, axis=-1)                       # (N, 12, 12, 25)
            quads.append(jnp.pad(q, ((0, 0), (0, 0), (0, W1PAD - 12), (0, 7))))
    p1 = jnp.concatenate(quads, axis=-1)                       # (N, 12, 16, 128)
    return p1.reshape(n * ROWS1, 128)


# ---------------------------------------------------------------------------
# Parameters: synthetic PyTorch-layout params + conversion to kernel layout
# ---------------------------------------------------------------------------

def init_torch_params(key):
    """PyTorch-shaped parameters, U(-1/sqrt(fan_in), +1/sqrt(fan_in))."""
    def uniform(k, shape, fan_in):
        bound = 1.0 / jnp.sqrt(jnp.float32(fan_in))
        return jax.random.uniform(k, shape, jnp.float32, -bound, bound)

    ks = jax.random.split(key, 8)
    return {
        "conv1_w": uniform(ks[0], (20, 1, 5, 5), 25),
        "conv1_b": uniform(ks[1], (20,), 25),
        "conv2_w": uniform(ks[2], (50, 20, 5, 5), 500),
        "conv2_b": uniform(ks[3], (50,), 500),
        "fc1_w": uniform(ks[4], (500, 800), 800),
        "fc1_b": uniform(ks[5], (500,), 800),
        "fc2_w": uniform(ks[6], (10, 500), 500),
        "fc2_b": uniform(ks[7], (10,), 500),
    }


def prepare_params(tp):
    """Convert PyTorch-layout params to lane-padded bf16 kernel params."""
    def pad_to(a, shape):
        return jnp.zeros(shape, a.dtype).at[tuple(slice(0, s) for s in a.shape)].set(a)

    # conv1 -> (25 taps, 20 cout) -> pad (32, 128) -> 4x block-diagonal (128, 512)
    w1 = tp["conv1_w"].transpose(2, 3, 1, 0).reshape(25, 20)
    w1 = pad_to(w1, (32, C1P))
    w1big = jnp.zeros((4 * 32, 4 * C1P), jnp.float32)
    for q in range(4):
        w1big = w1big.at[q * 32:(q + 1) * 32, q * C1P:(q + 1) * C1P].set(w1)

    # conv2 -> rows (ki, kj, cin padded to 128), cols cout padded to 128
    w2 = pad_to(tp["conv2_w"].transpose(2, 3, 1, 0), (5, 5, C1P, C2P))
    w2 = w2.reshape(K2, C2P)

    # fc1: PyTorch flattens NCHW as (c, h, w); the kernel flattens as
    # (h, w, c_pad128) -> permute + pad weight rows to match.
    wf1 = tp["fc1_w"].T.reshape(50, 4, 4, 500).transpose(1, 2, 0, 3)   # (h, w, c, f)
    wf1 = pad_to(wf1, (4, 4, C2P, F1P)).reshape(FLAT, F1P)
    wf2 = pad_to(tp["fc2_w"].T, (F1P, F2P))

    return {
        "w1": w1big.astype(jnp.bfloat16),
        "b1": pad_to(tp["conv1_b"], (C1P,)).reshape(1, C1P),
        "w2": w2.astype(jnp.bfloat16),
        "b2": pad_to(tp["conv2_b"], (C2P,)).reshape(1, C2P),
        "wf1": wf1.astype(jnp.bfloat16),
        "bf1": pad_to(tp["fc1_b"], (F1P,)).reshape(1, F1P),
        "wf2": wf2.astype(jnp.bfloat16),
        "bf2": pad_to(tp["fc2_b"], (F2P,)).reshape(1, F2P),
    }


# ---------------------------------------------------------------------------
# Forward pass
# ---------------------------------------------------------------------------

def lenet_forward(x_nchw, kp, *, ipt=None):
    n = x_nchw.shape[0]
    assert x_nchw.shape[1:] == (1, 28, 28), x_nchw.shape
    # Images per grid step: sweepable; auto choice guarantees >=2 grid steps
    # whenever N >= 2 (v7x megacore + DMA double-buffering), larger tiles for
    # large batches to amortize per-step overhead.
    if ipt is None:
        ipt = 8 if n >= 16 else max(1, n // 2)
    ipt = max(1, int(ipt))
    t = pl.cdiv(n, ipt)
    n_pad = t * ipt

    x = x_nchw[:, 0, :, :].astype(jnp.bfloat16)                # (N, 28, 28)
    if n_pad != n:
        x = jnp.pad(x, ((0, n_pad - n), (0, 0), (0, 0)))

    p1 = _build_conv1_patches(x)                               # (N_pad*192, 128)
    logits = _fused_lenet_call(p1, kp, n_pad=n_pad, ipt=ipt)   # (N_pad, 128)
    return logits[:n, :10]


# ---------------------------------------------------------------------------
# Pure-JAX reference (PyTorch semantics) for a sanity check
# ---------------------------------------------------------------------------

def lenet_reference(x_nchw, tp):
    x = jnp.transpose(x_nchw, (0, 2, 3, 1))

    def conv(a, w, b):
        y = jax.lax.conv_general_dilated(
            a, jnp.transpose(w, (2, 3, 1, 0)), (1, 1), "VALID",
            dimension_numbers=("NHWC", "HWIO", "NHWC"))
        return y + b

    def pool(a):
        nb, hh, ww, cc = a.shape
        return jnp.max(a.reshape(nb, hh // 2, 2, ww // 2, 2, cc), axis=(2, 4))

    y = pool(jax.nn.relu(conv(x, tp["conv1_w"], tp["conv1_b"])))
    y = pool(jax.nn.relu(conv(y, tp["conv2_w"], tp["conv2_b"])))
    flat = jnp.transpose(y, (0, 3, 1, 2)).reshape(x.shape[0], 800)
    h = jax.nn.relu(flat @ tp["fc1_w"].T + tp["fc1_b"])
    return h @ tp["fc2_w"].T + tp["fc2_b"]


if __name__ == "__main__":
    key = jax.random.PRNGKey(0)
    k_param, k_x = jax.random.split(key)
    torch_params = init_torch_params(k_param)
    kernel_params = prepare_params(torch_params)
    # Input must be (N, 1, 28, 28) for the 4*4*50 = 800 flatten to hold.
    x = jax.random.normal(k_x, (2, 1, 28, 28), jnp.float32)

    fwd = jax.jit(lenet_forward)
    out = jax.block_until_ready(fwd(x, kernel_params))

    assert out.shape == (2, 10), out.shape
    assert out.dtype == jnp.float32
    assert bool(jnp.all(jnp.isfinite(out)))

    # bf16 weights/activations with f32 accumulation -> loose-ish tolerance
    # vs. the f32 reference (acceptable for inference).
    ref = lenet_reference(x, torch_params)
    rel = jnp.linalg.norm(out - ref) / jnp.maximum(jnp.linalg.norm(ref), 1e-6)
    assert float(rel) < 0.08, f"relative error vs reference too large: {float(rel)}"
    print("KERNEL_OK")
</pallas_src>

<mosaic_0001>
module attributes {stable_mosaic.version = 11 : i64} {
  func.func @_lenet_kernel(%arg0: i32, %arg1: memref<192x128xbf16, #tpu.memory_space<vmem>>, %arg2: memref<128x512xbf16, #tpu.memory_space<vmem>>, %arg3: memref<1x128xf32, #tpu.memory_space<vmem>>, %arg4: memref<3200x128xbf16, #tpu.memory_space<vmem>>, %arg5: memref<1x128xf32, #tpu.memory_space<vmem>>, %arg6: memref<2048x512xbf16, #tpu.memory_space<vmem>>, %arg7: memref<1x512xf32, #tpu.memory_space<vmem>>, %arg8: memref<512x128xbf16, #tpu.memory_space<vmem>>, %arg9: memref<1x128xf32, #tpu.memory_space<vmem>>, %arg10: memref<1x1x128xf32, #tpu.memory_space<vmem>>) attributes {dimension_semantics = [#tpu.dimension_semantics<parallel>], iteration_bounds = array<i64: 2>, scalar_prefetch = 0 : i64, scratch_operands = 0 : i64, tpu.core_type = #tpu.core_type<tc>, window_params = [{transform_indices = @transform_0, window_bounds = array<i64: 192, 128>}, {pipeline_mode = #tpu.pipeline_mode<synchronous>, transform_indices = @transform_1, window_bounds = array<i64: 128, 512>}, {pipeline_mode = #tpu.pipeline_mode<synchronous>, transform_indices = @transform_2, window_bounds = array<i64: 1, 128>}, {pipeline_mode = #tpu.pipeline_mode<synchronous>, transform_indices = @transform_3, window_bounds = array<i64: 3200, 128>}, {pipeline_mode = #tpu.pipeline_mode<synchronous>, transform_indices = @transform_4, window_bounds = array<i64: 1, 128>}, {pipeline_mode = #tpu.pipeline_mode<synchronous>, transform_indices = @transform_5, window_bounds = array<i64: 2048, 512>}, {pipeline_mode = #tpu.pipeline_mode<synchronous>, transform_indices = @transform_6, window_bounds = array<i64: 1, 512>}, {pipeline_mode = #tpu.pipeline_mode<synchronous>, transform_indices = @transform_7, window_bounds = array<i64: 512, 128>}, {pipeline_mode = #tpu.pipeline_mode<synchronous>, transform_indices = @transform_8, window_bounds = array<i64: 1, 128>}, {transform_indices = @transform_9, window_bounds = array<i64: 1, 1, 128>}]} {
    %c0 = arith.constant 0 : index
    %c0_0 = arith.constant 0 : index
    %0 = vector.load %arg1[%c0, %c0_0] : memref<192x128xbf16, #tpu.memory_space<vmem>>, vector<192x128xbf16>
    %c0_1 = arith.constant 0 : index
    %c0_2 = arith.constant 0 : index
    %1 = vector.load %arg2[%c0_1, %c0_2] : memref<128x512xbf16, #tpu.memory_space<vmem>>, vector<128x512xbf16>
    %cst = arith.constant dense<0.000000e+00> : vector<192x512xf32>
    %2 = tpu.matmul %0, %1, %cst {dimension_numbers = #tpu.dot_dimension_numbers<[1], [0], [0], [1], [0, 0, 1, 1], [], []>} : vector<192x128xbf16>, vector<128x512xbf16>, vector<192x512xf32> -> vector<192x512xf32>
    %3 = vector.extract_strided_slice %2 {offsets = [0, 0], sizes = [192, 128], strides = [1, 1]} : vector<192x512xf32> to vector<192x128xf32>
    %4 = vector.extract_strided_slice %2 {offsets = [0, 128], sizes = [192, 128], strides = [1, 1]} : vector<192x512xf32> to vector<192x128xf32>
    %5 = arith.maximumf %3, %4 : vector<192x128xf32>
    %6 = vector.extract_strided_slice %2 {offsets = [0, 256], sizes = [192, 128], strides = [1, 1]} : vector<192x512xf32> to vector<192x128xf32>
    %7 = vector.extract_strided_slice %2 {offsets = [0, 384], sizes = [192, 128], strides = [1, 1]} : vector<192x512xf32> to vector<192x128xf32>
    %8 = arith.maximumf %6, %7 : vector<192x128xf32>
    %9 = arith.maximumf %5, %8 : vector<192x128xf32>
    %c0_3 = arith.constant 0 : index
    %c0_4 = arith.constant 0 : index
    %10 = vector.load %arg3[%c0_3, %c0_4] : memref<1x128xf32, #tpu.memory_space<vmem>>, vector<1x128xf32>
    %11 = vector.broadcast %10 : vector<1x128xf32> to vector<192x128xf32>
    %12 = arith.addf %9, %11 : vector<192x128xf32>
    %cst_5 = arith.constant 0.000000e+00 : f32
    %13 = vector.broadcast %cst_5 : f32 to vector<192x128xf32>
    %14 = arith.maximumf %12, %13 : vector<192x128xf32>
    %15 = vector.shape_cast %14 : vector<192x128xf32> to vector<1x12x16x128xf32>
    %16 = vector.extract_strided_slice %15 {offsets = [0, 0, 0, 0], sizes = [1, 8, 8, 128], strides = [1, 1, 1, 1]} : vector<1x12x16x128xf32> to vector<1x8x8x128xf32>
    %17 = vector.shape_cast %16 : vector<1x8x8x128xf32> to vector<64x128xf32>
    %18 = arith.truncf %17 : vector<64x128xf32> to vector<64x128xbf16>
    %19 = vector.extract_strided_slice %15 {offsets = [0, 0, 1, 0], sizes = [1, 8, 8, 128], strides = [1, 1, 1, 1]} : vector<1x12x16x128xf32> to vector<1x8x8x128xf32>
    %20 = vector.shape_cast %19 : vector<1x8x8x128xf32> to vector<64x128xf32>
    %21 = arith.truncf %20 : vector<64x128xf32> to vector<64x128xbf16>
    %22 = vector.extract_strided_slice %15 {offsets = [0, 0, 2, 0], sizes = [1, 8, 8, 128], strides = [1, 1, 1, 1]} : vector<1x12x16x128xf32> to vector<1x8x8x128xf32>
    %23 = vector.shape_cast %22 : vector<1x8x8x128xf32> to vector<64x128xf32>
    %24 = arith.truncf %23 : vector<64x128xf32> to vector<64x128xbf16>
    %25 = vector.extract_strided_slice %15 {offsets = [0, 0, 3, 0], sizes = [1, 8, 8, 128], strides = [1, 1, 1, 1]} : vector<1x12x16x128xf32> to vector<1x8x8x128xf32>
    %26 = vector.shape_cast %25 : vector<1x8x8x128xf32> to vector<64x128xf32>
    %27 = arith.truncf %26 : vector<64x128xf32> to vector<64x128xbf16>
    %28 = vector.extract_strided_slice %15 {offsets = [0, 0, 4, 0], sizes = [1, 8, 8, 128], strides = [1, 1, 1, 1]} : vector<1x12x16x128xf32> to vector<1x8x8x128xf32>
    %29 = vector.shape_cast %28 : vector<1x8x8x128xf32> to vector<64x128xf32>
    %30 = arith.truncf %29 : vector<64x128xf32> to vector<64x128xbf16>
    %31 = vector.extract_strided_slice %15 {offsets = [0, 1, 0, 0], sizes = [1, 8, 8, 128], strides = [1, 1, 1, 1]} : vector<1x12x16x128xf32> to vector<1x8x8x128xf32>
    %32 = vector.shape_cast %31 : vector<1x8x8x128xf32> to vector<64x128xf32>
    %33 = arith.truncf %32 : vector<64x128xf32> to vector<64x128xbf16>
    %34 = vector.extract_strided_slice %15 {offsets = [0, 1, 1, 0], sizes = [1, 8, 8, 128], strides = [1, 1, 1, 1]} : vector<1x12x16x128xf32> to vector<1x8x8x128xf32>
    %35 = vector.shape_cast %34 : vector<1x8x8x128xf32> to vector<64x128xf32>
    %36 = arith.truncf %35 : vector<64x128xf32> to vector<64x128xbf16>
    %37 = vector.extract_strided_slice %15 {offsets = [0, 1, 2, 0], sizes = [1, 8, 8, 128], strides = [1, 1, 1, 1]} : vector<1x12x16x128xf32> to vector<1x8x8x128xf32>
    %38 = vector.shape_cast %37 : vector<1x8x8x128xf32> to vector<64x128xf32>
    %39 = arith.truncf %38 : vector<64x128xf32> to vector<64x128xbf16>
    %40 = vector.extract_strided_slice %15 {offsets = [0, 1, 3, 0], sizes = [1, 8, 8, 128], strides = [1, 1, 1, 1]} : vector<1x12x16x128xf32> to vector<1x8x8x128xf32>
    %41 = vector.shape_cast %40 : vector<1x8x8x128xf32> to vector<64x128xf32>
    %42 = arith.truncf %41 : vector<64x128xf32> to vector<64x128xbf16>
    %43 = vector.extract_strided_slice %15 {offsets = [0, 1, 4, 0], sizes = [1, 8, 8, 128], strides = [1, 1, 1, 1]} : vector<1x12x16x128xf32> to vector<1x8x8x128xf32>
    %44 = vector.shape_cast %43 : vector<1x8x8x128xf32> to vector<64x128xf32>
    %45 = arith.truncf %44 : vector<64x128xf32> to vector<64x128xbf16>
    %46 = vector.extract_strided_slice %15 {offsets = [0, 2, 0, 0], sizes = [1, 8, 8, 128], strides = [1, 1, 1, 1]} : vector<1x12x16x128xf32> to vector<1x8x8x128xf32>
    %47 = vector.shape_cast %46 : vector<1x8x8x128xf32> to vector<64x128xf32>
    %48 = arith.truncf %47 : vector<64x128xf32> to vector<64x128xbf16>
    %49 = vector.extract_strided_slice %15 {offsets = [0, 2, 1, 0], sizes = [1, 8, 8, 128], strides = [1, 1, 1, 1]} : vector<1x12x16x128xf32> to vector<1x8x8x128xf32>
    %50 = vector.shape_cast %49 : vector<1x8x8x128xf32> to vector<64x128xf32>
    %51 = arith.truncf %50 : vector<64x128xf32> to vector<64x128xbf16>
    %52 = vector.extract_strided_slice %15 {offsets = [0, 2, 2, 0], sizes = [1, 8, 8, 128], strides = [1, 1, 1, 1]} : vector<1x12x16x128xf32> to vector<1x8x8x128xf32>
    %53 = vector.shape_cast %52 : vector<1x8x8x128xf32> to vector<64x128xf32>
    %54 = arith.truncf %53 : vector<64x128xf32> to vector<64x128xbf16>
    %55 = vector.extract_strided_slice %15 {offsets = [0, 2, 3, 0], sizes = [1, 8, 8, 128], strides = [1, 1, 1, 1]} : vector<1x12x16x128xf32> to vector<1x8x8x128xf32>
    %56 = vector.shape_cast %55 : vector<1x8x8x128xf32> to vector<64x128xf32>
    %57 = arith.truncf %56 : vector<64x128xf32> to vector<64x128xbf16>
    %58 = vector.extract_strided_slice %15 {offsets = [0, 2, 4, 0], sizes = [1, 8, 8, 128], strides = [1, 1, 1, 1]} : vector<1x12x16x128xf32> to vector<1x8x8x128xf32>
    %59 = vector.shape_cast %58 : vector<1x8x8x128xf32> to vector<64x128xf32>
    %60 = arith.truncf %59 : vector<64x128xf32> to vector<64x128xbf16>
    %61 = vector.extract_strided_slice %15 {offsets = [0, 3, 0, 0], sizes = [1, 8, 8, 128], strides = [1, 1, 1, 1]} : vector<1x12x16x128xf32> to vector<1x8x8x128xf32>
    %62 = vector.shape_cast %61 : vector<1x8x8x128xf32> to vector<64x128xf32>
    %63 = arith.truncf %62 : vector<64x128xf32> to vector<64x128xbf16>
    %64 = vector.extract_strided_slice %15 {offsets = [0, 3, 1, 0], sizes = [1, 8, 8, 128], strides = [1, 1, 1, 1]} : vector<1x12x16x128xf32> to vector<1x8x8x128xf32>
    %65 = vector.shape_cast %64 : vector<1x8x8x128xf32> to vector<64x128xf32>
    %66 = arith.truncf %65 : vector<64x128xf32> to vector<64x128xbf16>
    %67 = vector.extract_strided_slice %15 {offsets = [0, 3, 2, 0], sizes = [1, 8, 8, 128], strides = [1, 1, 1, 1]} : vector<1x12x16x128xf32> to vector<1x8x8x128xf32>
    %68 = vector.shape_cast %67 : vector<1x8x8x128xf32> to vector<64x128xf32>
    %69 = arith.truncf %68 : vector<64x128xf32> to vector<64x128xbf16>
    %70 = vector.extract_strided_slice %15 {offsets = [0, 3, 3, 0], sizes = [1, 8, 8, 128], strides = [1, 1, 1, 1]} : vector<1x12x16x128xf32> to vector<1x8x8x128xf32>
    %71 = vector.shape_cast %70 : vector<1x8x8x128xf32> to vector<64x128xf32>
    %72 = arith.truncf %71 : vector<64x128xf32> to vector<64x128xbf16>
    %73 = vector.extract_strided_slice %15 {offsets = [0, 3, 4, 0], sizes = [1, 8, 8, 128], strides = [1, 1, 1, 1]} : vector<1x12x16x128xf32> to vector<1x8x8x128xf32>
    %74 = vector.shape_cast %73 : vector<1x8x8x128xf32> to vector<64x128xf32>
    %75 = arith.truncf %74 : vector<64x128xf32> to vector<64x128xbf16>
    %76 = vector.extract_strided_slice %15 {offsets = [0, 4, 0, 0], sizes = [1, 8, 8, 128], strides = [1, 1, 1, 1]} : vector<1x12x16x128xf32> to vector<1x8x8x128xf32>
    %77 = vector.shape_cast %76 : vector<1x8x8x128xf32> to vector<64x128xf32>
    %78 = arith.truncf %77 : vector<64x128xf32> to vector<64x128xbf16>
    %79 = vector.extract_strided_slice %15 {offsets = [0, 4, 1, 0], sizes = [1, 8, 8, 128], strides = [1, 1, 1, 1]} : vector<1x12x16x128xf32> to vector<1x8x8x128xf32>
    %80 = vector.shape_cast %79 : vector<1x8x8x128xf32> to vector<64x128xf32>
    %81 = arith.truncf %80 : vector<64x128xf32> to vector<64x128xbf16>
    %82 = vector.extract_strided_slice %15 {offsets = [0, 4, 2, 0], sizes = [1, 8, 8, 128], strides = [1, 1, 1, 1]} : vector<1x12x16x128xf32> to vector<1x8x8x128xf32>
    %83 = vector.shape_cast %82 : vector<1x8x8x128xf32> to vector<64x128xf32>
    %84 = arith.truncf %83 : vector<64x128xf32> to vector<64x128xbf16>
    %85 = vector.extract_strided_slice %15 {offsets = [0, 4, 3, 0], sizes = [1, 8, 8, 128], strides = [1, 1, 1, 1]} : vector<1x12x16x128xf32> to vector<1x8x8x128xf32>
    %86 = vector.shape_cast %85 : vector<1x8x8x128xf32> to vector<64x128xf32>
    %87 = arith.truncf %86 : vector<64x128xf32> to vector<64x128xbf16>
    %88 = vector.extract_strided_slice %15 {offsets = [0, 4, 4, 0], sizes = [1, 8, 8, 128], strides = [1, 1, 1, 1]} : vector<1x12x16x128xf32> to vector<1x8x8x128xf32>
    %89 = vector.shape_cast %88 : vector<1x8x8x128xf32> to vector<64x128xf32>
    %90 = arith.truncf %89 : vector<64x128xf32> to vector<64x128xbf16>
    %91 = tpu.concatenate %18, %21, %24, %27, %30, %33, %36, %39, %42, %45, %48, %51, %54, %57, %60, %63 in 1 : vector<64x128xbf16>, vector<64x128xbf16>, vector<64x128xbf16>, vector<64x128xbf16>, vector<64x128xbf16>, vector<64x128xbf16>, vector<64x128xbf16>, vector<64x128xbf16>, vector<64x128xbf16>, vector<64x128xbf16>, vector<64x128xbf16>, vector<64x128xbf16>, vector<64x128xbf16>, vector<64x128xbf16>, vector<64x128xbf16>, vector<64x128xbf16> -> vector<64x2048xbf16>
    %92 = tpu.concatenate %66, %69, %72, %75, %78, %81, %84, %87, %90 in 1 : vector<64x128xbf16>, vector<64x128xbf16>, vector<64x128xbf16>, vector<64x128xbf16>, vector<64x128xbf16>, vector<64x128xbf16>, vector<64x128xbf16>, vector<64x128xbf16>, vector<64x128xbf16> -> vector<64x1152xbf16>
    %93 = tpu.concatenate %91, %92 in 1 : vector<64x2048xbf16>, vector<64x1152xbf16> -> vector<64x3200xbf16>
    %c0_6 = arith.constant 0 : index
    %c0_7 = arith.constant 0 : index
    %94 = vector.load %arg4[%c0_6, %c0_7] : memref<3200x128xbf16, #tpu.memory_space<vmem>>, vector<3200x128xbf16>
    %cst_8 = arith.constant dense<0.000000e+00> : vector<64x128xf32>
    %95 = tpu.matmul %93, %94, %cst_8 {dimension_numbers = #tpu.dot_dimension_numbers<[1], [0], [0], [1], [0, 0, 1, 1], [], []>} : vector<64x3200xbf16>, vector<3200x128xbf16>, vector<64x128xf32> -> vector<64x128xf32>
    %96 = vector.shape_cast %95 : vector<64x128xf32> to vector<1x8x8x128xf32>
    %97 = vector.extract_strided_slice %96 {offsets = [0, 0, 0, 0], sizes = [1, 1, 1, 128], strides = [1, 1, 1, 1]} : vector<1x8x8x128xf32> to vector<1x1x1x128xf32>
    %98 = vector.shape_cast %97 : vector<1x1x1x128xf32> to vector<1x128xf32>
    %99 = vector.extract_strided_slice %96 {offsets = [0, 0, 1, 0], sizes = [1, 1, 1, 128], strides = [1, 1, 1, 1]} : vector<1x8x8x128xf32> to vector<1x1x1x128xf32>
    %100 = vector.shape_cast %99 : vector<1x1x1x128xf32> to vector<1x128xf32>
    %101 = arith.maximumf %98, %100 : vector<1x128xf32>
    %102 = vector.extract_strided_slice %96 {offsets = [0, 1, 0, 0], sizes = [1, 1, 1, 128], strides = [1, 1, 1, 1]} : vector<1x8x8x128xf32> to vector<1x1x1x128xf32>
    %103 = vector.shape_cast %102 : vector<1x1x1x128xf32> to vector<1x128xf32>
    %104 = vector.extract_strided_slice %96 {offsets = [0, 1, 1, 0], sizes = [1, 1, 1, 128], strides = [1, 1, 1, 1]} : vector<1x8x8x128xf32> to vector<1x1x1x128xf32>
    %105 = vector.shape_cast %104 : vector<1x1x1x128xf32> to vector<1x128xf32>
    %106 = arith.maximumf %103, %105 : vector<1x128xf32>
    %107 = arith.maximumf %101, %106 : vector<1x128xf32>
    %c0_9 = arith.constant 0 : index
    %c0_10 = arith.constant 0 : index
    %108 = vector.load %arg5[%c0_9, %c0_10] : memref<1x128xf32, #tpu.memory_space<vmem>>, vector<1x128xf32>
    %109 = arith.addf %107, %108 : vector<1x128xf32>
    %cst_11 = arith.constant 0.000000e+00 : f32
    %110 = vector.broadcast %cst_11 : f32 to vector<1x128xf32>
    %111 = arith.maximumf %109, %110 : vector<1x128xf32>
    %112 = arith.truncf %111 : vector<1x128xf32> to vector<1x128xbf16>
    %113 = vector.extract_strided_slice %96 {offsets = [0, 0, 2, 0], sizes = [1, 1, 1, 128], strides = [1, 1, 1, 1]} : vector<1x8x8x128xf32> to vector<1x1x1x128xf32>
    %114 = vector.shape_cast %113 : vector<1x1x1x128xf32> to vector<1x128xf32>
    %115 = vector.extract_strided_slice %96 {offsets = [0, 0, 3, 0], sizes = [1, 1, 1, 128], strides = [1, 1, 1, 1]} : vector<1x8x8x128xf32> to vector<1x1x1x128xf32>
    %116 = vector.shape_cast %115 : vector<1x1x1x128xf32> to vector<1x128xf32>
    %117 = arith.maximumf %114, %116 : vector<1x128xf32>
    %118 = vector.extract_strided_slice %96 {offsets = [0, 1, 2, 0], sizes = [1, 1, 1, 128], strides = [1, 1, 1, 1]} : vector<1x8x8x128xf32> to vector<1x1x1x128xf32>
    %119 = vector.shape_cast %118 : vector<1x1x1x128xf32> to vector<1x128xf32>
    %120 = vector.extract_strided_slice %96 {offsets = [0, 1, 3, 0], sizes = [1, 1, 1, 128], strides = [1, 1, 1, 1]} : vector<1x8x8x128xf32> to vector<1x1x1x128xf32>
    %121 = vector.shape_cast %120 : vector<1x1x1x128xf32> to vector<1x128xf32>
    %122 = arith.maximumf %119, %121 : vector<1x128xf32>
    %123 = arith.maximumf %117, %122 : vector<1x128xf32>
    %c0_12 = arith.constant 0 : index
    %c0_13 = arith.constant 0 : index
    %124 = vector.load %arg5[%c0_12, %c0_13] : memref<1x128xf32, #tpu.memory_space<vmem>>, vector<1x128xf32>
    %125 = arith.addf %123, %124 : vector<1x128xf32>
    %cst_14 = arith.constant 0.000000e+00 : f32
    %126 = vector.broadcast %cst_14 : f32 to vector<1x128xf32>
    %127 = arith.maximumf %125, %126 : vector<1x128xf32>
    %128 = arith.truncf %127 : vector<1x128xf32> to vector<1x128xbf16>
    %129 = vector.extract_strided_slice %96 {offsets = [0, 0, 4, 0], sizes = [1, 1, 1, 128], strides = [1, 1, 1, 1]} : vector<1x8x8x128xf32> to vector<1x1x1x128xf32>
    %130 = vector.shape_cast %129 : vector<1x1x1x128xf32> to vector<1x128xf32>
    %131 = vector.extract_strided_slice %96 {offsets = [0, 0, 5, 0], sizes = [1, 1, 1, 128], strides = [1, 1, 1, 1]} : vector<1x8x8x128xf32> to vector<1x1x1x128xf32>
    %132 = vector.shape_cast %131 : vector<1x1x1x128xf32> to vector<1x128xf32>
    %133 = arith.maximumf %130, %132 : vector<1x128xf32>
    %134 = vector.extract_strided_slice %96 {offsets = [0, 1, 4, 0], sizes = [1, 1, 1, 128], strides = [1, 1, 1, 1]} : vector<1x8x8x128xf32> to vector<1x1x1x128xf32>
    %135 = vector.shape_cast %134 : vector<1x1x1x128xf32> to vector<1x128xf32>
    %136 = vector.extract_strided_slice %96 {offsets = [0, 1, 5, 0], sizes = [1, 1, 1, 128], strides = [1, 1, 1, 1]} : vector<1x8x8x128xf32> to vector<1x1x1x128xf32>
    %137 = vector.shape_cast %136 : vector<1x1x1x128xf32> to vector<1x128xf32>
    %138 = arith.maximumf %135, %137 : vector<1x128xf32>
    %139 = arith.maximumf %133, %138 : vector<1x128xf32>
    %c0_15 = arith.constant 0 : index
    %c0_16 = arith.constant 0 : index
    %140 = vector.load %arg5[%c0_15, %c0_16] : memref<1x128xf32, #tpu.memory_space<vmem>>, vector<1x128xf32>
    %141 = arith.addf %139, %140 : vector<1x128xf32>
    %cst_17 = arith.constant 0.000000e+00 : f32
    %142 = vector.broadcast %cst_17 : f32 to vector<1x128xf32>
    %143 = arith.maximumf %141, %142 : vector<1x128xf32>
    %144 = arith.truncf %143 : vector<1x128xf32> to vector<1x128xbf16>
    %145 = vector.extract_strided_slice %96 {offsets = [0, 0, 6, 0], sizes = [1, 1, 1, 128], strides = [1, 1, 1, 1]} : vector<1x8x8x128xf32> to vector<1x1x1x128xf32>
    %146 = vector.shape_cast %145 : vector<1x1x1x128xf32> to vector<1x128xf32>
    %147 = vector.extract_strided_slice %96 {offsets = [0, 0, 7, 0], sizes = [1, 1, 1, 128], strides = [1, 1, 1, 1]} : vector<1x8x8x128xf32> to vector<1x1x1x128xf32>
    %148 = vector.shape_cast %147 : vector<1x1x1x128xf32> to vector<1x128xf32>
    %149 = arith.maximumf %146, %148 : vector<1x128xf32>
    %150 = vector.extract_strided_slice %96 {offsets = [0, 1, 6, 0], sizes = [1, 1, 1, 128], strides = [1, 1, 1, 1]} : vector<1x8x8x128xf32> to vector<1x1x1x128xf32>
    %151 = vector.shape_cast %150 : vector<1x1x1x128xf32> to vector<1x128xf32>
    %152 = vector.extract_strided_slice %96 {offsets = [0, 1, 7, 0], sizes = [1, 1, 1, 128], strides = [1, 1, 1, 1]} : vector<1x8x8x128xf32> to vector<1x1x1x128xf32>
    %153 = vector.shape_cast %152 : vector<1x1x1x128xf32> to vector<1x128xf32>
    %154 = arith.maximumf %151, %153 : vector<1x128xf32>
    %155 = arith.maximumf %149, %154 : vector<1x128xf32>
    %c0_18 = arith.constant 0 : index
    %c0_19 = arith.constant 0 : index
    %156 = vector.load %arg5[%c0_18, %c0_19] : memref<1x128xf32, #tpu.memory_space<vmem>>, vector<1x128xf32>
    %157 = arith.addf %155, %156 : vector<1x128xf32>
    %cst_20 = arith.constant 0.000000e+00 : f32
    %158 = vector.broadcast %cst_20 : f32 to vector<1x128xf32>
    %159 = arith.maximumf %157, %158 : vector<1x128xf32>
    %160 = arith.truncf %159 : vector<1x128xf32> to vector<1x128xbf16>
    %161 = vector.extract_strided_slice %96 {offsets = [0, 2, 0, 0], sizes = [1, 1, 1, 128], strides = [1, 1, 1, 1]} : vector<1x8x8x128xf32> to vector<1x1x1x128xf32>
    %162 = vector.shape_cast %161 : vector<1x1x1x128xf32> to vector<1x128xf32>
    %163 = vector.extract_strided_slice %96 {offsets = [0, 2, 1, 0], sizes = [1, 1, 1, 128], strides = [1, 1, 1, 1]} : vector<1x8x8x128xf32> to vector<1x1x1x128xf32>
    %164 = vector.shape_cast %163 : vector<1x1x1x128xf32> to vector<1x128xf32>
    %165 = arith.maximumf %162, %164 : vector<1x128xf32>
    %166 = vector.extract_strided_slice %96 {offsets = [0, 3, 0, 0], sizes = [1, 1, 1, 128], strides = [1, 1, 1, 1]} : vector<1x8x8x128xf32> to vector<1x1x1x128xf32>
    %167 = vector.shape_cast %166 : vector<1x1x1x128xf32> to vector<1x128xf32>
    %168 = vector.extract_strided_slice %96 {offsets = [0, 3, 1, 0], sizes = [1, 1, 1, 128], strides = [1, 1, 1, 1]} : vector<1x8x8x128xf32> to vector<1x1x1x128xf32>
    %169 = vector.shape_cast %168 : vector<1x1x1x128xf32> to vector<1x128xf32>
    %170 = arith.maximumf %167, %169 : vector<1x128xf32>
    %171 = arith.maximumf %165, %170 : vector<1x128xf32>
    %c0_21 = arith.constant 0 : index
    %c0_22 = arith.constant 0 : index
    %172 = vector.load %arg5[%c0_21, %c0_22] : memref<1x128xf32, #tpu.memory_space<vmem>>, vector<1x128xf32>
    %173 = arith.addf %171, %172 : vector<1x128xf32>
    %cst_23 = arith.constant 0.000000e+00 : f32
    %174 = vector.broadcast %cst_23 : f32 to vector<1x128xf32>
    %175 = arith.maximumf %173, %174 : vector<1x128xf32>
    %176 = arith.truncf %175 : vector<1x128xf32> to vector<1x128xbf16>
    %177 = vector.extract_strided_slice %96 {offsets = [0, 2, 2, 0], sizes = [1, 1, 1, 128], strides = [1, 1, 1, 1]} : vector<1x8x8x128xf32> to vector<1x1x1x128xf32>
    %178 = vector.shape_cast %177 : vector<1x1x1x128xf32> to vector<1x128xf32>
    %179 = vector.extract_strided_slice %96 {offsets = [0, 2, 3, 0], sizes = [1, 1, 1, 128], strides = [1, 1, 1, 1]} : vector<1x8x8x128xf32> to vector<1x1x1x128xf32>
    %180 = vector.shape_cast %179 : vector<1x1x1x128xf32> to vector<1x128xf32>
    %181 = arith.maximumf %178, %180 : vector<1x128xf32>
    %182 = vector.extract_strided_slice %96 {offsets = [0, 3, 2, 0], sizes = [1, 1, 1, 128], strides = [1, 1, 1, 1]} : vector<1x8x8x128xf32> to vector<1x1x1x128xf32>
    %183 = vector.shape_cast %182 : vector<1x1x1x128xf32> to vector<1x128xf32>
    %184 = vector.extract_strided_slice %96 {offsets = [0, 3, 3, 0], sizes = [1, 1, 1, 128], strides = [1, 1, 1, 1]} : vector<1x8x8x128xf32> to vector<1x1x1x128xf32>
    %185 = vector.shape_cast %184 : vector<1x1x1x128xf32> to vector<1x128xf32>
    %186 = arith.maximumf %183, %185 : vector<1x128xf32>
    %187 = arith.maximumf %181, %186 : vector<1x128xf32>
    %c0_24 = arith.constant 0 : index
    %c0_25 = arith.constant 0 : index
    %188 = vector.load %arg5[%c0_24, %c0_25] : memref<1x128xf32, #tpu.memory_space<vmem>>, vector<1x128xf32>
    %189 = arith.addf %187, %188 : vector<1x128xf32>
    %cst_26 = arith.constant 0.000000e+00 : f32
    %190 = vector.broadcast %cst_26 : f32 to vector<1x128xf32>
    %191 = arith.maximumf %189, %190 : vector<1x128xf32>
    %192 = arith.truncf %191 : vector<1x128xf32> to vector<1x128xbf16>
    %193 = vector.extract_strided_slice %96 {offsets = [0, 2, 4, 0], sizes = [1, 1, 1, 128], strides = [1, 1, 1, 1]} : vector<1x8x8x128xf32> to vector<1x1x1x128xf32>
    %194 = vector.shape_cast %193 : vector<1x1x1x128xf32> to vector<1x128xf32>
    %195 = vector.extract_strided_slice %96 {offsets = [0, 2, 5, 0], sizes = [1, 1, 1, 128], strides = [1, 1, 1, 1]} : vector<1x8x8x128xf32> to vector<1x1x1x128xf32>
    %196 = vector.shape_cast %195 : vector<1x1x1x128xf32> to vector<1x128xf32>
    %197 = arith.maximumf %194, %196 : vector<1x128xf32>
    %198 = vector.extract_strided_slice %96 {offsets = [0, 3, 4, 0], sizes = [1, 1, 1, 128], strides = [1, 1, 1, 1]} : vector<1x8x8x128xf32> to vector<1x1x1x128xf32>
    %199 = vector.shape_cast %198 : vector<1x1x1x128xf32> to vector<1x128xf32>
    %200 = vector.extract_strided_slice %96 {offsets = [0, 3, 5, 0], sizes = [1, 1, 1, 128], strides = [1, 1, 1, 1]} : vector<1x8x8x128xf32> to vector<1x1x1x128xf32>
    %201 = vector.shape_cast %200 : vector<1x1x1x128xf32> to vector<1x128xf32>
    %202 = arith.maximumf %199, %201 : vector<1x128xf32>
    %203 = arith.maximumf %197, %202 : vector<1x128xf32>
    %c0_27 = arith.constant 0 : index
    %c0_28 = arith.constant 0 : index
    %204 = vector.load %arg5[%c0_27, %c0_28] : memref<1x128xf32, #tpu.memory_space<vmem>>, vector<1x128xf32>
    %205 = arith.addf %203, %204 : vector<1x128xf32>
    %cst_29 = arith.constant 0.000000e+00 : f32
    %206 = vector.broadcast %cst_29 : f32 to vector<1x128xf32>
    %207 = arith.maximumf %205, %206 : vector<1x128xf32>
    %208 = arith.truncf %207 : vector<1x128xf32> to vector<1x128xbf16>
    %209 = vector.extract_strided_slice %96 {offsets = [0, 2, 6, 0], sizes = [1, 1, 1, 128], strides = [1, 1, 1, 1]} : vector<1x8x8x128xf32> to vector<1x1x1x128xf32>
    %210 = vector.shape_cast %209 : vector<1x1x1x128xf32> to vector<1x128xf32>
    %211 = vector.extract_strided_slice %96 {offsets = [0, 2, 7, 0], sizes = [1, 1, 1, 128], strides = [1, 1, 1, 1]} : vector<1x8x8x128xf32> to vector<1x1x1x128xf32>
    %212 = vector.shape_cast %211 : vector<1x1x1x128xf32> to vector<1x128xf32>
    %213 = arith.maximumf %210, %212 : vector<1x128xf32>
    %214 = vector.extract_strided_slice %96 {offsets = [0, 3, 6, 0], sizes = [1, 1, 1, 128], strides = [1, 1, 1, 1]} : vector<1x8x8x128xf32> to vector<1x1x1x128xf32>
    %215 = vector.shape_cast %214 : vector<1x1x1x128xf32> to vector<1x128xf32>
    %216 = vector.extract_strided_slice %96 {offsets = [0, 3, 7, 0], sizes = [1, 1, 1, 128], strides = [1, 1, 1, 1]} : vector<1x8x8x128xf32> to vector<1x1x1x128xf32>
    %217 = vector.shape_cast %216 : vector<1x1x1x128xf32> to vector<1x128xf32>
    %218 = arith.maximumf %215, %217 : vector<1x128xf32>
    %219 = arith.maximumf %213, %218 : vector<1x128xf32>
    %c0_30 = arith.constant 0 : index
    %c0_31 = arith.constant 0 : index
    %220 = vector.load %arg5[%c0_30, %c0_31] : memref<1x128xf32, #tpu.memory_space<vmem>>, vector<1x128xf32>
    %221 = arith.addf %219, %220 : vector<1x128xf32>
    %cst_32 = arith.constant 0.000000e+00 : f32
    %222 = vector.broadcast %cst_32 : f32 to vector<1x128xf32>
    %223 = arith.maximumf %221, %222 : vector<1x128xf32>
    %224 = arith.truncf %223 : vector<1x128xf32> to vector<1x128xbf16>
    %225 = vector.extract_strided_slice %96 {offsets = [0, 4, 0, 0], sizes = [1, 1, 1, 128], strides = [1, 1, 1, 1]} : vector<1x8x8x128xf32> to vector<1x1x1x128xf32>
    %226 = vector.shape_cast %225 : vector<1x1x1x128xf32> to vector<1x128xf32>
    %227 = vector.extract_strided_slice %96 {offsets = [0, 4, 1, 0], sizes = [1, 1, 1, 128], strides = [1, 1, 1, 1]} : vector<1x8x8x128xf32> to vector<1x1x1x128xf32>
    %228 = vector.shape_cast %227 : vector<1x1x1x128xf32> to vector<1x128xf32>
    %229 = arith.maximumf %226, %228 : vector<1x128xf32>
    %230 = vector.extract_strided_slice %96 {offsets = [0, 5, 0, 0], sizes = [1, 1, 1, 128], strides = [1, 1, 1, 1]} : vector<1x8x8x128xf32> to vector<1x1x1x128xf32>
    %231 = vector.shape_cast %230 : vector<1x1x1x128xf32> to vector<1x128xf32>
    %232 = vector.extract_strided_slice %96 {offsets = [0, 5, 1, 0], sizes = [1, 1, 1, 128], strides = [1, 1, 1, 1]} : vector<1x8x8x128xf32> to vector<1x1x1x128xf32>
    %233 = vector.shape_cast %232 : vector<1x1x1x128xf32> to vector<1x128xf32>
    %234 = arith.maximumf %231, %233 : vector<1x128xf32>
    %235 = arith.maximumf %229, %234 : vector<1x128xf32>
    %c0_33 = arith.constant 0 : index
    %c0_34 = arith.constant 0 : index
    %236 = vector.load %arg5[%c0_33, %c0_34] : memref<1x128xf32, #tpu.memory_space<vmem>>, vector<1x128xf32>
    %237 = arith.addf %235, %236 : vector<1x128xf32>
    %cst_35 = arith.constant 0.000000e+00 : f32
    %238 = vector.broadcast %cst_35 : f32 to vector<1x128xf32>
    %239 = arith.maximumf %237, %238 : vector<1x128xf32>
    %240 = arith.truncf %239 : vector<1x128xf32> to vector<1x128xbf16>
    %241 = vector.extract_strided_slice %96 {offsets = [0, 4, 2, 0], sizes = [1, 1, 1, 128], strides = [1, 1, 1, 1]} : vector<1x8x8x128xf32> to vector<1x1x1x128xf32>
    %242 = vector.shape_cast %241 : vector<1x1x1x128xf32> to vector<1x128xf32>
    %243 = vector.extract_strided_slice %96 {offsets = [0, 4, 3, 0], sizes = [1, 1, 1, 128], strides = [1, 1, 1, 1]} : vector<1x8x8x128xf32> to vector<1x1x1x128xf32>
    %244 = vector.shape_cast %243 : vector<1x1x1x128xf32> to vector<1x128xf32>
    %245 = arith.maximumf %242, %244 : vector<1x128xf32>
    %246 = vector.extract_strided_slice %96 {offsets = [0, 5, 2, 0], sizes = [1, 1, 1, 128], strides = [1, 1, 1, 1]} : vector<1x8x8x128xf32> to vector<1x1x1x128xf32>
    %247 = vector.shape_cast %246 : vector<1x1x1x128xf32> to vector<1x128xf32>
    %248 = vector.extract_strided_slice %96 {offsets = [0, 5, 3, 0], sizes = [1, 1, 1, 128], strides = [1, 1, 1, 1]} : vector<1x8x8x128xf32> to vector<1x1x1x128xf32>
    %249 = vector.shape_cast %248 : vector<1x1x1x128xf32> to vector<1x128xf32>
    %250 = arith.maximumf %247, %249 : vector<1x128xf32>
    %251 = arith.maximumf %245, %250 : vector<1x128xf32>
    %c0_36 = arith.constant 0 : index
    %c0_37 = arith.constant 0 : index
    %252 = vector.load %arg5[%c0_36, %c0_37] : memref<1x128xf32, #tpu.memory_space<vmem>>, vector<1x128xf32>
    %253 = arith.addf %251, %252 : vector<1x128xf32>
    %cst_38 = arith.constant 0.000000e+00 : f32
    %254 = vector.broadcast %cst_38 : f32 to vector<1x128xf32>
    %255 = arith.maximumf %253, %254 : vector<1x128xf32>
    %256 = arith.truncf %255 : vector<1x128xf32> to vector<1x128xbf16>
    %257 = vector.extract_strided_slice %96 {offsets = [0, 4, 4, 0], sizes = [1, 1, 1, 128], strides = [1, 1, 1, 1]} : vector<1x8x8x128xf32> to vector<1x1x1x128xf32>
    %258 = vector.shape_cast %257 : vector<1x1x1x128xf32> to vector<1x128xf32>
    %259 = vector.extract_strided_slice %96 {offsets = [0, 4, 5, 0], sizes = [1, 1, 1, 128], strides = [1, 1, 1, 1]} : vector<1x8x8x128xf32> to vector<1x1x1x128xf32>
    %260 = vector.shape_cast %259 : vector<1x1x1x128xf32> to vector<1x128xf32>
    %261 = arith.maximumf %258, %260 : vector<1x128xf32>
    %262 = vector.extract_strided_slice %96 {offsets = [0, 5, 4, 0], sizes = [1, 1, 1, 128], strides = [1, 1, 1, 1]} : vector<1x8x8x128xf32> to vector<1x1x1x128xf32>
    %263 = vector.shape_cast %262 : vector<1x1x1x128xf32> to vector<1x128xf32>
    %264 = vector.extract_strided_slice %96 {offsets = [0, 5, 5, 0], sizes = [1, 1, 1, 128], strides = [1, 1, 1, 1]} : vector<1x8x8x128xf32> to vector<1x1x1x128xf32>
    %265 = vector.shape_cast %264 : vector<1x1x1x128xf32> to vector<1x128xf32>
    %266 = arith.maximumf %263, %265 : vector<1x128xf32>
    %267 = arith.maximumf %261, %266 : vector<1x128xf32>
    %c0_39 = arith.constant 0 : index
    %c0_40 = arith.constant 0 : index
    %268 = vector.load %arg5[%c0_39, %c0_40] : memref<1x128xf32, #tpu.memory_space<vmem>>, vector<1x128xf32>
    %269 = arith.addf %267, %268 : vector<1x128xf32>
    %cst_41 = arith.constant 0.000000e+00 : f32
    %270 = vector.broadcast %cst_41 : f32 to vector<1x128xf32>
    %271 = arith.maximumf %269, %270 : vector<1x128xf32>
    %272 = arith.truncf %271 : vector<1x128xf32> to vector<1x128xbf16>
    %273 = vector.extract_strided_slice %96 {offsets = [0, 4, 6, 0], sizes = [1, 1, 1, 128], strides = [1, 1, 1, 1]} : vector<1x8x8x128xf32> to vector<1x1x1x128xf32>
    %274 = vector.shape_cast %273 : vector<1x1x1x128xf32> to vector<1x128xf32>
    %275 = vector.extract_strided_slice %96 {offsets = [0, 4, 7, 0], sizes = [1, 1, 1, 128], strides = [1, 1, 1, 1]} : vector<1x8x8x128xf32> to vector<1x1x1x128xf32>
    %276 = vector.shape_cast %275 : vector<1x1x1x128xf32> to vector<1x128xf32>
    %277 = arith.maximumf %274, %276 : vector<1x128xf32>
    %278 = vector.extract_strided_slice %96 {offsets = [0, 5, 6, 0], sizes = [1, 1, 1, 128], strides = [1, 1, 1, 1]} : vector<1x8x8x128xf32> to vector<1x1x1x128xf32>
    %279 = vector.shape_cast %278 : vector<1x1x1x128xf32> to vector<1x128xf32>
    %280 = vector.extract_strided_slice %96 {offsets = [0, 5, 7, 0], sizes = [1, 1, 1, 128], strides = [1, 1, 1, 1]} : vector<1x8x8x128xf32> to vector<1x1x1x128xf32>
    %281 = vector.shape_cast %280 : vector<1x1x1x128xf32> to vector<1x128xf32>
    %282 = arith.maximumf %279, %281 : vector<1x128xf32>
    %283 = arith.maximumf %277, %282 : vector<1x128xf32>
    %c0_42 = arith.constant 0 : index
    %c0_43 = arith.constant 0 : index
    %284 = vector.load %arg5[%c0_42, %c0_43] : memref<1x128xf32, #tpu.memory_space<vmem>>, vector<1x128xf32>
    %285 = arith.addf %283, %284 : vector<1x128xf32>
    %cst_44 = arith.constant 0.000000e+00 : f32
    %286 = vector.broadcast %cst_44 : f32 to vector<1x128xf32>
    %287 = arith.maximumf %285, %286 : vector<1x128xf32>
    %288 = arith.truncf %287 : vector<1x128xf32> to vector<1x128xbf16>
    %289 = vector.extract_strided_slice %96 {offsets = [0, 6, 0, 0], sizes = [1, 1, 1, 128], strides = [1, 1, 1, 1]} : vector<1x8x8x128xf32> to vector<1x1x1x128xf32>
    %290 = vector.shape_cast %289 : vector<1x1x1x128xf32> to vector<1x128xf32>
    %291 = vector.extract_strided_slice %96 {offsets = [0, 6, 1, 0], sizes = [1, 1, 1, 128], strides = [1, 1, 1, 1]} : vector<1x8x8x128xf32> to vector<1x1x1x128xf32>
    %292 = vector.shape_cast %291 : vector<1x1x1x128xf32> to vector<1x128xf32>
    %293 = arith.maximumf %290, %292 : vector<1x128xf32>
    %294 = vector.extract_strided_slice %96 {offsets = [0, 7, 0, 0], sizes = [1, 1, 1, 128], strides = [1, 1, 1, 1]} : vector<1x8x8x128xf32> to vector<1x1x1x128xf32>
    %295 = vector.shape_cast %294 : vector<1x1x1x128xf32> to vector<1x128xf32>
    %296 = vector.extract_strided_slice %96 {offsets = [0, 7, 1, 0], sizes = [1, 1, 1, 128], strides = [1, 1, 1, 1]} : vector<1x8x8x128xf32> to vector<1x1x1x128xf32>
    %297 = vector.shape_cast %296 : vector<1x1x1x128xf32> to vector<1x128xf32>
    %298 = arith.maximumf %295, %297 : vector<1x128xf32>
    %299 = arith.maximumf %293, %298 : vector<1x128xf32>
    %c0_45 = arith.constant 0 : index
    %c0_46 = arith.constant 0 : index
    %300 = vector.load %arg5[%c0_45, %c0_46] : memref<1x128xf32, #tpu.memory_space<vmem>>, vector<1x128xf32>
    %301 = arith.addf %299, %300 : vector<1x128xf32>
    %cst_47 = arith.constant 0.000000e+00 : f32
    %302 = vector.broadcast %cst_47 : f32 to vector<1x128xf32>
    %303 = arith.maximumf %301, %302 : vector<1x128xf32>
    %304 = arith.truncf %303 : vector<1x128xf32> to vector<1x128xbf16>
    %305 = vector.extract_strided_slice %96 {offsets = [0, 6, 2, 0], sizes = [1, 1, 1, 128], strides = [1, 1, 1, 1]} : vector<1x8x8x128xf32> to vector<1x1x1x128xf32>
    %306 = vector.shape_cast %305 : vector<1x1x1x128xf32> to vector<1x128xf32>
    %307 = vector.extract_strided_slice %96 {offsets = [0, 6, 3, 0], sizes = [1, 1, 1, 128], strides = [1, 1, 1, 1]} : vector<1x8x8x128xf32> to vector<1x1x1x128xf32>
    %308 = vector.shape_cast %307 : vector<1x1x1x128xf32> to vector<1x128xf32>
    %309 = arith.maximumf %306, %308 : vector<1x128xf32>
    %310 = vector.extract_strided_slice %96 {offsets = [0, 7, 2, 0], sizes = [1, 1, 1, 128], strides = [1, 1, 1, 1]} : vector<1x8x8x128xf32> to vector<1x1x1x128xf32>
    %311 = vector.shape_cast %310 : vector<1x1x1x128xf32> to vector<1x128xf32>
    %312 = vector.extract_strided_slice %96 {offsets = [0, 7, 3, 0], sizes = [1, 1, 1, 128], strides = [1, 1, 1, 1]} : vector<1x8x8x128xf32> to vector<1x1x1x128xf32>
    %313 = vector.shape_cast %312 : vector<1x1x1x128xf32> to vector<1x128xf32>
    %314 = arith.maximumf %311, %313 : vector<1x128xf32>
    %315 = arith.maximumf %309, %314 : vector<1x128xf32>
    %c0_48 = arith.constant 0 : index
    %c0_49 = arith.constant 0 : index
    %316 = vector.load %arg5[%c0_48, %c0_49] : memref<1x128xf32, #tpu.memory_space<vmem>>, vector<1x128xf32>
    %317 = arith.addf %315, %316 : vector<1x128xf32>
    %cst_50 = arith.constant 0.000000e+00 : f32
    %318 = vector.broadcast %cst_50 : f32 to vector<1x128xf32>
    %319 = arith.maximumf %317, %318 : vector<1x128xf32>
    %320 = arith.truncf %319 : vector<1x128xf32> to vector<1x128xbf16>
    %321 = vector.extract_strided_slice %96 {offsets = [0, 6, 4, 0], sizes = [1, 1, 1, 128], strides = [1, 1, 1, 1]} : vector<1x8x8x128xf32> to vector<1x1x1x128xf32>
    %322 = vector.shape_cast %321 : vector<1x1x1x128xf32> to vector<1x128xf32>
    %323 = vector.extract_strided_slice %96 {offsets = [0, 6, 5, 0], sizes = [1, 1, 1, 128], strides = [1, 1, 1, 1]} : vector<1x8x8x128xf32> to vector<1x1x1x128xf32>
    %324 = vector.shape_cast %323 : vector<1x1x1x128xf32> to vector<1x128xf32>
    %325 = arith.maximumf %322, %324 : vector<1x128xf32>
    %326 = vector.extract_strided_slice %96 {offsets = [0, 7, 4, 0], sizes = [1, 1, 1, 128], strides = [1, 1, 1, 1]} : vector<1x8x8x128xf32> to vector<1x1x1x128xf32>
    %327 = vector.shape_cast %326 : vector<1x1x1x128xf32> to vector<1x128xf32>
    %328 = vector.extract_strided_slice %96 {offsets = [0, 7, 5, 0], sizes = [1, 1, 1, 128], strides = [1, 1, 1, 1]} : vector<1x8x8x128xf32> to vector<1x1x1x128xf32>
    %329 = vector.shape_cast %328 : vector<1x1x1x128xf32> to vector<1x128xf32>
    %330 = arith.maximumf %327, %329 : vector<1x128xf32>
    %331 = arith.maximumf %325, %330 : vector<1x128xf32>
    %c0_51 = arith.constant 0 : index
    %c0_52 = arith.constant 0 : index
    %332 = vector.load %arg5[%c0_51, %c0_52] : memref<1x128xf32, #tpu.memory_space<vmem>>, vector<1x128xf32>
    %333 = arith.addf %331, %332 : vector<1x128xf32>
    %cst_53 = arith.constant 0.000000e+00 : f32
    %334 = vector.broadcast %cst_53 : f32 to vector<1x128xf32>
    %335 = arith.maximumf %333, %334 : vector<1x128xf32>
    %336 = arith.truncf %335 : vector<1x128xf32> to vector<1x128xbf16>
    %337 = vector.extract_strided_slice %96 {offsets = [0, 6, 6, 0], sizes = [1, 1, 1, 128], strides = [1, 1, 1, 1]} : vector<1x8x8x128xf32> to vector<1x1x1x128xf32>
    %338 = vector.shape_cast %337 : vector<1x1x1x128xf32> to vector<1x128xf32>
    %339 = vector.extract_strided_slice %96 {offsets = [0, 6, 7, 0], sizes = [1, 1, 1, 128], strides = [1, 1, 1, 1]} : vector<1x8x8x128xf32> to vector<1x1x1x128xf32>
    %340 = vector.shape_cast %339 : vector<1x1x1x128xf32> to vector<1x128xf32>
    %341 = arith.maximumf %338, %340 : vector<1x128xf32>
    %342 = vector.extract_strided_slice %96 {offsets = [0, 7, 6, 0], sizes = [1, 1, 1, 128], strides = [1, 1, 1, 1]} : vector<1x8x8x128xf32> to vector<1x1x1x128xf32>
    %343 = vector.shape_cast %342 : vector<1x1x1x128xf32> to vector<1x128xf32>
    %344 = vector.extract_strided_slice %96 {offsets = [0, 7, 7, 0], sizes = [1, 1, 1, 128], strides = [1, 1, 1, 1]} : vector<1x8x8x128xf32> to vector<1x1x1x128xf32>
    %345 = vector.shape_cast %344 : vector<1x1x1x128xf32> to vector<1x128xf32>
    %346 = arith.maximumf %343, %345 : vector<1x128xf32>
    %347 = arith.maximumf %341, %346 : vector<1x128xf32>
    %c0_54 = arith.constant 0 : index
    %c0_55 = arith.constant 0 : index
    %348 = vector.load %arg5[%c0_54, %c0_55] : memref<1x128xf32, #tpu.memory_space<vmem>>, vector<1x128xf32>
    %349 = arith.addf %347, %348 : vector<1x128xf32>
    %cst_56 = arith.constant 0.000000e+00 : f32
    %350 = vector.broadcast %cst_56 : f32 to vector<1x128xf32>
    %351 = arith.maximumf %349, %350 : vector<1x128xf32>
    %352 = arith.truncf %351 : vector<1x128xf32> to vector<1x128xbf16>
    %353 = tpu.concatenate %112, %128, %144, %160, %176, %192, %208, %224, %240, %256, %272, %288, %304, %320, %336, %352 in 1 : vector<1x128xbf16>, vector<1x128xbf16>, vector<1x128xbf16>, vector<1x128xbf16>, vector<1x128xbf16>, vector<1x128xbf16>, vector<1x128xbf16>, vector<1x128xbf16>, vector<1x128xbf16>, vector<1x128xbf16>, vector<1x128xbf16>, vector<1x128xbf16>, vector<1x128xbf16>, vector<1x128xbf16>, vector<1x128xbf16>, vector<1x128xbf16> -> vector<1x2048xbf16>
    %c0_57 = arith.constant 0 : index
    %c0_58 = arith.constant 0 : index
    %354 = vector.load %arg6[%c0_57, %c0_58] : memref<2048x512xbf16, #tpu.memory_space<vmem>>, vector<2048x512xbf16>
    %cst_59 = arith.constant dense<0.000000e+00> : vector<1x512xf32>
    %355 = tpu.matmul %353, %354, %cst_59 {dimension_numbers = #tpu.dot_dimension_numbers<[1], [0], [0], [1], [0, 0, 1, 1], [], []>} : vector<1x2048xbf16>, vector<2048x512xbf16>, vector<1x512xf32> -> vector<1x512xf32>
    %c0_60 = arith.constant 0 : index
    %c0_61 = arith.constant 0 : index
    %356 = vector.load %arg7[%c0_60, %c0_61] : memref<1x512xf32, #tpu.memory_space<vmem>>, vector<1x512xf32>
    %357 = arith.addf %355, %356 : vector<1x512xf32>
    %cst_62 = arith.constant 0.000000e+00 : f32
    %358 = vector.broadcast %cst_62 : f32 to vector<1x512xf32>
    %359 = arith.maximumf %357, %358 : vector<1x512xf32>
    %360 = arith.truncf %359 : vector<1x512xf32> to vector<1x512xbf16>
    %c0_63 = arith.constant 0 : index
    %c0_64 = arith.constant 0 : index
    %361 = vector.load %arg8[%c0_63, %c0_64] : memref<512x128xbf16, #tpu.memory_space<vmem>>, vector<512x128xbf16>
    %cst_65 = arith.constant dense<0.000000e+00> : vector<1x128xf32>
    %362 = tpu.matmul %360, %361, %cst_65 {dimension_numbers = #tpu.dot_dimension_numbers<[1], [0], [0], [1], [0, 0, 1, 1], [], []>} : vector<1x512xbf16>, vector<512x128xbf16>, vector<1x128xf32> -> vector<1x128xf32>
    %c0_66 = arith.constant 0 : index
    %c0_67 = arith.constant 0 : index
    %363 = vector.load %arg9[%c0_66, %c0_67] : memref<1x128xf32, #tpu.memory_space<vmem>>, vector<1x128xf32>
    %364 = arith.addf %362, %363 : vector<1x128xf32>
    %c0_68 = arith.constant 0 : index
    %c0_69 = arith.constant 0 : index
    %c0_70 = arith.constant 0 : index
    %365 = vector.load %arg10[%c0_68, %c0_69, %c0_70] : memref<1x1x128xf32, #tpu.memory_space<vmem>>, vector<1x1x128xf32>
    %366 = vector.shape_cast %365 : vector<1x1x128xf32> to vector<1x128xf32>
    %367 = vector.shape_cast %364 : vector<1x128xf32> to vector<1x1x128xf32>
    tpu.vector_store %arg10[%c0_68, %c0_69, %c0_70], %367 {strides = array<i32>} : memref<1x1x128xf32, #tpu.memory_space<vmem>>, vector<1x1x128xf32>,
    return
  }
  func.func @transform_0(%arg0: i32) -> (i32, i32) {
    %c0_i32 = arith.constant 0 : i32
    %c0_i32_0 = arith.constant 0 : i32
    return %arg0, %c0_i32 : i32, i32
  }
  func.func @transform_1(%arg0: i32) -> (i32, i32) {
    %c0_i32 = arith.constant 0 : i32
    %c0_i32_0 = arith.constant 0 : i32
    %c0_i32_1 = arith.constant 0 : i32
    return %c0_i32, %c0_i32_0 : i32, i32
  }
  func.func @transform_2(%arg0: i32) -> (i32, i32) {
    %c0_i32 = arith.constant 0 : i32
    %c0_i32_0 = arith.constant 0 : i32
    %c0_i32_1 = arith.constant 0 : i32
    return %c0_i32, %c0_i32_0 : i32, i32
  }
  func.func @transform_3(%arg0: i32) -> (i32, i32) {
    %c0_i32 = arith.constant 0 : i32
    %c0_i32_0 = arith.constant 0 : i32
    %c0_i32_1 = arith.constant 0 : i32
    return %c0_i32, %c0_i32_0 : i32, i32
  }
  func.func @transform_4(%arg0: i32) -> (i32, i32) {
    %c0_i32 = arith.constant 0 : i32
    %c0_i32_0 = arith.constant 0 : i32
    %c0_i32_1 = arith.constant 0 : i32
    return %c0_i32, %c0_i32_0 : i32, i32
  }
  func.func @transform_5(%arg0: i32) -> (i32, i32) {
    %c0_i32 = arith.constant 0 : i32
    %c0_i32_0 = arith.constant 0 : i32
    %c0_i32_1 = arith.constant 0 : i32
    return %c0_i32, %c0_i32_0 : i32, i32
  }
  func.func @transform_6(%arg0: i32) -> (i32, i32) {
    %c0_i32 = arith.constant 0 : i32
    %c0_i32_0 = arith.constant 0 : i32
    %c0_i32_1 = arith.constant 0 : i32
    return %c0_i32, %c0_i32_0 : i32, i32
  }
  func.func @transform_7(%arg0: i32) -> (i32, i32) {
    %c0_i32 = arith.constant 0 : i32
    %c0_i32_0 = arith.constant 0 : i32
    %c0_i32_1 = arith.constant 0 : i32
    return %c0_i32, %c0_i32_0 : i32, i32
  }
  func.func @transform_8(%arg0: i32) -> (i32, i32) {
    %c0_i32 = arith.constant 0 : i32
    %c0_i32_0 = arith.constant 0 : i32
    %c0_i32_1 = arith.constant 0 : i32
    return %c0_i32, %c0_i32_0 : i32, i32
  }
  func.func @transform_9(%arg0: i32) -> (i32, i32, i32) {
    %c0_i32 = arith.constant 0 : i32
    %c0_i32_0 = arith.constant 0 : i32
    %c0_i32_1 = arith.constant 0 : i32
    return %arg0, %c0_i32, %c0_i32_0 : i32, i32, i32
  }
}

</mosaic_0001>

<llo_original>
// kernel: lenet_forward.1
$region0: #{lenet_forward.1}
  #allocation0 [shape = 'u32[]', space=smem, size = 0x4, offset = 0x4, fixed_abs, tag = 'smem constant byte address 0x4 - core index']
  #allocation1 [shape = 'u32[144,128]{1,0:T(1,128)}', space=vmem, size = 0x12000, scoped, tag = 'internal scratch']
  %s0 = inlined_call_operand.vmem [shape: bf16[384,128], index: 0, kind: input, shape index: {}]
  %s1 = inlined_call_operand.vmem [shape: bf16[128,512], index: 1, kind: input, shape index: {}]
  %s2 = inlined_call_operand.vmem [shape: f32[1,128], index: 2, kind: input, shape index: {}]
  %s3 = inlined_call_operand.vmem [shape: bf16[3200,128], index: 3, kind: input, shape index: {}]
  %s4 = inlined_call_operand.vmem [shape: f32[1,128], index: 4, kind: input, shape index: {}]
  %s5 = inlined_call_operand.vmem [shape: bf16[2048,512], index: 5, kind: input, shape index: {}]
  %s6 = inlined_call_operand.vmem [shape: f32[1,512], index: 6, kind: input, shape index: {}]
  %s7 = inlined_call_operand.vmem [shape: bf16[512,128], index: 7, kind: input, shape index: {}]
  %s8 = inlined_call_operand.vmem [shape: f32[1,128], index: 8, kind: input, shape index: {}]
  %s9 = inlined_call_operand.hbm [shape: f32[2,1,128], index: 9, kind: output, shape index: {}]
  %s10 = sld [smem:[#allocation0]]
  $region69: #{lenet_forward.1} parent=0
    _
  %s12 = ssub.s32 1, %s10
  %s13 = scalar_select 0, %s12, %s10
  $region1: #{lenet_forward.1} parent=0
    #allocation2 [shape = 'u8[1024]{0}', space=vmem, size = 0x400, scoped, tag = 'output window, operand 0']
    #allocation3 [shape = 's32[2]{0}', space=sflag, size = 0x8, scoped, tag = 'scoped memory for lenet_forward.1']
    %14 = vsyncpa [#allocation3], 0
    %s15 = scalar_lea.sflag [#allocation3], 1
    %16 = vsyncpa %s15, 0
    loop: start=0, step=1, limit=4
    $region2: #{lenet_forward.1} parent=1 // loop_pre_header
      _
    $region3: #{lenet_forward.1} parent=1 // loop_header
      %s18 = sphi 0, %s22
      %p19 = scmp.ge.s32.totalorder %s18, 4
      %s28 = sphi 0, %s30
      %s31 = sphi 0, %s28
      %s32 = sphi 0, %s31
      %s48 = sphi 0, %s32
      %s52 = sphi 0, %s52
      %s54 = sphi 0, %s52
      %s55 = sphi 0, %s54
      %s69 = sphi 0, %s55
      %s73 = sphi 0, %s73
      %s75 = sphi 0, %s73
      %s76 = sphi 0, %s75
      %s90 = sphi 0, %s76
      %s94 = sphi 0, %s94
      %s96 = sphi 0, %s94
      %s97 = sphi 0, %s96
      %s111 = sphi 0, %s97
      %s115 = sphi 0, %s115
      %s117 = sphi 0, %s115
      %s118 = sphi 0, %s117
      %s132 = sphi 0, %s118
      %s136 = sphi 0, %s136
      %s138 = sphi 0, %s136
      %s139 = sphi 0, %s138
      %s153 = sphi 0, %s139
      %s157 = sphi 0, %s157
      %s159 = sphi 0, %s157
      %s160 = sphi 0, %s159
      %s174 = sphi 0, %s160
      %s178 = sphi 0, %s178
      %s180 = sphi 0, %s178
      %s181 = sphi 0, %s180
      %s195 = sphi 0, %s181
      %s199 = sphi 0, %s199
      %s201 = sphi 0, %s199
      %s202 = sphi 0, %s201
      %s216 = sphi 0, %s202
      %s222 = sphi 0, %s224
      %s225 = sphi 0, %s222
      %s226 = sphi 0, %s225
      %s242 = sphi 0, %s226
    $region4: #{lenet_forward.1} parent=1 // loop_header_branch
      %21 = sbr.rel (%p19) target = $region8
    $region5: #{lenet_forward.1} parent=1 // loop_body
      %s23 = ssub.s32 %s18, 1
      %s24 = ssub.s32 %s18, 2
      %s25 = sadd.s32 %s18, 1
      %s26 = ssub.s32 %s18, %s25
      %p27 = scmp.eq.s32.totalorder %s26, 0
      %s29 = sadd.s32 %s28, 1
      %s30 = scalar_select %p27, %s28, %s29
      %p33 = pneg %p27
      %p34 = scmp.eq.s32.totalorder %s18, 1
      %p35 = por %p33, %p34
      %p36 = scmp.ne.s32.totalorder %s28, %s31
      %p37 = scmp.eq.s32.totalorder %s18, 0
      %p38 = por %p36, %p37
      %p39 = scmp.ne.s32.totalorder %s28, %s31
      %p40 = scmp.eq.s32.totalorder %s23, 1
      %p41 = por %p39, %p40
      %p42 = scmp.ne.s32.totalorder %s31, %s32
      %p43 = scmp.eq.s32.totalorder %s23, 0
      %p44 = por %p42, %p43
      %p45 = scmp.ne.s32.totalorder %s31, %s32
      %p46 = scmp.eq.s32.totalorder %s24, 1
      %p47 = por %p45, %p46
      %p49 = scmp.ne.s32.totalorder %s32, %s48
      %p50 = scmp.eq.s32.totalorder %s24, 0
      %p51 = por %p49, %p50
      %s53 = sadd.s32 %s52, 1
      %p56 = scmp.eq.s32.totalorder %s18, 1
      %p57 = scmp.ne.s32.totalorder %s52, %s54
      %p58 = scmp.eq.s32.totalorder %s18, 0
      %p59 = por %p57, %p58
      %p60 = scmp.ne.s32.totalorder %s52, %s54
      %p61 = scmp.eq.s32.totalorder %s23, 1
      %p62 = por %p60, %p61
      %p63 = scmp.ne.s32.totalorder %s54, %s55
      %p64 = scmp.eq.s32.totalorder %s23, 0
      %p65 = por %p63, %p64
      %p66 = scmp.ne.s32.totalorder %s54, %s55
      %p67 = scmp.eq.s32.totalorder %s24, 1
      %p68 = por %p66, %p67
      %p70 = scmp.ne.s32.totalorder %s55, %s69
      %p71 = scmp.eq.s32.totalorder %s24, 0
      %p72 = por %p70, %p71
      %s74 = sadd.s32 %s73, 1
      %p77 = scmp.eq.s32.totalorder %s18, 1
      %p78 = scmp.ne.s32.totalorder %s73, %s75
      %p79 = scmp.eq.s32.totalorder %s18, 0
      %p80 = por %p78, %p79
      %p81 = scmp.ne.s32.totalorder %s73, %s75
      %p82 = scmp.eq.s32.totalorder %s23, 1
      %p83 = por %p81, %p82
      %p84 = scmp.ne.s32.totalorder %s75, %s76
      %p85 = scmp.eq.s32.totalorder %s23, 0
      %p86 = por %p84, %p85
      %p87 = scmp.ne.s32.totalorder %s75, %s76
      %p88 = scmp.eq.s32.totalorder %s24, 1
      %p89 = por %p87, %p88
      %p91 = scmp.ne.s32.totalorder %s76, %s90
      %p92 = scmp.eq.s32.totalorder %s24, 0
      %p93 = por %p91, %p92
      %s95 = sadd.s32 %s94, 1
      %p98 = scmp.eq.s32.totalorder %s18, 1
      %p99 = scmp.ne.s32.totalorder %s94, %s96
      %p100 = scmp.eq.s32.totalorder %s18, 0
      %p101 = por %p99, %p100
      %p102 = scmp.ne.s32.totalorder %s94, %s96
      %p103 = scmp.eq.s32.totalorder %s23, 1
      %p104 = por %p102, %p103
      %p105 = scmp.ne.s32.totalorder %s96, %s97
      %p106 = scmp.eq.s32.totalorder %s23, 0
      %p107 = por %p105, %p106
      %p108 = scmp.ne.s32.totalorder %s96, %s97
      %p109 = scmp.eq.s32.totalorder %s24, 1
      %p110 = por %p108, %p109
      %p112 = scmp.ne.s32.totalorder %s97, %s111
      %p113 = scmp.eq.s32.totalorder %s24, 0
      %p114 = por %p112, %p113
      %s116 = sadd.s32 %s115, 1
      %p119 = scmp.eq.s32.totalorder %s18, 1
      %p120 = scmp.ne.s32.totalorder %s115, %s117
      %p121 = scmp.eq.s32.totalorder %s18, 0
      %p122 = por %p120, %p121
      %p123 = scmp.ne.s32.totalorder %s115, %s117
      %p124 = scmp.eq.s32.totalorder %s23, 1
      %p125 = por %p123, %p124
      %p126 = scmp.ne.s32.totalorder %s117, %s118
      %p127 = scmp.eq.s32.totalorder %s23, 0
      %p128 = por %p126, %p127
      %p129 = scmp.ne.s32.totalorder %s117, %s118
      %p130 = scmp.eq.s32.totalorder %s24, 1
      %p131 = por %p129, %p130
      %p133 = scmp.ne.s32.totalorder %s118, %s132
      %p134 = scmp.eq.s32.totalorder %s24, 0
      %p135 = por %p133, %p134
      %s137 = sadd.s32 %s136, 1
      %p140 = scmp.eq.s32.totalorder %s18, 1
      %p141 = scmp.ne.s32.totalorder %s136, %s138
      %p142 = scmp.eq.s32.totalorder %s18, 0
      %p143 = por %p141, %p142
      %p144 = scmp.ne.s32.totalorder %s136, %s138
      %p145 = scmp.eq.s32.totalorder %s23, 1
      %p146 = por %p144, %p145
      %p147 = scmp.ne.s32.totalorder %s138, %s139
      %p148 = scmp.eq.s32.totalorder %s23, 0
      %p149 = por %p147, %p148
      %p150 = scmp.ne.s32.totalorder %s138, %s139
      %p151 = scmp.eq.s32.totalorder %s24, 1
      %p152 = por %p150, %p151
      %p154 = scmp.ne.s32.totalorder %s139, %s153
      %p155 = scmp.eq.s32.totalorder %s24, 0
      %p156 = por %p154, %p155
      %s158 = sadd.s32 %s157, 1
      %p161 = scmp.eq.s32.totalorder %s18, 1
      %p162 = scmp.ne.s32.totalorder %s157, %s159
      %p163 = scmp.eq.s32.totalorder %s18, 0
      %p164 = por %p162, %p163
      %p165 = scmp.ne.s32.totalorder %s157, %s159
      %p166 = scmp.eq.s32.totalorder %s23, 1
      %p167 = por %p165, %p166
      %p168 = scmp.ne.s32.totalorder %s159, %s160
      %p169 = scmp.eq.s32.totalorder %s23, 0
      %p170 = por %p168, %p169
      %p171 = scmp.ne.s32.totalorder %s159, %s160
      %p172 = scmp.eq.s32.totalorder %s24, 1
      %p173 = por %p171, %p172
      %p175 = scmp.ne.s32.totalorder %s160, %s174
      %p176 = scmp.eq.s32.totalorder %s24, 0
      %p177 = por %p175, %p176
      %s179 = sadd.s32 %s178, 1
      %p182 = scmp.eq.s32.totalorder %s18, 1
      %p183 = scmp.ne.s32.totalorder %s178, %s180
      %p184 = scmp.eq.s32.totalorder %s18, 0
      %p185 = por %p183, %p184
      %p186 = scmp.ne.s32.totalorder %s178, %s180
      %p187 = scmp.eq.s32.totalorder %s23, 1
      %p188 = por %p186, %p187
      %p189 = scmp.ne.s32.totalorder %s180, %s181
      %p190 = scmp.eq.s32.totalorder %s23, 0
      %p191 = por %p189, %p190
      %p192 = scmp.ne.s32.totalorder %s180, %s181
      %p193 = scmp.eq.s32.totalorder %s24, 1
      %p194 = por %p192, %p193
      %p196 = scmp.ne.s32.totalorder %s181, %s195
      %p197 = scmp.eq.s32.totalorder %s24, 0
      %p198 = por %p196, %p197
      %s200 = sadd.s32 %s199, 1
      %p203 = scmp.eq.s32.totalorder %s18, 1
      %p204 = scmp.ne.s32.totalorder %s199, %s201
      %p205 = scmp.eq.s32.totalorder %s18, 0
      %p206 = por %p204, %p205
      %p207 = scmp.ne.s32.totalorder %s199, %s201
      %p208 = scmp.eq.s32.totalorder %s23, 1
      %p209 = por %p207, %p208
      %p210 = scmp.ne.s32.totalorder %s201, %s202
      %p211 = scmp.eq.s32.totalorder %s23, 0
      %p212 = por %p210, %p211
      %p213 = scmp.ne.s32.totalorder %s201, %s202
      %p214 = scmp.eq.s32.totalorder %s24, 1
      %p215 = por %p213, %p214
      %p217 = scmp.ne.s32.totalorder %s202, %s216
      %p218 = scmp.eq.s32.totalorder %s24, 0
      %p219 = por %p217, %p218
      %s220 = ssub.s32 %s18, %s25
      %p221 = scmp.eq.s32.totalorder %s220, 0
      %s223 = sadd.s32 %s222, 1
      %s224 = scalar_select %p221, %s222, %s223
      %p227 = pneg %p221
      %p228 = scmp.eq.s32.totalorder %s18, 1
      %p229 = por %p227, %p228
      %p230 = scmp.ne.s32.totalorder %s222, %s225
      %p231 = scmp.eq.s32.totalorder %s18, 0
      %p232 = por %p230, %p231
      %p233 = scmp.ne.s32.totalorder %s222, %s225
      %p234 = scmp.eq.s32.totalorder %s23, 1
      %p235 = por %p233, %p234
      %p236 = scmp.ne.s32.totalorder %s225, %s226
      %p237 = scmp.eq.s32.totalorder %s23, 0
      %p238 = por %p236, %p237
      %p239 = scmp.ne.s32.totalorder %s225, %s226
      %p240 = scmp.eq.s32.totalorder %s24, 1
      %p241 = por %p239, %p240
      %p243 = scmp.ne.s32.totalorder %s226, %s242
      %p244 = scmp.eq.s32.totalorder %s24, 0
      %p245 = por %p243, %p244
      %p246 = scmp.le.s32.totalorder 1, %s18
      %p247 = scmp.lt.s32.totalorder %s18, 3
      %p248 = pnand %p246, %p247
      %p249 = pneg %p248
      // Predicated region
      $region9: #{lenet_forward.1} parent=5 // pred_check
        _
      $region10: #{lenet_forward.1} parent=5 // pred_check_branch
        %251 = sbr.rel (%p248) target = $region12
      $region11: #{lenet_forward.1} parent=5 // pred_region
        %s252 = ssub.s32 %s18, 1
        // Predicated region
        $region13: #{lenet_forward.1} parent=11 // pred_check
          %p253 = pneg %p65
        $region14: #{lenet_forward.1} parent=11 // pred_check_branch
          %255 = sbr.rel (%p253) target = $region16
        $region15: #{lenet_forward.1} parent=11 // pred_region
          _
        $region16: #{lenet_forward.1} parent=11 // pred_fallthru
          _
        // Predicated region
        $region17: #{lenet_forward.1} parent=11 // pred_check
          %p256 = pneg %p86
        $region18: #{lenet_forward.1} parent=11 // pred_check_branch
          %258 = sbr.rel (%p256) target = $region20
        $region19: #{lenet_forward.1} parent=11 // pred_region
          _
        $region20: #{lenet_forward.1} parent=11 // pred_fallthru
          _
        // Predicated region
        $region21: #{lenet_forward.1} parent=11 // pred_check
          %p259 = pneg %p107
        $region22: #{lenet_forward.1} parent=11 // pred_check_branch
          %261 = sbr.rel (%p259) target = $region24
        $region23: #{lenet_forward.1} parent=11 // pred_region
          _
        $region24: #{lenet_forward.1} parent=11 // pred_fallthru
          _
        // Predicated region
        $region25: #{lenet_forward.1} parent=11 // pred_check
          %p262 = pneg %p128
        $region26: #{lenet_forward.1} parent=11 // pred_check_branch
          %264 = sbr.rel (%p262) target = $region28
        $region27: #{lenet_forward.1} parent=11 // pred_region
          _
        $region28: #{lenet_forward.1} parent=11 // pred_fallthru
          _
        // Predicated region
        $region29: #{lenet_forward.1} parent=11 // pred_check
          %p265 = pneg %p149
        $region30: #{lenet_forward.1} parent=11 // pred_check_branch
          %267 = sbr.rel (%p265) target = $region32
        $region31: #{lenet_forward.1} parent=11 // pred_region
          _
        $region32: #{lenet_forward.1} parent=11 // pred_fallthru
          _
        // Predicated region
        $region33: #{lenet_forward.1} parent=11 // pred_check
          %p268 = pneg %p170
        $region34: #{lenet_forward.1} parent=11 // pred_check_branch
          %270 = sbr.rel (%p268) target = $region36
        $region35: #{lenet_forward.1} parent=11 // pred_region
          _
        $region36: #{lenet_forward.1} parent=11 // pred_fallthru
          _
        // Predicated region
        $region37: #{lenet_forward.1} parent=11 // pred_check
          %p271 = pneg %p191
        $region38: #{lenet_forward.1} parent=11 // pred_check_branch
          %273 = sbr.rel (%p271) target = $region40
        $region39: #{lenet_forward.1} parent=11 // pred_region
          _
        $region40: #{lenet_forward.1} parent=11 // pred_fallthru
          _
        // Predicated region
        $region41: #{lenet_forward.1} parent=11 // pred_check
          %p274 = pneg %p212
        $region42: #{lenet_forward.1} parent=11 // pred_check_branch
          %276 = sbr.rel (%p274) target = $region44
        $region43: #{lenet_forward.1} parent=11 // pred_region
          _
        $region44: #{lenet_forward.1} parent=11 // pred_fallthru
          _
      $region12: #{lenet_forward.1} parent=5 // pred_fallthru
        _
      %p277 = scmp.lt.s32.totalorder %s18, 2
      // Predicated region
      $region45: #{lenet_forward.1} parent=5 // pred_check
        %p278 = pneg %p277
      $region46: #{lenet_forward.1} parent=5 // pred_check_branch
        %280 = sbr.rel (%p278) target = $region48
      $region47: #{lenet_forward.1} parent=5 // pred_region
        // Predicated region
        $region49: #{lenet_forward.1} parent=47 // pred_check
          %p281 = pneg %p38
        $region50: #{lenet_forward.1} parent=47 // pred_check_branch
          %283 = sbr.rel (%p281) target = $region52
        $region51: #{lenet_forward.1} parent=47 // pred_region
          %s284 = smul.u32 24, %s18
          %p285 = scmp.lt.s32.totalorder %s284, 47
          %s286 = scalar_select %p285, %s284, 47
          %s287 = smul.addr %s286, 4
          %s288 = scalar_lea.vmem %s0, %s287
          %s289 = smul.u32 24, %s18
        $region52: #{lenet_forward.1} parent=47 // pred_fallthru
          _
      $region48: #{lenet_forward.1} parent=5 // pred_fallthru
        _
      %p290 = scmp.le.s32.totalorder 1, %s18
      %p291 = scmp.lt.s32.totalorder %s18, 3
      %p292 = pnand %p290, %p291
      %p293 = pneg %p292
      // Predicated region
      $region53: #{lenet_forward.1} parent=5 // pred_check
        _
      $region54: #{lenet_forward.1} parent=5 // pred_check_branch
        %295 = sbr.rel (%p292) target = $region56
      $region55: #{lenet_forward.1} parent=5 // pred_region
        %s296 = ssub.s32 %s18, 1
        %s297 = smul.u32 24, %s23
        %p298 = scmp.lt.s32.totalorder %s297, 47
        %s299 = scalar_select %p298, %s297, 47
        %s300 = smul.addr %s299, 4
        %s301 = scalar_lea.vmem %s0, %s300
        %p302 = pneg %p44
        %p303 = pneg %p41
        %p304 = pneg %p65
        %p305 = pneg %p62
        %p306 = pneg %p86
        %p307 = pneg %p83
        %p308 = pneg %p107
        %p309 = pneg %p104
        %p310 = pneg %p128
        %p311 = pneg %p125
        %p312 = pneg %p149
        %p313 = pneg %p146
        %p314 = pneg %p170
        %p315 = pneg %p167
        %p316 = pneg %p191
        %p317 = pneg %p188
        %p318 = pneg %p212
        %p319 = pneg %p209
        %p320 = pneg %p238
        %p321 = pneg %p235
        %s322 = sand.u32 %s225, 1
        %s323 = scalar_lea.sflag [#allocation3], %s322
        %s324 = sand.u32 %s225, 1
        %s325 = scalar_lea.vmem [#allocation2], %s324
        %s326 = smul.u32 24, %s23
        %p327 = scmp.lt.s32.totalorder %s326, 47
        %s328 = scalar_select %p327, %s326, 47
        %s329 = smul.addr %s328, 4
        %s330 = scalar_lea.vmem %s0, %s329
        %s331 = smul.u32 24, %s23
        %v333 = vld [vmem:[%s330] sm:$0xf]
        %v334 = vld [vmem:[%s330 + $0x4] sm:$0xf]
        %v335 = vld [vmem:[%s330 + $0x8] sm:$0xf]
        %v336 = vld [vmem:[%s330 + $0xc] sm:$0xf]
        %v337 = vld [vmem:[%s330 + $0x10] sm:$0xf]
        %v338 = vld [vmem:[%s330 + $0x14] sm:$0xf]
        %v339 = vld [vmem:[%s330 + $0x18] sm:$0xf]
        %v340 = vld [vmem:[%s330 + $0x1c] sm:$0xf]
        %v341 = vld [vmem:[%s330 + $0x20] sm:$0xf]
        %v342 = vld [vmem:[%s330 + $0x24] sm:$0xf]
        %v343 = vld [vmem:[%s330 + $0x28] sm:$0xf]
        %v344 = vld [vmem:[%s330 + $0x2c] sm:$0xf]
        %v345 = vld [vmem:[%s330 + $0x30] sm:$0xf]
        %v346 = vld [vmem:[%s330 + $0x34] sm:$0xf]
        %v347 = vld [vmem:[%s330 + $0x38] sm:$0xf]
        %v348 = vld [vmem:[%s330 + $0x3c] sm:$0xf]
        %v349 = vld [vmem:[%s330 + $0x40] sm:$0xf]
        %v350 = vld [vmem:[%s330 + $0x44] sm:$0xf]
        %v351 = vld [vmem:[%s330 + $0x48] sm:$0xf]
        %v352 = vld [vmem:[%s330 + $0x4c] sm:$0xf]
        %v353 = vld [vmem:[%s330 + $0x50] sm:$0xf]
        %v354 = vld [vmem:[%s330 + $0x54] sm:$0xf]
        %v355 = vld [vmem:[%s330 + $0x58] sm:$0xf]
        %v356 = vld [vmem:[%s330 + $0x5c] sm:$0xf]
        %v357 = vld [vmem:[%s1] sm:$0xff]
        %v358 = vld [vmem:[%s1 + $0x8] sm:$0xff]
        %v359 = vld [vmem:[%s1 + $0x10] sm:$0xff]
        %v360 = vld [vmem:[%s1 + $0x18] sm:$0xff]
        %v361 = vld [vmem:[%s1 + $0x20] sm:$0xff]
        %v362 = vld [vmem:[%s1 + $0x28] sm:$0xff]
        %v363 = vld [vmem:[%s1 + $0x30] sm:$0xff]
        %v364 = vld [vmem:[%s1 + $0x38] sm:$0xff]
        %v365 = vld [vmem:[%s1 + $0x40] sm:$0xff]
        %v366 = vld [vmem:[%s1 + $0x48] sm:$0xff]
        %v367 = vld [vmem:[%s1 + $0x50] sm:$0xff]
        %v368 = vld [vmem:[%s1 + $0x58] sm:$0xff]
        %v369 = vld [vmem:[%s1 + $0x60] sm:$0xff]
        %v370 = vld [vmem:[%s1 + $0x68] sm:$0xff]
        %v371 = vld [vmem:[%s1 + $0x70] sm:$0xff]
        %v372 = vld [vmem:[%s1 + $0x78] sm:$0xff]
        %v373 = vld [vmem:[%s1 + $0x80] sm:$0xff]
        %v374 = vld [vmem:[%s1 + $0x88] sm:$0xff]
        %v375 = vld [vmem:[%s1 + $0x90] sm:$0xff]
        %v376 = vld [vmem:[%s1 + $0x98] sm:$0xff]
        %v377 = vld [vmem:[%s1 + $0xa0] sm:$0xff]
        %v378 = vld [vmem:[%s1 + $0xa8] sm:$0xff]
        %v379 = vld [vmem:[%s1 + $0xb0] sm:$0xff]
        %v380 = vld [vmem:[%s1 + $0xb8] sm:$0xff]
        %v381 = vld [vmem:[%s1 + $0xc0] sm:$0xff]
        %v382 = vld [vmem:[%s1 + $0xc8] sm:$0xff]
        %v383 = vld [vmem:[%s1 + $0xd0] sm:$0xff]
        %v384 = vld [vmem:[%s1 + $0xd8] sm:$0xff]
        %v385 = vld [vmem:[%s1 + $0xe0] sm:$0xff]
        %v386 = vld [vmem:[%s1 + $0xe8] sm:$0xff]
        %v387 = vld [vmem:[%s1 + $0xf0] sm:$0xff]
        %v388 = vld [vmem:[%s1 + $0xf8] sm:$0xff]
        %v413 = vunpack.c.l.b16 %v333
        %v414 = vunpack.c.l.b16 %v334
        %v415 = vunpack.c.l.b16 %v335
        %v416 = vunpack.c.l.b16 %v336
        %v417 = vunpack.c.l.b16 %v337
        %v418 = vunpack.c.l.b16 %v338
        %v419 = vunpack.c.l.b16 %v339
        %v420 = vunpack.c.l.b16 %v340
        %v421 = vunpack.c.l.b16 %v341
        %v422 = vunpack.c.l.b16 %v342
        %v423 = vunpack.c.l.b16 %v343
        %v424 = vunpack.c.l.b16 %v344
        %v425 = vunpack.c.l.b16 %v345
        %v426 = vunpack.c.l.b16 %v346
        %v427 = vunpack.c.l.b16 %v347
        %v428 = vunpack.c.l.b16 %v348
        %v429 = vunpack.c.l.b16 %v349
        %v430 = vunpack.c.l.b16 %v350
        %v431 = vunpack.c.l.b16 %v351
        %v432 = vunpack.c.l.b16 %v352
        %v433 = vunpack.c.l.b16 %v353
        %v434 = vunpack.c.l.b16 %v354
        %v435 = vunpack.c.l.b16 %v355
        %v436 = vunpack.c.l.b16 %v356
        %v437 = vpack.c.b16 %v414, %v413
        %v438 = vpack.c.b16 %v416, %v415
        %v439 = vpack.c.b16 %v418, %v417
        %v440 = vpack.c.b16 %v420, %v419
        %v441 = vpack.c.b16 %v422, %v421
        %v442 = vpack.c.b16 %v424, %v423
        %v443 = vpack.c.b16 %v426, %v425
        %v444 = vpack.c.b16 %v428, %v427
        %v445 = vpack.c.b16 %v430, %v429
        %v446 = vpack.c.b16 %v432, %v431
        %v447 = vpack.c.b16 %v434, %v433
        %v448 = vpack.c.b16 %v436, %v435
        %v493 = vunpack.c.l.b16 %v357
        %v494 = vunpack.c.h.b16 %v357
        %v495 = vunpack.c.l.b16 %v358
        %v496 = vunpack.c.h.b16 %v358
        %v497 = vunpack.c.l.b16 %v359
        %v498 = vunpack.c.h.b16 %v359
        %v499 = vunpack.c.l.b16 %v360
        %v500 = vunpack.c.h.b16 %v360
        %v501 = vunpack.c.l.b16 %v361
        %v502 = vunpack.c.h.b16 %v361
        %v503 = vunpack.c.l.b16 %v362
        %v504 = vunpack.c.h.b16 %v362
        %v505 = vunpack.c.l.b16 %v363
        %v506 = vunpack.c.h.b16 %v363
        %v507 = vunpack.c.l.b16 %v364
        %v508 = vunpack.c.h.b16 %v364
        %v509 = vunpack.c.l.b16 %v365
        %v510 = vunpack.c.h.b16 %v365
        %v511 = vunpack.c.l.b16 %v366
        %v512 = vunpack.c.h.b16 %v366
        %v513 = vunpack.c.l.b16 %v367
        %v514 = vunpack.c.h.b16 %v367
        %v515 = vunpack.c.l.b16 %v368
        %v516 = vunpack.c.h.b16 %v368
        %v517 = vunpack.c.l.b16 %v369
        %v518 = vunpack.c.h.b16 %v369
        %v519 = vunpack.c.l.b16 %v370
        %v520 = vunpack.c.h.b16 %v370
        %v521 = vunpack.c.l.b16 %v371
        %v522 = vunpack.c.h.b16 %v371
        %v523 = vunpack.c.l.b16 %v372
        %v524 = vunpack.c.h.b16 %v372
        %v525 = vunpack.c.l.b16 %v373
        %v526 = vunpack.c.h.b16 %v373
        %v527 = vunpack.c.l.b16 %v374
        %v528 = vunpack.c.h.b16 %v374
        %v529 = vunpack.c.l.b16 %v375
        %v530 = vunpack.c.h.b16 %v375
        %v531 = vunpack.c.l.b16 %v376
        %v532 = vunpack.c.h.b16 %v376
        %v533 = vunpack.c.l.b16 %v377
        %v534 = vunpack.c.h.b16 %v377
        %v535 = vunpack.c.l.b16 %v378
        %v536 = vunpack.c.h.b16 %v378
        %v537 = vunpack.c.l.b16 %v379
        %v538 = vunpack.c.h.b16 %v379
        %v539 = vunpack.c.l.b16 %v380
        %v540 = vunpack.c.h.b16 %v380
        %v541 = vunpack.c.l.b16 %v381
        %v542 = vunpack.c.h.b16 %v381
        %v543 = vunpack.c.l.b16 %v382
        %v544 = vunpack.c.h.b16 %v382
        %v545 = vunpack.c.l.b16 %v383
        %v546 = vunpack.c.h.b16 %v383
        %v547 = vunpack.c.l.b16 %v384
        %v548 = vunpack.c.h.b16 %v384
        %v549 = vunpack.c.l.b16 %v385
        %v550 = vunpack.c.h.b16 %v385
        %v551 = vunpack.c.l.b16 %v386
        %v552 = vunpack.c.h.b16 %v386
        %v553 = vunpack.c.l.b16 %v387
        %v554 = vunpack.c.h.b16 %v387
        %v555 = vunpack.c.l.b16 %v388
        %v556 = vunpack.c.h.b16 %v388
        %v557 = vpack.c.b16 %v497, %v493
        %v558 = vpack.c.b16 %v498, %v494
        %v559 = vpack.c.b16 %v499, %v495
        %v560 = vpack.c.b16 %v500, %v496
        %v561 = vpack.c.b16 %v505, %v501
        %v562 = vpack.c.b16 %v506, %v502
        %v563 = vpack.c.b16 %v507, %v503
        %v564 = vpack.c.b16 %v508, %v504
        %v565 = vpack.c.b16 %v513, %v509
        %v566 = vpack.c.b16 %v514, %v510
        %v567 = vpack.c.b16 %v515, %v511
        %v568 = vpack.c.b16 %v516, %v512
        %v569 = vpack.c.b16 %v521, %v517
        %v570 = vpack.c.b16 %v522, %v518
        %v571 = vpack.c.b16 %v523, %v519
        %v572 = vpack.c.b16 %v524, %v520
        %v573 = vpack.c.b16 %v529, %v525
        %v574 = vpack.c.b16 %v530, %v526
        %v575 = vpack.c.b16 %v531, %v527
        %v576 = vpack.c.b16 %v532, %v528
        %v577 = vpack.c.b16 %v537, %v533
        %v578 = vpack.c.b16 %v538, %v534
        %v579 = vpack.c.b16 %v539, %v535
        %v580 = vpack.c.b16 %v540, %v536
        %v581 = vpack.c.b16 %v545, %v541
        %v582 = vpack.c.b16 %v546, %v542
        %v583 = vpack.c.b16 %v547, %v543
        %v584 = vpack.c.b16 %v548, %v544
        %v585 = vpack.c.b16 %v553, %v549
        %v586 = vpack.c.b16 %v554, %v550
        %v587 = vpack.c.b16 %v555, %v551
        %v588 = vpack.c.b16 %v556, %v552
        %621 = vmatprep.subr.bf16.mxu0 %v558
        %622 = vmatpush1.bf16.msra.mxu0 %v557
        %623 = vmatprep.subr.bf16.mxu0 %v562
        %624 = vmatpush1.bf16.msra.mxu0 %v561
        %625 = vmatprep.subr.bf16.mxu0 %v566
        %626 = vmatpush1.bf16.msra.mxu0 %v565
        %627 = vmatprep.subr.bf16.mxu0 %v570
        %628 = vmatpush1.bf16.msra.mxu0 %v569
        %629 = vmatprep.subr.bf16.mxu0 %v574
        %630 = vmatpush1.bf16.msra.mxu0 %v573
        %631 = vmatprep.subr.bf16.mxu0 %v578
        %632 = vmatpush1.bf16.msra.mxu0 %v577
        %633 = vmatprep.subr.bf16.mxu0 %v582
        %634 = vmatpush1.bf16.msra.mxu0 %v581
        %635 = vmatprep.subr.bf16.mxu0 %v586
        %636 = vmatpush1.bf16.msra.mxu0 %v585
        %637 = vmatprep.subr.bf16.mxu0 0
        %638 = vmatpush1.bf16.msra.mxu0 0
        %639 = vmatprep.subr.bf16.mxu0 0
        %640 = vmatpush1.bf16.msra.mxu0 0
        %641 = vmatprep.subr.bf16.mxu0 0
        %642 = vmatpush1.bf16.msra.mxu0 0
        %643 = vmatprep.subr.bf16.mxu0 0
        %644 = vmatpush1.bf16.msra.mxu0 0
        %645 = vmatprep.subr.bf16.mxu0 0
        %646 = vmatpush1.bf16.msra.mxu0 0
        %647 = vmatprep.subr.bf16.mxu0 0
        %648 = vmatpush1.bf16.msra.mxu0 0
        %649 = vmatprep.subr.bf16.mxu0 0
        %650 = vmatpush1.bf16.msra.mxu0 0
        %651 = vmatprep.subr.bf16.mxu0 0
        %652 = vmatpush1.bf16.msra.mxu0 0
        %653 = vmatprep.mubr.bf16.mxu0 0
        %654 = vmatmul.mubr.bf16.gmra.mrb[0].mxu0 %v437
        %v655 = vpop.f32.mrb[0].mxu0
        %v656 = vadd.f32 0.0, %v655
        %v657 = vpop.f32.mrb[0].mxu0
        %v658 = vadd.f32 0.0, %v657
        %v659 = vpop.f32.mrb[0].mxu0
        %v660 = vadd.f32 0.0, %v659
        %v661 = vpop.f32.mrb[0].mxu0
        %v662 = vadd.f32 0.0, %v661
        %663 = vmatprep.mubr.bf16.mxu0 0
        %664 = vmatmul.mubr.bf16.gmra.mrb[0].mxu0 %v438
        %v665 = vpop.f32.mrb[0].mxu0
        %v666 = vadd.f32 0.0, %v665
        %v667 = vpop.f32.mrb[0].mxu0
        %v668 = vadd.f32 0.0, %v667
        %v669 = vpop.f32.mrb[0].mxu0
        %v670 = vadd.f32 0.0, %v669
        %v671 = vpop.f32.mrb[0].mxu0
        %v672 = vadd.f32 0.0, %v671
        %673 = vmatprep.mubr.bf16.mxu0 0
        %674 = vmatmul.mubr.bf16.gmra.mrb[0].mxu0 %v439
        %v675 = vpop.f32.mrb[0].mxu0
        %v676 = vadd.f32 0.0, %v675
        %v677 = vpop.f32.mrb[0].mxu0
        %v678 = vadd.f32 0.0, %v677
        %v679 = vpop.f32.mrb[0].mxu0
        %v680 = vadd.f32 0.0, %v679
        %v681 = vpop.f32.mrb[0].mxu0
        %v682 = vadd.f32 0.0, %v681
        %683 = vmatprep.mubr.bf16.mxu0 0
        %684 = vmatmul.mubr.bf16.gmra.mrb[0].mxu0 %v440
        %v685 = vpop.f32.mrb[0].mxu0
        %v686 = vadd.f32 0.0, %v685
        %v687 = vpop.f32.mrb[0].mxu0
        %v688 = vadd.f32 0.0, %v687
        %v689 = vpop.f32.mrb[0].mxu0
        %v690 = vadd.f32 0.0, %v689
        %v691 = vpop.f32.mrb[0].mxu0
        %v692 = vadd.f32 0.0, %v691
        %693 = vmatprep.mubr.bf16.mxu0 0
        %694 = vmatmul.mubr.bf16.gmra.mrb[0].mxu0 %v441
        %v695 = vpop.f32.mrb[0].mxu0
        %v696 = vadd.f32 0.0, %v695
        %v697 = vpop.f32.mrb[0].mxu0
        %v698 = vadd.f32 0.0, %v697
        %v699 = vpop.f32.mrb[0].mxu0
        %v700 = vadd.f32 0.0, %v699
        %v701 = vpop.f32.mrb[0].mxu0
        %v702 = vadd.f32 0.0, %v701
        %703 = vmatprep.mubr.bf16.mxu0 0
        %704 = vmatmul.mubr.bf16.gmra.mrb[0].mxu0 %v442
        %v705 = vpop.f32.mrb[0].mxu0
        %v706 = vadd.f32 0.0, %v705
        %v707 = vpop.f32.mrb[0].mxu0
        %v708 = vadd.f32 0.0, %v707
        %v709 = vpop.f32.mrb[0].mxu0
        %v710 = vadd.f32 0.0, %v709
        %v711 = vpop.f32.mrb[0].mxu0
        %v712 = vadd.f32 0.0, %v711
        %713 = vmatprep.mubr.bf16.mxu0 0
        %714 = vmatmul.mubr.bf16.gmra.mrb[0].mxu0 %v443
        %v715 = vpop.f32.mrb[0].mxu0
        %v716 = vadd.f32 0.0, %v715
        %v717 = vpop.f32.mrb[0].mxu0
        %v718 = vadd.f32 0.0, %v717
        %v719 = vpop.f32.mrb[0].mxu0
        %v720 = vadd.f32 0.0, %v719
        %v721 = vpop.f32.mrb[0].mxu0
        %v722 = vadd.f32 0.0, %v721
        %723 = vmatprep.mubr.bf16.mxu0 0
        %724 = vmatmul.mubr.bf16.gmra.mrb[0].mxu0 %v444
        %v725 = vpop.f32.mrb[0].mxu0
        %v726 = vadd.f32 0.0, %v725
        %v727 = vpop.f32.mrb[0].mxu0
        %v728 = vadd.f32 0.0, %v727
        %v729 = vpop.f32.mrb[0].mxu0
        %v730 = vadd.f32 0.0, %v729
        %v731 = vpop.f32.mrb[0].mxu0
        %v732 = vadd.f32 0.0, %v731
        %733 = vmatprep.mubr.bf16.mxu0 0
        %734 = vmatmul.mubr.bf16.gmra.mrb[0].mxu0 %v445
        %v735 = vpop.f32.mrb[0].mxu0
        %v736 = vadd.f32 0.0, %v735
        %v737 = vpop.f32.mrb[0].mxu0
        %v738 = vadd.f32 0.0, %v737
        %v739 = vpop.f32.mrb[0].mxu0
        %v740 = vadd.f32 0.0, %v739
        %v741 = vpop.f32.mrb[0].mxu0
        %v742 = vadd.f32 0.0, %v741
        %743 = vmatprep.mubr.bf16.mxu0 0
        %744 = vmatmul.mubr.bf16.gmra.mrb[0].mxu0 %v446
        %v745 = vpop.f32.mrb[0].mxu0
        %v746 = vadd.f32 0.0, %v745
        %v747 = vpop.f32.mrb[0].mxu0
        %v748 = vadd.f32 0.0, %v747
        %v749 = vpop.f32.mrb[0].mxu0
        %v750 = vadd.f32 0.0, %v749
        %v751 = vpop.f32.mrb[0].mxu0
        %v752 = vadd.f32 0.0, %v751
        %753 = vmatprep.mubr.bf16.mxu0 0
        %754 = vmatmul.mubr.bf16.gmra.mrb[0].mxu0 %v447
        %v755 = vpop.f32.mrb[0].mxu0
        %v756 = vadd.f32 0.0, %v755
        %v757 = vpop.f32.mrb[0].mxu0
        %v758 = vadd.f32 0.0, %v757
        %v759 = vpop.f32.mrb[0].mxu0
        %v760 = vadd.f32 0.0, %v759
        %v761 = vpop.f32.mrb[0].mxu0
        %v762 = vadd.f32 0.0, %v761
        %763 = vmatprep.mubr.bf16.mxu0 0
        %764 = vmatmul.mubr.bf16.gmra.mrb[0].mxu0 %v448
        %v765 = vpop.f32.mrb[0].mxu0
        %v766 = vadd.f32 0.0, %v765
        %v767 = vpop.f32.mrb[0].mxu0
        %v768 = vadd.f32 0.0, %v767
        %v769 = vpop.f32.mrb[0].mxu0
        %v770 = vadd.f32 0.0, %v769
        %v771 = vpop.f32.mrb[0].mxu0
        %v772 = vadd.f32 0.0, %v771
        %773 = vdwg.mxu0
        %774 = vmatprep.subr.bf16.mxu0 %v560
        %775 = vmatpush1.bf16.msra.mxu0 %v559
        %776 = vmatprep.subr.bf16.mxu0 %v564
        %777 = vmatpush1.bf16.msra.mxu0 %v563
        %778 = vmatprep.subr.bf16.mxu0 %v568
        %779 = vmatpush1.bf16.msra.mxu0 %v567
        %780 = vmatprep.subr.bf16.mxu0 %v572
        %781 = vmatpush1.bf16.msra.mxu0 %v571
        %782 = vmatprep.subr.bf16.mxu0 %v576
        %783 = vmatpush1.bf16.msra.mxu0 %v575
        %784 = vmatprep.subr.bf16.mxu0 %v580
        %785 = vmatpush1.bf16.msra.mxu0 %v579
        %786 = vmatprep.subr.bf16.mxu0 %v584
        %787 = vmatpush1.bf16.msra.mxu0 %v583
        %788 = vmatprep.subr.bf16.mxu0 %v588
        %789 = vmatpush1.bf16.msra.mxu0 %v587
        %790 = vmatprep.subr.bf16.mxu0 0
        %791 = vmatpush1.bf16.msra.mxu0 0
        %792 = vmatprep.subr.bf16.mxu0 0
        %793 = vmatpush1.bf16.msra.mxu0 0
        %794 = vmatprep.subr.bf16.mxu0 0
        %795 = vmatpush1.bf16.msra.mxu0 0
        %796 = vmatprep.subr.bf16.mxu0 0
        %797 = vmatpush1.bf16.msra.mxu0 0
        %798 = vmatprep.subr.bf16.mxu0 0
        %799 = vmatpush1.bf16.msra.mxu0 0
        %800 = vmatprep.subr.bf16.mxu0 0
        %801 = vmatpush1.bf16.msra.mxu0 0
        %802 = vmatprep.subr.bf16.mxu0 0
        %803 = vmatpush1.bf16.msra.mxu0 0
        %804 = vmatprep.subr.bf16.mxu0 0
        %805 = vmatpush1.bf16.msra.mxu0 0
        %806 = vmatprep.mubr.bf16.mxu0 0
        %807 = vmatmul.mubr.bf16.gmra.mrb[0].mxu0 %v437
        %v808 = vpop.f32.mrb[0].mxu0
        %v809 = vadd.f32 0.0, %v808
        %v810 = vpop.f32.mrb[0].mxu0
        %v811 = vadd.f32 0.0, %v810
        %v812 = vpop.f32.mrb[0].mxu0
        %v813 = vadd.f32 0.0, %v812
        %v814 = vpop.f32.mrb[0].mxu0
        %v815 = vadd.f32 0.0, %v814
        %816 = vmatprep.mubr.bf16.mxu0 0
        %817 = vmatmul.mubr.bf16.gmra.mrb[0].mxu0 %v438
        %v818 = vpop.f32.mrb[0].mxu0
        %v819 = vadd.f32 0.0, %v818
        %v820 = vpop.f32.mrb[0].mxu0
        %v821 = vadd.f32 0.0, %v820
        %v822 = vpop.f32.mrb[0].mxu0
        %v823 = vadd.f32 0.0, %v822
        %v824 = vpop.f32.mrb[0].mxu0
        %v825 = vadd.f32 0.0, %v824
        %826 = vmatprep.mubr.bf16.mxu0 0
        %827 = vmatmul.mubr.bf16.gmra.mrb[0].mxu0 %v439
        %v828 = vpop.f32.mrb[0].mxu0
        %v829 = vadd.f32 0.0, %v828
        %v830 = vpop.f32.mrb[0].mxu0
        %v831 = vadd.f32 0.0, %v830
        %v832 = vpop.f32.mrb[0].mxu0
        %v833 = vadd.f32 0.0, %v832
        %v834 = vpop.f32.mrb[0].mxu0
        %v835 = vadd.f32 0.0, %v834
        %836 = vmatprep.mubr.bf16.mxu0 0
        %837 = vmatmul.mubr.bf16.gmra.mrb[0].mxu0 %v440
        %v838 = vpop.f32.mrb[0].mxu0
        %v839 = vadd.f32 0.0, %v838
        %v840 = vpop.f32.mrb[0].mxu0
        %v841 = vadd.f32 0.0, %v840
        %v842 = vpop.f32.mrb[0].mxu0
        %v843 = vadd.f32 0.0, %v842
        %v844 = vpop.f32.mrb[0].mxu0
        %v845 = vadd.f32 0.0, %v844
        %846 = vmatprep.mubr.bf16.mxu0 0
        %847 = vmatmul.mubr.bf16.gmra.mrb[0].mxu0 %v441
        %v848 = vpop.f32.mrb[0].mxu0
        %v849 = vadd.f32 0.0, %v848
        %v850 = vpop.f32.mrb[0].mxu0
        %v851 = vadd.f32 0.0, %v850
        %v852 = vpop.f32.mrb[0].mxu0
        %v853 = vadd.f32 0.0, %v852
        %v854 = vpop.f32.mrb[0].mxu0
        %v855 = vadd.f32 0.0, %v854
        %856 = vmatprep.mubr.bf16.mxu0 0
        %857 = vmatmul.mubr.bf16.gmra.mrb[0].mxu0 %v442
        %v858 = vpop.f32.mrb[0].mxu0
        %v859 = vadd.f32 0.0, %v858
        %v860 = vpop.f32.mrb[0].mxu0
        %v861 = vadd.f32 0.0, %v860
        %v862 = vpop.f32.mrb[0].mxu0
        %v863 = vadd.f32 0.0, %v862
        %v864 = vpop.f32.mrb[0].mxu0
        %v865 = vadd.f32 0.0, %v864
        %866 = vmatprep.mubr.bf16.mxu0 0
        %867 = vmatmul.mubr.bf16.gmra.mrb[0].mxu0 %v443
        %v868 = vpop.f32.mrb[0].mxu0
        %v869 = vadd.f32 0.0, %v868
        %v870 = vpop.f32.mrb[0].mxu0
        %v871 = vadd.f32 0.0, %v870
        %v872 = vpop.f32.mrb[0].mxu0
        %v873 = vadd.f32 0.0, %v872
        %v874 = vpop.f32.mrb[0].mxu0
        %v875 = vadd.f32 0.0, %v874
        %876 = vmatprep.mubr.bf16.mxu0 0
        %877 = vmatmul.mubr.bf16.gmra.mrb[0].mxu0 %v444
        %v878 = vpop.f32.mrb[0].mxu0
        %v879 = vadd.f32 0.0, %v878
        %v880 = vpop.f32.mrb[0].mxu0
        %v881 = vadd.f32 0.0, %v880
        %v882 = vpop.f32.mrb[0].mxu0
        %v883 = vadd.f32 0.0, %v882
        %v884 = vpop.f32.mrb[0].mxu0
        %v885 = vadd.f32 0.0, %v884
        %886 = vmatprep.mubr.bf16.mxu0 0
        %887 = vmatmul.mubr.bf16.gmra.mrb[0].mxu0 %v445
        %v888 = vpop.f32.mrb[0].mxu0
        %v889 = vadd.f32 0.0, %v888
        %v890 = vpop.f32.mrb[0].mxu0
        %v891 = vadd.f32 0.0, %v890
        %v892 = vpop.f32.mrb[0].mxu0
        %v893 = vadd.f32 0.0, %v892
        %v894 = vpop.f32.mrb[0].mxu0
        %v895 = vadd.f32 0.0, %v894
        %896 = vmatprep.mubr.bf16.mxu0 0
        %897 = vmatmul.mubr.bf16.gmra.mrb[0].mxu0 %v446
        %v898 = vpop.f32.mrb[0].mxu0
        %v899 = vadd.f32 0.0, %v898
        %v900 = vpop.f32.mrb[0].mxu0
        %v901 = vadd.f32 0.0, %v900
        %v902 = vpop.f32.mrb[0].mxu0
        %v903 = vadd.f32 0.0, %v902
        %v904 = vpop.f32.mrb[0].mxu0
        %v905 = vadd.f32 0.0, %v904
        %906 = vmatprep.mubr.bf16.mxu0 0
        %907 = vmatmul.mubr.bf16.gmra.mrb[0].mxu0 %v447
        %v908 = vpop.f32.mrb[0].mxu0
        %v909 = vadd.f32 0.0, %v908
        %v910 = vpop.f32.mrb[0].mxu0
        %v911 = vadd.f32 0.0, %v910
        %v912 = vpop.f32.mrb[0].mxu0
        %v913 = vadd.f32 0.0, %v912
        %v914 = vpop.f32.mrb[0].mxu0
        %v915 = vadd.f32 0.0, %v914
        %916 = vmatprep.mubr.bf16.mxu0 0
        %917 = vmatmul.mubr.bf16.gmra.mrb[0].mxu0 %v448
        %v918 = vpop.f32.mrb[0].mxu0
        %v919 = vadd.f32 0.0, %v918
        %v920 = vpop.f32.mrb[0].mxu0
        %v921 = vadd.f32 0.0, %v920
        %v922 = vpop.f32.mrb[0].mxu0
        %v923 = vadd.f32 0.0, %v922
        %v924 = vpop.f32.mrb[0].mxu0
        %v925 = vadd.f32 0.0, %v924
        %926 = vdwg.mxu0
        %v927 = vmax.f32 %v656, %v658
        %v928 = vmax.f32 %v660, %v662
        %v929 = vmax.f32 %v666, %v668
        %v930 = vmax.f32 %v670, %v672
        %v931 = vmax.f32 %v676, %v678
        %v932 = vmax.f32 %v680, %v682
        %v933 = vmax.f32 %v686, %v688
        %v934 = vmax.f32 %v690, %v692
        %v935 = vmax.f32 %v696, %v698
        %v936 = vmax.f32 %v700, %v702
        %v937 = vmax.f32 %v706, %v708
        %v938 = vmax.f32 %v710, %v712
        %v939 = vmax.f32 %v716, %v718
        %v940 = vmax.f32 %v720, %v722
        %v941 = vmax.f32 %v726, %v728
        %v942 = vmax.f32 %v730, %v732
        %v943 = vmax.f32 %v736, %v738
        %v944 = vmax.f32 %v740, %v742
        %v945 = vmax.f32 %v746, %v748
        %v946 = vmax.f32 %v750, %v752
        %v947 = vmax.f32 %v756, %v758
        %v948 = vmax.f32 %v760, %v762
        %v949 = vmax.f32 %v766, %v768
        %v950 = vmax.f32 %v770, %v772
        %v951 = vmax.f32 %v809, %v811
        %v952 = vmax.f32 %v813, %v815
        %v953 = vmax.f32 %v819, %v821
        %v954 = vmax.f32 %v823, %v825
        %v955 = vmax.f32 %v829, %v831
        %v956 = vmax.f32 %v833, %v835
        %v957 = vmax.f32 %v839, %v841
        %v958 = vmax.f32 %v843, %v845
        %v959 = vmax.f32 %v849, %v851
        %v960 = vmax.f32 %v853, %v855
        %v961 = vmax.f32 %v859, %v861
        %v962 = vmax.f32 %v863, %v865
        %v963 = vmax.f32 %v869, %v871
        %v964 = vmax.f32 %v873, %v875
        %v965 = vmax.f32 %v879, %v881
        %v966 = vmax.f32 %v883, %v885
        %v967 = vmax.f32 %v889, %v891
        %v968 = vmax.f32 %v893, %v895
        %v969 = vmax.f32 %v899, %v901
        %v970 = vmax.f32 %v903, %v905
        %v971 = vmax.f32 %v909, %v911
        %v972 = vmax.f32 %v913, %v915
        %v973 = vmax.f32 %v919, %v921
        %v974 = vmax.f32 %v923, %v925
        %v975 = vmax.f32 %v927, %v951
        %v976 = vmax.f32 %v928, %v952
        %v977 = vmax.f32 %v929, %v953
        %v978 = vmax.f32 %v930, %v954
        %v979 = vmax.f32 %v931, %v955
        %v980 = vmax.f32 %v932, %v956
        %v981 = vmax.f32 %v933, %v957
        %v982 = vmax.f32 %v934, %v958
        %v983 = vmax.f32 %v935, %v959
        %v984 = vmax.f32 %v936, %v960
        %v985 = vmax.f32 %v937, %v961
        %v986 = vmax.f32 %v938, %v962
        %v987 = vmax.f32 %v939, %v963
        %v988 = vmax.f32 %v940, %v964
        %v989 = vmax.f32 %v941, %v965
        %v990 = vmax.f32 %v942, %v966
        %v991 = vmax.f32 %v943, %v967
        %v992 = vmax.f32 %v944, %v968
        %v993 = vmax.f32 %v945, %v969
        %v994 = vmax.f32 %v946, %v970
        %v995 = vmax.f32 %v947, %v971
        %v996 = vmax.f32 %v948, %v972
        %v997 = vmax.f32 %v949, %v973
        %v998 = vmax.f32 %v950, %v974
        %v999 = vld [vmem:[%s2] sm:$0x1]
        %v1001 = vlaneseq
        %v1002 = vshrl.u32 %v1001, 7
        %v1003 = vsub.s32 0, %v1002
        %v1004 = vrot.slane %v999, %v1003
        %v1006 = vadd.f32 %v975, %v1004
        %v1007 = vadd.f32 %v976, %v1004
        %v1008 = vadd.f32 %v977, %v1004
        %v1009 = vadd.f32 %v978, %v1004
        %v1010 = vadd.f32 %v979, %v1004
        %v1011 = vadd.f32 %v980, %v1004
        %v1012 = vadd.f32 %v981, %v1004
        %v1013 = vadd.f32 %v982, %v1004
        %v1014 = vadd.f32 %v983, %v1004
        %v1015 = vadd.f32 %v984, %v1004
        %v1016 = vadd.f32 %v985, %v1004
        %v1017 = vadd.f32 %v986, %v1004
        %v1018 = vadd.f32 %v987, %v1004
        %v1019 = vadd.f32 %v988, %v1004
        %v1020 = vadd.f32 %v989, %v1004
        %v1021 = vadd.f32 %v990, %v1004
        %v1022 = vadd.f32 %v991, %v1004
        %v1023 = vadd.f32 %v992, %v1004
        %v1024 = vadd.f32 %v993, %v1004
        %v1025 = vadd.f32 %v994, %v1004
        %v1026 = vadd.f32 %v995, %v1004
        %v1027 = vadd.f32 %v996, %v1004
        %v1028 = vadd.f32 %v997, %v1004
        %v1029 = vadd.f32 %v998, %v1004
        %v1030 = vmax.f32 %v1006, 0.0
        %v1031 = vmax.f32 %v1007, 0.0
        %v1032 = vmax.f32 %v1008, 0.0
        %v1033 = vmax.f32 %v1009, 0.0
        %v1034 = vmax.f32 %v1010, 0.0
        %v1035 = vmax.f32 %v1011, 0.0
        %v1036 = vmax.f32 %v1012, 0.0
        %v1037 = vmax.f32 %v1013, 0.0
        %v1038 = vmax.f32 %v1014, 0.0
        %v1039 = vmax.f32 %v1015, 0.0
        %v1040 = vmax.f32 %v1016, 0.0
        %v1041 = vmax.f32 %v1017, 0.0
        %v1042 = vmax.f32 %v1018, 0.0
        %v1043 = vmax.f32 %v1019, 0.0
        %v1044 = vmax.f32 %v1020, 0.0
        %v1045 = vmax.f32 %v1021, 0.0
        %v1046 = vmax.f32 %v1022, 0.0
        %v1047 = vmax.f32 %v1023, 0.0
        %v1048 = vmax.f32 %v1024, 0.0
        %v1049 = vmax.f32 %v1025, 0.0
        %v1050 = vmax.f32 %v1026, 0.0
        %v1051 = vmax.f32 %v1027, 0.0
        %v1052 = vmax.f32 %v1028, 0.0
        %v1053 = vmax.f32 %v1029, 0.0
        %v1054 = vpack.c.bf16 %v1032, %v1030
        %v1055 = vpack.c.bf16 %v1036, %v1034
        %v1056 = vpack.c.bf16 %v1040, %v1038
        %v1057 = vpack.c.bf16 %v1044, %v1042
        %vm1074 = vcmask 1046528
        %v1075 = vrot.slane %v1030, 1
        %v1076 = vrot.slane %v1031, 1
        %v1077 = vsel %vm1074, %v1075, %v1076
        %v1078 = vrot.slane %v1032, 1
        %v1079 = vrot.slane %v1033, 1
        %v1080 = vsel %vm1074, %v1078, %v1079
        %v1081 = vrot.slane %v1034, 1
        %v1082 = vrot.slane %v1035, 1
        %v1083 = vsel %vm1074, %v1081, %v1082
        %v1084 = vrot.slane %v1036, 1
        %v1085 = vrot.slane %v1037, 1
        %v1086 = vsel %vm1074, %v1084, %v1085
        %v1087 = vrot.slane %v1038, 1
        %v1088 = vrot.slane %v1039, 1
        %v1089 = vsel %vm1074, %v1087, %v1088
        %v1090 = vrot.slane %v1040, 1
        %v1091 = vrot.slane %v1041, 1
        %v1092 = vsel %vm1074, %v1090, %v1091
        %v1093 = vrot.slane %v1042, 1
        %v1094 = vrot.slane %v1043, 1
        %v1095 = vsel %vm1074, %v1093, %v1094
        %v1096 = vrot.slane %v1044, 1
        %v1097 = vrot.slane %v1045, 1
        %v1098 = vsel %vm1074, %v1096, %v1097
        %v1107 = vpack.c.bf16 %v1080, %v1077
        %v1108 = vpack.c.bf16 %v1086, %v1083
        %v1109 = vpack.c.bf16 %v1092, %v1089
        %v1110 = vpack.c.bf16 %v1098, %v1095
        %vm1111 = vcmask 1045504
        %v1112 = vrot.slane %v1030, 2
        %v1113 = vrot.slane %v1031, 2
        %v1114 = vsel %vm1111, %v1112, %v1113
        %v1115 = vrot.slane %v1032, 2
        %v1116 = vrot.slane %v1033, 2
        %v1117 = vsel %vm1111, %v1115, %v1116
        %v1118 = vrot.slane %v1034, 2
        %v1119 = vrot.slane %v1035, 2
        %v1120 = vsel %vm1111, %v1118, %v1119
        %v1121 = vrot.slane %v1036, 2
        %v1122 = vrot.slane %v1037, 2
        %v1123 = vsel %vm1111, %v1121, %v1122
        %v1124 = vrot.slane %v1038, 2
        %v1125 = vrot.slane %v1039, 2
        %v1126 = vsel %vm1111, %v1124, %v1125
        %v1127 = vrot.slane %v1040, 2
        %v1128 = vrot.slane %v1041, 2
        %v1129 = vsel %vm1111, %v1127, %v1128
        %v1130 = vrot.slane %v1042, 2
        %v1131 = vrot.slane %v1043, 2
        %v1132 = vsel %vm1111, %v1130, %v1131
        %v1133 = vrot.slane %v1044, 2
        %v1134 = vrot.slane %v1045, 2
        %v1135 = vsel %vm1111, %v1133, %v1134
        %v1144 = vpack.c.bf16 %v1117, %v1114
        %v1145 = vpack.c.bf16 %v1123, %v1120
        %v1146 = vpack.c.bf16 %v1129, %v1126
        %v1147 = vpack.c.bf16 %v1135, %v1132
        %vm1148 = vcmask 1044480
        %v1149 = vrot.slane %v1030, 3
        %v1150 = vrot.slane %v1031, 3
        %v1151 = vsel %vm1148, %v1149, %v1150
        %v1152 = vrot.slane %v1032, 3
        %v1153 = vrot.slane %v1033, 3
        %v1154 = vsel %vm1148, %v1152, %v1153
        %v1155 = vrot.slane %v1034, 3
        %v1156 = vrot.slane %v1035, 3
        %v1157 = vsel %vm1148, %v1155, %v1156
        %v1158 = vrot.slane %v1036, 3
        %v1159 = vrot.slane %v1037, 3
        %v1160 = vsel %vm1148, %v1158, %v1159
        %v1161 = vrot.slane %v1038, 3
        %v1162 = vrot.slane %v1039, 3
        %v1163 = vsel %vm1148, %v1161, %v1162
        %v1164 = vrot.slane %v1040, 3
        %v1165 = vrot.slane %v1041, 3
        %v1166 = vsel %vm1148, %v1164, %v1165
        %v1167 = vrot.slane %v1042, 3
        %v1168 = vrot.slane %v1043, 3
        %v1169 = vsel %vm1148, %v1167, %v1168
        %v1170 = vrot.slane %v1044, 3
        %v1171 = vrot.slane %v1045, 3
        %v1172 = vsel %vm1148, %v1170, %v1171
        %v1181 = vpack.c.bf16 %v1154, %v1151
        %v1182 = vpack.c.bf16 %v1160, %v1157
        %v1183 = vpack.c.bf16 %v1166, %v1163
        %v1184 = vpack.c.bf16 %v1172, %v1169
        %vm1185 = vcmask 1043456
        %v1186 = vrot.slane %v1030, 4
        %v1187 = vrot.slane %v1031, 4
        %v1188 = vsel %vm1185, %v1186, %v1187
        %v1189 = vrot.slane %v1032, 4
        %v1190 = vrot.slane %v1033, 4
        %v1191 = vsel %vm1185, %v1189, %v1190
        %v1192 = vrot.slane %v1034, 4
        %v1193 = vrot.slane %v1035, 4
        %v1194 = vsel %vm1185, %v1192, %v1193
        %v1195 = vrot.slane %v1036, 4
        %v1196 = vrot.slane %v1037, 4
        %v1197 = vsel %vm1185, %v1195, %v1196
        %v1198 = vrot.slane %v1038, 4
        %v1199 = vrot.slane %v1039, 4
        %v1200 = vsel %vm1185, %v1198, %v1199
        %v1201 = vrot.slane %v1040, 4
        %v1202 = vrot.slane %v1041, 4
        %v1203 = vsel %vm1185, %v1201, %v1202
        %v1204 = vrot.slane %v1042, 4
        %v1205 = vrot.slane %v1043, 4
        %v1206 = vsel %vm1185, %v1204, %v1205
        %v1207 = vrot.slane %v1044, 4
        %v1208 = vrot.slane %v1045, 4
        %v1209 = vsel %vm1185, %v1207, %v1208
        %v1218 = vpack.c.bf16 %v1191, %v1188
        %v1219 = vpack.c.bf16 %v1197, %v1194
        %v1220 = vpack.c.bf16 %v1203, %v1200
        %v1221 = vpack.c.bf16 %v1209, %v1206
        %v1222 = vpack.c.bf16 %v1034, %v1032
        %v1223 = vpack.c.bf16 %v1038, %v1036
        %v1224 = vpack.c.bf16 %v1042, %v1040
        %v1225 = vpack.c.bf16 %v1046, %v1044
        %v1228 = vrot.slane %v1046, 1
        %v1229 = vrot.slane %v1047, 1
        %v1230 = vsel %vm1074, %v1228, %v1229
        %v1232 = vpack.c.bf16 %v1083, %v1080
        %v1233 = vpack.c.bf16 %v1089, %v1086
        %v1234 = vpack.c.bf16 %v1095, %v1092
        %v1235 = vpack.c.bf16 %v1230, %v1098
        %v1236 = vrot.slane %v1046, 2
        %v1237 = vrot.slane %v1047, 2
        %v1238 = vsel %vm1111, %v1236, %v1237
        %v1240 = vpack.c.bf16 %v1120, %v1117
        %v1241 = vpack.c.bf16 %v1126, %v1123
        %v1242 = vpack.c.bf16 %v1132, %v1129
        %v1243 = vpack.c.bf16 %v1238, %v1135
        %v1244 = vrot.slane %v1046, 3
        %v1245 = vrot.slane %v1047, 3
        %v1246 = vsel %vm1148, %v1244, %v1245
        %v1248 = vpack.c.bf16 %v1157, %v1154
        %v1249 = vpack.c.bf16 %v1163, %v1160
        %v1250 = vpack.c.bf16 %v1169, %v1166
        %v1251 = vpack.c.bf16 %v1246, %v1172
        %v1252 = vrot.slane %v1046, 4
        %v1253 = vrot.slane %v1047, 4
        %v1254 = vsel %vm1185, %v1252, %v1253
        %v1256 = vpack.c.bf16 %v1194, %v1191
        %v1257 = vpack.c.bf16 %v1200, %v1197
        %v1258 = vpack.c.bf16 %v1206, %v1203
        %v1259 = vpack.c.bf16 %v1254, %v1209
        %v1260 = vpack.c.bf16 %v1048, %v1046
        %v1263 = vrot.slane %v1048, 1
        %v1264 = vrot.slane %v1049, 1
        %v1265 = vsel %vm1074, %v1263, %v1264
        %v1267 = vpack.c.bf16 %v1265, %v1230
        %v1268 = vrot.slane %v1048, 2
        %v1269 = vrot.slane %v1049, 2
        %v1270 = vsel %vm1111, %v1268, %v1269
        %v1272 = vpack.c.bf16 %v1270, %v1238
        %v1273 = vrot.slane %v1048, 3
        %v1274 = vrot.slane %v1049, 3
        %v1275 = vsel %vm1148, %v1273, %v1274
        %v1277 = vpack.c.bf16 %v1275, %v1246
        %v1278 = vrot.slane %v1048, 4
        %v1279 = vrot.slane %v1049, 4
        %v1280 = vsel %vm1185, %v1278, %v1279
        %v1282 = vpack.c.bf16 %v1280, %v1254
        %v1283 = vpack.c.bf16 %v1050, %v1048
        %v1286 = vrot.slane %v1050, 1
        %v1287 = vrot.slane %v1051, 1
        %v1288 = vsel %vm1074, %v1286, %v1287
        %v1290 = vpack.c.bf16 %v1288, %v1265
        %v1291 = vrot.slane %v1050, 2
        %v1292 = vrot.slane %v1051, 2
        %v1293 = vsel %vm1111, %v1291, %v1292
        %v1295 = vpack.c.bf16 %v1293, %v1270
        %v1296 = vrot.slane %v1050, 3
        %v1297 = vrot.slane %v1051, 3
        %v1298 = vsel %vm1148, %v1296, %v1297
        %v1300 = vpack.c.bf16 %v1298, %v1275
        %v1301 = vrot.slane %v1050, 4
        %v1302 = vrot.slane %v1051, 4
        %v1303 = vsel %vm1185, %v1301, %v1302
        %v1305 = vpack.c.bf16 %v1303, %v1280
        %v1306 = vpack.c.bf16 %v1052, %v1050
        %v1309 = vrot.slane %v1052, 1
        %v1310 = vrot.slane %v1053, 1
        %v1311 = vsel %vm1074, %v1309, %v1310
        %v1313 = vpack.c.bf16 %v1311, %v1288
        %v1314 = vrot.slane %v1052, 2
        %v1315 = vrot.slane %v1053, 2
        %v1316 = vsel %vm1111, %v1314, %v1315
        %v1318 = vpack.c.bf16 %v1316, %v1293
        %v1319 = vrot.slane %v1052, 3
        %v1320 = vrot.slane %v1053, 3
        %v1321 = vsel %vm1148, %v1319, %v1320
        %v1323 = vpack.c.bf16 %v1321, %v1298
        %v1324 = vrot.slane %v1052, 4
        %v1325 = vrot.slane %v1053, 4
        %v1326 = vsel %vm1185, %v1324, %v1325
        %v1328 = vpack.c.bf16 %v1326, %v1303
        %v1329 = vld [vmem:[%s3] sm:$0xf]
        %v1330 = vld [vmem:[%s3 + $0x4] sm:$0xf]
        %v1331 = vld [vmem:[%s3 + $0x8] sm:$0xf]
        %v1332 = vld [vmem:[%s3 + $0xc] sm:$0xf]
        %v1333 = vld [vmem:[%s3 + $0x10] sm:$0xf]
        %v1334 = vld [vmem:[%s3 + $0x14] sm:$0xf]
        %v1335 = vld [vmem:[%s3 + $0x18] sm:$0xf]
        %v1336 = vld [vmem:[%s3 + $0x1c] sm:$0xf]
        %v1337 = vld [vmem:[%s3 + $0x20] sm:$0xf]
        %v1338 = vld [vmem:[%s3 + $0x24] sm:$0xf]
        %v1339 = vld [vmem:[%s3 + $0x28] sm:$0xf]
        %v1340 = vld [vmem:[%s3 + $0x2c] sm:$0xf]
        %v1341 = vld [vmem:[%s3 + $0x30] sm:$0xf]
        %v1342 = vld [vmem:[%s3 + $0x34] sm:$0xf]
        %v1343 = vld [vmem:[%s3 + $0x38] sm:$0xf]
        %v1344 = vld [vmem:[%s3 + $0x3c] sm:$0xf]
        %v1345 = vld [vmem:[%s3 + $0x40] sm:$0xf]
        %v1346 = vld [vmem:[%s3 + $0x44] sm:$0xf]
        %v1347 = vld [vmem:[%s3 + $0x48] sm:$0xf]
        %v1348 = vld [vmem:[%s3 + $0x4c] sm:$0xf]
        %v1349 = vld [vmem:[%s3 + $0x50] sm:$0xf]
        %v1350 = vld [vmem:[%s3 + $0x54] sm:$0xf]
        %v1351 = vld [vmem:[%s3 + $0x58] sm:$0xf]
        %v1352 = vld [vmem:[%s3 + $0x5c] sm:$0xf]
        %v1353 = vld [vmem:[%s3 + $0x60] sm:$0xf]
        %v1354 = vld [vmem:[%s3 + $0x64] sm:$0xf]
        %v1355 = vld [vmem:[%s3 + $0x68] sm:$0xf]
        %v1356 = vld [vmem:[%s3 + $0x6c] sm:$0xf]
        %v1357 = vld [vmem:[%s3 + $0x70] sm:$0xf]
        %v1358 = vld [vmem:[%s3 + $0x74] sm:$0xf]
        %v1359 = vld [vmem:[%s3 + $0x78] sm:$0xf]
        %v1360 = vld [vmem:[%s3 + $0x7c] sm:$0xf]
        %v1361 = vld [vmem:[%s3 + $0x80] sm:$0xf]
        %v1362 = vld [vmem:[%s3 + $0x84] sm:$0xf]
        %v1363 = vld [vmem:[%s3 + $0x88] sm:$0xf]
        %v1364 = vld [vmem:[%s3 + $0x8c] sm:$0xf]
        %v1365 = vld [vmem:[%s3 + $0x90] sm:$0xf]
        %v1366 = vld [vmem:[%s3 + $0x94] sm:$0xf]
        %v1367 = vld [vmem:[%s3 + $0x98] sm:$0xf]
        %v1368 = vld [vmem:[%s3 + $0x9c] sm:$0xf]
        %v1369 = vld [vmem:[%s3 + $0xa0] sm:$0xf]
        %v1370 = vld [vmem:[%s3 + $0xa4] sm:$0xf]
        %v1371 = vld [vmem:[%s3 + $0xa8] sm:$0xf]
        %v1372 = vld [vmem:[%s3 + $0xac] sm:$0xf]
        %v1373 = vld [vmem:[%s3 + $0xb0] sm:$0xf]
        %v1374 = vld [vmem:[%s3 + $0xb4] sm:$0xf]
        %v1375 = vld [vmem:[%s3 + $0xb8] sm:$0xf]
        %v1376 = vld [vmem:[%s3 + $0xbc] sm:$0xf]
        %v1377 = vld [vmem:[%s3 + $0xc0] sm:$0xf]
        %v1378 = vld [vmem:[%s3 + $0xc4] sm:$0xf]
        %v1379 = vld [vmem:[%s3 + $0xc8] sm:$0xf]
        %v1380 = vld [vmem:[%s3 + $0xcc] sm:$0xf]
        %v1381 = vld [vmem:[%s3 + $0xd0] sm:$0xf]
        %v1382 = vld [vmem:[%s3 + $0xd4] sm:$0xf]
        %v1383 = vld [vmem:[%s3 + $0xd8] sm:$0xf]
        %v1384 = vld [vmem:[%s3 + $0xdc] sm:$0xf]
        %v1385 = vld [vmem:[%s3 + $0xe0] sm:$0xf]
        %v1386 = vld [vmem:[%s3 + $0xe4] sm:$0xf]
        %v1387 = vld [vmem:[%s3 + $0xe8] sm:$0xf]
        %v1388 = vld [vmem:[%s3 + $0xec] sm:$0xf]
        %v1389 = vld [vmem:[%s3 + $0xf0] sm:$0xf]
        %v1390 = vld [vmem:[%s3 + $0xf4] sm:$0xf]
        %v1391 = vld [vmem:[%s3 + $0xf8] sm:$0xf]
        %v1392 = vld [vmem:[%s3 + $0xfc] sm:$0xf]
        %v1393 = vld [vmem:[%s3 + $0x100] sm:$0xf]
        %v1394 = vld [vmem:[%s3 + $0x104] sm:$0xf]
        %v1395 = vld [vmem:[%s3 + $0x108] sm:$0xf]
        %v1396 = vld [vmem:[%s3 + $0x10c] sm:$0xf]
        %v1397 = vld [vmem:[%s3 + $0x110] sm:$0xf]
        %v1398 = vld [vmem:[%s3 + $0x114] sm:$0xf]
        %v1399 = vld [vmem:[%s3 + $0x118] sm:$0xf]
        %v1400 = vld [vmem:[%s3 + $0x11c] sm:$0xf]
        %v1401 = vld [vmem:[%s3 + $0x120] sm:$0xf]
        %v1402 = vld [vmem:[%s3 + $0x124] sm:$0xf]
        %v1403 = vld [vmem:[%s3 + $0x128] sm:$0xf]
        %v1404 = vld [vmem:[%s3 + $0x12c] sm:$0xf]
        %v1405 = vld [vmem:[%s3 + $0x130] sm:$0xf]
        %v1406 = vld [vmem:[%s3 + $0x134] sm:$0xf]
        %v1407 = vld [vmem:[%s3 + $0x138] sm:$0xf]
        %v1408 = vld [vmem:[%s3 + $0x13c] sm:$0xf]
        %v1409 = vld [vmem:[%s3 + $0x140] sm:$0xf]
        %v1410 = vld [vmem:[%s3 + $0x144] sm:$0xf]
        %v1411 = vld [vmem:[%s3 + $0x148] sm:$0xf]
        %v1412 = vld [vmem:[%s3 + $0x14c] sm:$0xf]
        %v1413 = vld [vmem:[%s3 + $0x150] sm:$0xf]
        %v1414 = vld [vmem:[%s3 + $0x154] sm:$0xf]
        %v1415 = vld [vmem:[%s3 + $0x158] sm:$0xf]
        %v1416 = vld [vmem:[%s3 + $0x15c] sm:$0xf]
        %v1417 = vld [vmem:[%s3 + $0x160] sm:$0xf]
        %v1418 = vld [vmem:[%s3 + $0x164] sm:$0xf]
        %v1419 = vld [vmem:[%s3 + $0x168] sm:$0xf]
        %v1420 = vld [vmem:[%s3 + $0x16c] sm:$0xf]
        %v1421 = vld [vmem:[%s3 + $0x170] sm:$0xf]
        %v1422 = vld [vmem:[%s3 + $0x174] sm:$0xf]
        %v1423 = vld [vmem:[%s3 + $0x178] sm:$0xf]
        %v1424 = vld [vmem:[%s3 + $0x17c] sm:$0xf]
        %v1425 = vld [vmem:[%s3 + $0x180] sm:$0xf]
        %v1426 = vld [vmem:[%s3 + $0x184] sm:$0xf]
        %v1427 = vld [vmem:[%s3 + $0x188] sm:$0xf]
        %v1428 = vld [vmem:[%s3 + $0x18c] sm:$0xf]
        %v1429 = vld [vmem:[%s3 + $0x190] sm:$0xf]
        %v1430 = vld [vmem:[%s3 + $0x194] sm:$0xf]
        %v1431 = vld [vmem:[%s3 + $0x198] sm:$0xf]
        %v1432 = vld [vmem:[%s3 + $0x19c] sm:$0xf]
        %v1433 = vld [vmem:[%s3 + $0x1a0] sm:$0xf]
        %v1434 = vld [vmem:[%s3 + $0x1a4] sm:$0xf]
        %v1435 = vld [vmem:[%s3 + $0x1a8] sm:$0xf]
        %v1436 = vld [vmem:[%s3 + $0x1ac] sm:$0xf]
        %v1437 = vld [vmem:[%s3 + $0x1b0] sm:$0xf]
        %v1438 = vld [vmem:[%s3 + $0x1b4] sm:$0xf]
        %v1439 = vld [vmem:[%s3 + $0x1b8] sm:$0xf]
        %v1440 = vld [vmem:[%s3 + $0x1bc] sm:$0xf]
        %v1441 = vld [vmem:[%s3 + $0x1c0] sm:$0xf]
        %v1442 = vld [vmem:[%s3 + $0x1c4] sm:$0xf]
        %v1443 = vld [vmem:[%s3 + $0x1c8] sm:$0xf]
        %v1444 = vld [vmem:[%s3 + $0x1cc] sm:$0xf]
        %v1445 = vld [vmem:[%s3 + $0x1d0] sm:$0xf]
        %v1446 = vld [vmem:[%s3 + $0x1d4] sm:$0xf]
        %v1447 = vld [vmem:[%s3 + $0x1d8] sm:$0xf]
        %v1448 = vld [vmem:[%s3 + $0x1dc] sm:$0xf]
        %v1449 = vld [vmem:[%s3 + $0x1e0] sm:$0xf]
        %v1450 = vld [vmem:[%s3 + $0x1e4] sm:$0xf]
        %v1451 = vld [vmem:[%s3 + $0x1e8] sm:$0xf]
        %v1452 = vld [vmem:[%s3 + $0x1ec] sm:$0xf]
        %v1453 = vld [vmem:[%s3 + $0x1f0] sm:$0xf]
        %v1454 = vld [vmem:[%s3 + $0x1f4] sm:$0xf]
        %v1455 = vld [vmem:[%s3 + $0x1f8] sm:$0xf]
        %v1456 = vld [vmem:[%s3 + $0x1fc] sm:$0xf]
        %v1457 = vld [vmem:[%s3 + $0x200] sm:$0xf]
        %v1458 = vld [vmem:[%s3 + $0x204] sm:$0xf]
        %v1459 = vld [vmem:[%s3 + $0x208] sm:$0xf]
        %v1460 = vld [vmem:[%s3 + $0x20c] sm:$0xf]
        %v1461 = vld [vmem:[%s3 + $0x210] sm:$0xf]
        %v1462 = vld [vmem:[%s3 + $0x214] sm:$0xf]
        %v1463 = vld [vmem:[%s3 + $0x218] sm:$0xf]
        %v1464 = vld [vmem:[%s3 + $0x21c] sm:$0xf]
        %v1465 = vld [vmem:[%s3 + $0x220] sm:$0xf]
        %v1466 = vld [vmem:[%s3 + $0x224] sm:$0xf]
        %v1467 = vld [vmem:[%s3 + $0x228] sm:$0xf]
        %v1468 = vld [vmem:[%s3 + $0x22c] sm:$0xf]
        %v1469 = vld [vmem:[%s3 + $0x230] sm:$0xf]
        %v1470 = vld [vmem:[%s3 + $0x234] sm:$0xf]
        %v1471 = vld [vmem:[%s3 + $0x238] sm:$0xf]
        %v1472 = vld [vmem:[%s3 + $0x23c] sm:$0xf]
        %v1473 = vld [vmem:[%s3 + $0x240] sm:$0xf]
        %v1474 = vld [vmem:[%s3 + $0x244] sm:$0xf]
        %v1475 = vld [vmem:[%s3 + $0x248] sm:$0xf]
        %v1476 = vld [vmem:[%s3 + $0x24c] sm:$0xf]
        %v1477 = vld [vmem:[%s3 + $0x250] sm:$0xf]
        %v1478 = vld [vmem:[%s3 + $0x254] sm:$0xf]
        %v1479 = vld [vmem:[%s3 + $0x258] sm:$0xf]
        %v1480 = vld [vmem:[%s3 + $0x25c] sm:$0xf]
        %v1481 = vld [vmem:[%s3 + $0x260] sm:$0xf]
        %v1482 = vld [vmem:[%s3 + $0x264] sm:$0xf]
        %v1483 = vld [vmem:[%s3 + $0x268] sm:$0xf]
        %v1484 = vld [vmem:[%s3 + $0x26c] sm:$0xf]
        %v1485 = vld [vmem:[%s3 + $0x270] sm:$0xf]
        %v1486 = vld [vmem:[%s3 + $0x274] sm:$0xf]
        %v1487 = vld [vmem:[%s3 + $0x278] sm:$0xf]
        %v1488 = vld [vmem:[%s3 + $0x27c] sm:$0xf]
        %v1489 = vld [vmem:[%s3 + $0x280] sm:$0xf]
        %v1490 = vld [vmem:[%s3 + $0x284] sm:$0xf]
        %v1491 = vld [vmem:[%s3 + $0x288] sm:$0xf]
        %v1492 = vld [vmem:[%s3 + $0x28c] sm:$0xf]
        %v1493 = vld [vmem:[%s3 + $0x290] sm:$0xf]
        %v1494 = vld [vmem:[%s3 + $0x294] sm:$0xf]
        %v1495 = vld [vmem:[%s3 + $0x298] sm:$0xf]
        %v1496 = vld [vmem:[%s3 + $0x29c] sm:$0xf]
        %v1497 = vld [vmem:[%s3 + $0x2a0] sm:$0xf]
        %v1498 = vld [vmem:[%s3 + $0x2a4] sm:$0xf]
        %v1499 = vld [vmem:[%s3 + $0x2a8] sm:$0xf]
        %v1500 = vld [vmem:[%s3 + $0x2ac] sm:$0xf]
        %v1501 = vld [vmem:[%s3 + $0x2b0] sm:$0xf]
        %v1502 = vld [vmem:[%s3 + $0x2b4] sm:$0xf]
        %v1503 = vld [vmem:[%s3 + $0x2b8] sm:$0xf]
        %v1504 = vld [vmem:[%s3 + $0x2bc] sm:$0xf]
        %v1505 = vld [vmem:[%s3 + $0x2c0] sm:$0xf]
        %v1506 = vld [vmem:[%s3 + $0x2c4] sm:$0xf]
        %v1507 = vld [vmem:[%s3 + $0x2c8] sm:$0xf]
        %v1508 = vld [vmem:[%s3 + $0x2cc] sm:$0xf]
        %v1509 = vld [vmem:[%s3 + $0x2d0] sm:$0xf]
        %v1510 = vld [vmem:[%s3 + $0x2d4] sm:$0xf]
        %v1511 = vld [vmem:[%s3 + $0x2d8] sm:$0xf]
        %v1512 = vld [vmem:[%s3 + $0x2dc] sm:$0xf]
        %v1513 = vld [vmem:[%s3 + $0x2e0] sm:$0xf]
        %v1514 = vld [vmem:[%s3 + $0x2e4] sm:$0xf]
        %v1515 = vld [vmem:[%s3 + $0x2e8] sm:$0xf]
        %v1516 = vld [vmem:[%s3 + $0x2ec] sm:$0xf]
        %v1517 = vld [vmem:[%s3 + $0x2f0] sm:$0xf]
        %v1518 = vld [vmem:[%s3 + $0x2f4] sm:$0xf]
        %v1519 = vld [vmem:[%s3 + $0x2f8] sm:$0xf]
        %v1520 = vld [vmem:[%s3 + $0x2fc] sm:$0xf]
        %v1521 = vld [vmem:[%s3 + $0x300] sm:$0xf]
        %v1522 = vld [vmem:[%s3 + $0x304] sm:$0xf]
        %v1523 = vld [vmem:[%s3 + $0x308] sm:$0xf]
        %v1524 = vld [vmem:[%s3 + $0x30c] sm:$0xf]
        %v1525 = vld [vmem:[%s3 + $0x310] sm:$0xf]
        %v1526 = vld [vmem:[%s3 + $0x314] sm:$0xf]
        %v1527 = vld [vmem:[%s3 + $0x318] sm:$0xf]
        %v1528 = vld [vmem:[%s3 + $0x31c] sm:$0xf]
        %v1529 = vld [vmem:[%s3 + $0x320] sm:$0xf]
        %v1530 = vld [vmem:[%s3 + $0x324] sm:$0xf]
        %v1531 = vld [vmem:[%s3 + $0x328] sm:$0xf]
        %v1532 = vld [vmem:[%s3 + $0x32c] sm:$0xf]
        %v1533 = vld [vmem:[%s3 + $0x330] sm:$0xf]
        %v1534 = vld [vmem:[%s3 + $0x334] sm:$0xf]
        %v1535 = vld [vmem:[%s3 + $0x338] sm:$0xf]
        %v1536 = vld [vmem:[%s3 + $0x33c] sm:$0xf]
        %v1537 = vld [vmem:[%s3 + $0x340] sm:$0xf]
        %v1538 = vld [vmem:[%s3 + $0x344] sm:$0xf]
        %v1539 = vld [vmem:[%s3 + $0x348] sm:$0xf]
        %v1540 = vld [vmem:[%s3 + $0x34c] sm:$0xf]
        %v1541 = vld [vmem:[%s3 + $0x350] sm:$0xf]
        %v1542 = vld [vmem:[%s3 + $0x354] sm:$0xf]
        %v1543 = vld [vmem:[%s3 + $0x358] sm:$0xf]
        %v1544 = vld [vmem:[%s3 + $0x35c] sm:$0xf]
        %v1545 = vld [vmem:[%s3 + $0x360] sm:$0xf]
        %v1546 = vld [vmem:[%s3 + $0x364] sm:$0xf]
        %v1547 = vld [vmem:[%s3 + $0x368] sm:$0xf]
        %v1548 = vld [vmem:[%s3 + $0x36c] sm:$0xf]
        %v1549 = vld [vmem:[%s3 + $0x370] sm:$0xf]
        %v1550 = vld [vmem:[%s3 + $0x374] sm:$0xf]
        %v1551 = vld [vmem:[%s3 + $0x378] sm:$0xf]
        %v1552 = vld [vmem:[%s3 + $0x37c] sm:$0xf]
        %v1553 = vld [vmem:[%s3 + $0x380] sm:$0xf]
        %v1554 = vld [vmem:[%s3 + $0x384] sm:$0xf]
        %v1555 = vld [vmem:[%s3 + $0x388] sm:$0xf]
        %v1556 = vld [vmem:[%s3 + $0x38c] sm:$0xf]
        %v1557 = vld [vmem:[%s3 + $0x390] sm:$0xf]
        %v1558 = vld [vmem:[%s3 + $0x394] sm:$0xf]
        %v1559 = vld [vmem:[%s3 + $0x398] sm:$0xf]
        %v1560 = vld [vmem:[%s3 + $0x39c] sm:$0xf]
        %v1561 = vld [vmem:[%s3 + $0x3a0] sm:$0xf]
        %v1562 = vld [vmem:[%s3 + $0x3a4] sm:$0xf]
        %v1563 = vld [vmem:[%s3 + $0x3a8] sm:$0xf]
        %v1564 = vld [vmem:[%s3 + $0x3ac] sm:$0xf]
        %v1565 = vld [vmem:[%s3 + $0x3b0] sm:$0xf]
        %v1566 = vld [vmem:[%s3 + $0x3b4] sm:$0xf]
        %v1567 = vld [vmem:[%s3 + $0x3b8] sm:$0xf]
        %v1568 = vld [vmem:[%s3 + $0x3bc] sm:$0xf]
        %v1569 = vld [vmem:[%s3 + $0x3c0] sm:$0xf]
        %v1570 = vld [vmem:[%s3 + $0x3c4] sm:$0xf]
        %v1571 = vld [vmem:[%s3 + $0x3c8] sm:$0xf]
        %v1572 = vld [vmem:[%s3 + $0x3cc] sm:$0xf]
        %v1573 = vld [vmem:[%s3 + $0x3d0] sm:$0xf]
        %v1574 = vld [vmem:[%s3 + $0x3d4] sm:$0xf]
        %v1575 = vld [vmem:[%s3 + $0x3d8] sm:$0xf]
        %v1576 = vld [vmem:[%s3 + $0x3dc] sm:$0xf]
        %v1577 = vld [vmem:[%s3 + $0x3e0] sm:$0xf]
        %v1578 = vld [vmem:[%s3 + $0x3e4] sm:$0xf]
        %v1579 = vld [vmem:[%s3 + $0x3e8] sm:$0xf]
        %v1580 = vld [vmem:[%s3 + $0x3ec] sm:$0xf]
        %v1581 = vld [vmem:[%s3 + $0x3f0] sm:$0xf]
        %v1582 = vld [vmem:[%s3 + $0x3f4] sm:$0xf]
        %v1583 = vld [vmem:[%s3 + $0x3f8] sm:$0xf]
        %v1584 = vld [vmem:[%s3 + $0x3fc] sm:$0xf]
        %v1585 = vld [vmem:[%s3 + $0x400] sm:$0xf]
        %v1586 = vld [vmem:[%s3 + $0x404] sm:$0xf]
        %v1587 = vld [vmem:[%s3 + $0x408] sm:$0xf]
        %v1588 = vld [vmem:[%s3 + $0x40c] sm:$0xf]
        %v1589 = vld [vmem:[%s3 + $0x410] sm:$0xf]
        %v1590 = vld [vmem:[%s3 + $0x414] sm:$0xf]
        %v1591 = vld [vmem:[%s3 + $0x418] sm:$0xf]
        %v1592 = vld [vmem:[%s3 + $0x41c] sm:$0xf]
        %v1593 = vld [vmem:[%s3 + $0x420] sm:$0xf]
        %v1594 = vld [vmem:[%s3 + $0x424] sm:$0xf]
        %v1595 = vld [vmem:[%s3 + $0x428] sm:$0xf]
        %v1596 = vld [vmem:[%s3 + $0x42c] sm:$0xf]
        %v1597 = vld [vmem:[%s3 + $0x430] sm:$0xf]
        %v1598 = vld [vmem:[%s3 + $0x434] sm:$0xf]
        %v1599 = vld [vmem:[%s3 + $0x438] sm:$0xf]
        %v1600 = vld [vmem:[%s3 + $0x43c] sm:$0xf]
        %v1601 = vld [vmem:[%s3 + $0x440] sm:$0xf]
        %v1602 = vld [vmem:[%s3 + $0x444] sm:$0xf]
        %v1603 = vld [vmem:[%s3 + $0x448] sm:$0xf]
        %v1604 = vld [vmem:[%s3 + $0x44c] sm:$0xf]
        %v1605 = vld [vmem:[%s3 + $0x450] sm:$0xf]
        %v1606 = vld [vmem:[%s3 + $0x454] sm:$0xf]
        %v1607 = vld [vmem:[%s3 + $0x458] sm:$0xf]
        %v1608 = vld [vmem:[%s3 + $0x45c] sm:$0xf]
        %v1609 = vld [vmem:[%s3 + $0x460] sm:$0xf]
        %v1610 = vld [vmem:[%s3 + $0x464] sm:$0xf]
        %v1611 = vld [vmem:[%s3 + $0x468] sm:$0xf]
        %v1612 = vld [vmem:[%s3 + $0x46c] sm:$0xf]
        %v1613 = vld [vmem:[%s3 + $0x470] sm:$0xf]
        %v1614 = vld [vmem:[%s3 + $0x474] sm:$0xf]
        %v1615 = vld [vmem:[%s3 + $0x478] sm:$0xf]
        %v1616 = vld [vmem:[%s3 + $0x47c] sm:$0xf]
        %v1617 = vld [vmem:[%s3 + $0x480] sm:$0xf]
        %v1618 = vld [vmem:[%s3 + $0x484] sm:$0xf]
        %v1619 = vld [vmem:[%s3 + $0x488] sm:$0xf]
        %v1620 = vld [vmem:[%s3 + $0x48c] sm:$0xf]
        %v1621 = vld [vmem:[%s3 + $0x490] sm:$0xf]
        %v1622 = vld [vmem:[%s3 + $0x494] sm:$0xf]
        %v1623 = vld [vmem:[%s3 + $0x498] sm:$0xf]
        %v1624 = vld [vmem:[%s3 + $0x49c] sm:$0xf]
        %v1625 = vld [vmem:[%s3 + $0x4a0] sm:$0xf]
        %v1626 = vld [vmem:[%s3 + $0x4a4] sm:$0xf]
        %v1627 = vld [vmem:[%s3 + $0x4a8] sm:$0xf]
        %v1628 = vld [vmem:[%s3 + $0x4ac] sm:$0xf]
        %v1629 = vld [vmem:[%s3 + $0x4b0] sm:$0xf]
        %v1630 = vld [vmem:[%s3 + $0x4b4] sm:$0xf]
        %v1631 = vld [vmem:[%s3 + $0x4b8] sm:$0xf]
        %v1632 = vld [vmem:[%s3 + $0x4bc] sm:$0xf]
        %v1633 = vld [vmem:[%s3 + $0x4c0] sm:$0xf]
        %v1634 = vld [vmem:[%s3 + $0x4c4] sm:$0xf]
        %v1635 = vld [vmem:[%s3 + $0x4c8] sm:$0xf]
        %v1636 = vld [vmem:[%s3 + $0x4cc] sm:$0xf]
        %v1637 = vld [vmem:[%s3 + $0x4d0] sm:$0xf]
        %v1638 = vld [vmem:[%s3 + $0x4d4] sm:$0xf]
        %v1639 = vld [vmem:[%s3 + $0x4d8] sm:$0xf]
        %v1640 = vld [vmem:[%s3 + $0x4dc] sm:$0xf]
        %v1641 = vld [vmem:[%s3 + $0x4e0] sm:$0xf]
        %v1642 = vld [vmem:[%s3 + $0x4e4] sm:$0xf]
        %v1643 = vld [vmem:[%s3 + $0x4e8] sm:$0xf]
        %v1644 = vld [vmem:[%s3 + $0x4ec] sm:$0xf]
        %v1645 = vld [vmem:[%s3 + $0x4f0] sm:$0xf]
        %v1646 = vld [vmem:[%s3 + $0x4f4] sm:$0xf]
        %v1647 = vld [vmem:[%s3 + $0x4f8] sm:$0xf]
        %v1648 = vld [vmem:[%s3 + $0x4fc] sm:$0xf]
        %v1649 = vld [vmem:[%s3 + $0x500] sm:$0xf]
        %v1650 = vld [vmem:[%s3 + $0x504] sm:$0xf]
        %v1651 = vld [vmem:[%s3 + $0x508] sm:$0xf]
        %v1652 = vld [vmem:[%s3 + $0x50c] sm:$0xf]
        %v1653 = vld [vmem:[%s3 + $0x510] sm:$0xf]
        %v1654 = vld [vmem:[%s3 + $0x514] sm:$0xf]
        %v1655 = vld [vmem:[%s3 + $0x518] sm:$0xf]
        %v1656 = vld [vmem:[%s3 + $0x51c] sm:$0xf]
        %v1657 = vld [vmem:[%s3 + $0x520] sm:$0xf]
        %v1658 = vld [vmem:[%s3 + $0x524] sm:$0xf]
        %v1659 = vld [vmem:[%s3 + $0x528] sm:$0xf]
        %v1660 = vld [vmem:[%s3 + $0x52c] sm:$0xf]
        %v1661 = vld [vmem:[%s3 + $0x530] sm:$0xf]
        %v1662 = vld [vmem:[%s3 + $0x534] sm:$0xf]
        %v1663 = vld [vmem:[%s3 + $0x538] sm:$0xf]
        %v1664 = vld [vmem:[%s3 + $0x53c] sm:$0xf]
        %v1665 = vld [vmem:[%s3 + $0x540] sm:$0xf]
        %v1666 = vld [vmem:[%s3 + $0x544] sm:$0xf]
        %v1667 = vld [vmem:[%s3 + $0x548] sm:$0xf]
        %v1668 = vld [vmem:[%s3 + $0x54c] sm:$0xf]
        %v1669 = vld [vmem:[%s3 + $0x550] sm:$0xf]
        %v1670 = vld [vmem:[%s3 + $0x554] sm:$0xf]
        %v1671 = vld [vmem:[%s3 + $0x558] sm:$0xf]
        %v1672 = vld [vmem:[%s3 + $0x55c] sm:$0xf]
        %v1673 = vld [vmem:[%s3 + $0x560] sm:$0xf]
        %v1674 = vld [vmem:[%s3 + $0x564] sm:$0xf]
        %v1675 = vld [vmem:[%s3 + $0x568] sm:$0xf]
        %v1676 = vld [vmem:[%s3 + $0x56c] sm:$0xf]
        %v1677 = vld [vmem:[%s3 + $0x570] sm:$0xf]
        %v1678 = vld [vmem:[%s3 + $0x574] sm:$0xf]
        %v1679 = vld [vmem:[%s3 + $0x578] sm:$0xf]
        %v1680 = vld [vmem:[%s3 + $0x57c] sm:$0xf]
        %v1681 = vld [vmem:[%s3 + $0x580] sm:$0xf]
        %v1682 = vld [vmem:[%s3 + $0x584] sm:$0xf]
        %v1683 = vld [vmem:[%s3 + $0x588] sm:$0xf]
        %v1684 = vld [vmem:[%s3 + $0x58c] sm:$0xf]
        %v1685 = vld [vmem:[%s3 + $0x590] sm:$0xf]
        %v1686 = vld [vmem:[%s3 + $0x594] sm:$0xf]
        %v1687 = vld [vmem:[%s3 + $0x598] sm:$0xf]
        %v1688 = vld [vmem:[%s3 + $0x59c] sm:$0xf]
        %v1689 = vld [vmem:[%s3 + $0x5a0] sm:$0xf]
        %v1690 = vld [vmem:[%s3 + $0x5a4] sm:$0xf]
        %v1691 = vld [vmem:[%s3 + $0x5a8] sm:$0xf]
        %v1692 = vld [vmem:[%s3 + $0x5ac] sm:$0xf]
        %v1693 = vld [vmem:[%s3 + $0x5b0] sm:$0xf]
        %v1694 = vld [vmem:[%s3 + $0x5b4] sm:$0xf]
        %v1695 = vld [vmem:[%s3 + $0x5b8] sm:$0xf]
        %v1696 = vld [vmem:[%s3 + $0x5bc] sm:$0xf]
        %v1697 = vld [vmem:[%s3 + $0x5c0] sm:$0xf]
        %v1698 = vld [vmem:[%s3 + $0x5c4] sm:$0xf]
        %v1699 = vld [vmem:[%s3 + $0x5c8] sm:$0xf]
        %v1700 = vld [vmem:[%s3 + $0x5cc] sm:$0xf]
        %v1701 = vld [vmem:[%s3 + $0x5d0] sm:$0xf]
        %v1702 = vld [vmem:[%s3 + $0x5d4] sm:$0xf]
        %v1703 = vld [vmem:[%s3 + $0x5d8] sm:$0xf]
        %v1704 = vld [vmem:[%s3 + $0x5dc] sm:$0xf]
        %v1705 = vld [vmem:[%s3 + $0x5e0] sm:$0xf]
        %v1706 = vld [vmem:[%s3 + $0x5e4] sm:$0xf]
        %v1707 = vld [vmem:[%s3 + $0x5e8] sm:$0xf]
        %v1708 = vld [vmem:[%s3 + $0x5ec] sm:$0xf]
        %v1709 = vld [vmem:[%s3 + $0x5f0] sm:$0xf]
        %v1710 = vld [vmem:[%s3 + $0x5f4] sm:$0xf]
        %v1711 = vld [vmem:[%s3 + $0x5f8] sm:$0xf]
        %v1712 = vld [vmem:[%s3 + $0x5fc] sm:$0xf]
        %v1713 = vld [vmem:[%s3 + $0x600] sm:$0xf]
        %v1714 = vld [vmem:[%s3 + $0x604] sm:$0xf]
        %v1715 = vld [vmem:[%s3 + $0x608] sm:$0xf]
        %v1716 = vld [vmem:[%s3 + $0x60c] sm:$0xf]
        %v1717 = vld [vmem:[%s3 + $0x610] sm:$0xf]
        %v1718 = vld [vmem:[%s3 + $0x614] sm:$0xf]
        %v1719 = vld [vmem:[%s3 + $0x618] sm:$0xf]
        %v1720 = vld [vmem:[%s3 + $0x61c] sm:$0xf]
        %v1721 = vld [vmem:[%s3 + $0x620] sm:$0xf]
        %v1722 = vld [vmem:[%s3 + $0x624] sm:$0xf]
        %v1723 = vld [vmem:[%s3 + $0x628] sm:$0xf]
        %v1724 = vld [vmem:[%s3 + $0x62c] sm:$0xf]
        %v1725 = vld [vmem:[%s3 + $0x630] sm:$0xf]
        %v1726 = vld [vmem:[%s3 + $0x634] sm:$0xf]
        %v1727 = vld [vmem:[%s3 + $0x638] sm:$0xf]
        %v1728 = vld [vmem:[%s3 + $0x63c] sm:$0xf]
        %v2129 = vunpack.c.l.b16 %v1329
        %v2130 = vunpack.c.l.b16 %v1330
        %v2131 = vunpack.c.l.b16 %v1331
        %v2132 = vunpack.c.l.b16 %v1332
        %v2133 = vunpack.c.l.b16 %v1333
        %v2134 = vunpack.c.l.b16 %v1334
        %v2135 = vunpack.c.l.b16 %v1335
        %v2136 = vunpack.c.l.b16 %v1336
        %v2137 = vunpack.c.l.b16 %v1337
        %v2138 = vunpack.c.l.b16 %v1338
        %v2139 = vunpack.c.l.b16 %v1339
        %v2140 = vunpack.c.l.b16 %v1340
        %v2141 = vunpack.c.l.b16 %v1341
        %v2142 = vunpack.c.l.b16 %v1342
        %v2143 = vunpack.c.l.b16 %v1343
        %v2144 = vunpack.c.l.b16 %v1344
        %v2145 = vunpack.c.l.b16 %v1345
        %v2146 = vunpack.c.l.b16 %v1346
        %v2147 = vunpack.c.l.b16 %v1347
        %v2148 = vunpack.c.l.b16 %v1348
        %v2149 = vunpack.c.l.b16 %v1349
        %v2150 = vunpack.c.l.b16 %v1350
        %v2151 = vunpack.c.l.b16 %v1351
        %v2152 = vunpack.c.l.b16 %v1352
        %v2153 = vunpack.c.l.b16 %v1353
        %v2154 = vunpack.c.l.b16 %v1354
        %v2155 = vunpack.c.l.b16 %v1355
        %v2156 = vunpack.c.l.b16 %v1356
        %v2157 = vunpack.c.l.b16 %v1357
        %v2158 = vunpack.c.l.b16 %v1358
        %v2159 = vunpack.c.l.b16 %v1359
        %v2160 = vunpack.c.l.b16 %v1360
        %v2161 = vunpack.c.l.b16 %v1361
        %v2162 = vunpack.c.l.b16 %v1362
        %v2163 = vunpack.c.l.b16 %v1363
        %v2164 = vunpack.c.l.b16 %v1364
        %v2165 = vunpack.c.l.b16 %v1365
        %v2166 = vunpack.c.l.b16 %v1366
        %v2167 = vunpack.c.l.b16 %v1367
        %v2168 = vunpack.c.l.b16 %v1368
        %v2169 = vunpack.c.l.b16 %v1369
        %v2170 = vunpack.c.l.b16 %v1370
        %v2171 = vunpack.c.l.b16 %v1371
        %v2172 = vunpack.c.l.b16 %v1372
        %v2173 = vunpack.c.l.b16 %v1373
        %v2174 = vunpack.c.l.b16 %v1374
        %v2175 = vunpack.c.l.b16 %v1375
        %v2176 = vunpack.c.l.b16 %v1376
        %v2177 = vunpack.c.l.b16 %v1377
        %v2178 = vunpack.c.l.b16 %v1378
        %v2179 = vunpack.c.l.b16 %v1379
        %v2180 = vunpack.c.l.b16 %v1380
        %v2181 = vunpack.c.l.b16 %v1381
        %v2182 = vunpack.c.l.b16 %v1382
        %v2183 = vunpack.c.l.b16 %v1383
        %v2184 = vunpack.c.l.b16 %v1384
        %v2185 = vunpack.c.l.b16 %v1385
        %v2186 = vunpack.c.l.b16 %v1386
        %v2187 = vunpack.c.l.b16 %v1387
        %v2188 = vunpack.c.l.b16 %v1388
        %v2189 = vunpack.c.l.b16 %v1389
        %v2190 = vunpack.c.l.b16 %v1390
        %v2191 = vunpack.c.l.b16 %v1391
        %v2192 = vunpack.c.l.b16 %v1392
        %v2193 = vunpack.c.l.b16 %v1393
        %v2194 = vunpack.c.l.b16 %v1394
        %v2195 = vunpack.c.l.b16 %v1395
        %v2196 = vunpack.c.l.b16 %v1396
        %v2197 = vunpack.c.l.b16 %v1397
        %v2198 = vunpack.c.l.b16 %v1398
        %v2199 = vunpack.c.l.b16 %v1399
        %v2200 = vunpack.c.l.b16 %v1400
        %v2201 = vunpack.c.l.b16 %v1401
        %v2202 = vunpack.c.l.b16 %v1402
        %v2203 = vunpack.c.l.b16 %v1403
        %v2204 = vunpack.c.l.b16 %v1404
        %v2205 = vunpack.c.l.b16 %v1405
        %v2206 = vunpack.c.l.b16 %v1406
        %v2207 = vunpack.c.l.b16 %v1407
        %v2208 = vunpack.c.l.b16 %v1408
        %v2209 = vunpack.c.l.b16 %v1409
        %v2210 = vunpack.c.l.b16 %v1410
        %v2211 = vunpack.c.l.b16 %v1411
        %v2212 = vunpack.c.l.b16 %v1412
        %v2213 = vunpack.c.l.b16 %v1413
        %v2214 = vunpack.c.l.b16 %v1414
        %v2215 = vunpack.c.l.b16 %v1415
        %v2216 = vunpack.c.l.b16 %v1416
        %v2217 = vunpack.c.l.b16 %v1417
        %v2218 = vunpack.c.l.b16 %v1418
        %v2219 = vunpack.c.l.b16 %v1419
        %v2220 = vunpack.c.l.b16 %v1420
        %v2221 = vunpack.c.l.b16 %v1421
        %v2222 = vunpack.c.l.b16 %v1422
        %v2223 = vunpack.c.l.b16 %v1423
        %v2224 = vunpack.c.l.b16 %v1424
        %v2225 = vunpack.c.l.b16 %v1425
        %v2226 = vunpack.c.l.b16 %v1426
        %v2227 = vunpack.c.l.b16 %v1427
        %v2228 = vunpack.c.l.b16 %v1428
        %v2229 = vunpack.c.l.b16 %v1429
        %v2230 = vunpack.c.l.b16 %v1430
        %v2231 = vunpack.c.l.b16 %v1431
        %v2232 = vunpack.c.l.b16 %v1432
        %v2233 = vunpack.c.l.b16 %v1433
        %v2234 = vunpack.c.l.b16 %v1434
        %v2235 = vunpack.c.l.b16 %v1435
        %v2236 = vunpack.c.l.b16 %v1436
        %v2237 = vunpack.c.l.b16 %v1437
        %v2238 = vunpack.c.l.b16 %v1438
        %v2239 = vunpack.c.l.b16 %v1439
        %v2240 = vunpack.c.l.b16 %v1440
        %v2241 = vunpack.c.l.b16 %v1441
        %v2242 = vunpack.c.l.b16 %v1442
        %v2243 = vunpack.c.l.b16 %v1443
        %v2244 = vunpack.c.l.b16 %v1444
        %v2245 = vunpack.c.l.b16 %v1445
        %v2246 = vunpack.c.l.b16 %v1446
        %v2247 = vunpack.c.l.b16 %v1447
        %v2248 = vunpack.c.l.b16 %v1448
        %v2249 = vunpack.c.l.b16 %v1449
        %v2250 = vunpack.c.l.b16 %v1450
        %v2251 = vunpack.c.l.b16 %v1451
        %v2252 = vunpack.c.l.b16 %v1452
        %v2253 = vunpack.c.l.b16 %v1453
        %v2254 = vunpack.c.l.b16 %v1454
        %v2255 = vunpack.c.l.b16 %v1455
        %v2256 = vunpack.c.l.b16 %v1456
        %v2257 = vunpack.c.l.b16 %v1457
        %v2258 = vunpack.c.l.b16 %v1458
        %v2259 = vunpack.c.l.b16 %v1459
        %v2260 = vunpack.c.l.b16 %v1460
        %v2261 = vunpack.c.l.b16 %v1461
        %v2262 = vunpack.c.l.b16 %v1462
        %v2263 = vunpack.c.l.b16 %v1463
        %v2264 = vunpack.c.l.b16 %v1464
        %v2265 = vunpack.c.l.b16 %v1465
        %v2266 = vunpack.c.l.b16 %v1466
        %v2267 = vunpack.c.l.b16 %v1467
        %v2268 = vunpack.c.l.b16 %v1468
        %v2269 = vunpack.c.l.b16 %v1469
        %v2270 = vunpack.c.l.b16 %v1470
        %v2271 = vunpack.c.l.b16 %v1471
        %v2272 = vunpack.c.l.b16 %v1472
        %v2273 = vunpack.c.l.b16 %v1473
        %v2274 = vunpack.c.l.b16 %v1474
        %v2275 = vunpack.c.l.b16 %v1475
        %v2276 = vunpack.c.l.b16 %v1476
        %v2277 = vunpack.c.l.b16 %v1477
        %v2278 = vunpack.c.l.b16 %v1478
        %v2279 = vunpack.c.l.b16 %v1479
        %v2280 = vunpack.c.l.b16 %v1480
        %v2281 = vunpack.c.l.b16 %v1481
        %v2282 = vunpack.c.l.b16 %v1482
        %v2283 = vunpack.c.l.b16 %v1483
        %v2284 = vunpack.c.l.b16 %v1484
        %v2285 = vunpack.c.l.b16 %v1485
        %v2286 = vunpack.c.l.b16 %v1486
        %v2287 = vunpack.c.l.b16 %v1487
        %v2288 = vunpack.c.l.b16 %v1488
        %v2289 = vunpack.c.l.b16 %v1489
        %v2290 = vunpack.c.l.b16 %v1490
        %v2291 = vunpack.c.l.b16 %v1491
        %v2292 = vunpack.c.l.b16 %v1492
        %v2293 = vunpack.c.l.b16 %v1493
        %v2294 = vunpack.c.l.b16 %v1494
        %v2295 = vunpack.c.l.b16 %v1495
        %v2296 = vunpack.c.l.b16 %v1496
        %v2297 = vunpack.c.l.b16 %v1497
        %v2298 = vunpack.c.l.b16 %v1498
        %v2299 = vunpack.c.l.b16 %v1499
        %v2300 = vunpack.c.l.b16 %v1500
        %v2301 = vunpack.c.l.b16 %v1501
        %v2302 = vunpack.c.l.b16 %v1502
        %v2303 = vunpack.c.l.b16 %v1503
        %v2304 = vunpack.c.l.b16 %v1504
        %v2305 = vunpack.c.l.b16 %v1505
        %v2306 = vunpack.c.l.b16 %v1506
        %v2307 = vunpack.c.l.b16 %v1507
        %v2308 = vunpack.c.l.b16 %v1508
        %v2309 = vunpack.c.l.b16 %v1509
        %v2310 = vunpack.c.l.b16 %v1510
        %v2311 = vunpack.c.l.b16 %v1511
        %v2312 = vunpack.c.l.b16 %v1512
        %v2313 = vunpack.c.l.b16 %v1513
        %v2314 = vunpack.c.l.b16 %v1514
        %v2315 = vunpack.c.l.b16 %v1515
        %v2316 = vunpack.c.l.b16 %v1516
        %v2317 = vunpack.c.l.b16 %v1517
        %v2318 = vunpack.c.l.b16 %v1518
        %v2319 = vunpack.c.l.b16 %v1519
        %v2320 = vunpack.c.l.b16 %v1520
        %v2321 = vunpack.c.l.b16 %v1521
        %v2322 = vunpack.c.l.b16 %v1522
        %v2323 = vunpack.c.l.b16 %v1523
        %v2324 = vunpack.c.l.b16 %v1524
        %v2325 = vunpack.c.l.b16 %v1525
        %v2326 = vunpack.c.l.b16 %v1526
        %v2327 = vunpack.c.l.b16 %v1527
        %v2328 = vunpack.c.l.b16 %v1528
        %v2329 = vunpack.c.l.b16 %v1529
        %v2330 = vunpack.c.l.b16 %v1530
        %v2331 = vunpack.c.l.b16 %v1531
        %v2332 = vunpack.c.l.b16 %v1532
        %v2333 = vunpack.c.l.b16 %v1533
        %v2334 = vunpack.c.l.b16 %v1534
        %v2335 = vunpack.c.l.b16 %v1535
        %v2336 = vunpack.c.l.b16 %v1536
        %v2337 = vunpack.c.l.b16 %v1537
        %v2338 = vunpack.c.l.b16 %v1538
        %v2339 = vunpack.c.l.b16 %v1539
        %v2340 = vunpack.c.l.b16 %v1540
        %v2341 = vunpack.c.l.b16 %v1541
        %v2342 = vunpack.c.l.b16 %v1542
        %v2343 = vunpack.c.l.b16 %v1543
        %v2344 = vunpack.c.l.b16 %v1544
        %v2345 = vunpack.c.l.b16 %v1545
        %v2346 = vunpack.c.l.b16 %v1546
        %v2347 = vunpack.c.l.b16 %v1547
        %v2348 = vunpack.c.l.b16 %v1548
        %v2349 = vunpack.c.l.b16 %v1549
        %v2350 = vunpack.c.l.b16 %v1550
        %v2351 = vunpack.c.l.b16 %v1551
        %v2352 = vunpack.c.l.b16 %v1552
        %v2353 = vunpack.c.l.b16 %v1553
        %v2354 = vunpack.c.l.b16 %v1554
        %v2355 = vunpack.c.l.b16 %v1555
        %v2356 = vunpack.c.l.b16 %v1556
        %v2357 = vunpack.c.l.b16 %v1557
        %v2358 = vunpack.c.l.b16 %v1558
        %v2359 = vunpack.c.l.b16 %v1559
        %v2360 = vunpack.c.l.b16 %v1560
        %v2361 = vunpack.c.l.b16 %v1561
        %v2362 = vunpack.c.l.b16 %v1562
        %v2363 = vunpack.c.l.b16 %v1563
        %v2364 = vunpack.c.l.b16 %v1564
        %v2365 = vunpack.c.l.b16 %v1565
        %v2366 = vunpack.c.l.b16 %v1566
        %v2367 = vunpack.c.l.b16 %v1567
        %v2368 = vunpack.c.l.b16 %v1568
        %v2369 = vunpack.c.l.b16 %v1569
        %v2370 = vunpack.c.l.b16 %v1570
        %v2371 = vunpack.c.l.b16 %v1571
        %v2372 = vunpack.c.l.b16 %v1572
        %v2373 = vunpack.c.l.b16 %v1573
        %v2374 = vunpack.c.l.b16 %v1574
        %v2375 = vunpack.c.l.b16 %v1575
        %v2376 = vunpack.c.l.b16 %v1576
        %v2377 = vunpack.c.l.b16 %v1577
        %v2378 = vunpack.c.l.b16 %v1578
        %v2379 = vunpack.c.l.b16 %v1579
        %v2380 = vunpack.c.l.b16 %v1580
        %v2381 = vunpack.c.l.b16 %v1581
        %v2382 = vunpack.c.l.b16 %v1582
        %v2383 = vunpack.c.l.b16 %v1583
        %v2384 = vunpack.c.l.b16 %v1584
        %v2385 = vunpack.c.l.b16 %v1585
        %v2386 = vunpack.c.l.b16 %v1586
        %v2387 = vunpack.c.l.b16 %v1587
        %v2388 = vunpack.c.l.b16 %v1588
        %v2389 = vunpack.c.l.b16 %v1589
        %v2390 = vunpack.c.l.b16 %v1590
        %v2391 = vunpack.c.l.b16 %v1591
        %v2392 = vunpack.c.l.b16 %v1592
        %v2393 = vunpack.c.l.b16 %v1593
        %v2394 = vunpack.c.l.b16 %v1594
        %v2395 = vunpack.c.l.b16 %v1595
        %v2396 = vunpack.c.l.b16 %v1596
        %v2397 = vunpack.c.l.b16 %v1597
        %v2398 = vunpack.c.l.b16 %v1598
        %v2399 = vunpack.c.l.b16 %v1599
        %v2400 = vunpack.c.l.b16 %v1600
        %v2401 = vunpack.c.l.b16 %v1601
        %v2402 = vunpack.c.l.b16 %v1602
        %v2403 = vunpack.c.l.b16 %v1603
        %v2404 = vunpack.c.l.b16 %v1604
        %v2405 = vunpack.c.l.b16 %v1605
        %v2406 = vunpack.c.l.b16 %v1606
        %v2407 = vunpack.c.l.b16 %v1607
        %v2408 = vunpack.c.l.b16 %v1608
        %v2409 = vunpack.c.l.b16 %v1609
        %v2410 = vunpack.c.l.b16 %v1610
        %v2411 = vunpack.c.l.b16 %v1611
        %v2412 = vunpack.c.l.b16 %v1612
        %v2413 = vunpack.c.l.b16 %v1613
        %v2414 = vunpack.c.l.b16 %v1614
        %v2415 = vunpack.c.l.b16 %v1615
        %v2416 = vunpack.c.l.b16 %v1616
        %v2417 = vunpack.c.l.b16 %v1617
        %v2418 = vunpack.c.l.b16 %v1618
        %v2419 = vunpack.c.l.b16 %v1619
        %v2420 = vunpack.c.l.b16 %v1620
        %v2421 = vunpack.c.l.b16 %v1621
        %v2422 = vunpack.c.l.b16 %v1622
        %v2423 = vunpack.c.l.b16 %v1623
        %v2424 = vunpack.c.l.b16 %v1624
        %v2425 = vunpack.c.l.b16 %v1625
        %v2426 = vunpack.c.l.b16 %v1626
        %v2427 = vunpack.c.l.b16 %v1627
        %v2428 = vunpack.c.l.b16 %v1628
        %v2429 = vunpack.c.l.b16 %v1629
        %v2430 = vunpack.c.l.b16 %v1630
        %v2431 = vunpack.c.l.b16 %v1631
        %v2432 = vunpack.c.l.b16 %v1632
        %v2433 = vunpack.c.l.b16 %v1633
        %v2434 = vunpack.c.l.b16 %v1634
        %v2435 = vunpack.c.l.b16 %v1635
        %v2436 = vunpack.c.l.b16 %v1636
        %v2437 = vunpack.c.l.b16 %v1637
        %v2438 = vunpack.c.l.b16 %v1638
        %v2439 = vunpack.c.l.b16 %v1639
        %v2440 = vunpack.c.l.b16 %v1640
        %v2441 = vunpack.c.l.b16 %v1641
        %v2442 = vunpack.c.l.b16 %v1642
        %v2443 = vunpack.c.l.b16 %v1643
        %v2444 = vunpack.c.l.b16 %v1644
        %v2445 = vunpack.c.l.b16 %v1645
        %v2446 = vunpack.c.l.b16 %v1646
        %v2447 = vunpack.c.l.b16 %v1647
        %v2448 = vunpack.c.l.b16 %v1648
        %v2449 = vunpack.c.l.b16 %v1649
        %v2450 = vunpack.c.l.b16 %v1650
        %v2451 = vunpack.c.l.b16 %v1651
        %v2452 = vunpack.c.l.b16 %v1652
        %v2453 = vunpack.c.l.b16 %v1653
        %v2454 = vunpack.c.l.b16 %v1654
        %v2455 = vunpack.c.l.b16 %v1655
        %v2456 = vunpack.c.l.b16 %v1656
        %v2457 = vunpack.c.l.b16 %v1657
        %v2458 = vunpack.c.l.b16 %v1658
        %v2459 = vunpack.c.l.b16 %v1659
        %v2460 = vunpack.c.l.b16 %v1660
        %v2461 = vunpack.c.l.b16 %v1661
        %v2462 = vunpack.c.l.b16 %v1662
        %v2463 = vunpack.c.l.b16 %v1663
        %v2464 = vunpack.c.l.b16 %v1664
        %v2465 = vunpack.c.l.b16 %v1665
        %v2466 = vunpack.c.l.b16 %v1666
        %v2467 = vunpack.c.l.b16 %v1667
        %v2468 = vunpack.c.l.b16 %v1668
        %v2469 = vunpack.c.l.b16 %v1669
        %v2470 = vunpack.c.l.b16 %v1670
        %v2471 = vunpack.c.l.b16 %v1671
        %v2472 = vunpack.c.l.b16 %v1672
        %v2473 = vunpack.c.l.b16 %v1673
        %v2474 = vunpack.c.l.b16 %v1674
        %v2475 = vunpack.c.l.b16 %v1675
        %v2476 = vunpack.c.l.b16 %v1676
        %v2477 = vunpack.c.l.b16 %v1677
        %v2478 = vunpack.c.l.b16 %v1678
        %v2479 = vunpack.c.l.b16 %v1679
        %v2480 = vunpack.c.l.b16 %v1680
        %v2481 = vunpack.c.l.b16 %v1681
        %v2482 = vunpack.c.l.b16 %v1682
        %v2483 = vunpack.c.l.b16 %v1683
        %v2484 = vunpack.c.l.b16 %v1684
        %v2485 = vunpack.c.l.b16 %v1685
        %v2486 = vunpack.c.l.b16 %v1686
        %v2487 = vunpack.c.l.b16 %v1687
        %v2488 = vunpack.c.l.b16 %v1688
        %v2489 = vunpack.c.l.b16 %v1689
        %v2490 = vunpack.c.l.b16 %v1690
        %v2491 = vunpack.c.l.b16 %v1691
        %v2492 = vunpack.c.l.b16 %v1692
        %v2493 = vunpack.c.l.b16 %v1693
        %v2494 = vunpack.c.l.b16 %v1694
        %v2495 = vunpack.c.l.b16 %v1695
        %v2496 = vunpack.c.l.b16 %v1696
        %v2497 = vunpack.c.l.b16 %v1697
        %v2498 = vunpack.c.l.b16 %v1698
        %v2499 = vunpack.c.l.b16 %v1699
        %v2500 = vunpack.c.l.b16 %v1700
        %v2501 = vunpack.c.l.b16 %v1701
        %v2502 = vunpack.c.l.b16 %v1702
        %v2503 = vunpack.c.l.b16 %v1703
        %v2504 = vunpack.c.l.b16 %v1704
        %v2505 = vunpack.c.l.b16 %v1705
        %v2506 = vunpack.c.l.b16 %v1706
        %v2507 = vunpack.c.l.b16 %v1707
        %v2508 = vunpack.c.l.b16 %v1708
        %v2509 = vunpack.c.l.b16 %v1709
        %v2510 = vunpack.c.l.b16 %v1710
        %v2511 = vunpack.c.l.b16 %v1711
        %v2512 = vunpack.c.l.b16 %v1712
        %v2513 = vunpack.c.l.b16 %v1713
        %v2514 = vunpack.c.l.b16 %v1714
        %v2515 = vunpack.c.l.b16 %v1715
        %v2516 = vunpack.c.l.b16 %v1716
        %v2517 = vunpack.c.l.b16 %v1717
        %v2518 = vunpack.c.l.b16 %v1718
        %v2519 = vunpack.c.l.b16 %v1719
        %v2520 = vunpack.c.l.b16 %v1720
        %v2521 = vunpack.c.l.b16 %v1721
        %v2522 = vunpack.c.l.b16 %v1722
        %v2523 = vunpack.c.l.b16 %v1723
        %v2524 = vunpack.c.l.b16 %v1724
        %v2525 = vunpack.c.l.b16 %v1725
        %v2526 = vunpack.c.l.b16 %v1726
        %v2527 = vunpack.c.l.b16 %v1727
        %v2528 = vunpack.c.l.b16 %v1728
        %v2529 = vpack.c.b16 %v2130, %v2129
        %v2530 = vpack.c.b16 %v2132, %v2131
        %v2531 = vpack.c.b16 %v2134, %v2133
        %v2532 = vpack.c.b16 %v2136, %v2135
        %v2533 = vpack.c.b16 %v2138, %v2137
        %v2534 = vpack.c.b16 %v2140, %v2139
        %v2535 = vpack.c.b16 %v2142, %v2141
        %v2536 = vpack.c.b16 %v2144, %v2143
        %v2537 = vpack.c.b16 %v2146, %v2145
        %v2538 = vpack.c.b16 %v2148, %v2147
        %v2539 = vpack.c.b16 %v2150, %v2149
        %v2540 = vpack.c.b16 %v2152, %v2151
        %v2541 = vpack.c.b16 %v2154, %v2153
        %v2542 = vpack.c.b16 %v2156, %v2155
        %v2543 = vpack.c.b16 %v2158, %v2157
        %v2544 = vpack.c.b16 %v2160, %v2159
        %v2545 = vpack.c.b16 %v2162, %v2161
        %v2546 = vpack.c.b16 %v2164, %v2163
        %v2547 = vpack.c.b16 %v2166, %v2165
        %v2548 = vpack.c.b16 %v2168, %v2167
        %v2549 = vpack.c.b16 %v2170, %v2169
        %v2550 = vpack.c.b16 %v2172, %v2171
        %v2551 = vpack.c.b16 %v2174, %v2173
        %v2552 = vpack.c.b16 %v2176, %v2175
        %v2553 = vpack.c.b16 %v2178, %v2177
        %v2554 = vpack.c.b16 %v2180, %v2179
        %v2555 = vpack.c.b16 %v2182, %v2181
        %v2556 = vpack.c.b16 %v2184, %v2183
        %v2557 = vpack.c.b16 %v2186, %v2185
        %v2558 = vpack.c.b16 %v2188, %v2187
        %v2559 = vpack.c.b16 %v2190, %v2189
        %v2560 = vpack.c.b16 %v2192, %v2191
        %v2561 = vpack.c.b16 %v2194, %v2193
        %v2562 = vpack.c.b16 %v2196, %v2195
        %v2563 = vpack.c.b16 %v2198, %v2197
        %v2564 = vpack.c.b16 %v2200, %v2199
        %v2565 = vpack.c.b16 %v2202, %v2201
        %v2566 = vpack.c.b16 %v2204, %v2203
        %v2567 = vpack.c.b16 %v2206, %v2205
        %v2568 = vpack.c.b16 %v2208, %v2207
        %v2569 = vpack.c.b16 %v2210, %v2209
        %v2570 = vpack.c.b16 %v2212, %v2211
        %v2571 = vpack.c.b16 %v2214, %v2213
        %v2572 = vpack.c.b16 %v2216, %v2215
        %v2573 = vpack.c.b16 %v2218, %v2217
        %v2574 = vpack.c.b16 %v2220, %v2219
        %v2575 = vpack.c.b16 %v2222, %v2221
        %v2576 = vpack.c.b16 %v2224, %v2223
        %v2577 = vpack.c.b16 %v2226, %v2225
        %v2578 = vpack.c.b16 %v2228, %v2227
        %v2579 = vpack.c.b16 %v2230, %v2229
        %v2580 = vpack.c.b16 %v2232, %v2231
        %v2581 = vpack.c.b16 %v2234, %v2233
        %v2582 = vpack.c.b16 %v2236, %v2235
        %v2583 = vpack.c.b16 %v2238, %v2237
        %v2584 = vpack.c.b16 %v2240, %v2239
        %v2585 = vpack.c.b16 %v2242, %v2241
        %v2586 = vpack.c.b16 %v2244, %v2243
        %v2587 = vpack.c.b16 %v2246, %v2245
        %v2588 = vpack.c.b16 %v2248, %v2247
        %v2589 = vpack.c.b16 %v2250, %v2249
        %v2590 = vpack.c.b16 %v2252, %v2251
        %v2591 = vpack.c.b16 %v2254, %v2253
        %v2592 = vpack.c.b16 %v2256, %v2255
        %v2593 = vpack.c.b16 %v2258, %v2257
        %v2594 = vpack.c.b16 %v2260, %v2259
        %v2595 = vpack.c.b16 %v2262, %v2261
        %v2596 = vpack.c.b16 %v2264, %v2263
        %v2597 = vpack.c.b16 %v2266, %v2265
        %v2598 = vpack.c.b16 %v2268, %v2267
        %v2599 = vpack.c.b16 %v2270, %v2269
        %v2600 = vpack.c.b16 %v2272, %v2271
        %v2601 = vpack.c.b16 %v2274, %v2273
        %v2602 = vpack.c.b16 %v2276, %v2275
        %v2603 = vpack.c.b16 %v2278, %v2277
        %v2604 = vpack.c.b16 %v2280, %v2279
        %v2605 = vpack.c.b16 %v2282, %v2281
        %v2606 = vpack.c.b16 %v2284, %v2283
        %v2607 = vpack.c.b16 %v2286, %v2285
        %v2608 = vpack.c.b16 %v2288, %v2287
        %v2609 = vpack.c.b16 %v2290, %v2289
        %v2610 = vpack.c.b16 %v2292, %v2291
        %v2611 = vpack.c.b16 %v2294, %v2293
        %v2612 = vpack.c.b16 %v2296, %v2295
        %v2613 = vpack.c.b16 %v2298, %v2297
        %v2614 = vpack.c.b16 %v2300, %v2299
        %v2615 = vpack.c.b16 %v2302, %v2301
        %v2616 = vpack.c.b16 %v2304, %v2303
        %v2617 = vpack.c.b16 %v2306, %v2305
        %v2618 = vpack.c.b16 %v2308, %v2307
        %v2619 = vpack.c.b16 %v2310, %v2309
        %v2620 = vpack.c.b16 %v2312, %v2311
        %v2621 = vpack.c.b16 %v2314, %v2313
        %v2622 = vpack.c.b16 %v2316, %v2315
        %v2623 = vpack.c.b16 %v2318, %v2317
        %v2624 = vpack.c.b16 %v2320, %v2319
        %v2625 = vpack.c.b16 %v2322, %v2321
        %v2626 = vpack.c.b16 %v2324, %v2323
        %v2627 = vpack.c.b16 %v2326, %v2325
        %v2628 = vpack.c.b16 %v2328, %v2327
        %v2629 = vpack.c.b16 %v2330, %v2329
        %v2630 = vpack.c.b16 %v2332, %v2331
        %v2631 = vpack.c.b16 %v2334, %v2333
        %v2632 = vpack.c.b16 %v2336, %v2335
        %v2633 = vpack.c.b16 %v2338, %v2337
        %v2634 = vpack.c.b16 %v2340, %v2339
        %v2635 = vpack.c.b16 %v2342, %v2341
        %v2636 = vpack.c.b16 %v2344, %v2343
        %v2637 = vpack.c.b16 %v2346, %v2345
        %v2638 = vpack.c.b16 %v2348, %v2347
        %v2639 = vpack.c.b16 %v2350, %v2349
        %v2640 = vpack.c.b16 %v2352, %v2351
        %v2641 = vpack.c.b16 %v2354, %v2353
        %v2642 = vpack.c.b16 %v2356, %v2355
        %v2643 = vpack.c.b16 %v2358, %v2357
        %v2644 = vpack.c.b16 %v2360, %v2359
        %v2645 = vpack.c.b16 %v2362, %v2361
        %v2646 = vpack.c.b16 %v2364, %v2363
        %v2647 = vpack.c.b16 %v2366, %v2365
        %v2648 = vpack.c.b16 %v2368, %v2367
        %v2649 = vpack.c.b16 %v2370, %v2369
        %v2650 = vpack.c.b16 %v2372, %v2371
        %v2651 = vpack.c.b16 %v2374, %v2373
        %v2652 = vpack.c.b16 %v2376, %v2375
        %v2653 = vpack.c.b16 %v2378, %v2377
        %v2654 = vpack.c.b16 %v2380, %v2379
        %v2655 = vpack.c.b16 %v2382, %v2381
        %v2656 = vpack.c.b16 %v2384, %v2383
        %v2657 = vpack.c.b16 %v2386, %v2385
        %v2658 = vpack.c.b16 %v2388, %v2387
        %v2659 = vpack.c.b16 %v2390, %v2389
        %v2660 = vpack.c.b16 %v2392, %v2391
        %v2661 = vpack.c.b16 %v2394, %v2393
        %v2662 = vpack.c.b16 %v2396, %v2395
        %v2663 = vpack.c.b16 %v2398, %v2397
        %v2664 = vpack.c.b16 %v2400, %v2399
        %v2665 = vpack.c.b16 %v2402, %v2401
        %v2666 = vpack.c.b16 %v2404, %v2403
        %v2667 = vpack.c.b16 %v2406, %v2405
        %v2668 = vpack.c.b16 %v2408, %v2407
        %v2669 = vpack.c.b16 %v2410, %v2409
        %v2670 = vpack.c.b16 %v2412, %v2411
        %v2671 = vpack.c.b16 %v2414, %v2413
        %v2672 = vpack.c.b16 %v2416, %v2415
        %v2673 = vpack.c.b16 %v2418, %v2417
        %v2674 = vpack.c.b16 %v2420, %v2419
        %v2675 = vpack.c.b16 %v2422, %v2421
        %v2676 = vpack.c.b16 %v2424, %v2423
        %v2677 = vpack.c.b16 %v2426, %v2425
        %v2678 = vpack.c.b16 %v2428, %v2427
        %v2679 = vpack.c.b16 %v2430, %v2429
        %v2680 = vpack.c.b16 %v2432, %v2431
        %v2681 = vpack.c.b16 %v2434, %v2433
        %v2682 = vpack.c.b16 %v2436, %v2435
        %v2683 = vpack.c.b16 %v2438, %v2437
        %v2684 = vpack.c.b16 %v2440, %v2439
        %v2685 = vpack.c.b16 %v2442, %v2441
        %v2686 = vpack.c.b16 %v2444, %v2443
        %v2687 = vpack.c.b16 %v2446, %v2445
        %v2688 = vpack.c.b16 %v2448, %v2447
        %v2689 = vpack.c.b16 %v2450, %v2449
        %v2690 = vpack.c.b16 %v2452, %v2451
        %v2691 = vpack.c.b16 %v2454, %v2453
        %v2692 = vpack.c.b16 %v2456, %v2455
        %v2693 = vpack.c.b16 %v2458, %v2457
        %v2694 = vpack.c.b16 %v2460, %v2459
        %v2695 = vpack.c.b16 %v2462, %v2461
        %v2696 = vpack.c.b16 %v2464, %v2463
        %v2697 = vpack.c.b16 %v2466, %v2465
        %v2698 = vpack.c.b16 %v2468, %v2467
        %v2699 = vpack.c.b16 %v2470, %v2469
        %v2700 = vpack.c.b16 %v2472, %v2471
        %v2701 = vpack.c.b16 %v2474, %v2473
        %v2702 = vpack.c.b16 %v2476, %v2475
        %v2703 = vpack.c.b16 %v2478, %v2477
        %v2704 = vpack.c.b16 %v2480, %v2479
        %v2705 = vpack.c.b16 %v2482, %v2481
        %v2706 = vpack.c.b16 %v2484, %v2483
        %v2707 = vpack.c.b16 %v2486, %v2485
        %v2708 = vpack.c.b16 %v2488, %v2487
        %v2709 = vpack.c.b16 %v2490, %v2489
        %v2710 = vpack.c.b16 %v2492, %v2491
        %v2711 = vpack.c.b16 %v2494, %v2493
        %v2712 = vpack.c.b16 %v2496, %v2495
        %v2713 = vpack.c.b16 %v2498, %v2497
        %v2714 = vpack.c.b16 %v2500, %v2499
        %v2715 = vpack.c.b16 %v2502, %v2501
        %v2716 = vpack.c.b16 %v2504, %v2503
        %v2717 = vpack.c.b16 %v2506, %v2505
        %v2718 = vpack.c.b16 %v2508, %v2507
        %v2719 = vpack.c.b16 %v2510, %v2509
        %v2720 = vpack.c.b16 %v2512, %v2511
        %v2721 = vpack.c.b16 %v2514, %v2513
        %v2722 = vpack.c.b16 %v2516, %v2515
        %v2723 = vpack.c.b16 %v2518, %v2517
        %v2724 = vpack.c.b16 %v2520, %v2519
        %v2725 = vpack.c.b16 %v2522, %v2521
        %v2726 = vpack.c.b16 %v2524, %v2523
        %v2727 = vpack.c.b16 %v2526, %v2525
        %v2728 = vpack.c.b16 %v2528, %v2527
        %2929 = vmatprep.subr.bf16.mxu0 0
        %2930 = vmatpush1.bf16.msra.mxu0 %v2529
        %2931 = vmatprep.subr.bf16.mxu0 0
        %2932 = vmatpush1.bf16.msra.mxu0 %v2530
        %2933 = vmatprep.subr.bf16.mxu0 0
        %2934 = vmatpush1.bf16.msra.mxu0 %v2531
        %2935 = vmatprep.subr.bf16.mxu0 0
        %2936 = vmatpush1.bf16.msra.mxu0 %v2532
        %2937 = vmatprep.subr.bf16.mxu0 0
        %2938 = vmatpush1.bf16.msra.mxu0 %v2533
        %2939 = vmatprep.subr.bf16.mxu0 0
        %2940 = vmatpush1.bf16.msra.mxu0 %v2534
        %2941 = vmatprep.subr.bf16.mxu0 0
        %2942 = vmatpush1.bf16.msra.mxu0 %v2535
        %2943 = vmatprep.subr.bf16.mxu0 0
        %2944 = vmatpush1.bf16.msra.mxu0 %v2536
        %2945 = vmatprep.subr.bf16.mxu0 0
        %2946 = vmatpush1.bf16.msra.mxu0 %v2537
        %2947 = vmatprep.subr.bf16.mxu0 0
        %2948 = vmatpush1.bf16.msra.mxu0 %v2538
        %2949 = vmatprep.subr.bf16.mxu0 0
        %2950 = vmatpush1.bf16.msra.mxu0 %v2539
        %2951 = vmatprep.subr.bf16.mxu0 0
        %2952 = vmatpush1.bf16.msra.mxu0 %v2540
        %2953 = vmatprep.subr.bf16.mxu0 0
        %2954 = vmatpush1.bf16.msra.mxu0 %v2541
        %2955 = vmatprep.subr.bf16.mxu0 0
        %2956 = vmatpush1.bf16.msra.mxu0 %v2542
        %2957 = vmatprep.subr.bf16.mxu0 0
        %2958 = vmatpush1.bf16.msra.mxu0 %v2543
        %2959 = vmatprep.subr.bf16.mxu0 0
        %2960 = vmatpush1.bf16.msra.mxu0 %v2544
        %2961 = vmatprep.mubr.bf16.mxu0 %v1107
        %2962 = vmatmul.mubr.bf16.gmra.mrb[0].mxu0 %v1054
        %v2963 = vpop.f32.mrb[0].mxu0
        %v2964 = vadd.f32 0.0, %v2963
        %v2965 = vpop.f32.mrb[0].mxu0
        %v2966 = vpop.f32.mrb[0].mxu0
        %v2967 = vadd.f32 0.0, %v2966
        %v2968 = vpop.f32.mrb[0].mxu0
        %2969 = vmatprep.mubr.bf16.mxu0 %v1108
        %2970 = vmatmul.mubr.bf16.gmra.mrb[0].mxu0 %v1055
        %v2971 = vpop.f32.mrb[0].mxu0
        %v2972 = vadd.f32 0.0, %v2971
        %v2973 = vpop.f32.mrb[0].mxu0
        %v2974 = vpop.f32.mrb[0].mxu0
        %v2975 = vadd.f32 0.0, %v2974
        %v2976 = vpop.f32.mrb[0].mxu0
        %2977 = vmatprep.mubr.bf16.mxu0 %v1109
        %2978 = vmatmul.mubr.bf16.gmra.mrb[0].mxu0 %v1056
        %v2979 = vpop.f32.mrb[0].mxu0
        %v2980 = vadd.f32 0.0, %v2979
        %v2981 = vpop.f32.mrb[0].mxu0
        %v2982 = vpop.f32.mrb[0].mxu0
        %v2983 = vadd.f32 0.0, %v2982
        %v2984 = vpop.f32.mrb[0].mxu0
        %2985 = vmatprep.mubr.bf16.mxu0 %v1110
        %2986 = vmatmul.mubr.bf16.gmra.mrb[0].mxu0 %v1057
        %v2987 = vpop.f32.mrb[0].mxu0
        %v2988 = vadd.f32 0.0, %v2987
        %v2989 = vpop.f32.mrb[0].mxu0
        %v2990 = vpop.f32.mrb[0].mxu0
        %v2991 = vadd.f32 0.0, %v2990
        %v2992 = vpop.f32.mrb[0].mxu0
        %2993 = vdwg.mxu0
        %2994 = vmatprep.subr.bf16.mxu0 0
        %2995 = vmatpush1.bf16.msra.mxu0 %v2545
        %2996 = vmatprep.subr.bf16.mxu0 0
        %2997 = vmatpush1.bf16.msra.mxu0 %v2546
        %2998 = vmatprep.subr.bf16.mxu0 0
        %2999 = vmatpush1.bf16.msra.mxu0 %v2547
        %3000 = vmatprep.subr.bf16.mxu0 0
        %3001 = vmatpush1.bf16.msra.mxu0 %v2548
        %3002 = vmatprep.subr.bf16.mxu0 0
        %3003 = vmatpush1.bf16.msra.mxu0 %v2549
        %3004 = vmatprep.subr.bf16.mxu0 0
        %3005 = vmatpush1.bf16.msra.mxu0 %v2550
        %3006 = vmatprep.subr.bf16.mxu0 0
        %3007 = vmatpush1.bf16.msra.mxu0 %v2551
        %3008 = vmatprep.subr.bf16.mxu0 0
        %3009 = vmatpush1.bf16.msra.mxu0 %v2552
        %3010 = vmatprep.subr.bf16.mxu0 0
        %3011 = vmatpush1.bf16.msra.mxu0 %v2553
        %3012 = vmatprep.subr.bf16.mxu0 0
        %3013 = vmatpush1.bf16.msra.mxu0 %v2554
        %3014 = vmatprep.subr.bf16.mxu0 0
        %3015 = vmatpush1.bf16.msra.mxu0 %v2555
        %3016 = vmatprep.subr.bf16.mxu0 0
        %3017 = vmatpush1.bf16.msra.mxu0 %v2556
        %3018 = vmatprep.subr.bf16.mxu0 0
        %3019 = vmatpush1.bf16.msra.mxu0 %v2557
        %3020 = vmatprep.subr.bf16.mxu0 0
        %3021 = vmatpush1.bf16.msra.mxu0 %v2558
        %3022 = vmatprep.subr.bf16.mxu0 0
        %3023 = vmatpush1.bf16.msra.mxu0 %v2559
        %3024 = vmatprep.subr.bf16.mxu0 0
        %3025 = vmatpush1.bf16.msra.mxu0 %v2560
        %3026 = vmatprep.mubr.bf16.mxu0 %v1181
        %3027 = vmatmul.mubr.bf16.gmra.mrb[0].mxu0 %v1144
        %v3028 = vpop.f32.mrb[0].mxu0
        %v3029 = vadd.f32 %v2964, %v3028
        %v3030 = vpop.f32.mrb[0].mxu0
        %v3031 = vpop.f32.mrb[0].mxu0
        %v3032 = vadd.f32 %v2967, %v3031
        %v3033 = vpop.f32.mrb[0].mxu0
        %3034 = vmatprep.mubr.bf16.mxu0 %v1182
        %3035 = vmatmul.mubr.bf16.gmra.mrb[0].mxu0 %v1145
        %v3036 = vpop.f32.mrb[0].mxu0
        %v3037 = vadd.f32 %v2972, %v3036
        %v3038 = vpop.f32.mrb[0].mxu0
        %v3039 = vpop.f32.mrb[0].mxu0
        %v3040 = vadd.f32 %v2975, %v3039
        %v3041 = vpop.f32.mrb[0].mxu0
        %3042 = vmatprep.mubr.bf16.mxu0 %v1183
        %3043 = vmatmul.mubr.bf16.gmra.mrb[0].mxu0 %v1146
        %v3044 = vpop.f32.mrb[0].mxu0
        %v3045 = vadd.f32 %v2980, %v3044
        %v3046 = vpop.f32.mrb[0].mxu0
        %v3047 = vpop.f32.mrb[0].mxu0
        %v3048 = vadd.f32 %v2983, %v3047
        %v3049 = vpop.f32.mrb[0].mxu0
        %3050 = vmatprep.mubr.bf16.mxu0 %v1184
        %3051 = vmatmul.mubr.bf16.gmra.mrb[0].mxu0 %v1147
        %v3052 = vpop.f32.mrb[0].mxu0
        %v3053 = vadd.f32 %v2988, %v3052
        %v3054 = vpop.f32.mrb[0].mxu0
        %v3055 = vpop.f32.mrb[0].mxu0
        %v3056 = vadd.f32 %v2991, %v3055
        %v3057 = vpop.f32.mrb[0].mxu0
        %3058 = vdwg.mxu0
        %3059 = vmatprep.subr.bf16.mxu0 0
        %3060 = vmatpush1.bf16.msra.mxu0 %v2561
        %3061 = vmatprep.subr.bf16.mxu0 0
        %3062 = vmatpush1.bf16.msra.mxu0 %v2562
        %3063 = vmatprep.subr.bf16.mxu0 0
        %3064 = vmatpush1.bf16.msra.mxu0 %v2563
        %3065 = vmatprep.subr.bf16.mxu0 0
        %3066 = vmatpush1.bf16.msra.mxu0 %v2564
        %3067 = vmatprep.subr.bf16.mxu0 0
        %3068 = vmatpush1.bf16.msra.mxu0 %v2565
        %3069 = vmatprep.subr.bf16.mxu0 0
        %3070 = vmatpush1.bf16.msra.mxu0 %v2566
        %3071 = vmatprep.subr.bf16.mxu0 0
        %3072 = vmatpush1.bf16.msra.mxu0 %v2567
        %3073 = vmatprep.subr.bf16.mxu0 0
        %3074 = vmatpush1.bf16.msra.mxu0 %v2568
        %3075 = vmatprep.subr.bf16.mxu0 0
        %3076 = vmatpush1.bf16.msra.mxu0 %v2569
        %3077 = vmatprep.subr.bf16.mxu0 0
        %3078 = vmatpush1.bf16.msra.mxu0 %v2570
        %3079 = vmatprep.subr.bf16.mxu0 0
        %3080 = vmatpush1.bf16.msra.mxu0 %v2571
        %3081 = vmatprep.subr.bf16.mxu0 0
        %3082 = vmatpush1.bf16.msra.mxu0 %v2572
        %3083 = vmatprep.subr.bf16.mxu0 0
        %3084 = vmatpush1.bf16.msra.mxu0 %v2573
        %3085 = vmatprep.subr.bf16.mxu0 0
        %3086 = vmatpush1.bf16.msra.mxu0 %v2574
        %3087 = vmatprep.subr.bf16.mxu0 0
        %3088 = vmatpush1.bf16.msra.mxu0 %v2575
        %3089 = vmatprep.subr.bf16.mxu0 0
        %3090 = vmatpush1.bf16.msra.mxu0 %v2576
        %3091 = vmatprep.mubr.bf16.mxu0 %v1222
        %3092 = vmatmul.mubr.bf16.gmra.mrb[0].mxu0 %v1218
        %v3093 = vpop.f32.mrb[0].mxu0
        %v3094 = vadd.f32 %v3029, %v3093
        %v3095 = vpop.f32.mrb[0].mxu0
        %v3096 = vpop.f32.mrb[0].mxu0
        %v3097 = vadd.f32 %v3032, %v3096
        %v3098 = vpop.f32.mrb[0].mxu0
        %3099 = vmatprep.mubr.bf16.mxu0 %v1223
        %3100 = vmatmul.mubr.bf16.gmra.mrb[0].mxu0 %v1219
        %v3101 = vpop.f32.mrb[0].mxu0
        %v3102 = vadd.f32 %v3037, %v3101
        %v3103 = vpop.f32.mrb[0].mxu0
        %v3104 = vpop.f32.mrb[0].mxu0
        %v3105 = vadd.f32 %v3040, %v3104
        %v3106 = vpop.f32.mrb[0].mxu0
        %3107 = vmatprep.mubr.bf16.mxu0 %v1224
        %3108 = vmatmul.mubr.bf16.gmra.mrb[0].mxu0 %v1220
        %v3109 = vpop.f32.mrb[0].mxu0
        %v3110 = vadd.f32 %v3045, %v3109
        %v3111 = vpop.f32.mrb[0].mxu0
        %v3112 = vpop.f32.mrb[0].mxu0
        %v3113 = vadd.f32 %v3048, %v3112
        %v3114 = vpop.f32.mrb[0].mxu0
        %3115 = vmatprep.mubr.bf16.mxu0 %v1225
        %3116 = vmatmul.mubr.bf16.gmra.mrb[0].mxu0 %v1221
        %v3117 = vpop.f32.mrb[0].mxu0
        %v3118 = vadd.f32 %v3053, %v3117
        %v3119 = vpop.f32.mrb[0].mxu0
        %v3120 = vpop.f32.mrb[0].mxu0
        %v3121 = vadd.f32 %v3056, %v3120
        %v3122 = vpop.f32.mrb[0].mxu0
        %3123 = vdwg.mxu0
        %3124 = vmatprep.subr.bf16.mxu0 0
        %3125 = vmatpush1.bf16.msra.mxu0 %v2577
        %3126 = vmatprep.subr.bf16.mxu0 0
        %3127 = vmatpush1.bf16.msra.mxu0 %v2578
        %3128 = vmatprep.subr.bf16.mxu0 0
        %3129 = vmatpush1.bf16.msra.mxu0 %v2579
        %3130 = vmatprep.subr.bf16.mxu0 0
        %3131 = vmatpush1.bf16.msra.mxu0 %v2580
        %3132 = vmatprep.subr.bf16.mxu0 0
        %3133 = vmatpush1.bf16.msra.mxu0 %v2581
        %3134 = vmatprep.subr.bf16.mxu0 0
        %3135 = vmatpush1.bf16.msra.mxu0 %v2582
        %3136 = vmatprep.subr.bf16.mxu0 0
        %3137 = vmatpush1.bf16.msra.mxu0 %v2583
        %3138 = vmatprep.subr.bf16.mxu0 0
        %3139 = vmatpush1.bf16.msra.mxu0 %v2584
        %3140 = vmatprep.subr.bf16.mxu0 0
        %3141 = vmatpush1.bf16.msra.mxu0 %v2585
        %3142 = vmatprep.subr.bf16.mxu0 0
        %3143 = vmatpush1.bf16.msra.mxu0 %v2586
        %3144 = vmatprep.subr.bf16.mxu0 0
        %3145 = vmatpush1.bf16.msra.mxu0 %v2587
        %3146 = vmatprep.subr.bf16.mxu0 0
        %3147 = vmatpush1.bf16.msra.mxu0 %v2588
        %3148 = vmatprep.subr.bf16.mxu0 0
        %3149 = vmatpush1.bf16.msra.mxu0 %v2589
        %3150 = vmatprep.subr.bf16.mxu0 0
        %3151 = vmatpush1.bf16.msra.mxu0 %v2590
        %3152 = vmatprep.subr.bf16.mxu0 0
        %3153 = vmatpush1.bf16.msra.mxu0 %v2591
        %3154 = vmatprep.subr.bf16.mxu0 0
        %3155 = vmatpush1.bf16.msra.mxu0 %v2592
        %3156 = vmatprep.mubr.bf16.mxu0 %v1240
        %3157 = vmatmul.mubr.bf16.gmra.mrb[0].mxu0 %v1232
        %v3158 = vpop.f32.mrb[0].mxu0
        %v3159 = vadd.f32 %v3094, %v3158
        %v3160 = vpop.f32.mrb[0].mxu0
        %v3161 = vpop.f32.mrb[0].mxu0
        %v3162 = vadd.f32 %v3097, %v3161
        %v3163 = vpop.f32.mrb[0].mxu0
        %3164 = vmatprep.mubr.bf16.mxu0 %v1241
        %3165 = vmatmul.mubr.bf16.gmra.mrb[0].mxu0 %v1233
        %v3166 = vpop.f32.mrb[0].mxu0
        %v3167 = vadd.f32 %v3102, %v3166
        %v3168 = vpop.f32.mrb[0].mxu0
        %v3169 = vpop.f32.mrb[0].mxu0
        %v3170 = vadd.f32 %v3105, %v3169
        %v3171 = vpop.f32.mrb[0].mxu0
        %3172 = vmatprep.mubr.bf16.mxu0 %v1242
        %3173 = vmatmul.mubr.bf16.gmra.mrb[0].mxu0 %v1234
        %v3174 = vpop.f32.mrb[0].mxu0
        %v3175 = vadd.f32 %v3110, %v3174
        %v3176 = vpop.f32.mrb[0].mxu0
        %v3177 = vpop.f32.mrb[0].mxu0
        %v3178 = vadd.f32 %v3113, %v3177
        %v3179 = vpop.f32.mrb[0].mxu0
        %3180 = vmatprep.mubr.bf16.mxu0 %v1243
        %3181 = vmatmul.mubr.bf16.gmra.mrb[0].mxu0 %v1235
        %v3182 = vpop.f32.mrb[0].mxu0
        %v3183 = vadd.f32 %v3118, %v3182
        %v3184 = vpop.f32.mrb[0].mxu0
        %v3185 = vpop.f32.mrb[0].mxu0
        %v3186 = vadd.f32 %v3121, %v3185
        %v3187 = vpop.f32.mrb[0].mxu0
        %3188 = vdwg.mxu0
        %3189 = vmatprep.subr.bf16.mxu0 0
        %3190 = vmatpush1.bf16.msra.mxu0 %v2593
        %3191 = vmatprep.subr.bf16.mxu0 0
        %3192 = vmatpush1.bf16.msra.mxu0 %v2594
        %3193 = vmatprep.subr.bf16.mxu0 0
        %3194 = vmatpush1.bf16.msra.mxu0 %v2595
        %3195 = vmatprep.subr.bf16.mxu0 0
        %3196 = vmatpush1.bf16.msra.mxu0 %v2596
        %3197 = vmatprep.subr.bf16.mxu0 0
        %3198 = vmatpush1.bf16.msra.mxu0 %v2597
        %3199 = vmatprep.subr.bf16.mxu0 0
        %3200 = vmatpush1.bf16.msra.mxu0 %v2598
        %3201 = vmatprep.subr.bf16.mxu0 0
        %3202 = vmatpush1.bf16.msra.mxu0 %v2599
        %3203 = vmatprep.subr.bf16.mxu0 0
        %3204 = vmatpush1.bf16.msra.mxu0 %v2600
        %3205 = vmatprep.subr.bf16.mxu0 0
        %3206 = vmatpush1.bf16.msra.mxu0 %v2601
        %3207 = vmatprep.subr.bf16.mxu0 0
        %3208 = vmatpush1.bf16.msra.mxu0 %v2602
        %3209 = vmatprep.subr.bf16.mxu0 0
        %3210 = vmatpush1.bf16.msra.mxu0 %v2603
        %3211 = vmatprep.subr.bf16.mxu0 0
        %3212 = vmatpush1.bf16.msra.mxu0 %v2604
        %3213 = vmatprep.subr.bf16.mxu0 0
        %3214 = vmatpush1.bf16.msra.mxu0 %v2605
        %3215 = vmatprep.subr.bf16.mxu0 0
        %3216 = vmatpush1.bf16.msra.mxu0 %v2606
        %3217 = vmatprep.subr.bf16.mxu0 0
        %3218 = vmatpush1.bf16.msra.mxu0 %v2607
        %3219 = vmatprep.subr.bf16.mxu0 0
        %3220 = vmatpush1.bf16.msra.mxu0 %v2608
        %3221 = vmatprep.mubr.bf16.mxu0 %v1256
        %3222 = vmatmul.mubr.bf16.gmra.mrb[0].mxu0 %v1248
        %v3223 = vpop.f32.mrb[0].mxu0
        %v3224 = vadd.f32 %v3159, %v3223
        %v3225 = vpop.f32.mrb[0].mxu0
        %v3226 = vpop.f32.mrb[0].mxu0
        %v3227 = vadd.f32 %v3162, %v3226
        %v3228 = vpop.f32.mrb[0].mxu0
        %3229 = vmatprep.mubr.bf16.mxu0 %v1257
        %3230 = vmatmul.mubr.bf16.gmra.mrb[0].mxu0 %v1249
        %v3231 = vpop.f32.mrb[0].mxu0
        %v3232 = vadd.f32 %v3167, %v3231
        %v3233 = vpop.f32.mrb[0].mxu0
        %v3234 = vpop.f32.mrb[0].mxu0
        %v3235 = vadd.f32 %v3170, %v3234
        %v3236 = vpop.f32.mrb[0].mxu0
        %3237 = vmatprep.mubr.bf16.mxu0 %v1258
        %3238 = vmatmul.mubr.bf16.gmra.mrb[0].mxu0 %v1250
        %v3239 = vpop.f32.mrb[0].mxu0
        %v3240 = vadd.f32 %v3175, %v3239
        %v3241 = vpop.f32.mrb[0].mxu0
        %v3242 = vpop.f32.mrb[0].mxu0
        %v3243 = vadd.f32 %v3178, %v3242
        %v3244 = vpop.f32.mrb[0].mxu0
        %3245 = vmatprep.mubr.bf16.mxu0 %v1259
        %3246 = vmatmul.mubr.bf16.gmra.mrb[0].mxu0 %v1251
        %v3247 = vpop.f32.mrb[0].mxu0
        %v3248 = vadd.f32 %v3183, %v3247
        %v3249 = vpop.f32.mrb[0].mxu0
        %v3250 = vpop.f32.mrb[0].mxu0
        %v3251 = vadd.f32 %v3186, %v3250
        %v3252 = vpop.f32.mrb[0].mxu0
        %3253 = vdwg.mxu0
        %3254 = vmatprep.subr.bf16.mxu0 0
        %3255 = vmatpush1.bf16.msra.mxu0 %v2609
        %3256 = vmatprep.subr.bf16.mxu0 0
        %3257 = vmatpush1.bf16.msra.mxu0 %v2610
        %3258 = vmatprep.subr.bf16.mxu0 0
        %3259 = vmatpush1.bf16.msra.mxu0 %v2611
        %3260 = vmatprep.subr.bf16.mxu0 0
        %3261 = vmatpush1.bf16.msra.mxu0 %v2612
        %3262 = vmatprep.subr.bf16.mxu0 0
        %3263 = vmatpush1.bf16.msra.mxu0 %v2613
        %3264 = vmatprep.subr.bf16.mxu0 0
        %3265 = vmatpush1.bf16.msra.mxu0 %v2614
        %3266 = vmatprep.subr.bf16.mxu0 0
        %3267 = vmatpush1.bf16.msra.mxu0 %v2615
        %3268 = vmatprep.subr.bf16.mxu0 0
        %3269 = vmatpush1.bf16.msra.mxu0 %v2616
        %3270 = vmatprep.subr.bf16.mxu0 0
        %3271 = vmatpush1.bf16.msra.mxu0 %v2617
        %3272 = vmatprep.subr.bf16.mxu0 0
        %3273 = vmatpush1.bf16.msra.mxu0 %v2618
        %3274 = vmatprep.subr.bf16.mxu0 0
        %3275 = vmatpush1.bf16.msra.mxu0 %v2619
        %3276 = vmatprep.subr.bf16.mxu0 0
        %3277 = vmatpush1.bf16.msra.mxu0 %v2620
        %3278 = vmatprep.subr.bf16.mxu0 0
        %3279 = vmatpush1.bf16.msra.mxu0 %v2621
        %3280 = vmatprep.subr.bf16.mxu0 0
        %3281 = vmatpush1.bf16.msra.mxu0 %v2622
        %3282 = vmatprep.subr.bf16.mxu0 0
        %3283 = vmatpush1.bf16.msra.mxu0 %v2623
        %3284 = vmatprep.subr.bf16.mxu0 0
        %3285 = vmatpush1.bf16.msra.mxu0 %v2624
        %3286 = vmatprep.mubr.bf16.mxu0 %v1108
        %3287 = vmatmul.mubr.bf16.gmra.mrb[0].mxu0 %v1055
        %v3288 = vpop.f32.mrb[0].mxu0
        %v3289 = vadd.f32 %v3224, %v3288
        %v3290 = vpop.f32.mrb[0].mxu0
        %v3291 = vpop.f32.mrb[0].mxu0
        %v3292 = vadd.f32 %v3227, %v3291
        %v3293 = vpop.f32.mrb[0].mxu0
        %3294 = vmatprep.mubr.bf16.mxu0 %v1109
        %3295 = vmatmul.mubr.bf16.gmra.mrb[0].mxu0 %v1056
        %v3296 = vpop.f32.mrb[0].mxu0
        %v3297 = vadd.f32 %v3232, %v3296
        %v3298 = vpop.f32.mrb[0].mxu0
        %v3299 = vpop.f32.mrb[0].mxu0
        %v3300 = vadd.f32 %v3235, %v3299
        %v3301 = vpop.f32.mrb[0].mxu0
        %3302 = vmatprep.mubr.bf16.mxu0 %v1110
        %3303 = vmatmul.mubr.bf16.gmra.mrb[0].mxu0 %v1057
        %v3304 = vpop.f32.mrb[0].mxu0
        %v3305 = vadd.f32 %v3240, %v3304
        %v3306 = vpop.f32.mrb[0].mxu0
        %v3307 = vpop.f32.mrb[0].mxu0
        %v3308 = vadd.f32 %v3243, %v3307
        %v3309 = vpop.f32.mrb[0].mxu0
        %3310 = vmatprep.mubr.bf16.mxu0 %v1267
        %3311 = vmatmul.mubr.bf16.gmra.mrb[0].mxu0 %v1260
        %v3312 = vpop.f32.mrb[0].mxu0
        %v3313 = vadd.f32 %v3248, %v3312
        %v3314 = vpop.f32.mrb[0].mxu0
        %v3315 = vpop.f32.mrb[0].mxu0
        %v3316 = vadd.f32 %v3251, %v3315
        %v3317 = vpop.f32.mrb[0].mxu0
        %3318 = vdwg.mxu0
        %3319 = vmatprep.subr.bf16.mxu0 0
        %3320 = vmatpush1.bf16.msra.mxu0 %v2625
        %3321 = vmatprep.subr.bf16.mxu0 0
        %3322 = vmatpush1.bf16.msra.mxu0 %v2626
        %3323 = vmatprep.subr.bf16.mxu0 0
        %3324 = vmatpush1.bf16.msra.mxu0 %v2627
        %3325 = vmatprep.subr.bf16.mxu0 0
        %3326 = vmatpush1.bf16.msra.mxu0 %v2628
        %3327 = vmatprep.subr.bf16.mxu0 0
        %3328 = vmatpush1.bf16.msra.mxu0 %v2629
        %3329 = vmatprep.subr.bf16.mxu0 0
        %3330 = vmatpush1.bf16.msra.mxu0 %v2630
        %3331 = vmatprep.subr.bf16.mxu0 0
        %3332 = vmatpush1.bf16.msra.mxu0 %v2631
        %3333 = vmatprep.subr.bf16.mxu0 0
        %3334 = vmatpush1.bf16.msra.mxu0 %v2632
        %3335 = vmatprep.subr.bf16.mxu0 0
        %3336 = vmatpush1.bf16.msra.mxu0 %v2633
        %3337 = vmatprep.subr.bf16.mxu0 0
        %3338 = vmatpush1.bf16.msra.mxu0 %v2634
        %3339 = vmatprep.subr.bf16.mxu0 0
        %3340 = vmatpush1.bf16.msra.mxu0 %v2635
        %3341 = vmatprep.subr.bf16.mxu0 0
        %3342 = vmatpush1.bf16.msra.mxu0 %v2636
        %3343 = vmatprep.subr.bf16.mxu0 0
        %3344 = vmatpush1.bf16.msra.mxu0 %v2637
        %3345 = vmatprep.subr.bf16.mxu0 0
        %3346 = vmatpush1.bf16.msra.mxu0 %v2638
        %3347 = vmatprep.subr.bf16.mxu0 0
        %3348 = vmatpush1.bf16.msra.mxu0 %v2639
        %3349 = vmatprep.subr.bf16.mxu0 0
        %3350 = vmatpush1.bf16.msra.mxu0 %v2640
        %3351 = vmatprep.mubr.bf16.mxu0 %v1182
        %3352 = vmatmul.mubr.bf16.gmra.mrb[0].mxu0 %v1145
        %v3353 = vpop.f32.mrb[0].mxu0
        %v3354 = vadd.f32 %v3289, %v3353
        %v3355 = vpop.f32.mrb[0].mxu0
        %v3356 = vpop.f32.mrb[0].mxu0
        %v3357 = vadd.f32 %v3292, %v3356
        %v3358 = vpop.f32.mrb[0].mxu0
        %3359 = vmatprep.mubr.bf16.mxu0 %v1183
        %3360 = vmatmul.mubr.bf16.gmra.mrb[0].mxu0 %v1146
        %v3361 = vpop.f32.mrb[0].mxu0
        %v3362 = vadd.f32 %v3297, %v3361
        %v3363 = vpop.f32.mrb[0].mxu0
        %v3364 = vpop.f32.mrb[0].mxu0
        %v3365 = vadd.f32 %v3300, %v3364
        %v3366 = vpop.f32.mrb[0].mxu0
        %3367 = vmatprep.mubr.bf16.mxu0 %v1184
        %3368 = vmatmul.mubr.bf16.gmra.mrb[0].mxu0 %v1147
        %v3369 = vpop.f32.mrb[0].mxu0
        %v3370 = vadd.f32 %v3305, %v3369
        %v3371 = vpop.f32.mrb[0].mxu0
        %v3372 = vpop.f32.mrb[0].mxu0
        %v3373 = vadd.f32 %v3308, %v3372
        %v3374 = vpop.f32.mrb[0].mxu0
        %3375 = vmatprep.mubr.bf16.mxu0 %v1277
        %3376 = vmatmul.mubr.bf16.gmra.mrb[0].mxu0 %v1272
        %v3377 = vpop.f32.mrb[0].mxu0
        %v3378 = vadd.f32 %v3313, %v3377
        %v3379 = vpop.f32.mrb[0].mxu0
        %v3380 = vpop.f32.mrb[0].mxu0
        %v3381 = vadd.f32 %v3316, %v3380
        %v3382 = vpop.f32.mrb[0].mxu0
        %3383 = vdwg.mxu0
        %3384 = vmatprep.subr.bf16.mxu0 0
        %3385 = vmatpush1.bf16.msra.mxu0 %v2641
        %3386 = vmatprep.subr.bf16.mxu0 0
        %3387 = vmatpush1.bf16.msra.mxu0 %v2642
        %3388 = vmatprep.subr.bf16.mxu0 0
        %3389 = vmatpush1.bf16.msra.mxu0 %v2643
        %3390 = vmatprep.subr.bf16.mxu0 0
        %3391 = vmatpush1.bf16.msra.mxu0 %v2644
        %3392 = vmatprep.subr.bf16.mxu0 0
        %3393 = vmatpush1.bf16.msra.mxu0 %v2645
        %3394 = vmatprep.subr.bf16.mxu0 0
        %3395 = vmatpush1.bf16.msra.mxu0 %v2646
        %3396 = vmatprep.subr.bf16.mxu0 0
        %3397 = vmatpush1.bf16.msra.mxu0 %v2647
        %3398 = vmatprep.subr.bf16.mxu0 0
        %3399 = vmatpush1.bf16.msra.mxu0 %v2648
        %3400 = vmatprep.subr.bf16.mxu0 0
        %3401 = vmatpush1.bf16.msra.mxu0 %v2649
        %3402 = vmatprep.subr.bf16.mxu0 0
        %3403 = vmatpush1.bf16.msra.mxu0 %v2650
        %3404 = vmatprep.subr.bf16.mxu0 0
        %3405 = vmatpush1.bf16.msra.mxu0 %v2651
        %3406 = vmatprep.subr.bf16.mxu0 0
        %3407 = vmatpush1.bf16.msra.mxu0 %v2652
        %3408 = vmatprep.subr.bf16.mxu0 0
        %3409 = vmatpush1.bf16.msra.mxu0 %v2653
        %3410 = vmatprep.subr.bf16.mxu0 0
        %3411 = vmatpush1.bf16.msra.mxu0 %v2654
        %3412 = vmatprep.subr.bf16.mxu0 0
        %3413 = vmatpush1.bf16.msra.mxu0 %v2655
        %3414 = vmatprep.subr.bf16.mxu0 0
        %3415 = vmatpush1.bf16.msra.mxu0 %v2656
        %3416 = vmatprep.mubr.bf16.mxu0 %v1223
        %3417 = vmatmul.mubr.bf16.gmra.mrb[0].mxu0 %v1219
        %v3418 = vpop.f32.mrb[0].mxu0
        %v3419 = vadd.f32 %v3354, %v3418
        %v3420 = vpop.f32.mrb[0].mxu0
        %v3421 = vpop.f32.mrb[0].mxu0
        %v3422 = vadd.f32 %v3357, %v3421
        %v3423 = vpop.f32.mrb[0].mxu0
        %3424 = vmatprep.mubr.bf16.mxu0 %v1224
        %3425 = vmatmul.mubr.bf16.gmra.mrb[0].mxu0 %v1220
        %v3426 = vpop.f32.mrb[0].mxu0
        %v3427 = vadd.f32 %v3362, %v3426
        %v3428 = vpop.f32.mrb[0].mxu0
        %v3429 = vpop.f32.mrb[0].mxu0
        %v3430 = vadd.f32 %v3365, %v3429
        %v3431 = vpop.f32.mrb[0].mxu0
        %3432 = vmatprep.mubr.bf16.mxu0 %v1225
        %3433 = vmatmul.mubr.bf16.gmra.mrb[0].mxu0 %v1221
        %v3434 = vpop.f32.mrb[0].mxu0
        %v3435 = vadd.f32 %v3370, %v3434
        %v3436 = vpop.f32.mrb[0].mxu0
        %v3437 = vpop.f32.mrb[0].mxu0
        %v3438 = vadd.f32 %v3373, %v3437
        %v3439 = vpop.f32.mrb[0].mxu0
        %3440 = vmatprep.mubr.bf16.mxu0 %v1283
        %3441 = vmatmul.mubr.bf16.gmra.mrb[0].mxu0 %v1282
        %v3442 = vpop.f32.mrb[0].mxu0
        %v3443 = vadd.f32 %v3378, %v3442
        %v3444 = vpop.f32.mrb[0].mxu0
        %v3445 = vpop.f32.mrb[0].mxu0
        %v3446 = vadd.f32 %v3381, %v3445
        %v3447 = vpop.f32.mrb[0].mxu0
        %3448 = vdwg.mxu0
        %3449 = vmatprep.subr.bf16.mxu0 0
        %3450 = vmatpush1.bf16.msra.mxu0 %v2657
        %3451 = vmatprep.subr.bf16.mxu0 0
        %3452 = vmatpush1.bf16.msra.mxu0 %v2658
        %3453 = vmatprep.subr.bf16.mxu0 0
        %3454 = vmatpush1.bf16.msra.mxu0 %v2659
        %3455 = vmatprep.subr.bf16.mxu0 0
        %3456 = vmatpush1.bf16.msra.mxu0 %v2660
        %3457 = vmatprep.subr.bf16.mxu0 0
        %3458 = vmatpush1.bf16.msra.mxu0 %v2661
        %3459 = vmatprep.subr.bf16.mxu0 0
        %3460 = vmatpush1.bf16.msra.mxu0 %v2662
        %3461 = vmatprep.subr.bf16.mxu0 0
        %3462 = vmatpush1.bf16.msra.mxu0 %v2663
        %3463 = vmatprep.subr.bf16.mxu0 0
        %3464 = vmatpush1.bf16.msra.mxu0 %v2664
        %3465 = vmatprep.subr.bf16.mxu0 0
        %3466 = vmatpush1.bf16.msra.mxu0 %v2665
        %3467 = vmatprep.subr.bf16.mxu0 0
        %3468 = vmatpush1.bf16.msra.mxu0 %v2666
        %3469 = vmatprep.subr.bf16.mxu0 0
        %3470 = vmatpush1.bf16.msra.mxu0 %v2667
        %3471 = vmatprep.subr.bf16.mxu0 0
        %3472 = vmatpush1.bf16.msra.mxu0 %v2668
        %3473 = vmatprep.subr.bf16.mxu0 0
        %3474 = vmatpush1.bf16.msra.mxu0 %v2669
        %3475 = vmatprep.subr.bf16.mxu0 0
        %3476 = vmatpush1.bf16.msra.mxu0 %v2670
        %3477 = vmatprep.subr.bf16.mxu0 0
        %3478 = vmatpush1.bf16.msra.mxu0 %v2671
        %3479 = vmatprep.subr.bf16.mxu0 0
        %3480 = vmatpush1.bf16.msra.mxu0 %v2672
        %3481 = vmatprep.mubr.bf16.mxu0 %v1241
        %3482 = vmatmul.mubr.bf16.gmra.mrb[0].mxu0 %v1233
        %v3483 = vpop.f32.mrb[0].mxu0
        %v3484 = vadd.f32 %v3419, %v3483
        %v3485 = vpop.f32.mrb[0].mxu0
        %v3486 = vpop.f32.mrb[0].mxu0
        %v3487 = vadd.f32 %v3422, %v3486
        %v3488 = vpop.f32.mrb[0].mxu0
        %3489 = vmatprep.mubr.bf16.mxu0 %v1242
        %3490 = vmatmul.mubr.bf16.gmra.mrb[0].mxu0 %v1234
        %v3491 = vpop.f32.mrb[0].mxu0
        %v3492 = vadd.f32 %v3427, %v3491
        %v3493 = vpop.f32.mrb[0].mxu0
        %v3494 = vpop.f32.mrb[0].mxu0
        %v3495 = vadd.f32 %v3430, %v3494
        %v3496 = vpop.f32.mrb[0].mxu0
        %3497 = vmatprep.mubr.bf16.mxu0 %v1243
        %3498 = vmatmul.mubr.bf16.gmra.mrb[0].mxu0 %v1235
        %v3499 = vpop.f32.mrb[0].mxu0
        %v3500 = vadd.f32 %v3435, %v3499
        %v3501 = vpop.f32.mrb[0].mxu0
        %v3502 = vpop.f32.mrb[0].mxu0
        %v3503 = vadd.f32 %v3438, %v3502
        %v3504 = vpop.f32.mrb[0].mxu0
        %3505 = vmatprep.mubr.bf16.mxu0 %v1295
        %3506 = vmatmul.mubr.bf16.gmra.mrb[0].mxu0 %v1290
        %v3507 = vpop.f32.mrb[0].mxu0
        %v3508 = vadd.f32 %v3443, %v3507
        %v3509 = vpop.f32.mrb[0].mxu0
        %v3510 = vpop.f32.mrb[0].mxu0
        %v3511 = vadd.f32 %v3446, %v3510
        %v3512 = vpop.f32.mrb[0].mxu0
        %3513 = vdwg.mxu0
        %3514 = vmatprep.subr.bf16.mxu0 0
        %3515 = vmatpush1.bf16.msra.mxu0 %v2673
        %3516 = vmatprep.subr.bf16.mxu0 0
        %3517 = vmatpush1.bf16.msra.mxu0 %v2674
        %3518 = vmatprep.subr.bf16.mxu0 0
        %3519 = vmatpush1.bf16.msra.mxu0 %v2675
        %3520 = vmatprep.subr.bf16.mxu0 0
        %3521 = vmatpush1.bf16.msra.mxu0 %v2676
        %3522 = vmatprep.subr.bf16.mxu0 0
        %3523 = vmatpush1.bf16.msra.mxu0 %v2677
        %3524 = vmatprep.subr.bf16.mxu0 0
        %3525 = vmatpush1.bf16.msra.mxu0 %v2678
        %3526 = vmatprep.subr.bf16.mxu0 0
        %3527 = vmatpush1.bf16.msra.mxu0 %v2679
        %3528 = vmatprep.subr.bf16.mxu0 0
        %3529 = vmatpush1.bf16.msra.mxu0 %v2680
        %3530 = vmatprep.subr.bf16.mxu0 0
        %3531 = vmatpush1.bf16.msra.mxu0 %v2681
        %3532 = vmatprep.subr.bf16.mxu0 0
        %3533 = vmatpush1.bf16.msra.mxu0 %v2682
        %3534 = vmatprep.subr.bf16.mxu0 0
        %3535 = vmatpush1.bf16.msra.mxu0 %v2683
        %3536 = vmatprep.subr.bf16.mxu0 0
        %3537 = vmatpush1.bf16.msra.mxu0 %v2684
        %3538 = vmatprep.subr.bf16.mxu0 0
        %3539 = vmatpush1.bf16.msra.mxu0 %v2685
        %3540 = vmatprep.subr.bf16.mxu0 0
        %3541 = vmatpush1.bf16.msra.mxu0 %v2686
        %3542 = vmatprep.subr.bf16.mxu0 0
        %3543 = vmatpush1.bf16.msra.mxu0 %v2687
        %3544 = vmatprep.subr.bf16.mxu0 0
        %3545 = vmatpush1.bf16.msra.mxu0 %v2688
        %3546 = vmatprep.mubr.bf16.mxu0 %v1257
        %3547 = vmatmul.mubr.bf16.gmra.mrb[0].mxu0 %v1249
        %v3548 = vpop.f32.mrb[0].mxu0
        %v3549 = vadd.f32 %v3484, %v3548
        %v3550 = vpop.f32.mrb[0].mxu0
        %v3551 = vpop.f32.mrb[0].mxu0
        %v3552 = vadd.f32 %v3487, %v3551
        %v3553 = vpop.f32.mrb[0].mxu0
        %3554 = vmatprep.mubr.bf16.mxu0 %v1258
        %3555 = vmatmul.mubr.bf16.gmra.mrb[0].mxu0 %v1250
        %v3556 = vpop.f32.mrb[0].mxu0
        %v3557 = vadd.f32 %v3492, %v3556
        %v3558 = vpop.f32.mrb[0].mxu0
        %v3559 = vpop.f32.mrb[0].mxu0
        %v3560 = vadd.f32 %v3495, %v3559
        %v3561 = vpop.f32.mrb[0].mxu0
        %3562 = vmatprep.mubr.bf16.mxu0 %v1259
        %3563 = vmatmul.mubr.bf16.gmra.mrb[0].mxu0 %v1251
        %v3564 = vpop.f32.mrb[0].mxu0
        %v3565 = vadd.f32 %v3500, %v3564
        %v3566 = vpop.f32.mrb[0].mxu0
        %v3567 = vpop.f32.mrb[0].mxu0
        %v3568 = vadd.f32 %v3503, %v3567
        %v3569 = vpop.f32.mrb[0].mxu0
        %3570 = vmatprep.mubr.bf16.mxu0 %v1305
        %3571 = vmatmul.mubr.bf16.gmra.mrb[0].mxu0 %v1300
        %v3572 = vpop.f32.mrb[0].mxu0
        %v3573 = vadd.f32 %v3508, %v3572
        %v3574 = vpop.f32.mrb[0].mxu0
        %v3575 = vpop.f32.mrb[0].mxu0
        %v3576 = vadd.f32 %v3511, %v3575
        %v3577 = vpop.f32.mrb[0].mxu0
        %3578 = vdwg.mxu0
        %3579 = vmatprep.subr.bf16.mxu0 0
        %3580 = vmatpush1.bf16.msra.mxu0 %v2689
        %3581 = vmatprep.subr.bf16.mxu0 0
        %3582 = vmatpush1.bf16.msra.mxu0 %v2690
        %3583 = vmatprep.subr.bf16.mxu0 0
        %3584 = vmatpush1.bf16.msra.mxu0 %v2691
        %3585 = vmatprep.subr.bf16.mxu0 0
        %3586 = vmatpush1.bf16.msra.mxu0 %v2692
        %3587 = vmatprep.subr.bf16.mxu0 0
        %3588 = vmatpush1.bf16.msra.mxu0 %v2693
        %3589 = vmatprep.subr.bf16.mxu0 0
        %3590 = vmatpush1.bf16.msra.mxu0 %v2694
        %3591 = vmatprep.subr.bf16.mxu0 0
        %3592 = vmatpush1.bf16.msra.mxu0 %v2695
        %3593 = vmatprep.subr.bf16.mxu0 0
        %3594 = vmatpush1.bf16.msra.mxu0 %v2696
        %3595 = vmatprep.subr.bf16.mxu0 0
        %3596 = vmatpush1.bf16.msra.mxu0 %v2697
        %3597 = vmatprep.subr.bf16.mxu0 0
        %3598 = vmatpush1.bf16.msra.mxu0 %v2698
        %3599 = vmatprep.subr.bf16.mxu0 0
        %3600 = vmatpush1.bf16.msra.mxu0 %v2699
        %3601 = vmatprep.subr.bf16.mxu0 0
        %3602 = vmatpush1.bf16.msra.mxu0 %v2700
        %3603 = vmatprep.subr.bf16.mxu0 0
        %3604 = vmatpush1.bf16.msra.mxu0 %v2701
        %3605 = vmatprep.subr.bf16.mxu0 0
        %3606 = vmatpush1.bf16.msra.mxu0 %v2702
        %3607 = vmatprep.subr.bf16.mxu0 0
        %3608 = vmatpush1.bf16.msra.mxu0 %v2703
        %3609 = vmatprep.subr.bf16.mxu0 0
        %3610 = vmatpush1.bf16.msra.mxu0 %v2704
        %3611 = vmatprep.mubr.bf16.mxu0 %v1109
        %3612 = vmatmul.mubr.bf16.gmra.mrb[0].mxu0 %v1056
        %v3613 = vpop.f32.mrb[0].mxu0
        %v3614 = vadd.f32 %v3549, %v3613
        %v3615 = vpop.f32.mrb[0].mxu0
        %v3616 = vpop.f32.mrb[0].mxu0
        %v3617 = vadd.f32 %v3552, %v3616
        %v3618 = vpop.f32.mrb[0].mxu0
        %3619 = vmatprep.mubr.bf16.mxu0 %v1110
        %3620 = vmatmul.mubr.bf16.gmra.mrb[0].mxu0 %v1057
        %v3621 = vpop.f32.mrb[0].mxu0
        %v3622 = vadd.f32 %v3557, %v3621
        %v3623 = vpop.f32.mrb[0].mxu0
        %v3624 = vpop.f32.mrb[0].mxu0
        %v3625 = vadd.f32 %v3560, %v3624
        %v3626 = vpop.f32.mrb[0].mxu0
        %3627 = vmatprep.mubr.bf16.mxu0 %v1267
        %3628 = vmatmul.mubr.bf16.gmra.mrb[0].mxu0 %v1260
        %v3629 = vpop.f32.mrb[0].mxu0
        %v3630 = vadd.f32 %v3565, %v3629
        %v3631 = vpop.f32.mrb[0].mxu0
        %v3632 = vpop.f32.mrb[0].mxu0
        %v3633 = vadd.f32 %v3568, %v3632
        %v3634 = vpop.f32.mrb[0].mxu0
        %3635 = vmatprep.mubr.bf16.mxu0 %v1313
        %3636 = vmatmul.mubr.bf16.gmra.mrb[0].mxu0 %v1306
        %v3637 = vpop.f32.mrb[0].mxu0
        %v3638 = vadd.f32 %v3573, %v3637
        %v3639 = vpop.f32.mrb[0].mxu0
        %v3640 = vpop.f32.mrb[0].mxu0
        %v3641 = vadd.f32 %v3576, %v3640
        %v3642 = vpop.f32.mrb[0].mxu0
        %3643 = vdwg.mxu0
        %3644 = vmatprep.subr.bf16.mxu0 0
        %3645 = vmatpush1.bf16.msra.mxu0 %v2705
        %3646 = vmatprep.subr.bf16.mxu0 0
        %3647 = vmatpush1.bf16.msra.mxu0 %v2706
        %3648 = vmatprep.subr.bf16.mxu0 0
        %3649 = vmatpush1.bf16.msra.mxu0 %v2707
        %3650 = vmatprep.subr.bf16.mxu0 0
        %3651 = vmatpush1.bf16.msra.mxu0 %v2708
        %3652 = vmatprep.subr.bf16.mxu0 0
        %3653 = vmatpush1.bf16.msra.mxu0 %v2709
        %3654 = vmatprep.subr.bf16.mxu0 0
        %3655 = vmatpush1.bf16.msra.mxu0 %v2710
        %3656 = vmatprep.subr.bf16.mxu0 0
        %3657 = vmatpush1.bf16.msra.mxu0 %v2711
        %3658 = vmatprep.subr.bf16.mxu0 0
        %3659 = vmatpush1.bf16.msra.mxu0 %v2712
        %3660 = vmatprep.subr.bf16.mxu0 0
        %3661 = vmatpush1.bf16.msra.mxu0 %v2713
        %3662 = vmatprep.subr.bf16.mxu0 0
        %3663 = vmatpush1.bf16.msra.mxu0 %v2714
        %3664 = vmatprep.subr.bf16.mxu0 0
        %3665 = vmatpush1.bf16.msra.mxu0 %v2715
        %3666 = vmatprep.subr.bf16.mxu0 0
        %3667 = vmatpush1.bf16.msra.mxu0 %v2716
        %3668 = vmatprep.subr.bf16.mxu0 0
        %3669 = vmatpush1.bf16.msra.mxu0 %v2717
        %3670 = vmatprep.subr.bf16.mxu0 0
        %3671 = vmatpush1.bf16.msra.mxu0 %v2718
        %3672 = vmatprep.subr.bf16.mxu0 0
        %3673 = vmatpush1.bf16.msra.mxu0 %v2719
        %3674 = vmatprep.subr.bf16.mxu0 0
        %3675 = vmatpush1.bf16.msra.mxu0 %v2720
        %3676 = vmatprep.mubr.bf16.mxu0 %v1183
        %3677 = vmatmul.mubr.bf16.gmra.mrb[0].mxu0 %v1146
        %v3678 = vpop.f32.mrb[0].mxu0
        %v3679 = vadd.f32 %v3614, %v3678
        %v3680 = vpop.f32.mrb[0].mxu0
        %v3681 = vpop.f32.mrb[0].mxu0
        %v3682 = vadd.f32 %v3617, %v3681
        %v3683 = vpop.f32.mrb[0].mxu0
        %3684 = vmatprep.mubr.bf16.mxu0 %v1184
        %3685 = vmatmul.mubr.bf16.gmra.mrb[0].mxu0 %v1147
        %v3686 = vpop.f32.mrb[0].mxu0
        %v3687 = vadd.f32 %v3622, %v3686
        %v3688 = vpop.f32.mrb[0].mxu0
        %v3689 = vpop.f32.mrb[0].mxu0
        %v3690 = vadd.f32 %v3625, %v3689
        %v3691 = vpop.f32.mrb[0].mxu0
        %3692 = vmatprep.mubr.bf16.mxu0 %v1277
        %3693 = vmatmul.mubr.bf16.gmra.mrb[0].mxu0 %v1272
        %v3694 = vpop.f32.mrb[0].mxu0
        %v3695 = vadd.f32 %v3630, %v3694
        %v3696 = vpop.f32.mrb[0].mxu0
        %v3697 = vpop.f32.mrb[0].mxu0
        %v3698 = vadd.f32 %v3633, %v3697
        %v3699 = vpop.f32.mrb[0].mxu0
        %3700 = vmatprep.mubr.bf16.mxu0 %v1323
        %3701 = vmatmul.mubr.bf16.gmra.mrb[0].mxu0 %v1318
        %v3702 = vpop.f32.mrb[0].mxu0
        %v3703 = vadd.f32 %v3638, %v3702
        %v3704 = vpop.f32.mrb[0].mxu0
        %v3705 = vpop.f32.mrb[0].mxu0
        %v3706 = vadd.f32 %v3641, %v3705
        %v3707 = vpop.f32.mrb[0].mxu0
        %3708 = vdwg.mxu0
        %3709 = vmatprep.subr.bf16.mxu0 0
        %3710 = vmatpush1.bf16.msra.mxu0 %v2721
        %3711 = vmatprep.subr.bf16.mxu0 0
        %3712 = vmatpush1.bf16.msra.mxu0 %v2722
        %3713 = vmatprep.subr.bf16.mxu0 0
        %3714 = vmatpush1.bf16.msra.mxu0 %v2723
        %3715 = vmatprep.subr.bf16.mxu0 0
        %3716 = vmatpush1.bf16.msra.mxu0 %v2724
        %3717 = vmatprep.subr.bf16.mxu0 0
        %3718 = vmatpush1.bf16.msra.mxu0 %v2725
        %3719 = vmatprep.subr.bf16.mxu0 0
        %3720 = vmatpush1.bf16.msra.mxu0 %v2726
        %3721 = vmatprep.subr.bf16.mxu0 0
        %3722 = vmatpush1.bf16.msra.mxu0 %v2727
        %3723 = vmatprep.subr.bf16.mxu0 0
        %3724 = vmatpush1.bf16.msra.mxu0 %v2728
        %3725 = vmatprep.subr.bf16.mxu0 0
        %3726 = vmatpush1.bf16.msra.mxu0 0
        %3727 = vmatprep.subr.bf16.mxu0 0
        %3728 = vmatpush1.bf16.msra.mxu0 0
        %3729 = vmatprep.subr.bf16.mxu0 0
        %3730 = vmatpush1.bf16.msra.mxu0 0
        %3731 = vmatprep.subr.bf16.mxu0 0
        %3732 = vmatpush1.bf16.msra.mxu0 0
        %3733 = vmatprep.subr.bf16.mxu0 0
        %3734 = vmatpush1.bf16.msra.mxu0 0
        %3735 = vmatprep.subr.bf16.mxu0 0
        %3736 = vmatpush1.bf16.msra.mxu0 0
        %3737 = vmatprep.subr.bf16.mxu0 0
        %3738 = vmatpush1.bf16.msra.mxu0 0
        %3739 = vmatprep.subr.bf16.mxu0 0
        %3740 = vmatpush1.bf16.msra.mxu0 0
        %3741 = vmatprep.mubr.bf16.mxu0 0
        %3742 = vmatmul.mubr.bf16.gmra.mrb[0].mxu0 %v1220
        %v3743 = vpop.f32.mrb[0].mxu0
        %v3744 = vadd.f32 %v3679, %v3743
        %v3745 = vpop.f32.mrb[0].mxu0
        %v3746 = vpop.f32.mrb[0].mxu0
        %v3747 = vadd.f32 %v3682, %v3746
        %v3748 = vpop.f32.mrb[0].mxu0
        %3749 = vmatprep.mubr.bf16.mxu0 0
        %3750 = vmatmul.mubr.bf16.gmra.mrb[0].mxu0 %v1221
        %v3751 = vpop.f32.mrb[0].mxu0
        %v3752 = vadd.f32 %v3687, %v3751
        %v3753 = vpop.f32.mrb[0].mxu0
        %v3754 = vpop.f32.mrb[0].mxu0
        %v3755 = vadd.f32 %v3690, %v3754
        %v3756 = vpop.f32.mrb[0].mxu0
        %3757 = vmatprep.mubr.bf16.mxu0 0
        %3758 = vmatmul.mubr.bf16.gmra.mrb[0].mxu0 %v1282
        %v3759 = vpop.f32.mrb[0].mxu0
        %v3760 = vadd.f32 %v3695, %v3759
        %v3761 = vpop.f32.mrb[0].mxu0
        %v3762 = vpop.f32.mrb[0].mxu0
        %v3763 = vadd.f32 %v3698, %v3762
        %v3764 = vpop.f32.mrb[0].mxu0
        %3765 = vmatprep.mubr.bf16.mxu0 0
        %3766 = vmatmul.mubr.bf16.gmra.mrb[0].mxu0 %v1328
        %v3767 = vpop.f32.mrb[0].mxu0
        %v3768 = vadd.f32 %v3703, %v3767
        %v3769 = vpop.f32.mrb[0].mxu0
        %v3770 = vpop.f32.mrb[0].mxu0
        %v3771 = vadd.f32 %v3706, %v3770
        %v3772 = vpop.f32.mrb[0].mxu0
        %3773 = vdwg.mxu0
        %v3775 = vrot.slane %v3744, 1
        %v3777 = vmax.f32 %v3744, %v3775
        %v3779 = vrot.slane %v3747, 1
        %v3781 = vmax.f32 %v3747, %v3779
        %v3782 = vmax.f32 %v3777, %v3781
        %v3783 = vld [vmem:[%s4] sm:$0x1]
        %v3784 = vadd.f32 %v3782, %v3783
        %v3785 = vmax.f32 %v3784, 0.0
        %v3786 = vpack.c.bf16 %v3785, %v3785
        %v3788 = vlaneseq
        %v3789 = vshrl.u32 %v3788, 7
        %v3790 = vsub.s32 0, %v3789
        %v3791 = vrot.slane %v3783, %v3790
        %v3793 = vadd.f32 %v3782, %v3791
        %v3794 = vmax.f32 %v3793, 0.0
        %v3795 = vpack.c.bf16 %v3794, %v3794
        %v3797 = vrot.slane %v3752, 1
        %v3799 = vmax.f32 %v3752, %v3797
        %v3801 = vrot.slane %v3755, 1
        %v3803 = vmax.f32 %v3755, %v3801
        %v3804 = vmax.f32 %v3799, %v3803
        %v3805 = vadd.f32 %v3804, %v3783
        %v3806 = vmax.f32 %v3805, 0.0
        %v3807 = vpack.c.bf16 %v3806, %v3806
        %v3808 = vadd.f32 %v3804, %v3791
        %v3809 = vmax.f32 %v3808, 0.0
        %v3810 = vpack.c.bf16 %v3809, %v3809
        %v3812 = vrot.slane %v3760, 1
        %v3814 = vmax.f32 %v3760, %v3812
        %v3816 = vrot.slane %v3763, 1
        %v3818 = vmax.f32 %v3763, %v3816
        %v3819 = vmax.f32 %v3814, %v3818
        %v3820 = vadd.f32 %v3819, %v3783
        %v3821 = vmax.f32 %v3820, 0.0
        %v3822 = vpack.c.bf16 %v3821, %v3821
        %v3823 = vadd.f32 %v3819, %v3791
        %v3824 = vmax.f32 %v3823, 0.0
        %v3825 = vpack.c.bf16 %v3824, %v3824
        %v3827 = vrot.slane %v3768, 1
        %v3829 = vmax.f32 %v3768, %v3827
        %v3831 = vrot.slane %v3771, 1
        %v3833 = vmax.f32 %v3771, %v3831
        %v3834 = vmax.f32 %v3829, %v3833
        %v3835 = vadd.f32 %v3834, %v3783
        %v3836 = vmax.f32 %v3835, 0.0
        %v3837 = vpack.c.bf16 %v3836, %v3836
        %v3838 = vadd.f32 %v3834, %v3791
        %v3839 = vmax.f32 %v3838, 0.0
        %v3840 = vpack.c.bf16 %v3839, %v3839
        %v3842 = vrot.slane %v3795, 1
        %v3844 = vrot.slane %v3795, 2
        %v3846 = vrot.slane %v3795, 3
        %v3849 = vrot.slane %v3810, 1
        %v3851 = vrot.slane %v3810, 2
        %v3853 = vrot.slane %v3810, 3
        %v3856 = vrot.slane %v3825, 1
        %v3858 = vrot.slane %v3825, 2
        %v3860 = vrot.slane %v3825, 3
        %v3863 = vrot.slane %v3840, 1
        %v3865 = vrot.slane %v3840, 2
        %v3867 = vrot.slane %v3840, 3
        %v3869 = vld [vmem:[%s5] sm:$0xff]
        %v3870 = vld [vmem:[%s5 + $0x8] sm:$0xff]
        %v3871 = vld [vmem:[%s5 + $0x10] sm:$0xff]
        %v3872 = vld [vmem:[%s5 + $0x18] sm:$0xff]
        %v3873 = vld [vmem:[%s5 + $0x20] sm:$0xff]
        %v3874 = vld [vmem:[%s5 + $0x28] sm:$0xff]
        %v3875 = vld [vmem:[%s5 + $0x30] sm:$0xff]
        %v3876 = vld [vmem:[%s5 + $0x38] sm:$0xff]
        %v3877 = vld [vmem:[%s5 + $0x40] sm:$0xff]
        %v3878 = vld [vmem:[%s5 + $0x48] sm:$0xff]
        %v3879 = vld [vmem:[%s5 + $0x50] sm:$0xff]
        %v3880 = vld [vmem:[%s5 + $0x58] sm:$0xff]
        %v3881 = vld [vmem:[%s5 + $0x60] sm:$0xff]
        %v3882 = vld [vmem:[%s5 + $0x68] sm:$0xff]
        %v3883 = vld [vmem:[%s5 + $0x70] sm:$0xff]
        %v3884 = vld [vmem:[%s5 + $0x78] sm:$0xff]
        %v3885 = vld [vmem:[%s5 + $0x80] sm:$0xff]
        %v3886 = vld [vmem:[%s5 + $0x88] sm:$0xff]
        %v3887 = vld [vmem:[%s5 + $0x90] sm:$0xff]
        %v3888 = vld [vmem:[%s5 + $0x98] sm:$0xff]
        %v3889 = vld [vmem:[%s5 + $0xa0] sm:$0xff]
        %v3890 = vld [vmem:[%s5 + $0xa8] sm:$0xff]
        %v3891 = vld [vmem:[%s5 + $0xb0] sm:$0xff]
        %v3892 = vld [vmem:[%s5 + $0xb8] sm:$0xff]
        %v3893 = vld [vmem:[%s5 + $0xc0] sm:$0xff]
        %v3894 = vld [vmem:[%s5 + $0xc8] sm:$0xff]
        %v3895 = vld [vmem:[%s5 + $0xd0] sm:$0xff]
        %v3896 = vld [vmem:[%s5 + $0xd8] sm:$0xff]
        %v3897 = vld [vmem:[%s5 + $0xe0] sm:$0xff]
        %v3898 = vld [vmem:[%s5 + $0xe8] sm:$0xff]
        %v3899 = vld [vmem:[%s5 + $0xf0] sm:$0xff]
        %v3900 = vld [vmem:[%s5 + $0xf8] sm:$0xff]
        %v3901 = vld [vmem:[%s5 + $0x100] sm:$0xff]
        %v3902 = vld [vmem:[%s5 + $0x108] sm:$0xff]
        %v3903 = vld [vmem:[%s5 + $0x110] sm:$0xff]
        %v3904 = vld [vmem:[%s5 + $0x118] sm:$0xff]
        %v3905 = vld [vmem:[%s5 + $0x120] sm:$0xff]
        %v3906 = vld [vmem:[%s5 + $0x128] sm:$0xff]
        %v3907 = vld [vmem:[%s5 + $0x130] sm:$0xff]
        %v3908 = vld [vmem:[%s5 + $0x138] sm:$0xff]
        %v3909 = vld [vmem:[%s5 + $0x140] sm:$0xff]
        %v3910 = vld [vmem:[%s5 + $0x148] sm:$0xff]
        %v3911 = vld [vmem:[%s5 + $0x150] sm:$0xff]
        %v3912 = vld [vmem:[%s5 + $0x158] sm:$0xff]
        %v3913 = vld [vmem:[%s5 + $0x160] sm:$0xff]
        %v3914 = vld [vmem:[%s5 + $0x168] sm:$0xff]
        %v3915 = vld [vmem:[%s5 + $0x170] sm:$0xff]
        %v3916 = vld [vmem:[%s5 + $0x178] sm:$0xff]
        %v3917 = vld [vmem:[%s5 + $0x180] sm:$0xff]
        %v3918 = vld [vmem:[%s5 + $0x188] sm:$0xff]
        %v3919 = vld [vmem:[%s5 + $0x190] sm:$0xff]
        %v3920 = vld [vmem:[%s5 + $0x198] sm:$0xff]
        %v3921 = vld [vmem:[%s5 + $0x1a0] sm:$0xff]
        %v3922 = vld [vmem:[%s5 + $0x1a8] sm:$0xff]
        %v3923 = vld [vmem:[%s5 + $0x1b0] sm:$0xff]
        %v3924 = vld [vmem:[%s5 + $0x1b8] sm:$0xff]
        %v3925 = vld [vmem:[%s5 + $0x1c0] sm:$0xff]
        %v3926 = vld [vmem:[%s5 + $0x1c8] sm:$0xff]
        %v3927 = vld [vmem:[%s5 + $0x1d0] sm:$0xff]
        %v3928 = vld [vmem:[%s5 + $0x1d8] sm:$0xff]
        %v3929 = vld [vmem:[%s5 + $0x1e0] sm:$0xff]
        %v3930 = vld [vmem:[%s5 + $0x1e8] sm:$0xff]
        %v3931 = vld [vmem:[%s5 + $0x1f0] sm:$0xff]
        %v3932 = vld [vmem:[%s5 + $0x1f8] sm:$0xff]
        %v3933 = vld [vmem:[%s5 + $0x200] sm:$0xff]
        %v3934 = vld [vmem:[%s5 + $0x208] sm:$0xff]
        %v3935 = vld [vmem:[%s5 + $0x210] sm:$0xff]
        %v3936 = vld [vmem:[%s5 + $0x218] sm:$0xff]
        %v3937 = vld [vmem:[%s5 + $0x220] sm:$0xff]
        %v3938 = vld [vmem:[%s5 + $0x228] sm:$0xff]
        %v3939 = vld [vmem:[%s5 + $0x230] sm:$0xff]
        %v3940 = vld [vmem:[%s5 + $0x238] sm:$0xff]
        %v3941 = vld [vmem:[%s5 + $0x240] sm:$0xff]
        %v3942 = vld [vmem:[%s5 + $0x248] sm:$0xff]
        %v3943 = vld [vmem:[%s5 + $0x250] sm:$0xff]
        %v3944 = vld [vmem:[%s5 + $0x258] sm:$0xff]
        %v3945 = vld [vmem:[%s5 + $0x260] sm:$0xff]
        %v3946 = vld [vmem:[%s5 + $0x268] sm:$0xff]
        %v3947 = vld [vmem:[%s5 + $0x270] sm:$0xff]
        %v3948 = vld [vmem:[%s5 + $0x278] sm:$0xff]
        %v3949 = vld [vmem:[%s5 + $0x280] sm:$0xff]
        %v3950 = vld [vmem:[%s5 + $0x288] sm:$0xff]
        %v3951 = vld [vmem:[%s5 + $0x290] sm:$0xff]
        %v3952 = vld [vmem:[%s5 + $0x298] sm:$0xff]
        %v3953 = vld [vmem:[%s5 + $0x2a0] sm:$0xff]
        %v3954 = vld [vmem:[%s5 + $0x2a8] sm:$0xff]
        %v3955 = vld [vmem:[%s5 + $0x2b0] sm:$0xff]
        %v3956 = vld [vmem:[%s5 + $0x2b8] sm:$0xff]
        %v3957 = vld [vmem:[%s5 + $0x2c0] sm:$0xff]
        %v3958 = vld [vmem:[%s5 + $0x2c8] sm:$0xff]
        %v3959 = vld [vmem:[%s5 + $0x2d0] sm:$0xff]
        %v3960 = vld [vmem:[%s5 + $0x2d8] sm:$0xff]
        %v3961 = vld [vmem:[%s5 + $0x2e0] sm:$0xff]
        %v3962 = vld [vmem:[%s5 + $0x2e8] sm:$0xff]
        %v3963 = vld [vmem:[%s5 + $0x2f0] sm:$0xff]
        %v3964 = vld [vmem:[%s5 + $0x2f8] sm:$0xff]
        %v3965 = vld [vmem:[%s5 + $0x300] sm:$0xff]
        %v3966 = vld [vmem:[%s5 + $0x308] sm:$0xff]
        %v3967 = vld [vmem:[%s5 + $0x310] sm:$0xff]
        %v3968 = vld [vmem:[%s5 + $0x318] sm:$0xff]
        %v3969 = vld [vmem:[%s5 + $0x320] sm:$0xff]
        %v3970 = vld [vmem:[%s5 + $0x328] sm:$0xff]
        %v3971 = vld [vmem:[%s5 + $0x330] sm:$0xff]
        %v3972 = vld [vmem:[%s5 + $0x338] sm:$0xff]
        %v3973 = vld [vmem:[%s5 + $0x340] sm:$0xff]
        %v3974 = vld [vmem:[%s5 + $0x348] sm:$0xff]
        %v3975 = vld [vmem:[%s5 + $0x350] sm:$0xff]
        %v3976 = vld [vmem:[%s5 + $0x358] sm:$0xff]
        %v3977 = vld [vmem:[%s5 + $0x360] sm:$0xff]
        %v3978 = vld [vmem:[%s5 + $0x368] sm:$0xff]
        %v3979 = vld [vmem:[%s5 + $0x370] sm:$0xff]
        %v3980 = vld [vmem:[%s5 + $0x378] sm:$0xff]
        %v3981 = vld [vmem:[%s5 + $0x380] sm:$0xff]
        %v3982 = vld [vmem:[%s5 + $0x388] sm:$0xff]
        %v3983 = vld [vmem:[%s5 + $0x390] sm:$0xff]
        %v3984 = vld [vmem:[%s5 + $0x398] sm:$0xff]
        %v3985 = vld [vmem:[%s5 + $0x3a0] sm:$0xff]
        %v3986 = vld [vmem:[%s5 + $0x3a8] sm:$0xff]
        %v3987 = vld [vmem:[%s5 + $0x3b0] sm:$0xff]
        %v3988 = vld [vmem:[%s5 + $0x3b8] sm:$0xff]
        %v3989 = vld [vmem:[%s5 + $0x3c0] sm:$0xff]
        %v3990 = vld [vmem:[%s5 + $0x3c8] sm:$0xff]
        %v3991 = vld [vmem:[%s5 + $0x3d0] sm:$0xff]
        %v3992 = vld [vmem:[%s5 + $0x3d8] sm:$0xff]
        %v3993 = vld [vmem:[%s5 + $0x3e0] sm:$0xff]
        %v3994 = vld [vmem:[%s5 + $0x3e8] sm:$0xff]
        %v3995 = vld [vmem:[%s5 + $0x3f0] sm:$0xff]
        %v3996 = vld [vmem:[%s5 + $0x3f8] sm:$0xff]
        %v3997 = vld [vmem:[%s5 + $0x400] sm:$0xff]
        %v3998 = vld [vmem:[%s5 + $0x408] sm:$0xff]
        %v3999 = vld [vmem:[%s5 + $0x410] sm:$0xff]
        %v4000 = vld [vmem:[%s5 + $0x418] sm:$0xff]
        %v4001 = vld [vmem:[%s5 + $0x420] sm:$0xff]
        %v4002 = vld [vmem:[%s5 + $0x428] sm:$0xff]
        %v4003 = vld [vmem:[%s5 + $0x430] sm:$0xff]
        %v4004 = vld [vmem:[%s5 + $0x438] sm:$0xff]
        %v4005 = vld [vmem:[%s5 + $0x440] sm:$0xff]
        %v4006 = vld [vmem:[%s5 + $0x448] sm:$0xff]
        %v4007 = vld [vmem:[%s5 + $0x450] sm:$0xff]
        %v4008 = vld [vmem:[%s5 + $0x458] sm:$0xff]
        %v4009 = vld [vmem:[%s5 + $0x460] sm:$0xff]
        %v4010 = vld [vmem:[%s5 + $0x468] sm:$0xff]
        %v4011 = vld [vmem:[%s5 + $0x470] sm:$0xff]
        %v4012 = vld [vmem:[%s5 + $0x478] sm:$0xff]
        %v4013 = vld [vmem:[%s5 + $0x480] sm:$0xff]
        %v4014 = vld [vmem:[%s5 + $0x488] sm:$0xff]
        %v4015 = vld [vmem:[%s5 + $0x490] sm:$0xff]
        %v4016 = vld [vmem:[%s5 + $0x498] sm:$0xff]
        %v4017 = vld [vmem:[%s5 + $0x4a0] sm:$0xff]
        %v4018 = vld [vmem:[%s5 + $0x4a8] sm:$0xff]
        %v4019 = vld [vmem:[%s5 + $0x4b0] sm:$0xff]
        %v4020 = vld [vmem:[%s5 + $0x4b8] sm:$0xff]
        %v4021 = vld [vmem:[%s5 + $0x4c0] sm:$0xff]
        %v4022 = vld [vmem:[%s5 + $0x4c8] sm:$0xff]
        %v4023 = vld [vmem:[%s5 + $0x4d0] sm:$0xff]
        %v4024 = vld [vmem:[%s5 + $0x4d8] sm:$0xff]
        %v4025 = vld [vmem:[%s5 + $0x4e0] sm:$0xff]
        %v4026 = vld [vmem:[%s5 + $0x4e8] sm:$0xff]
        %v4027 = vld [vmem:[%s5 + $0x4f0] sm:$0xff]
        %v4028 = vld [vmem:[%s5 + $0x4f8] sm:$0xff]
        %v4029 = vld [vmem:[%s5 + $0x500] sm:$0xff]
        %v4030 = vld [vmem:[%s5 + $0x508] sm:$0xff]
        %v4031 = vld [vmem:[%s5 + $0x510] sm:$0xff]
        %v4032 = vld [vmem:[%s5 + $0x518] sm:$0xff]
        %v4033 = vld [vmem:[%s5 + $0x520] sm:$0xff]
        %v4034 = vld [vmem:[%s5 + $0x528] sm:$0xff]
        %v4035 = vld [vmem:[%s5 + $0x530] sm:$0xff]
        %v4036 = vld [vmem:[%s5 + $0x538] sm:$0xff]
        %v4037 = vld [vmem:[%s5 + $0x540] sm:$0xff]
        %v4038 = vld [vmem:[%s5 + $0x548] sm:$0xff]
        %v4039 = vld [vmem:[%s5 + $0x550] sm:$0xff]
        %v4040 = vld [vmem:[%s5 + $0x558] sm:$0xff]
        %v4041 = vld [vmem:[%s5 + $0x560] sm:$0xff]
        %v4042 = vld [vmem:[%s5 + $0x568] sm:$0xff]
        %v4043 = vld [vmem:[%s5 + $0x570] sm:$0xff]
        %v4044 = vld [vmem:[%s5 + $0x578] sm:$0xff]
        %v4045 = vld [vmem:[%s5 + $0x580] sm:$0xff]
        %v4046 = vld [vmem:[%s5 + $0x588] sm:$0xff]
        %v4047 = vld [vmem:[%s5 + $0x590] sm:$0xff]
        %v4048 = vld [vmem:[%s5 + $0x598] sm:$0xff]
        %v4049 = vld [vmem:[%s5 + $0x5a0] sm:$0xff]
        %v4050 = vld [vmem:[%s5 + $0x5a8] sm:$0xff]
        %v4051 = vld [vmem:[%s5 + $0x5b0] sm:$0xff]
        %v4052 = vld [vmem:[%s5 + $0x5b8] sm:$0xff]
        %v4053 = vld [vmem:[%s5 + $0x5c0] sm:$0xff]
        %v4054 = vld [vmem:[%s5 + $0x5c8] sm:$0xff]
        %v4055 = vld [vmem:[%s5 + $0x5d0] sm:$0xff]
        %v4056 = vld [vmem:[%s5 + $0x5d8] sm:$0xff]
        %v4057 = vld [vmem:[%s5 + $0x5e0] sm:$0xff]
        %v4058 = vld [vmem:[%s5 + $0x5e8] sm:$0xff]
        %v4059 = vld [vmem:[%s5 + $0x5f0] sm:$0xff]
        %v4060 = vld [vmem:[%s5 + $0x5f8] sm:$0xff]
        %v4061 = vld [vmem:[%s5 + $0x600] sm:$0xff]
        %v4062 = vld [vmem:[%s5 + $0x608] sm:$0xff]
        %v4063 = vld [vmem:[%s5 + $0x610] sm:$0xff]
        %v4064 = vld [vmem:[%s5 + $0x618] sm:$0xff]
        %v4065 = vld [vmem:[%s5 + $0x620] sm:$0xff]
        %v4066 = vld [vmem:[%s5 + $0x628] sm:$0xff]
        %v4067 = vld [vmem:[%s5 + $0x630] sm:$0xff]
        %v4068 = vld [vmem:[%s5 + $0x638] sm:$0xff]
        %v4069 = vld [vmem:[%s5 + $0x640] sm:$0xff]
        %v4070 = vld [vmem:[%s5 + $0x648] sm:$0xff]
        %v4071 = vld [vmem:[%s5 + $0x650] sm:$0xff]
        %v4072 = vld [vmem:[%s5 + $0x658] sm:$0xff]
        %v4073 = vld [vmem:[%s5 + $0x660] sm:$0xff]
        %v4074 = vld [vmem:[%s5 + $0x668] sm:$0xff]
        %v4075 = vld [vmem:[%s5 + $0x670] sm:$0xff]
        %v4076 = vld [vmem:[%s5 + $0x678] sm:$0xff]
        %v4077 = vld [vmem:[%s5 + $0x680] sm:$0xff]
        %v4078 = vld [vmem:[%s5 + $0x688] sm:$0xff]
        %v4079 = vld [vmem:[%s5 + $0x690] sm:$0xff]
        %v4080 = vld [vmem:[%s5 + $0x698] sm:$0xff]
        %v4081 = vld [vmem:[%s5 + $0x6a0] sm:$0xff]
        %v4082 = vld [vmem:[%s5 + $0x6a8] sm:$0xff]
        %v4083 = vld [vmem:[%s5 + $0x6b0] sm:$0xff]
        %v4084 = vld [vmem:[%s5 + $0x6b8] sm:$0xff]
        %v4085 = vld [vmem:[%s5 + $0x6c0] sm:$0xff]
        %v4086 = vld [vmem:[%s5 + $0x6c8] sm:$0xff]
        %v4087 = vld [vmem:[%s5 + $0x6d0] sm:$0xff]
        %v4088 = vld [vmem:[%s5 + $0x6d8] sm:$0xff]
        %v4089 = vld [vmem:[%s5 + $0x6e0] sm:$0xff]
        %v4090 = vld [vmem:[%s5 + $0x6e8] sm:$0xff]
        %v4091 = vld [vmem:[%s5 + $0x6f0] sm:$0xff]
        %v4092 = vld [vmem:[%s5 + $0x6f8] sm:$0xff]
        %v4093 = vld [vmem:[%s5 + $0x700] sm:$0xff]
        %v4094 = vld [vmem:[%s5 + $0x708] sm:$0xff]
        %v4095 = vld [vmem:[%s5 + $0x710] sm:$0xff]
        %v4096 = vld [vmem:[%s5 + $0x718] sm:$0xff]
        %v4097 = vld [vmem:[%s5 + $0x720] sm:$0xff]
        %v4098 = vld [vmem:[%s5 + $0x728] sm:$0xff]
        %v4099 = vld [vmem:[%s5 + $0x730] sm:$0xff]
        %v4100 = vld [vmem:[%s5 + $0x738] sm:$0xff]
        %v4101 = vld [vmem:[%s5 + $0x740] sm:$0xff]
        %v4102 = vld [vmem:[%s5 + $0x748] sm:$0xff]
        %v4103 = vld [vmem:[%s5 + $0x750] sm:$0xff]
        %v4104 = vld [vmem:[%s5 + $0x758] sm:$0xff]
        %v4105 = vld [vmem:[%s5 + $0x760] sm:$0xff]
        %v4106 = vld [vmem:[%s5 + $0x768] sm:$0xff]
        %v4107 = vld [vmem:[%s5 + $0x770] sm:$0xff]
        %v4108 = vld [vmem:[%s5 + $0x778] sm:$0xff]
        %v4109 = vld [vmem:[%s5 + $0x780] sm:$0xff]
        %v4110 = vld [vmem:[%s5 + $0x788] sm:$0xff]
        %v4111 = vld [vmem:[%s5 + $0x790] sm:$0xff]
        %v4112 = vld [vmem:[%s5 + $0x798] sm:$0xff]
        %v4113 = vld [vmem:[%s5 + $0x7a0] sm:$0xff]
        %v4114 = vld [vmem:[%s5 + $0x7a8] sm:$0xff]
        %v4115 = vld [vmem:[%s5 + $0x7b0] sm:$0xff]
        %v4116 = vld [vmem:[%s5 + $0x7b8] sm:$0xff]
        %v4117 = vld [vmem:[%s5 + $0x7c0] sm:$0xff]
        %v4118 = vld [vmem:[%s5 + $0x7c8] sm:$0xff]
        %v4119 = vld [vmem:[%s5 + $0x7d0] sm:$0xff]
        %v4120 = vld [vmem:[%s5 + $0x7d8] sm:$0xff]
        %v4121 = vld [vmem:[%s5 + $0x7e0] sm:$0xff]
        %v4122 = vld [vmem:[%s5 + $0x7e8] sm:$0xff]
        %v4123 = vld [vmem:[%s5 + $0x7f0] sm:$0xff]
        %v4124 = vld [vmem:[%s5 + $0x7f8] sm:$0xff]
        %v4125 = vld [vmem:[%s5 + $0x800] sm:$0xff]
        %v4126 = vld [vmem:[%s5 + $0x808] sm:$0xff]
        %v4127 = vld [vmem:[%s5 + $0x810] sm:$0xff]
        %v4128 = vld [vmem:[%s5 + $0x818] sm:$0xff]
        %v4129 = vld [vmem:[%s5 + $0x820] sm:$0xff]
        %v4130 = vld [vmem:[%s5 + $0x828] sm:$0xff]
        %v4131 = vld [vmem:[%s5 + $0x830] sm:$0xff]
        %v4132 = vld [vmem:[%s5 + $0x838] sm:$0xff]
        %v4133 = vld [vmem:[%s5 + $0x840] sm:$0xff]
        %v4134 = vld [vmem:[%s5 + $0x848] sm:$0xff]
        %v4135 = vld [vmem:[%s5 + $0x850] sm:$0xff]
        %v4136 = vld [vmem:[%s5 + $0x858] sm:$0xff]
        %v4137 = vld [vmem:[%s5 + $0x860] sm:$0xff]
        %v4138 = vld [vmem:[%s5 + $0x868] sm:$0xff]
        %v4139 = vld [vmem:[%s5 + $0x870] sm:$0xff]
        %v4140 = vld [vmem:[%s5 + $0x878] sm:$0xff]
        %v4141 = vld [vmem:[%s5 + $0x880] sm:$0xff]
        %v4142 = vld [vmem:[%s5 + $0x888] sm:$0xff]
        %v4143 = vld [vmem:[%s5 + $0x890] sm:$0xff]
        %v4144 = vld [vmem:[%s5 + $0x898] sm:$0xff]
        %v4145 = vld [vmem:[%s5 + $0x8a0] sm:$0xff]
        %v4146 = vld [vmem:[%s5 + $0x8a8] sm:$0xff]
        %v4147 = vld [vmem:[%s5 + $0x8b0] sm:$0xff]
        %v4148 = vld [vmem:[%s5 + $0x8b8] sm:$0xff]
        %v4149 = vld [vmem:[%s5 + $0x8c0] sm:$0xff]
        %v4150 = vld [vmem:[%s5 + $0x8c8] sm:$0xff]
        %v4151 = vld [vmem:[%s5 + $0x8d0] sm:$0xff]
        %v4152 = vld [vmem:[%s5 + $0x8d8] sm:$0xff]
        %v4153 = vld [vmem:[%s5 + $0x8e0] sm:$0xff]
        %v4154 = vld [vmem:[%s5 + $0x8e8] sm:$0xff]
        %v4155 = vld [vmem:[%s5 + $0x8f0] sm:$0xff]
        %v4156 = vld [vmem:[%s5 + $0x8f8] sm:$0xff]
        %v4157 = vld [vmem:[%s5 + $0x900] sm:$0xff]
        %v4158 = vld [vmem:[%s5 + $0x908] sm:$0xff]
        %v4159 = vld [vmem:[%s5 + $0x910] sm:$0xff]
        %v4160 = vld [vmem:[%s5 + $0x918] sm:$0xff]
        %v4161 = vld [vmem:[%s5 + $0x920] sm:$0xff]
        %v4162 = vld [vmem:[%s5 + $0x928] sm:$0xff]
        %v4163 = vld [vmem:[%s5 + $0x930] sm:$0xff]
        %v4164 = vld [vmem:[%s5 + $0x938] sm:$0xff]
        %v4165 = vld [vmem:[%s5 + $0x940] sm:$0xff]
        %v4166 = vld [vmem:[%s5 + $0x948] sm:$0xff]
        %v4167 = vld [vmem:[%s5 + $0x950] sm:$0xff]
        %v4168 = vld [vmem:[%s5 + $0x958] sm:$0xff]
        %v4169 = vld [vmem:[%s5 + $0x960] sm:$0xff]
        %v4170 = vld [vmem:[%s5 + $0x968] sm:$0xff]
        %v4171 = vld [vmem:[%s5 + $0x970] sm:$0xff]
        %v4172 = vld [vmem:[%s5 + $0x978] sm:$0xff]
        %v4173 = vld [vmem:[%s5 + $0x980] sm:$0xff]
        %v4174 = vld [vmem:[%s5 + $0x988] sm:$0xff]
        %v4175 = vld [vmem:[%s5 + $0x990] sm:$0xff]
        %v4176 = vld [vmem:[%s5 + $0x998] sm:$0xff]
        %v4177 = vld [vmem:[%s5 + $0x9a0] sm:$0xff]
        %v4178 = vld [vmem:[%s5 + $0x9a8] sm:$0xff]
        %v4179 = vld [vmem:[%s5 + $0x9b0] sm:$0xff]
        %v4180 = vld [vmem:[%s5 + $0x9b8] sm:$0xff]
        %v4181 = vld [vmem:[%s5 + $0x9c0] sm:$0xff]
        %v4182 = vld [vmem:[%s5 + $0x9c8] sm:$0xff]
        %v4183 = vld [vmem:[%s5 + $0x9d0] sm:$0xff]
        %v4184 = vld [vmem:[%s5 + $0x9d8] sm:$0xff]
        %v4185 = vld [vmem:[%s5 + $0x9e0] sm:$0xff]
        %v4186 = vld [vmem:[%s5 + $0x9e8] sm:$0xff]
        %v4187 = vld [vmem:[%s5 + $0x9f0] sm:$0xff]
        %v4188 = vld [vmem:[%s5 + $0x9f8] sm:$0xff]
        %v4189 = vld [vmem:[%s5 + $0xa00] sm:$0xff]
        %v4190 = vld [vmem:[%s5 + $0xa08] sm:$0xff]
        %v4191 = vld [vmem:[%s5 + $0xa10] sm:$0xff]
        %v4192 = vld [vmem:[%s5 + $0xa18] sm:$0xff]
        %v4193 = vld [vmem:[%s5 + $0xa20] sm:$0xff]
        %v4194 = vld [vmem:[%s5 + $0xa28] sm:$0xff]
        %v4195 = vld [vmem:[%s5 + $0xa30] sm:$0xff]
        %v4196 = vld [vmem:[%s5 + $0xa38] sm:$0xff]
        %v4197 = vld [vmem:[%s5 + $0xa40] sm:$0xff]
        %v4198 = vld [vmem:[%s5 + $0xa48] sm:$0xff]
        %v4199 = vld [vmem:[%s5 + $0xa50] sm:$0xff]
        %v4200 = vld [vmem:[%s5 + $0xa58] sm:$0xff]
        %v4201 = vld [vmem:[%s5 + $0xa60] sm:$0xff]
        %v4202 = vld [vmem:[%s5 + $0xa68] sm:$0xff]
        %v4203 = vld [vmem:[%s5 + $0xa70] sm:$0xff]
        %v4204 = vld [vmem:[%s5 + $0xa78] sm:$0xff]
        %v4205 = vld [vmem:[%s5 + $0xa80] sm:$0xff]
        %v4206 = vld [vmem:[%s5 + $0xa88] sm:$0xff]
        %v4207 = vld [vmem:[%s5 + $0xa90] sm:$0xff]
        %v4208 = vld [vmem:[%s5 + $0xa98] sm:$0xff]
        %v4209 = vld [vmem:[%s5 + $0xaa0] sm:$0xff]
        %v4210 = vld [vmem:[%s5 + $0xaa8] sm:$0xff]
        %v4211 = vld [vmem:[%s5 + $0xab0] sm:$0xff]
        %v4212 = vld [vmem:[%s5 + $0xab8] sm:$0xff]
        %v4213 = vld [vmem:[%s5 + $0xac0] sm:$0xff]
        %v4214 = vld [vmem:[%s5 + $0xac8] sm:$0xff]
        %v4215 = vld [vmem:[%s5 + $0xad0] sm:$0xff]
        %v4216 = vld [vmem:[%s5 + $0xad8] sm:$0xff]
        %v4217 = vld [vmem:[%s5 + $0xae0] sm:$0xff]
        %v4218 = vld [vmem:[%s5 + $0xae8] sm:$0xff]
        %v4219 = vld [vmem:[%s5 + $0xaf0] sm:$0xff]
        %v4220 = vld [vmem:[%s5 + $0xaf8] sm:$0xff]
        %v4221 = vld [vmem:[%s5 + $0xb00] sm:$0xff]
        %v4222 = vld [vmem:[%s5 + $0xb08] sm:$0xff]
        %v4223 = vld [vmem:[%s5 + $0xb10] sm:$0xff]
        %v4224 = vld [vmem:[%s5 + $0xb18] sm:$0xff]
        %v4225 = vld [vmem:[%s5 + $0xb20] sm:$0xff]
        %v4226 = vld [vmem:[%s5 + $0xb28] sm:$0xff]
        %v4227 = vld [vmem:[%s5 + $0xb30] sm:$0xff]
        %v4228 = vld [vmem:[%s5 + $0xb38] sm:$0xff]
        %v4229 = vld [vmem:[%s5 + $0xb40] sm:$0xff]
        %v4230 = vld [vmem:[%s5 + $0xb48] sm:$0xff]
        %v4231 = vld [vmem:[%s5 + $0xb50] sm:$0xff]
        %v4232 = vld [vmem:[%s5 + $0xb58] sm:$0xff]
        %v4233 = vld [vmem:[%s5 + $0xb60] sm:$0xff]
        %v4234 = vld [vmem:[%s5 + $0xb68] sm:$0xff]
        %v4235 = vld [vmem:[%s5 + $0xb70] sm:$0xff]
        %v4236 = vld [vmem:[%s5 + $0xb78] sm:$0xff]
        %v4237 = vld [vmem:[%s5 + $0xb80] sm:$0xff]
        %v4238 = vld [vmem:[%s5 + $0xb88] sm:$0xff]
        %v4239 = vld [vmem:[%s5 + $0xb90] sm:$0xff]
        %v4240 = vld [vmem:[%s5 + $0xb98] sm:$0xff]
        %v4241 = vld [vmem:[%s5 + $0xba0] sm:$0xff]
        %v4242 = vld [vmem:[%s5 + $0xba8] sm:$0xff]
        %v4243 = vld [vmem:[%s5 + $0xbb0] sm:$0xff]
        %v4244 = vld [vmem:[%s5 + $0xbb8] sm:$0xff]
        %v4245 = vld [vmem:[%s5 + $0xbc0] sm:$0xff]
        %v4246 = vld [vmem:[%s5 + $0xbc8] sm:$0xff]
        %v4247 = vld [vmem:[%s5 + $0xbd0] sm:$0xff]
        %v4248 = vld [vmem:[%s5 + $0xbd8] sm:$0xff]
        %v4249 = vld [vmem:[%s5 + $0xbe0] sm:$0xff]
        %v4250 = vld [vmem:[%s5 + $0xbe8] sm:$0xff]
        %v4251 = vld [vmem:[%s5 + $0xbf0] sm:$0xff]
        %v4252 = vld [vmem:[%s5 + $0xbf8] sm:$0xff]
        %v4253 = vld [vmem:[%s5 + $0xc00] sm:$0xff]
        %v4254 = vld [vmem:[%s5 + $0xc08] sm:$0xff]
        %v4255 = vld [vmem:[%s5 + $0xc10] sm:$0xff]
        %v4256 = vld [vmem:[%s5 + $0xc18] sm:$0xff]
        %v4257 = vld [vmem:[%s5 + $0xc20] sm:$0xff]
        %v4258 = vld [vmem:[%s5 + $0xc28] sm:$0xff]
        %v4259 = vld [vmem:[%s5 + $0xc30] sm:$0xff]
        %v4260 = vld [vmem:[%s5 + $0xc38] sm:$0xff]
        %v4261 = vld [vmem:[%s5 + $0xc40] sm:$0xff]
        %v4262 = vld [vmem:[%s5 + $0xc48] sm:$0xff]
        %v4263 = vld [vmem:[%s5 + $0xc50] sm:$0xff]
        %v4264 = vld [vmem:[%s5 + $0xc58] sm:$0xff]
        %v4265 = vld [vmem:[%s5 + $0xc60] sm:$0xff]
        %v4266 = vld [vmem:[%s5 + $0xc68] sm:$0xff]
        %v4267 = vld [vmem:[%s5 + $0xc70] sm:$0xff]
        %v4268 = vld [vmem:[%s5 + $0xc78] sm:$0xff]
        %v4269 = vld [vmem:[%s5 + $0xc80] sm:$0xff]
        %v4270 = vld [vmem:[%s5 + $0xc88] sm:$0xff]
        %v4271 = vld [vmem:[%s5 + $0xc90] sm:$0xff]
        %v4272 = vld [vmem:[%s5 + $0xc98] sm:$0xff]
        %v4273 = vld [vmem:[%s5 + $0xca0] sm:$0xff]
        %v4274 = vld [vmem:[%s5 + $0xca8] sm:$0xff]
        %v4275 = vld [vmem:[%s5 + $0xcb0] sm:$0xff]
        %v4276 = vld [vmem:[%s5 + $0xcb8] sm:$0xff]
        %v4277 = vld [vmem:[%s5 + $0xcc0] sm:$0xff]
        %v4278 = vld [vmem:[%s5 + $0xcc8] sm:$0xff]
        %v4279 = vld [vmem:[%s5 + $0xcd0] sm:$0xff]
        %v4280 = vld [vmem:[%s5 + $0xcd8] sm:$0xff]
        %v4281 = vld [vmem:[%s5 + $0xce0] sm:$0xff]
        %v4282 = vld [vmem:[%s5 + $0xce8] sm:$0xff]
        %v4283 = vld [vmem:[%s5 + $0xcf0] sm:$0xff]
        %v4284 = vld [vmem:[%s5 + $0xcf8] sm:$0xff]
        %v4285 = vld [vmem:[%s5 + $0xd00] sm:$0xff]
        %v4286 = vld [vmem:[%s5 + $0xd08] sm:$0xff]
        %v4287 = vld [vmem:[%s5 + $0xd10] sm:$0xff]
        %v4288 = vld [vmem:[%s5 + $0xd18] sm:$0xff]
        %v4289 = vld [vmem:[%s5 + $0xd20] sm:$0xff]
        %v4290 = vld [vmem:[%s5 + $0xd28] sm:$0xff]
        %v4291 = vld [vmem:[%s5 + $0xd30] sm:$0xff]
        %v4292 = vld [vmem:[%s5 + $0xd38] sm:$0xff]
        %v4293 = vld [vmem:[%s5 + $0xd40] sm:$0xff]
        %v4294 = vld [vmem:[%s5 + $0xd48] sm:$0xff]
        %v4295 = vld [vmem:[%s5 + $0xd50] sm:$0xff]
        %v4296 = vld [vmem:[%s5 + $0xd58] sm:$0xff]
        %v4297 = vld [vmem:[%s5 + $0xd60] sm:$0xff]
        %v4298 = vld [vmem:[%s5 + $0xd68] sm:$0xff]
        %v4299 = vld [vmem:[%s5 + $0xd70] sm:$0xff]
        %v4300 = vld [vmem:[%s5 + $0xd78] sm:$0xff]
        %v4301 = vld [vmem:[%s5 + $0xd80] sm:$0xff]
        %v4302 = vld [vmem:[%s5 + $0xd88] sm:$0xff]
        %v4303 = vld [vmem:[%s5 + $0xd90] sm:$0xff]
        %v4304 = vld [vmem:[%s5 + $0xd98] sm:$0xff]
        %v4305 = vld [vmem:[%s5 + $0xda0] sm:$0xff]
        %v4306 = vld [vmem:[%s5 + $0xda8] sm:$0xff]
        %v4307 = vld [vmem:[%s5 + $0xdb0] sm:$0xff]
        %v4308 = vld [vmem:[%s5 + $0xdb8] sm:$0xff]
        %v4309 = vld [vmem:[%s5 + $0xdc0] sm:$0xff]
        %v4310 = vld [vmem:[%s5 + $0xdc8] sm:$0xff]
        %v4311 = vld [vmem:[%s5 + $0xdd0] sm:$0xff]
        %v4312 = vld [vmem:[%s5 + $0xdd8] sm:$0xff]
        %v4313 = vld [vmem:[%s5 + $0xde0] sm:$0xff]
        %v4314 = vld [vmem:[%s5 + $0xde8] sm:$0xff]
        %v4315 = vld [vmem:[%s5 + $0xdf0] sm:$0xff]
        %v4316 = vld [vmem:[%s5 + $0xdf8] sm:$0xff]
        %v4317 = vld [vmem:[%s5 + $0xe00] sm:$0xff]
        %v4318 = vld [vmem:[%s5 + $0xe08] sm:$0xff]
        %v4319 = vld [vmem:[%s5 + $0xe10] sm:$0xff]
        %v4320 = vld [vmem:[%s5 + $0xe18] sm:$0xff]
        %v4321 = vld [vmem:[%s5 + $0xe20] sm:$0xff]
        %v4322 = vld [vmem:[%s5 + $0xe28] sm:$0xff]
        %v4323 = vld [vmem:[%s5 + $0xe30] sm:$0xff]
        %v4324 = vld [vmem:[%s5 + $0xe38] sm:$0xff]
        %v4325 = vld [vmem:[%s5 + $0xe40] sm:$0xff]
        %v4326 = vld [vmem:[%s5 + $0xe48] sm:$0xff]
        %v4327 = vld [vmem:[%s5 + $0xe50] sm:$0xff]
        %v4328 = vld [vmem:[%s5 + $0xe58] sm:$0xff]
        %v4329 = vld [vmem:[%s5 + $0xe60] sm:$0xff]
        %v4330 = vld [vmem:[%s5 + $0xe68] sm:$0xff]
        %v4331 = vld [vmem:[%s5 + $0xe70] sm:$0xff]
        %v4332 = vld [vmem:[%s5 + $0xe78] sm:$0xff]
        %v4333 = vld [vmem:[%s5 + $0xe80] sm:$0xff]
        %v4334 = vld [vmem:[%s5 + $0xe88] sm:$0xff]
        %v4335 = vld [vmem:[%s5 + $0xe90] sm:$0xff]
        %v4336 = vld [vmem:[%s5 + $0xe98] sm:$0xff]
        %v4337 = vld [vmem:[%s5 + $0xea0] sm:$0xff]
        %v4338 = vld [vmem:[%s5 + $0xea8] sm:$0xff]
        %v4339 = vld [vmem:[%s5 + $0xeb0] sm:$0xff]
        %v4340 = vld [vmem:[%s5 + $0xeb8] sm:$0xff]
        %v4341 = vld [vmem:[%s5 + $0xec0] sm:$0xff]
        %v4342 = vld [vmem:[%s5 + $0xec8] sm:$0xff]
        %v4343 = vld [vmem:[%s5 + $0xed0] sm:$0xff]
        %v4344 = vld [vmem:[%s5 + $0xed8] sm:$0xff]
        %v4345 = vld [vmem:[%s5 + $0xee0] sm:$0xff]
        %v4346 = vld [vmem:[%s5 + $0xee8] sm:$0xff]
        %v4347 = vld [vmem:[%s5 + $0xef0] sm:$0xff]
        %v4348 = vld [vmem:[%s5 + $0xef8] sm:$0xff]
        %v4349 = vld [vmem:[%s5 + $0xf00] sm:$0xff]
        %v4350 = vld [vmem:[%s5 + $0xf08] sm:$0xff]
        %v4351 = vld [vmem:[%s5 + $0xf10] sm:$0xff]
        %v4352 = vld [vmem:[%s5 + $0xf18] sm:$0xff]
        %v4353 = vld [vmem:[%s5 + $0xf20] sm:$0xff]
        %v4354 = vld [vmem:[%s5 + $0xf28] sm:$0xff]
        %v4355 = vld [vmem:[%s5 + $0xf30] sm:$0xff]
        %v4356 = vld [vmem:[%s5 + $0xf38] sm:$0xff]
        %v4357 = vld [vmem:[%s5 + $0xf40] sm:$0xff]
        %v4358 = vld [vmem:[%s5 + $0xf48] sm:$0xff]
        %v4359 = vld [vmem:[%s5 + $0xf50] sm:$0xff]
        %v4360 = vld [vmem:[%s5 + $0xf58] sm:$0xff]
        %v4361 = vld [vmem:[%s5 + $0xf60] sm:$0xff]
        %v4362 = vld [vmem:[%s5 + $0xf68] sm:$0xff]
        %v4363 = vld [vmem:[%s5 + $0xf70] sm:$0xff]
        %v4364 = vld [vmem:[%s5 + $0xf78] sm:$0xff]
        %v4365 = vld [vmem:[%s5 + $0xf80] sm:$0xff]
        %v4366 = vld [vmem:[%s5 + $0xf88] sm:$0xff]
        %v4367 = vld [vmem:[%s5 + $0xf90] sm:$0xff]
        %v4368 = vld [vmem:[%s5 + $0xf98] sm:$0xff]
        %v4369 = vld [vmem:[%s5 + $0xfa0] sm:$0xff]
        %v4370 = vld [vmem:[%s5 + $0xfa8] sm:$0xff]
        %v4371 = vld [vmem:[%s5 + $0xfb0] sm:$0xff]
        %v4372 = vld [vmem:[%s5 + $0xfb8] sm:$0xff]
        %v4373 = vld [vmem:[%s5 + $0xfc0] sm:$0xff]
        %v4374 = vld [vmem:[%s5 + $0xfc8] sm:$0xff]
        %v4375 = vld [vmem:[%s5 + $0xfd0] sm:$0xff]
        %v4376 = vld [vmem:[%s5 + $0xfd8] sm:$0xff]
        %v4377 = vld [vmem:[%s5 + $0xfe0] sm:$0xff]
        %v4378 = vld [vmem:[%s5 + $0xfe8] sm:$0xff]
        %v4379 = vld [vmem:[%s5 + $0xff0] sm:$0xff]
        %v4380 = vld [vmem:[%s5 + $0xff8] sm:$0xff]
        %v4381 = vld [vmem:[%s6] sm:$0xf]
        %v4894 = vunpack.c.l.b16 %v3869
        %v4895 = vunpack.c.h.b16 %v3869
        %v4896 = vunpack.c.l.b16 %v3870
        %v4897 = vunpack.c.h.b16 %v3870
        %v4898 = vunpack.c.l.b16 %v3871
        %v4899 = vunpack.c.h.b16 %v3871
        %v4900 = vunpack.c.l.b16 %v3872
        %v4901 = vunpack.c.h.b16 %v3872
        %v4902 = vunpack.c.l.b16 %v3873
        %v4903 = vunpack.c.h.b16 %v3873
        %v4904 = vunpack.c.l.b16 %v3874
        %v4905 = vunpack.c.h.b16 %v3874
        %v4906 = vunpack.c.l.b16 %v3875
        %v4907 = vunpack.c.h.b16 %v3875
        %v4908 = vunpack.c.l.b16 %v3876
        %v4909 = vunpack.c.h.b16 %v3876
        %v4910 = vunpack.c.l.b16 %v3877
        %v4911 = vunpack.c.h.b16 %v3877
        %v4912 = vunpack.c.l.b16 %v3878
        %v4913 = vunpack.c.h.b16 %v3878
        %v4914 = vunpack.c.l.b16 %v3879
        %v4915 = vunpack.c.h.b16 %v3879
        %v4916 = vunpack.c.l.b16 %v3880
        %v4917 = vunpack.c.h.b16 %v3880
        %v4918 = vunpack.c.l.b16 %v3881
        %v4919 = vunpack.c.h.b16 %v3881
        %v4920 = vunpack.c.l.b16 %v3882
        %v4921 = vunpack.c.h.b16 %v3882
        %v4922 = vunpack.c.l.b16 %v3883
        %v4923 = vunpack.c.h.b16 %v3883
        %v4924 = vunpack.c.l.b16 %v3884
        %v4925 = vunpack.c.h.b16 %v3884
        %v4926 = vunpack.c.l.b16 %v3885
        %v4927 = vunpack.c.h.b16 %v3885
        %v4928 = vunpack.c.l.b16 %v3886
        %v4929 = vunpack.c.h.b16 %v3886
        %v4930 = vunpack.c.l.b16 %v3887
        %v4931 = vunpack.c.h.b16 %v3887
        %v4932 = vunpack.c.l.b16 %v3888
        %v4933 = vunpack.c.h.b16 %v3888
        %v4934 = vunpack.c.l.b16 %v3889
        %v4935 = vunpack.c.h.b16 %v3889
        %v4936 = vunpack.c.l.b16 %v3890
        %v4937 = vunpack.c.h.b16 %v3890
        %v4938 = vunpack.c.l.b16 %v3891
        %v4939 = vunpack.c.h.b16 %v3891
        %v4940 = vunpack.c.l.b16 %v3892
        %v4941 = vunpack.c.h.b16 %v3892
        %v4942 = vunpack.c.l.b16 %v3893
        %v4943 = vunpack.c.h.b16 %v3893
        %v4944 = vunpack.c.l.b16 %v3894
        %v4945 = vunpack.c.h.b16 %v3894
        %v4946 = vunpack.c.l.b16 %v3895
        %v4947 = vunpack.c.h.b16 %v3895
        %v4948 = vunpack.c.l.b16 %v3896
        %v4949 = vunpack.c.h.b16 %v3896
        %v4950 = vunpack.c.l.b16 %v3897
        %v4951 = vunpack.c.h.b16 %v3897
        %v4952 = vunpack.c.l.b16 %v3898
        %v4953 = vunpack.c.h.b16 %v3898
        %v4954 = vunpack.c.l.b16 %v3899
        %v4955 = vunpack.c.h.b16 %v3899
        %v4956 = vunpack.c.l.b16 %v3900
        %v4957 = vunpack.c.h.b16 %v3900
        %v4958 = vunpack.c.l.b16 %v3901
        %v4959 = vunpack.c.h.b16 %v3901
        %v4960 = vunpack.c.l.b16 %v3902
        %v4961 = vunpack.c.h.b16 %v3902
        %v4962 = vunpack.c.l.b16 %v3903
        %v4963 = vunpack.c.h.b16 %v3903
        %v4964 = vunpack.c.l.b16 %v3904
        %v4965 = vunpack.c.h.b16 %v3904
        %v4966 = vunpack.c.l.b16 %v3905
        %v4967 = vunpack.c.h.b16 %v3905
        %v4968 = vunpack.c.l.b16 %v3906
        %v4969 = vunpack.c.h.b16 %v3906
        %v4970 = vunpack.c.l.b16 %v3907
        %v4971 = vunpack.c.h.b16 %v3907
        %v4972 = vunpack.c.l.b16 %v3908
        %v4973 = vunpack.c.h.b16 %v3908
        %v4974 = vunpack.c.l.b16 %v3909
        %v4975 = vunpack.c.h.b16 %v3909
        %v4976 = vunpack.c.l.b16 %v3910
        %v4977 = vunpack.c.h.b16 %v3910
        %v4978 = vunpack.c.l.b16 %v3911
        %v4979 = vunpack.c.h.b16 %v3911
        %v4980 = vunpack.c.l.b16 %v3912
        %v4981 = vunpack.c.h.b16 %v3912
        %v4982 = vunpack.c.l.b16 %v3913
        %v4983 = vunpack.c.h.b16 %v3913
        %v4984 = vunpack.c.l.b16 %v3914
        %v4985 = vunpack.c.h.b16 %v3914
        %v4986 = vunpack.c.l.b16 %v3915
        %v4987 = vunpack.c.h.b16 %v3915
        %v4988 = vunpack.c.l.b16 %v3916
        %v4989 = vunpack.c.h.b16 %v3916
        %v4990 = vunpack.c.l.b16 %v3917
        %v4991 = vunpack.c.h.b16 %v3917
        %v4992 = vunpack.c.l.b16 %v3918
        %v4993 = vunpack.c.h.b16 %v3918
        %v4994 = vunpack.c.l.b16 %v3919
        %v4995 = vunpack.c.h.b16 %v3919
        %v4996 = vunpack.c.l.b16 %v3920
        %v4997 = vunpack.c.h.b16 %v3920
        %v4998 = vunpack.c.l.b16 %v3921
        %v4999 = vunpack.c.h.b16 %v3921
        %v5000 = vunpack.c.l.b16 %v3922
        %v5001 = vunpack.c.h.b16 %v3922
        %v5002 = vunpack.c.l.b16 %v3923
        %v5003 = vunpack.c.h.b16 %v3923
        %v5004 = vunpack.c.l.b16 %v3924
        %v5005 = vunpack.c.h.b16 %v3924
        %v5006 = vunpack.c.l.b16 %v3925
        %v5007 = vunpack.c.h.b16 %v3925
        %v5008 = vunpack.c.l.b16 %v3926
        %v5009 = vunpack.c.h.b16 %v3926
        %v5010 = vunpack.c.l.b16 %v3927
        %v5011 = vunpack.c.h.b16 %v3927
        %v5012 = vunpack.c.l.b16 %v3928
        %v5013 = vunpack.c.h.b16 %v3928
        %v5014 = vunpack.c.l.b16 %v3929
        %v5015 = vunpack.c.h.b16 %v3929
        %v5016 = vunpack.c.l.b16 %v3930
        %v5017 = vunpack.c.h.b16 %v3930
        %v5018 = vunpack.c.l.b16 %v3931
        %v5019 = vunpack.c.h.b16 %v3931
        %v5020 = vunpack.c.l.b16 %v3932
        %v5021 = vunpack.c.h.b16 %v3932
        %v5022 = vunpack.c.l.b16 %v3933
        %v5023 = vunpack.c.h.b16 %v3933
        %v5024 = vunpack.c.l.b16 %v3934
        %v5025 = vunpack.c.h.b16 %v3934
        %v5026 = vunpack.c.l.b16 %v3935
        %v5027 = vunpack.c.h.b16 %v3935
        %v5028 = vunpack.c.l.b16 %v3936
        %v5029 = vunpack.c.h.b16 %v3936
        %v5030 = vunpack.c.l.b16 %v3937
        %v5031 = vunpack.c.h.b16 %v3937
        %v5032 = vunpack.c.l.b16 %v3938
        %v5033 = vunpack.c.h.b16 %v3938
        %v5034 = vunpack.c.l.b16 %v3939
        %v5035 = vunpack.c.h.b16 %v3939
        %v5036 = vunpack.c.l.b16 %v3940
        %v5037 = vunpack.c.h.b16 %v3940
        %v5038 = vunpack.c.l.b16 %v3941
        %v5039 = vunpack.c.h.b16 %v3941
        %v5040 = vunpack.c.l.b16 %v3942
        %v5041 = vunpack.c.h.b16 %v3942
        %v5042 = vunpack.c.l.b16 %v3943
        %v5043 = vunpack.c.h.b16 %v3943
        %v5044 = vunpack.c.l.b16 %v3944
        %v5045 = vunpack.c.h.b16 %v3944
        %v5046 = vunpack.c.l.b16 %v3945
        %v5047 = vunpack.c.h.b16 %v3945
        %v5048 = vunpack.c.l.b16 %v3946
        %v5049 = vunpack.c.h.b16 %v3946
        %v5050 = vunpack.c.l.b16 %v3947
        %v5051 = vunpack.c.h.b16 %v3947
        %v5052 = vunpack.c.l.b16 %v3948
        %v5053 = vunpack.c.h.b16 %v3948
        %v5054 = vunpack.c.l.b16 %v3949
        %v5055 = vunpack.c.h.b16 %v3949
        %v5056 = vunpack.c.l.b16 %v3950
        %v5057 = vunpack.c.h.b16 %v3950
        %v5058 = vunpack.c.l.b16 %v3951
        %v5059 = vunpack.c.h.b16 %v3951
        %v5060 = vunpack.c.l.b16 %v3952
        %v5061 = vunpack.c.h.b16 %v3952
        %v5062 = vunpack.c.l.b16 %v3953
        %v5063 = vunpack.c.h.b16 %v3953
        %v5064 = vunpack.c.l.b16 %v3954
        %v5065 = vunpack.c.h.b16 %v3954
        %v5066 = vunpack.c.l.b16 %v3955
        %v5067 = vunpack.c.h.b16 %v3955
        %v5068 = vunpack.c.l.b16 %v3956
        %v5069 = vunpack.c.h.b16 %v3956
        %v5070 = vunpack.c.l.b16 %v3957
        %v5071 = vunpack.c.h.b16 %v3957
        %v5072 = vunpack.c.l.b16 %v3958
        %v5073 = vunpack.c.h.b16 %v3958
        %v5074 = vunpack.c.l.b16 %v3959
        %v5075 = vunpack.c.h.b16 %v3959
        %v5076 = vunpack.c.l.b16 %v3960
        %v5077 = vunpack.c.h.b16 %v3960
        %v5078 = vunpack.c.l.b16 %v3961
        %v5079 = vunpack.c.h.b16 %v3961
        %v5080 = vunpack.c.l.b16 %v3962
        %v5081 = vunpack.c.h.b16 %v3962
        %v5082 = vunpack.c.l.b16 %v3963
        %v5083 = vunpack.c.h.b16 %v3963
        %v5084 = vunpack.c.l.b16 %v3964
        %v5085 = vunpack.c.h.b16 %v3964
        %v5086 = vunpack.c.l.b16 %v3965
        %v5087 = vunpack.c.h.b16 %v3965
        %v5088 = vunpack.c.l.b16 %v3966
        %v5089 = vunpack.c.h.b16 %v3966
        %v5090 = vunpack.c.l.b16 %v3967
        %v5091 = vunpack.c.h.b16 %v3967
        %v5092 = vunpack.c.l.b16 %v3968
        %v5093 = vunpack.c.h.b16 %v3968
        %v5094 = vunpack.c.l.b16 %v3969
        %v5095 = vunpack.c.h.b16 %v3969
        %v5096 = vunpack.c.l.b16 %v3970
        %v5097 = vunpack.c.h.b16 %v3970
        %v5098 = vunpack.c.l.b16 %v3971
        %v5099 = vunpack.c.h.b16 %v3971
        %v5100 = vunpack.c.l.b16 %v3972
        %v5101 = vunpack.c.h.b16 %v3972
        %v5102 = vunpack.c.l.b16 %v3973
        %v5103 = vunpack.c.h.b16 %v3973
        %v5104 = vunpack.c.l.b16 %v3974
        %v5105 = vunpack.c.h.b16 %v3974
        %v5106 = vunpack.c.l.b16 %v3975
        %v5107 = vunpack.c.h.b16 %v3975
        %v5108 = vunpack.c.l.b16 %v3976
        %v5109 = vunpack.c.h.b16 %v3976
        %v5110 = vunpack.c.l.b16 %v3977
        %v5111 = vunpack.c.h.b16 %v3977
        %v5112 = vunpack.c.l.b16 %v3978
        %v5113 = vunpack.c.h.b16 %v3978
        %v5114 = vunpack.c.l.b16 %v3979
        %v5115 = vunpack.c.h.b16 %v3979
        %v5116 = vunpack.c.l.b16 %v3980
        %v5117 = vunpack.c.h.b16 %v3980
        %v5118 = vunpack.c.l.b16 %v3981
        %v5119 = vunpack.c.h.b16 %v3981
        %v5120 = vunpack.c.l.b16 %v3982
        %v5121 = vunpack.c.h.b16 %v3982
        %v5122 = vunpack.c.l.b16 %v3983
        %v5123 = vunpack.c.h.b16 %v3983
        %v5124 = vunpack.c.l.b16 %v3984
        %v5125 = vunpack.c.h.b16 %v3984
        %v5126 = vunpack.c.l.b16 %v3985
        %v5127 = vunpack.c.h.b16 %v3985
        %v5128 = vunpack.c.l.b16 %v3986
        %v5129 = vunpack.c.h.b16 %v3986
        %v5130 = vunpack.c.l.b16 %v3987
        %v5131 = vunpack.c.h.b16 %v3987
        %v5132 = vunpack.c.l.b16 %v3988
        %v5133 = vunpack.c.h.b16 %v3988
        %v5134 = vunpack.c.l.b16 %v3989
        %v5135 = vunpack.c.h.b16 %v3989
        %v5136 = vunpack.c.l.b16 %v3990
        %v5137 = vunpack.c.h.b16 %v3990
        %v5138 = vunpack.c.l.b16 %v3991
        %v5139 = vunpack.c.h.b16 %v3991
        %v5140 = vunpack.c.l.b16 %v3992
        %v5141 = vunpack.c.h.b16 %v3992
        %v5142 = vunpack.c.l.b16 %v3993
        %v5143 = vunpack.c.h.b16 %v3993
        %v5144 = vunpack.c.l.b16 %v3994
        %v5145 = vunpack.c.h.b16 %v3994
        %v5146 = vunpack.c.l.b16 %v3995
        %v5147 = vunpack.c.h.b16 %v3995
        %v5148 = vunpack.c.l.b16 %v3996
        %v5149 = vunpack.c.h.b16 %v3996
        %v5150 = vunpack.c.l.b16 %v3997
        %v5151 = vunpack.c.h.b16 %v3997
        %v5152 = vunpack.c.l.b16 %v3998
        %v5153 = vunpack.c.h.b16 %v3998
        %v5154 = vunpack.c.l.b16 %v3999
        %v5155 = vunpack.c.h.b16 %v3999
        %v5156 = vunpack.c.l.b16 %v4000
        %v5157 = vunpack.c.h.b16 %v4000
        %v5158 = vunpack.c.l.b16 %v4001
        %v5159 = vunpack.c.h.b16 %v4001
        %v5160 = vunpack.c.l.b16 %v4002
        %v5161 = vunpack.c.h.b16 %v4002
        %v5162 = vunpack.c.l.b16 %v4003
        %v5163 = vunpack.c.h.b16 %v4003
        %v5164 = vunpack.c.l.b16 %v4004
        %v5165 = vunpack.c.h.b16 %v4004
        %v5166 = vunpack.c.l.b16 %v4005
        %v5167 = vunpack.c.h.b16 %v4005
        %v5168 = vunpack.c.l.b16 %v4006
        %v5169 = vunpack.c.h.b16 %v4006
        %v5170 = vunpack.c.l.b16 %v4007
        %v5171 = vunpack.c.h.b16 %v4007
        %v5172 = vunpack.c.l.b16 %v4008
        %v5173 = vunpack.c.h.b16 %v4008
        %v5174 = vunpack.c.l.b16 %v4009
        %v5175 = vunpack.c.h.b16 %v4009
        %v5176 = vunpack.c.l.b16 %v4010
        %v5177 = vunpack.c.h.b16 %v4010
        %v5178 = vunpack.c.l.b16 %v4011
        %v5179 = vunpack.c.h.b16 %v4011
        %v5180 = vunpack.c.l.b16 %v4012
        %v5181 = vunpack.c.h.b16 %v4012
        %v5182 = vunpack.c.l.b16 %v4013
        %v5183 = vunpack.c.h.b16 %v4013
        %v5184 = vunpack.c.l.b16 %v4014
        %v5185 = vunpack.c.h.b16 %v4014
        %v5186 = vunpack.c.l.b16 %v4015
        %v5187 = vunpack.c.h.b16 %v4015
        %v5188 = vunpack.c.l.b16 %v4016
        %v5189 = vunpack.c.h.b16 %v4016
        %v5190 = vunpack.c.l.b16 %v4017
        %v5191 = vunpack.c.h.b16 %v4017
        %v5192 = vunpack.c.l.b16 %v4018
        %v5193 = vunpack.c.h.b16 %v4018
        %v5194 = vunpack.c.l.b16 %v4019
        %v5195 = vunpack.c.h.b16 %v4019
        %v5196 = vunpack.c.l.b16 %v4020
        %v5197 = vunpack.c.h.b16 %v4020
        %v5198 = vunpack.c.l.b16 %v4021
        %v5199 = vunpack.c.h.b16 %v4021
        %v5200 = vunpack.c.l.b16 %v4022
        %v5201 = vunpack.c.h.b16 %v4022
        %v5202 = vunpack.c.l.b16 %v4023
        %v5203 = vunpack.c.h.b16 %v4023
        %v5204 = vunpack.c.l.b16 %v4024
        %v5205 = vunpack.c.h.b16 %v4024
        %v5206 = vunpack.c.l.b16 %v4025
        %v5207 = vunpack.c.h.b16 %v4025
        %v5208 = vunpack.c.l.b16 %v4026
        %v5209 = vunpack.c.h.b16 %v4026
        %v5210 = vunpack.c.l.b16 %v4027
        %v5211 = vunpack.c.h.b16 %v4027
        %v5212 = vunpack.c.l.b16 %v4028
        %v5213 = vunpack.c.h.b16 %v4028
        %v5214 = vunpack.c.l.b16 %v4029
        %v5215 = vunpack.c.h.b16 %v4029
        %v5216 = vunpack.c.l.b16 %v4030
        %v5217 = vunpack.c.h.b16 %v4030
        %v5218 = vunpack.c.l.b16 %v4031
        %v5219 = vunpack.c.h.b16 %v4031
        %v5220 = vunpack.c.l.b16 %v4032
        %v5221 = vunpack.c.h.b16 %v4032
        %v5222 = vunpack.c.l.b16 %v4033
        %v5223 = vunpack.c.h.b16 %v4033
        %v5224 = vunpack.c.l.b16 %v4034
        %v5225 = vunpack.c.h.b16 %v4034
        %v5226 = vunpack.c.l.b16 %v4035
        %v5227 = vunpack.c.h.b16 %v4035
        %v5228 = vunpack.c.l.b16 %v4036
        %v5229 = vunpack.c.h.b16 %v4036
        %v5230 = vunpack.c.l.b16 %v4037
        %v5231 = vunpack.c.h.b16 %v4037
        %v5232 = vunpack.c.l.b16 %v4038
        %v5233 = vunpack.c.h.b16 %v4038
        %v5234 = vunpack.c.l.b16 %v4039
        %v5235 = vunpack.c.h.b16 %v4039
        %v5236 = vunpack.c.l.b16 %v4040
        %v5237 = vunpack.c.h.b16 %v4040
        %v5238 = vunpack.c.l.b16 %v4041
        %v5239 = vunpack.c.h.b16 %v4041
        %v5240 = vunpack.c.l.b16 %v4042
        %v5241 = vunpack.c.h.b16 %v4042
        %v5242 = vunpack.c.l.b16 %v4043
        %v5243 = vunpack.c.h.b16 %v4043
        %v5244 = vunpack.c.l.b16 %v4044
        %v5245 = vunpack.c.h.b16 %v4044
        %v5246 = vunpack.c.l.b16 %v4045
        %v5247 = vunpack.c.h.b16 %v4045
        %v5248 = vunpack.c.l.b16 %v4046
        %v5249 = vunpack.c.h.b16 %v4046
        %v5250 = vunpack.c.l.b16 %v4047
        %v5251 = vunpack.c.h.b16 %v4047
        %v5252 = vunpack.c.l.b16 %v4048
        %v5253 = vunpack.c.h.b16 %v4048
        %v5254 = vunpack.c.l.b16 %v4049
        %v5255 = vunpack.c.h.b16 %v4049
        %v5256 = vunpack.c.l.b16 %v4050
        %v5257 = vunpack.c.h.b16 %v4050
        %v5258 = vunpack.c.l.b16 %v4051
        %v5259 = vunpack.c.h.b16 %v4051
        %v5260 = vunpack.c.l.b16 %v4052
        %v5261 = vunpack.c.h.b16 %v4052
        %v5262 = vunpack.c.l.b16 %v4053
        %v5263 = vunpack.c.h.b16 %v4053
        %v5264 = vunpack.c.l.b16 %v4054
        %v5265 = vunpack.c.h.b16 %v4054
        %v5266 = vunpack.c.l.b16 %v4055
        %v5267 = vunpack.c.h.b16 %v4055
        %v5268 = vunpack.c.l.b16 %v4056
        %v5269 = vunpack.c.h.b16 %v4056
        %v5270 = vunpack.c.l.b16 %v4057
        %v5271 = vunpack.c.h.b16 %v4057
        %v5272 = vunpack.c.l.b16 %v4058
        %v5273 = vunpack.c.h.b16 %v4058
        %v5274 = vunpack.c.l.b16 %v4059
        %v5275 = vunpack.c.h.b16 %v4059
        %v5276 = vunpack.c.l.b16 %v4060
        %v5277 = vunpack.c.h.b16 %v4060
        %v5278 = vunpack.c.l.b16 %v4061
        %v5279 = vunpack.c.h.b16 %v4061
        %v5280 = vunpack.c.l.b16 %v4062
        %v5281 = vunpack.c.h.b16 %v4062
        %v5282 = vunpack.c.l.b16 %v4063
        %v5283 = vunpack.c.h.b16 %v4063
        %v5284 = vunpack.c.l.b16 %v4064
        %v5285 = vunpack.c.h.b16 %v4064
        %v5286 = vunpack.c.l.b16 %v4065
        %v5287 = vunpack.c.h.b16 %v4065
        %v5288 = vunpack.c.l.b16 %v4066
        %v5289 = vunpack.c.h.b16 %v4066
        %v5290 = vunpack.c.l.b16 %v4067
        %v5291 = vunpack.c.h.b16 %v4067
        %v5292 = vunpack.c.l.b16 %v4068
        %v5293 = vunpack.c.h.b16 %v4068
        %v5294 = vunpack.c.l.b16 %v4069
        %v5295 = vunpack.c.h.b16 %v4069
        %v5296 = vunpack.c.l.b16 %v4070
        %v5297 = vunpack.c.h.b16 %v4070
        %v5298 = vunpack.c.l.b16 %v4071
        %v5299 = vunpack.c.h.b16 %v4071
        %v5300 = vunpack.c.l.b16 %v4072
        %v5301 = vunpack.c.h.b16 %v4072
        %v5302 = vunpack.c.l.b16 %v4073
        %v5303 = vunpack.c.h.b16 %v4073
        %v5304 = vunpack.c.l.b16 %v4074
        %v5305 = vunpack.c.h.b16 %v4074
        %v5306 = vunpack.c.l.b16 %v4075
        %v5307 = vunpack.c.h.b16 %v4075
        %v5308 = vunpack.c.l.b16 %v4076
        %v5309 = vunpack.c.h.b16 %v4076
        %v5310 = vunpack.c.l.b16 %v4077
        %v5311 = vunpack.c.h.b16 %v4077
        %v5312 = vunpack.c.l.b16 %v4078
        %v5313 = vunpack.c.h.b16 %v4078
        %v5314 = vunpack.c.l.b16 %v4079
        %v5315 = vunpack.c.h.b16 %v4079
        %v5316 = vunpack.c.l.b16 %v4080
        %v5317 = vunpack.c.h.b16 %v4080
        %v5318 = vunpack.c.l.b16 %v4081
        %v5319 = vunpack.c.h.b16 %v4081
        %v5320 = vunpack.c.l.b16 %v4082
        %v5321 = vunpack.c.h.b16 %v4082
        %v5322 = vunpack.c.l.b16 %v4083
        %v5323 = vunpack.c.h.b16 %v4083
        %v5324 = vunpack.c.l.b16 %v4084
        %v5325 = vunpack.c.h.b16 %v4084
        %v5326 = vunpack.c.l.b16 %v4085
        %v5327 = vunpack.c.h.b16 %v4085
        %v5328 = vunpack.c.l.b16 %v4086
        %v5329 = vunpack.c.h.b16 %v4086
        %v5330 = vunpack.c.l.b16 %v4087
        %v5331 = vunpack.c.h.b16 %v4087
        %v5332 = vunpack.c.l.b16 %v4088
        %v5333 = vunpack.c.h.b16 %v4088
        %v5334 = vunpack.c.l.b16 %v4089
        %v5335 = vunpack.c.h.b16 %v4089
        %v5336 = vunpack.c.l.b16 %v4090
        %v5337 = vunpack.c.h.b16 %v4090
        %v5338 = vunpack.c.l.b16 %v4091
        %v5339 = vunpack.c.h.b16 %v4091
        %v5340 = vunpack.c.l.b16 %v4092
        %v5341 = vunpack.c.h.b16 %v4092
        %v5342 = vunpack.c.l.b16 %v4093
        %v5343 = vunpack.c.h.b16 %v4093
        %v5344 = vunpack.c.l.b16 %v4094
        %v5345 = vunpack.c.h.b16 %v4094
        %v5346 = vunpack.c.l.b16 %v4095
        %v5347 = vunpack.c.h.b16 %v4095
        %v5348 = vunpack.c.l.b16 %v4096
        %v5349 = vunpack.c.h.b16 %v4096
        %v5350 = vunpack.c.l.b16 %v4097
        %v5351 = vunpack.c.h.b16 %v4097
        %v5352 = vunpack.c.l.b16 %v4098
        %v5353 = vunpack.c.h.b16 %v4098
        %v5354 = vunpack.c.l.b16 %v4099
        %v5355 = vunpack.c.h.b16 %v4099
        %v5356 = vunpack.c.l.b16 %v4100
        %v5357 = vunpack.c.h.b16 %v4100
        %v5358 = vunpack.c.l.b16 %v4101
        %v5359 = vunpack.c.h.b16 %v4101
        %v5360 = vunpack.c.l.b16 %v4102
        %v5361 = vunpack.c.h.b16 %v4102
        %v5362 = vunpack.c.l.b16 %v4103
        %v5363 = vunpack.c.h.b16 %v4103
        %v5364 = vunpack.c.l.b16 %v4104
        %v5365 = vunpack.c.h.b16 %v4104
        %v5366 = vunpack.c.l.b16 %v4105
        %v5367 = vunpack.c.h.b16 %v4105
        %v5368 = vunpack.c.l.b16 %v4106
        %v5369 = vunpack.c.h.b16 %v4106
        %v5370 = vunpack.c.l.b16 %v4107
        %v5371 = vunpack.c.h.b16 %v4107
        %v5372 = vunpack.c.l.b16 %v4108
        %v5373 = vunpack.c.h.b16 %v4108
        %v5374 = vunpack.c.l.b16 %v4109
        %v5375 = vunpack.c.h.b16 %v4109
        %v5376 = vunpack.c.l.b16 %v4110
        %v5377 = vunpack.c.h.b16 %v4110
        %v5378 = vunpack.c.l.b16 %v4111
        %v5379 = vunpack.c.h.b16 %v4111
        %v5380 = vunpack.c.l.b16 %v4112
        %v5381 = vunpack.c.h.b16 %v4112
        %v5382 = vunpack.c.l.b16 %v4113
        %v5383 = vunpack.c.h.b16 %v4113
        %v5384 = vunpack.c.l.b16 %v4114
        %v5385 = vunpack.c.h.b16 %v4114
        %v5386 = vunpack.c.l.b16 %v4115
        %v5387 = vunpack.c.h.b16 %v4115
        %v5388 = vunpack.c.l.b16 %v4116
        %v5389 = vunpack.c.h.b16 %v4116
        %v5390 = vunpack.c.l.b16 %v4117
        %v5391 = vunpack.c.h.b16 %v4117
        %v5392 = vunpack.c.l.b16 %v4118
        %v5393 = vunpack.c.h.b16 %v4118
        %v5394 = vunpack.c.l.b16 %v4119
        %v5395 = vunpack.c.h.b16 %v4119
        %v5396 = vunpack.c.l.b16 %v4120
        %v5397 = vunpack.c.h.b16 %v4120
        %v5398 = vunpack.c.l.b16 %v4121
        %v5399 = vunpack.c.h.b16 %v4121
        %v5400 = vunpack.c.l.b16 %v4122
        %v5401 = vunpack.c.h.b16 %v4122
        %v5402 = vunpack.c.l.b16 %v4123
        %v5403 = vunpack.c.h.b16 %v4123
        %v5404 = vunpack.c.l.b16 %v4124
        %v5405 = vunpack.c.h.b16 %v4124
        %v5406 = vunpack.c.l.b16 %v4125
        %v5407 = vunpack.c.h.b16 %v4125
        %v5408 = vunpack.c.l.b16 %v4126
        %v5409 = vunpack.c.h.b16 %v4126
        %v5410 = vunpack.c.l.b16 %v4127
        %v5411 = vunpack.c.h.b16 %v4127
        %v5412 = vunpack.c.l.b16 %v4128
        %v5413 = vunpack.c.h.b16 %v4128
        %v5414 = vunpack.c.l.b16 %v4129
        %v5415 = vunpack.c.h.b16 %v4129
        %v5416 = vunpack.c.l.b16 %v4130
        %v5417 = vunpack.c.h.b16 %v4130
        %v5418 = vunpack.c.l.b16 %v4131
        %v5419 = vunpack.c.h.b16 %v4131
        %v5420 = vunpack.c.l.b16 %v4132
        %v5421 = vunpack.c.h.b16 %v4132
        %v5422 = vunpack.c.l.b16 %v4133
        %v5423 = vunpack.c.h.b16 %v4133
        %v5424 = vunpack.c.l.b16 %v4134
        %v5425 = vunpack.c.h.b16 %v4134
        %v5426 = vunpack.c.l.b16 %v4135
        %v5427 = vunpack.c.h.b16 %v4135
        %v5428 = vunpack.c.l.b16 %v4136
        %v5429 = vunpack.c.h.b16 %v4136
        %v5430 = vunpack.c.l.b16 %v4137
        %v5431 = vunpack.c.h.b16 %v4137
        %v5432 = vunpack.c.l.b16 %v4138
        %v5433 = vunpack.c.h.b16 %v4138
        %v5434 = vunpack.c.l.b16 %v4139
        %v5435 = vunpack.c.h.b16 %v4139
        %v5436 = vunpack.c.l.b16 %v4140
        %v5437 = vunpack.c.h.b16 %v4140
        %v5438 = vunpack.c.l.b16 %v4141
        %v5439 = vunpack.c.h.b16 %v4141
        %v5440 = vunpack.c.l.b16 %v4142
        %v5441 = vunpack.c.h.b16 %v4142
        %v5442 = vunpack.c.l.b16 %v4143
        %v5443 = vunpack.c.h.b16 %v4143
        %v5444 = vunpack.c.l.b16 %v4144
        %v5445 = vunpack.c.h.b16 %v4144
        %v5446 = vunpack.c.l.b16 %v4145
        %v5447 = vunpack.c.h.b16 %v4145
        %v5448 = vunpack.c.l.b16 %v4146
        %v5449 = vunpack.c.h.b16 %v4146
        %v5450 = vunpack.c.l.b16 %v4147
        %v5451 = vunpack.c.h.b16 %v4147
        %v5452 = vunpack.c.l.b16 %v4148
        %v5453 = vunpack.c.h.b16 %v4148
        %v5454 = vunpack.c.l.b16 %v4149
        %v5455 = vunpack.c.h.b16 %v4149
        %v5456 = vunpack.c.l.b16 %v4150
        %v5457 = vunpack.c.h.b16 %v4150
        %v5458 = vunpack.c.l.b16 %v4151
        %v5459 = vunpack.c.h.b16 %v4151
        %v5460 = vunpack.c.l.b16 %v4152
        %v5461 = vunpack.c.h.b16 %v4152
        %v5462 = vunpack.c.l.b16 %v4153
        %v5463 = vunpack.c.h.b16 %v4153
        %v5464 = vunpack.c.l.b16 %v4154
        %v5465 = vunpack.c.h.b16 %v4154
        %v5466 = vunpack.c.l.b16 %v4155
        %v5467 = vunpack.c.h.b16 %v4155
        %v5468 = vunpack.c.l.b16 %v4156
        %v5469 = vunpack.c.h.b16 %v4156
        %v5470 = vunpack.c.l.b16 %v4157
        %v5471 = vunpack.c.h.b16 %v4157
        %v5472 = vunpack.c.l.b16 %v4158
        %v5473 = vunpack.c.h.b16 %v4158
        %v5474 = vunpack.c.l.b16 %v4159
        %v5475 = vunpack.c.h.b16 %v4159
        %v5476 = vunpack.c.l.b16 %v4160
        %v5477 = vunpack.c.h.b16 %v4160
        %v5478 = vunpack.c.l.b16 %v4161
        %v5479 = vunpack.c.h.b16 %v4161
        %v5480 = vunpack.c.l.b16 %v4162
        %v5481 = vunpack.c.h.b16 %v4162
        %v5482 = vunpack.c.l.b16 %v4163
        %v5483 = vunpack.c.h.b16 %v4163
        %v5484 = vunpack.c.l.b16 %v4164
        %v5485 = vunpack.c.h.b16 %v4164
        %v5486 = vunpack.c.l.b16 %v4165
        %v5487 = vunpack.c.h.b16 %v4165
        %v5488 = vunpack.c.l.b16 %v4166
        %v5489 = vunpack.c.h.b16 %v4166
        %v5490 = vunpack.c.l.b16 %v4167
        %v5491 = vunpack.c.h.b16 %v4167
        %v5492 = vunpack.c.l.b16 %v4168
        %v5493 = vunpack.c.h.b16 %v4168
        %v5494 = vunpack.c.l.b16 %v4169
        %v5495 = vunpack.c.h.b16 %v4169
        %v5496 = vunpack.c.l.b16 %v4170
        %v5497 = vunpack.c.h.b16 %v4170
        %v5498 = vunpack.c.l.b16 %v4171
        %v5499 = vunpack.c.h.b16 %v4171
        %v5500 = vunpack.c.l.b16 %v4172
        %v5501 = vunpack.c.h.b16 %v4172
        %v5502 = vunpack.c.l.b16 %v4173
        %v5503 = vunpack.c.h.b16 %v4173
        %v5504 = vunpack.c.l.b16 %v4174
        %v5505 = vunpack.c.h.b16 %v4174
        %v5506 = vunpack.c.l.b16 %v4175
        %v5507 = vunpack.c.h.b16 %v4175
        %v5508 = vunpack.c.l.b16 %v4176
        %v5509 = vunpack.c.h.b16 %v4176
        %v5510 = vunpack.c.l.b16 %v4177
        %v5511 = vunpack.c.h.b16 %v4177
        %v5512 = vunpack.c.l.b16 %v4178
        %v5513 = vunpack.c.h.b16 %v4178
        %v5514 = vunpack.c.l.b16 %v4179
        %v5515 = vunpack.c.h.b16 %v4179
        %v5516 = vunpack.c.l.b16 %v4180
        %v5517 = vunpack.c.h.b16 %v4180
        %v5518 = vunpack.c.l.b16 %v4181
        %v5519 = vunpack.c.h.b16 %v4181
        %v5520 = vunpack.c.l.b16 %v4182
        %v5521 = vunpack.c.h.b16 %v4182
        %v5522 = vunpack.c.l.b16 %v4183
        %v5523 = vunpack.c.h.b16 %v4183
        %v5524 = vunpack.c.l.b16 %v4184
        %v5525 = vunpack.c.h.b16 %v4184
        %v5526 = vunpack.c.l.b16 %v4185
        %v5527 = vunpack.c.h.b16 %v4185
        %v5528 = vunpack.c.l.b16 %v4186
        %v5529 = vunpack.c.h.b16 %v4186
        %v5530 = vunpack.c.l.b16 %v4187
        %v5531 = vunpack.c.h.b16 %v4187
        %v5532 = vunpack.c.l.b16 %v4188
        %v5533 = vunpack.c.h.b16 %v4188
        %v5534 = vunpack.c.l.b16 %v4189
        %v5535 = vunpack.c.h.b16 %v4189
        %v5536 = vunpack.c.l.b16 %v4190
        %v5537 = vunpack.c.h.b16 %v4190
        %v5538 = vunpack.c.l.b16 %v4191
        %v5539 = vunpack.c.h.b16 %v4191
        %v5540 = vunpack.c.l.b16 %v4192
        %v5541 = vunpack.c.h.b16 %v4192
        %v5542 = vunpack.c.l.b16 %v4193
        %v5543 = vunpack.c.h.b16 %v4193
        %v5544 = vunpack.c.l.b16 %v4194
        %v5545 = vunpack.c.h.b16 %v4194
        %v5546 = vunpack.c.l.b16 %v4195
        %v5547 = vunpack.c.h.b16 %v4195
        %v5548 = vunpack.c.l.b16 %v4196
        %v5549 = vunpack.c.h.b16 %v4196
        %v5550 = vunpack.c.l.b16 %v4197
        %v5551 = vunpack.c.h.b16 %v4197
        %v5552 = vunpack.c.l.b16 %v4198
        %v5553 = vunpack.c.h.b16 %v4198
        %v5554 = vunpack.c.l.b16 %v4199
        %v5555 = vunpack.c.h.b16 %v4199
        %v5556 = vunpack.c.l.b16 %v4200
        %v5557 = vunpack.c.h.b16 %v4200
        %v5558 = vunpack.c.l.b16 %v4201
        %v5559 = vunpack.c.h.b16 %v4201
        %v5560 = vunpack.c.l.b16 %v4202
        %v5561 = vunpack.c.h.b16 %v4202
        %v5562 = vunpack.c.l.b16 %v4203
        %v5563 = vunpack.c.h.b16 %v4203
        %v5564 = vunpack.c.l.b16 %v4204
        %v5565 = vunpack.c.h.b16 %v4204
        %v5566 = vunpack.c.l.b16 %v4205
        %v5567 = vunpack.c.h.b16 %v4205
        %v5568 = vunpack.c.l.b16 %v4206
        %v5569 = vunpack.c.h.b16 %v4206
        %v5570 = vunpack.c.l.b16 %v4207
        %v5571 = vunpack.c.h.b16 %v4207
        %v5572 = vunpack.c.l.b16 %v4208
        %v5573 = vunpack.c.h.b16 %v4208
        %v5574 = vunpack.c.l.b16 %v4209
        %v5575 = vunpack.c.h.b16 %v4209
        %v5576 = vunpack.c.l.b16 %v4210
        %v5577 = vunpack.c.h.b16 %v4210
        %v5578 = vunpack.c.l.b16 %v4211
        %v5579 = vunpack.c.h.b16 %v4211
        %v5580 = vunpack.c.l.b16 %v4212
        %v5581 = vunpack.c.h.b16 %v4212
        %v5582 = vunpack.c.l.b16 %v4213
        %v5583 = vunpack.c.h.b16 %v4213
        %v5584 = vunpack.c.l.b16 %v4214
        %v5585 = vunpack.c.h.b16 %v4214
        %v5586 = vunpack.c.l.b16 %v4215
        %v5587 = vunpack.c.h.b16 %v4215
        %v5588 = vunpack.c.l.b16 %v4216
        %v5589 = vunpack.c.h.b16 %v4216
        %v5590 = vunpack.c.l.b16 %v4217
        %v5591 = vunpack.c.h.b16 %v4217
        %v5592 = vunpack.c.l.b16 %v4218
        %v5593 = vunpack.c.h.b16 %v4218
        %v5594 = vunpack.c.l.b16 %v4219
        %v5595 = vunpack.c.h.b16 %v4219
        %v5596 = vunpack.c.l.b16 %v4220
        %v5597 = vunpack.c.h.b16 %v4220
        %v5598 = vunpack.c.l.b16 %v4221
        %v5599 = vunpack.c.h.b16 %v4221
        %v5600 = vunpack.c.l.b16 %v4222
        %v5601 = vunpack.c.h.b16 %v4222
        %v5602 = vunpack.c.l.b16 %v4223
        %v5603 = vunpack.c.h.b16 %v4223
        %v5604 = vunpack.c.l.b16 %v4224
        %v5605 = vunpack.c.h.b16 %v4224
        %v5606 = vunpack.c.l.b16 %v4225
        %v5607 = vunpack.c.h.b16 %v4225
        %v5608 = vunpack.c.l.b16 %v4226
        %v5609 = vunpack.c.h.b16 %v4226
        %v5610 = vunpack.c.l.b16 %v4227
        %v5611 = vunpack.c.h.b16 %v4227
        %v5612 = vunpack.c.l.b16 %v4228
        %v5613 = vunpack.c.h.b16 %v4228
        %v5614 = vunpack.c.l.b16 %v4229
        %v5615 = vunpack.c.h.b16 %v4229
        %v5616 = vunpack.c.l.b16 %v4230
        %v5617 = vunpack.c.h.b16 %v4230
        %v5618 = vunpack.c.l.b16 %v4231
        %v5619 = vunpack.c.h.b16 %v4231
        %v5620 = vunpack.c.l.b16 %v4232
        %v5621 = vunpack.c.h.b16 %v4232
        %v5622 = vunpack.c.l.b16 %v4233
        %v5623 = vunpack.c.h.b16 %v4233
        %v5624 = vunpack.c.l.b16 %v4234
        %v5625 = vunpack.c.h.b16 %v4234
        %v5626 = vunpack.c.l.b16 %v4235
        %v5627 = vunpack.c.h.b16 %v4235
        %v5628 = vunpack.c.l.b16 %v4236
        %v5629 = vunpack.c.h.b16 %v4236
        %v5630 = vunpack.c.l.b16 %v4237
        %v5631 = vunpack.c.h.b16 %v4237
        %v5632 = vunpack.c.l.b16 %v4238
        %v5633 = vunpack.c.h.b16 %v4238
        %v5634 = vunpack.c.l.b16 %v4239
        %v5635 = vunpack.c.h.b16 %v4239
        %v5636 = vunpack.c.l.b16 %v4240
        %v5637 = vunpack.c.h.b16 %v4240
        %v5638 = vunpack.c.l.b16 %v4241
        %v5639 = vunpack.c.h.b16 %v4241
        %v5640 = vunpack.c.l.b16 %v4242
        %v5641 = vunpack.c.h.b16 %v4242
        %v5642 = vunpack.c.l.b16 %v4243
        %v5643 = vunpack.c.h.b16 %v4243
        %v5644 = vunpack.c.l.b16 %v4244
        %v5645 = vunpack.c.h.b16 %v4244
        %v5646 = vunpack.c.l.b16 %v4245
        %v5647 = vunpack.c.h.b16 %v4245
        %v5648 = vunpack.c.l.b16 %v4246
        %v5649 = vunpack.c.h.b16 %v4246
        %v5650 = vunpack.c.l.b16 %v4247
        %v5651 = vunpack.c.h.b16 %v4247
        %v5652 = vunpack.c.l.b16 %v4248
        %v5653 = vunpack.c.h.b16 %v4248
        %v5654 = vunpack.c.l.b16 %v4249
        %v5655 = vunpack.c.h.b16 %v4249
        %v5656 = vunpack.c.l.b16 %v4250
        %v5657 = vunpack.c.h.b16 %v4250
        %v5658 = vunpack.c.l.b16 %v4251
        %v5659 = vunpack.c.h.b16 %v4251
        %v5660 = vunpack.c.l.b16 %v4252
        %v5661 = vunpack.c.h.b16 %v4252
        %v5662 = vunpack.c.l.b16 %v4253
        %v5663 = vunpack.c.h.b16 %v4253
        %v5664 = vunpack.c.l.b16 %v4254
        %v5665 = vunpack.c.h.b16 %v4254
        %v5666 = vunpack.c.l.b16 %v4255
        %v5667 = vunpack.c.h.b16 %v4255
        %v5668 = vunpack.c.l.b16 %v4256
        %v5669 = vunpack.c.h.b16 %v4256
        %v5670 = vunpack.c.l.b16 %v4257
        %v5671 = vunpack.c.h.b16 %v4257
        %v5672 = vunpack.c.l.b16 %v4258
        %v5673 = vunpack.c.h.b16 %v4258
        %v5674 = vunpack.c.l.b16 %v4259
        %v5675 = vunpack.c.h.b16 %v4259
        %v5676 = vunpack.c.l.b16 %v4260
        %v5677 = vunpack.c.h.b16 %v4260
        %v5678 = vunpack.c.l.b16 %v4261
        %v5679 = vunpack.c.h.b16 %v4261
        %v5680 = vunpack.c.l.b16 %v4262
        %v5681 = vunpack.c.h.b16 %v4262
        %v5682 = vunpack.c.l.b16 %v4263
        %v5683 = vunpack.c.h.b16 %v4263
        %v5684 = vunpack.c.l.b16 %v4264
        %v5685 = vunpack.c.h.b16 %v4264
        %v5686 = vunpack.c.l.b16 %v4265
        %v5687 = vunpack.c.h.b16 %v4265
        %v5688 = vunpack.c.l.b16 %v4266
        %v5689 = vunpack.c.h.b16 %v4266
        %v5690 = vunpack.c.l.b16 %v4267
        %v5691 = vunpack.c.h.b16 %v4267
        %v5692 = vunpack.c.l.b16 %v4268
        %v5693 = vunpack.c.h.b16 %v4268
        %v5694 = vunpack.c.l.b16 %v4269
        %v5695 = vunpack.c.h.b16 %v4269
        %v5696 = vunpack.c.l.b16 %v4270
        %v5697 = vunpack.c.h.b16 %v4270
        %v5698 = vunpack.c.l.b16 %v4271
        %v5699 = vunpack.c.h.b16 %v4271
        %v5700 = vunpack.c.l.b16 %v4272
        %v5701 = vunpack.c.h.b16 %v4272
        %v5702 = vunpack.c.l.b16 %v4273
        %v5703 = vunpack.c.h.b16 %v4273
        %v5704 = vunpack.c.l.b16 %v4274
        %v5705 = vunpack.c.h.b16 %v4274
        %v5706 = vunpack.c.l.b16 %v4275
        %v5707 = vunpack.c.h.b16 %v4275
        %v5708 = vunpack.c.l.b16 %v4276
        %v5709 = vunpack.c.h.b16 %v4276
        %v5710 = vunpack.c.l.b16 %v4277
        %v5711 = vunpack.c.h.b16 %v4277
        %v5712 = vunpack.c.l.b16 %v4278
        %v5713 = vunpack.c.h.b16 %v4278
        %v5714 = vunpack.c.l.b16 %v4279
        %v5715 = vunpack.c.h.b16 %v4279
        %v5716 = vunpack.c.l.b16 %v4280
        %v5717 = vunpack.c.h.b16 %v4280
        %v5718 = vunpack.c.l.b16 %v4281
        %v5719 = vunpack.c.h.b16 %v4281
        %v5720 = vunpack.c.l.b16 %v4282
        %v5721 = vunpack.c.h.b16 %v4282
        %v5722 = vunpack.c.l.b16 %v4283
        %v5723 = vunpack.c.h.b16 %v4283
        %v5724 = vunpack.c.l.b16 %v4284
        %v5725 = vunpack.c.h.b16 %v4284
        %v5726 = vunpack.c.l.b16 %v4285
        %v5727 = vunpack.c.h.b16 %v4285
        %v5728 = vunpack.c.l.b16 %v4286
        %v5729 = vunpack.c.h.b16 %v4286
        %v5730 = vunpack.c.l.b16 %v4287
        %v5731 = vunpack.c.h.b16 %v4287
        %v5732 = vunpack.c.l.b16 %v4288
        %v5733 = vunpack.c.h.b16 %v4288
        %v5734 = vunpack.c.l.b16 %v4289
        %v5735 = vunpack.c.h.b16 %v4289
        %v5736 = vunpack.c.l.b16 %v4290
        %v5737 = vunpack.c.h.b16 %v4290
        %v5738 = vunpack.c.l.b16 %v4291
        %v5739 = vunpack.c.h.b16 %v4291
        %v5740 = vunpack.c.l.b16 %v4292
        %v5741 = vunpack.c.h.b16 %v4292
        %v5742 = vunpack.c.l.b16 %v4293
        %v5743 = vunpack.c.h.b16 %v4293
        %v5744 = vunpack.c.l.b16 %v4294
        %v5745 = vunpack.c.h.b16 %v4294
        %v5746 = vunpack.c.l.b16 %v4295
        %v5747 = vunpack.c.h.b16 %v4295
        %v5748 = vunpack.c.l.b16 %v4296
        %v5749 = vunpack.c.h.b16 %v4296
        %v5750 = vunpack.c.l.b16 %v4297
        %v5751 = vunpack.c.h.b16 %v4297
        %v5752 = vunpack.c.l.b16 %v4298
        %v5753 = vunpack.c.h.b16 %v4298
        %v5754 = vunpack.c.l.b16 %v4299
        %v5755 = vunpack.c.h.b16 %v4299
        %v5756 = vunpack.c.l.b16 %v4300
        %v5757 = vunpack.c.h.b16 %v4300
        %v5758 = vunpack.c.l.b16 %v4301
        %v5759 = vunpack.c.h.b16 %v4301
        %v5760 = vunpack.c.l.b16 %v4302
        %v5761 = vunpack.c.h.b16 %v4302
        %v5762 = vunpack.c.l.b16 %v4303
        %v5763 = vunpack.c.h.b16 %v4303
        %v5764 = vunpack.c.l.b16 %v4304
        %v5765 = vunpack.c.h.b16 %v4304
        %v5766 = vunpack.c.l.b16 %v4305
        %v5767 = vunpack.c.h.b16 %v4305
        %v5768 = vunpack.c.l.b16 %v4306
        %v5769 = vunpack.c.h.b16 %v4306
        %v5770 = vunpack.c.l.b16 %v4307
        %v5771 = vunpack.c.h.b16 %v4307
        %v5772 = vunpack.c.l.b16 %v4308
        %v5773 = vunpack.c.h.b16 %v4308
        %v5774 = vunpack.c.l.b16 %v4309
        %v5775 = vunpack.c.h.b16 %v4309
        %v5776 = vunpack.c.l.b16 %v4310
        %v5777 = vunpack.c.h.b16 %v4310
        %v5778 = vunpack.c.l.b16 %v4311
        %v5779 = vunpack.c.h.b16 %v4311
        %v5780 = vunpack.c.l.b16 %v4312
        %v5781 = vunpack.c.h.b16 %v4312
        %v5782 = vunpack.c.l.b16 %v4313
        %v5783 = vunpack.c.h.b16 %v4313
        %v5784 = vunpack.c.l.b16 %v4314
        %v5785 = vunpack.c.h.b16 %v4314
        %v5786 = vunpack.c.l.b16 %v4315
        %v5787 = vunpack.c.h.b16 %v4315
        %v5788 = vunpack.c.l.b16 %v4316
        %v5789 = vunpack.c.h.b16 %v4316
        %v5790 = vunpack.c.l.b16 %v4317
        %v5791 = vunpack.c.h.b16 %v4317
        %v5792 = vunpack.c.l.b16 %v4318
        %v5793 = vunpack.c.h.b16 %v4318
        %v5794 = vunpack.c.l.b16 %v4319
        %v5795 = vunpack.c.h.b16 %v4319
        %v5796 = vunpack.c.l.b16 %v4320
        %v5797 = vunpack.c.h.b16 %v4320
        %v5798 = vunpack.c.l.b16 %v4321
        %v5799 = vunpack.c.h.b16 %v4321
        %v5800 = vunpack.c.l.b16 %v4322
        %v5801 = vunpack.c.h.b16 %v4322
        %v5802 = vunpack.c.l.b16 %v4323
        %v5803 = vunpack.c.h.b16 %v4323
        %v5804 = vunpack.c.l.b16 %v4324
        %v5805 = vunpack.c.h.b16 %v4324
        %v5806 = vunpack.c.l.b16 %v4325
        %v5807 = vunpack.c.h.b16 %v4325
        %v5808 = vunpack.c.l.b16 %v4326
        %v5809 = vunpack.c.h.b16 %v4326
        %v5810 = vunpack.c.l.b16 %v4327
        %v5811 = vunpack.c.h.b16 %v4327
        %v5812 = vunpack.c.l.b16 %v4328
        %v5813 = vunpack.c.h.b16 %v4328
        %v5814 = vunpack.c.l.b16 %v4329
        %v5815 = vunpack.c.h.b16 %v4329
        %v5816 = vunpack.c.l.b16 %v4330
        %v5817 = vunpack.c.h.b16 %v4330
        %v5818 = vunpack.c.l.b16 %v4331
        %v5819 = vunpack.c.h.b16 %v4331
        %v5820 = vunpack.c.l.b16 %v4332
        %v5821 = vunpack.c.h.b16 %v4332
        %v5822 = vunpack.c.l.b16 %v4333
        %v5823 = vunpack.c.h.b16 %v4333
        %v5824 = vunpack.c.l.b16 %v4334
        %v5825 = vunpack.c.h.b16 %v4334
        %v5826 = vunpack.c.l.b16 %v4335
        %v5827 = vunpack.c.h.b16 %v4335
        %v5828 = vunpack.c.l.b16 %v4336
        %v5829 = vunpack.c.h.b16 %v4336
        %v5830 = vunpack.c.l.b16 %v4337
        %v5831 = vunpack.c.h.b16 %v4337
        %v5832 = vunpack.c.l.b16 %v4338
        %v5833 = vunpack.c.h.b16 %v4338
        %v5834 = vunpack.c.l.b16 %v4339
        %v5835 = vunpack.c.h.b16 %v4339
        %v5836 = vunpack.c.l.b16 %v4340
        %v5837 = vunpack.c.h.b16 %v4340
        %v5838 = vunpack.c.l.b16 %v4341
        %v5839 = vunpack.c.h.b16 %v4341
        %v5840 = vunpack.c.l.b16 %v4342
        %v5841 = vunpack.c.h.b16 %v4342
        %v5842 = vunpack.c.l.b16 %v4343
        %v5843 = vunpack.c.h.b16 %v4343
        %v5844 = vunpack.c.l.b16 %v4344
        %v5845 = vunpack.c.h.b16 %v4344
        %v5846 = vunpack.c.l.b16 %v4345
        %v5847 = vunpack.c.h.b16 %v4345
        %v5848 = vunpack.c.l.b16 %v4346
        %v5849 = vunpack.c.h.b16 %v4346
        %v5850 = vunpack.c.l.b16 %v4347
        %v5851 = vunpack.c.h.b16 %v4347
        %v5852 = vunpack.c.l.b16 %v4348
        %v5853 = vunpack.c.h.b16 %v4348
        %v5854 = vunpack.c.l.b16 %v4349
        %v5855 = vunpack.c.h.b16 %v4349
        %v5856 = vunpack.c.l.b16 %v4350
        %v5857 = vunpack.c.h.b16 %v4350
        %v5858 = vunpack.c.l.b16 %v4351
        %v5859 = vunpack.c.h.b16 %v4351
        %v5860 = vunpack.c.l.b16 %v4352
        %v5861 = vunpack.c.h.b16 %v4352
        %v5862 = vunpack.c.l.b16 %v4353
        %v5863 = vunpack.c.h.b16 %v4353
        %v5864 = vunpack.c.l.b16 %v4354
        %v5865 = vunpack.c.h.b16 %v4354
        %v5866 = vunpack.c.l.b16 %v4355
        %v5867 = vunpack.c.h.b16 %v4355
        %v5868 = vunpack.c.l.b16 %v4356
        %v5869 = vunpack.c.h.b16 %v4356
        %v5870 = vunpack.c.l.b16 %v4357
        %v5871 = vunpack.c.h.b16 %v4357
        %v5872 = vunpack.c.l.b16 %v4358
        %v5873 = vunpack.c.h.b16 %v4358
        %v5874 = vunpack.c.l.b16 %v4359
        %v5875 = vunpack.c.h.b16 %v4359
        %v5876 = vunpack.c.l.b16 %v4360
        %v5877 = vunpack.c.h.b16 %v4360
        %v5878 = vunpack.c.l.b16 %v4361
        %v5879 = vunpack.c.h.b16 %v4361
        %v5880 = vunpack.c.l.b16 %v4362
        %v5881 = vunpack.c.h.b16 %v4362
        %v5882 = vunpack.c.l.b16 %v4363
        %v5883 = vunpack.c.h.b16 %v4363
        %v5884 = vunpack.c.l.b16 %v4364
        %v5885 = vunpack.c.h.b16 %v4364
        %v5886 = vunpack.c.l.b16 %v4365
        %v5887 = vunpack.c.h.b16 %v4365
        %v5888 = vunpack.c.l.b16 %v4366
        %v5889 = vunpack.c.h.b16 %v4366
        %v5890 = vunpack.c.l.b16 %v4367
        %v5891 = vunpack.c.h.b16 %v4367
        %v5892 = vunpack.c.l.b16 %v4368
        %v5893 = vunpack.c.h.b16 %v4368
        %v5894 = vunpack.c.l.b16 %v4369
        %v5895 = vunpack.c.h.b16 %v4369
        %v5896 = vunpack.c.l.b16 %v4370
        %v5897 = vunpack.c.h.b16 %v4370
        %v5898 = vunpack.c.l.b16 %v4371
        %v5899 = vunpack.c.h.b16 %v4371
        %v5900 = vunpack.c.l.b16 %v4372
        %v5901 = vunpack.c.h.b16 %v4372
        %v5902 = vunpack.c.l.b16 %v4373
        %v5903 = vunpack.c.h.b16 %v4373
        %v5904 = vunpack.c.l.b16 %v4374
        %v5905 = vunpack.c.h.b16 %v4374
        %v5906 = vunpack.c.l.b16 %v4375
        %v5907 = vunpack.c.h.b16 %v4375
        %v5908 = vunpack.c.l.b16 %v4376
        %v5909 = vunpack.c.h.b16 %v4376
        %v5910 = vunpack.c.l.b16 %v4377
        %v5911 = vunpack.c.h.b16 %v4377
        %v5912 = vunpack.c.l.b16 %v4378
        %v5913 = vunpack.c.h.b16 %v4378
        %v5914 = vunpack.c.l.b16 %v4379
        %v5915 = vunpack.c.h.b16 %v4379
        %v5916 = vunpack.c.l.b16 %v4380
        %v5917 = vunpack.c.h.b16 %v4380
        %v5918 = vpack.c.b16 %v4898, %v4894
        %v5919 = vpack.c.b16 %v4899, %v4895
        %v5920 = vpack.c.b16 %v4900, %v4896
        %v5921 = vpack.c.b16 %v4901, %v4897
        %v5922 = vpack.c.b16 %v4906, %v4902
        %v5923 = vpack.c.b16 %v4907, %v4903
        %v5924 = vpack.c.b16 %v4908, %v4904
        %v5925 = vpack.c.b16 %v4909, %v4905
        %v5926 = vpack.c.b16 %v4914, %v4910
        %v5927 = vpack.c.b16 %v4915, %v4911
        %v5928 = vpack.c.b16 %v4916, %v4912
        %v5929 = vpack.c.b16 %v4917, %v4913
        %v5930 = vpack.c.b16 %v4922, %v4918
        %v5931 = vpack.c.b16 %v4923, %v4919
        %v5932 = vpack.c.b16 %v4924, %v4920
        %v5933 = vpack.c.b16 %v4925, %v4921
        %v5934 = vpack.c.b16 %v4930, %v4926
        %v5935 = vpack.c.b16 %v4931, %v4927
        %v5936 = vpack.c.b16 %v4932, %v4928
        %v5937 = vpack.c.b16 %v4933, %v4929
        %v5938 = vpack.c.b16 %v4938, %v4934
        %v5939 = vpack.c.b16 %v4939, %v4935
        %v5940 = vpack.c.b16 %v4940, %v4936
        %v5941 = vpack.c.b16 %v4941, %v4937
        %v5942 = vpack.c.b16 %v4946, %v4942
        %v5943 = vpack.c.b16 %v4947, %v4943
        %v5944 = vpack.c.b16 %v4948, %v4944
        %v5945 = vpack.c.b16 %v4949, %v4945
        %v5946 = vpack.c.b16 %v4954, %v4950
        %v5947 = vpack.c.b16 %v4955, %v4951
        %v5948 = vpack.c.b16 %v4956, %v4952
        %v5949 = vpack.c.b16 %v4957, %v4953
        %v5950 = vpack.c.b16 %v4962, %v4958
        %v5951 = vpack.c.b16 %v4963, %v4959
        %v5952 = vpack.c.b16 %v4964, %v4960
        %v5953 = vpack.c.b16 %v4965, %v4961
        %v5954 = vpack.c.b16 %v4970, %v4966
        %v5955 = vpack.c.b16 %v4971, %v4967
        %v5956 = vpack.c.b16 %v4972, %v4968
        %v5957 = vpack.c.b16 %v4973, %v4969
        %v5958 = vpack.c.b16 %v4978, %v4974
        %v5959 = vpack.c.b16 %v4979, %v4975
        %v5960 = vpack.c.b16 %v4980, %v4976
        %v5961 = vpack.c.b16 %v4981, %v4977
        %v5962 = vpack.c.b16 %v4986, %v4982
        %v5963 = vpack.c.b16 %v4987, %v4983
        %v5964 = vpack.c.b16 %v4988, %v4984
        %v5965 = vpack.c.b16 %v4989, %v4985
        %v5966 = vpack.c.b16 %v4994, %v4990
        %v5967 = vpack.c.b16 %v4995, %v4991
        %v5968 = vpack.c.b16 %v4996, %v4992
        %v5969 = vpack.c.b16 %v4997, %v4993
        %v5970 = vpack.c.b16 %v5002, %v4998
        %v5971 = vpack.c.b16 %v5003, %v4999
        %v5972 = vpack.c.b16 %v5004, %v5000
        %v5973 = vpack.c.b16 %v5005, %v5001
        %v5974 = vpack.c.b16 %v5010, %v5006
        %v5975 = vpack.c.b16 %v5011, %v5007
        %v5976 = vpack.c.b16 %v5012, %v5008
        %v5977 = vpack.c.b16 %v5013, %v5009
        %v5978 = vpack.c.b16 %v5018, %v5014
        %v5979 = vpack.c.b16 %v5019, %v5015
        %v5980 = vpack.c.b16 %v5020, %v5016
        %v5981 = vpack.c.b16 %v5021, %v5017
        %v5982 = vpack.c.b16 %v5026, %v5022
        %v5983 = vpack.c.b16 %v5027, %v5023
        %v5984 = vpack.c.b16 %v5028, %v5024
        %v5985 = vpack.c.b16 %v5029, %v5025
        %v5986 = vpack.c.b16 %v5034, %v5030
        %v5987 = vpack.c.b16 %v5035, %v5031
        %v5988 = vpack.c.b16 %v5036, %v5032
        %v5989 = vpack.c.b16 %v5037, %v5033
        %v5990 = vpack.c.b16 %v5042, %v5038
        %v5991 = vpack.c.b16 %v5043, %v5039
        %v5992 = vpack.c.b16 %v5044, %v5040
        %v5993 = vpack.c.b16 %v5045, %v5041
        %v5994 = vpack.c.b16 %v5050, %v5046
        %v5995 = vpack.c.b16 %v5051, %v5047
        %v5996 = vpack.c.b16 %v5052, %v5048
        %v5997 = vpack.c.b16 %v5053, %v5049
        %v5998 = vpack.c.b16 %v5058, %v5054
        %v5999 = vpack.c.b16 %v5059, %v5055
        %v6000 = vpack.c.b16 %v5060, %v5056
        %v6001 = vpack.c.b16 %v5061, %v5057
        %v6002 = vpack.c.b16 %v5066, %v5062
        %v6003 = vpack.c.b16 %v5067, %v5063
        %v6004 = vpack.c.b16 %v5068, %v5064
        %v6005 = vpack.c.b16 %v5069, %v5065
        %v6006 = vpack.c.b16 %v5074, %v5070
        %v6007 = vpack.c.b16 %v5075, %v5071
        %v6008 = vpack.c.b16 %v5076, %v5072
        %v6009 = vpack.c.b16 %v5077, %v5073
        %v6010 = vpack.c.b16 %v5082, %v5078
        %v6011 = vpack.c.b16 %v5083, %v5079
        %v6012 = vpack.c.b16 %v5084, %v5080
        %v6013 = vpack.c.b16 %v5085, %v5081
        %v6014 = vpack.c.b16 %v5090, %v5086
        %v6015 = vpack.c.b16 %v5091, %v5087
        %v6016 = vpack.c.b16 %v5092, %v5088
        %v6017 = vpack.c.b16 %v5093, %v5089
        %v6018 = vpack.c.b16 %v5098, %v5094
        %v6019 = vpack.c.b16 %v5099, %v5095
        %v6020 = vpack.c.b16 %v5100, %v5096
        %v6021 = vpack.c.b16 %v5101, %v5097
        %v6022 = vpack.c.b16 %v5106, %v5102
        %v6023 = vpack.c.b16 %v5107, %v5103
        %v6024 = vpack.c.b16 %v5108, %v5104
        %v6025 = vpack.c.b16 %v5109, %v5105
        %v6026 = vpack.c.b16 %v5114, %v5110
        %v6027 = vpack.c.b16 %v5115, %v5111
        %v6028 = vpack.c.b16 %v5116, %v5112
        %v6029 = vpack.c.b16 %v5117, %v5113
        %v6030 = vpack.c.b16 %v5122, %v5118
        %v6031 = vpack.c.b16 %v5123, %v5119
        %v6032 = vpack.c.b16 %v5124, %v5120
        %v6033 = vpack.c.b16 %v5125, %v5121
        %v6034 = vpack.c.b16 %v5130, %v5126
        %v6035 = vpack.c.b16 %v5131, %v5127
        %v6036 = vpack.c.b16 %v5132, %v5128
        %v6037 = vpack.c.b16 %v5133, %v5129
        %v6038 = vpack.c.b16 %v5138, %v5134
        %v6039 = vpack.c.b16 %v5139, %v5135
        %v6040 = vpack.c.b16 %v5140, %v5136
        %v6041 = vpack.c.b16 %v5141, %v5137
        %v6042 = vpack.c.b16 %v5146, %v5142
        %v6043 = vpack.c.b16 %v5147, %v5143
        %v6044 = vpack.c.b16 %v5148, %v5144
        %v6045 = vpack.c.b16 %v5149, %v5145
        %v6046 = vpack.c.b16 %v5154, %v5150
        %v6047 = vpack.c.b16 %v5155, %v5151
        %v6048 = vpack.c.b16 %v5156, %v5152
        %v6049 = vpack.c.b16 %v5157, %v5153
        %v6050 = vpack.c.b16 %v5162, %v5158
        %v6051 = vpack.c.b16 %v5163, %v5159
        %v6052 = vpack.c.b16 %v5164, %v5160
        %v6053 = vpack.c.b16 %v5165, %v5161
        %v6054 = vpack.c.b16 %v5170, %v5166
        %v6055 = vpack.c.b16 %v5171, %v5167
        %v6056 = vpack.c.b16 %v5172, %v5168
        %v6057 = vpack.c.b16 %v5173, %v5169
        %v6058 = vpack.c.b16 %v5178, %v5174
        %v6059 = vpack.c.b16 %v5179, %v5175
        %v6060 = vpack.c.b16 %v5180, %v5176
        %v6061 = vpack.c.b16 %v5181, %v5177
        %v6062 = vpack.c.b16 %v5186, %v5182
        %v6063 = vpack.c.b16 %v5187, %v5183
        %v6064 = vpack.c.b16 %v5188, %v5184
        %v6065 = vpack.c.b16 %v5189, %v5185
        %v6066 = vpack.c.b16 %v5194, %v5190
        %v6067 = vpack.c.b16 %v5195, %v5191
        %v6068 = vpack.c.b16 %v5196, %v5192
        %v6069 = vpack.c.b16 %v5197, %v5193
        %v6070 = vpack.c.b16 %v5202, %v5198
        %v6071 = vpack.c.b16 %v5203, %v5199
        %v6072 = vpack.c.b16 %v5204, %v5200
        %v6073 = vpack.c.b16 %v5205, %v5201
        %v6074 = vpack.c.b16 %v5210, %v5206
        %v6075 = vpack.c.b16 %v5211, %v5207
        %v6076 = vpack.c.b16 %v5212, %v5208
        %v6077 = vpack.c.b16 %v5213, %v5209
        %v6078 = vpack.c.b16 %v5218, %v5214
        %v6079 = vpack.c.b16 %v5219, %v5215
        %v6080 = vpack.c.b16 %v5220, %v5216
        %v6081 = vpack.c.b16 %v5221, %v5217
        %v6082 = vpack.c.b16 %v5226, %v5222
        %v6083 = vpack.c.b16 %v5227, %v5223
        %v6084 = vpack.c.b16 %v5228, %v5224
        %v6085 = vpack.c.b16 %v5229, %v5225
        %v6086 = vpack.c.b16 %v5234, %v5230
        %v6087 = vpack.c.b16 %v5235, %v5231
        %v6088 = vpack.c.b16 %v5236, %v5232
        %v6089 = vpack.c.b16 %v5237, %v5233
        %v6090 = vpack.c.b16 %v5242, %v5238
        %v6091 = vpack.c.b16 %v5243, %v5239
        %v6092 = vpack.c.b16 %v5244, %v5240
        %v6093 = vpack.c.b16 %v5245, %v5241
        %v6094 = vpack.c.b16 %v5250, %v5246
        %v6095 = vpack.c.b16 %v5251, %v5247
        %v6096 = vpack.c.b16 %v5252, %v5248
        %v6097 = vpack.c.b16 %v5253, %v5249
        %v6098 = vpack.c.b16 %v5258, %v5254
        %v6099 = vpack.c.b16 %v5259, %v5255
        %v6100 = vpack.c.b16 %v5260, %v5256
        %v6101 = vpack.c.b16 %v5261, %v5257
        %v6102 = vpack.c.b16 %v5266, %v5262
        %v6103 = vpack.c.b16 %v5267, %v5263
        %v6104 = vpack.c.b16 %v5268, %v5264
        %v6105 = vpack.c.b16 %v5269, %v5265
        %v6106 = vpack.c.b16 %v5274, %v5270
        %v6107 = vpack.c.b16 %v5275, %v5271
        %v6108 = vpack.c.b16 %v5276, %v5272
        %v6109 = vpack.c.b16 %v5277, %v5273
        %v6110 = vpack.c.b16 %v5282, %v5278
        %v6111 = vpack.c.b16 %v5283, %v5279
        %v6112 = vpack.c.b16 %v5284, %v5280
        %v6113 = vpack.c.b16 %v5285, %v5281
        %v6114 = vpack.c.b16 %v5290, %v5286
        %v6115 = vpack.c.b16 %v5291, %v5287
        %v6116 = vpack.c.b16 %v5292, %v5288
        %v6117 = vpack.c.b16 %v5293, %v5289
        %v6118 = vpack.c.b16 %v5298, %v5294
        %v6119 = vpack.c.b16 %v5299, %v5295
        %v6120 = vpack.c.b16 %v5300, %v5296
        %v6121 = vpack.c.b16 %v5301, %v5297
        %v6122 = vpack.c.b16 %v5306, %v5302
        %v6123 = vpack.c.b16 %v5307, %v5303
        %v6124 = vpack.c.b16 %v5308, %v5304
        %v6125 = vpack.c.b16 %v5309, %v5305
        %v6126 = vpack.c.b16 %v5314, %v5310
        %v6127 = vpack.c.b16 %v5315, %v5311
        %v6128 = vpack.c.b16 %v5316, %v5312
        %v6129 = vpack.c.b16 %v5317, %v5313
        %v6130 = vpack.c.b16 %v5322, %v5318
        %v6131 = vpack.c.b16 %v5323, %v5319
        %v6132 = vpack.c.b16 %v5324, %v5320
        %v6133 = vpack.c.b16 %v5325, %v5321
        %v6134 = vpack.c.b16 %v5330, %v5326
        %v6135 = vpack.c.b16 %v5331, %v5327
        %v6136 = vpack.c.b16 %v5332, %v5328
        %v6137 = vpack.c.b16 %v5333, %v5329
        %v6138 = vpack.c.b16 %v5338, %v5334
        %v6139 = vpack.c.b16 %v5339, %v5335
        %v6140 = vpack.c.b16 %v5340, %v5336
        %v6141 = vpack.c.b16 %v5341, %v5337
        %v6142 = vpack.c.b16 %v5346, %v5342
        %v6143 = vpack.c.b16 %v5347, %v5343
        %v6144 = vpack.c.b16 %v5348, %v5344
        %v6145 = vpack.c.b16 %v5349, %v5345
        %v6146 = vpack.c.b16 %v5354, %v5350
        %v6147 = vpack.c.b16 %v5355, %v5351
        %v6148 = vpack.c.b16 %v5356, %v5352
        %v6149 = vpack.c.b16 %v5357, %v5353
        %v6150 = vpack.c.b16 %v5362, %v5358
        %v6151 = vpack.c.b16 %v5363, %v5359
        %v6152 = vpack.c.b16 %v5364, %v5360
        %v6153 = vpack.c.b16 %v5365, %v5361
        %v6154 = vpack.c.b16 %v5370, %v5366
        %v6155 = vpack.c.b16 %v5371, %v5367
        %v6156 = vpack.c.b16 %v5372, %v5368
        %v6157 = vpack.c.b16 %v5373, %v5369
        %v6158 = vpack.c.b16 %v5378, %v5374
        %v6159 = vpack.c.b16 %v5379, %v5375
        %v6160 = vpack.c.b16 %v5380, %v5376
        %v6161 = vpack.c.b16 %v5381, %v5377
        %v6162 = vpack.c.b16 %v5386, %v5382
        %v6163 = vpack.c.b16 %v5387, %v5383
        %v6164 = vpack.c.b16 %v5388, %v5384
        %v6165 = vpack.c.b16 %v5389, %v5385
        %v6166 = vpack.c.b16 %v5394, %v5390
        %v6167 = vpack.c.b16 %v5395, %v5391
        %v6168 = vpack.c.b16 %v5396, %v5392
        %v6169 = vpack.c.b16 %v5397, %v5393
        %v6170 = vpack.c.b16 %v5402, %v5398
        %v6171 = vpack.c.b16 %v5403, %v5399
        %v6172 = vpack.c.b16 %v5404, %v5400
        %v6173 = vpack.c.b16 %v5405, %v5401
        %v6174 = vpack.c.b16 %v5410, %v5406
        %v6175 = vpack.c.b16 %v5411, %v5407
        %v6176 = vpack.c.b16 %v5412, %v5408
        %v6177 = vpack.c.b16 %v5413, %v5409
        %v6178 = vpack.c.b16 %v5418, %v5414
        %v6179 = vpack.c.b16 %v5419, %v5415
        %v6180 = vpack.c.b16 %v5420, %v5416
        %v6181 = vpack.c.b16 %v5421, %v5417
        %v6182 = vpack.c.b16 %v5426, %v5422
        %v6183 = vpack.c.b16 %v5427, %v5423
        %v6184 = vpack.c.b16 %v5428, %v5424
        %v6185 = vpack.c.b16 %v5429, %v5425
        %v6186 = vpack.c.b16 %v5434, %v5430
        %v6187 = vpack.c.b16 %v5435, %v5431
        %v6188 = vpack.c.b16 %v5436, %v5432
        %v6189 = vpack.c.b16 %v5437, %v5433
        %v6190 = vpack.c.b16 %v5442, %v5438
        %v6191 = vpack.c.b16 %v5443, %v5439
        %v6192 = vpack.c.b16 %v5444, %v5440
        %v6193 = vpack.c.b16 %v5445, %v5441
        %v6194 = vpack.c.b16 %v5450, %v5446
        %v6195 = vpack.c.b16 %v5451, %v5447
        %v6196 = vpack.c.b16 %v5452, %v5448
        %v6197 = vpack.c.b16 %v5453, %v5449
        %v6198 = vpack.c.b16 %v5458, %v5454
        %v6199 = vpack.c.b16 %v5459, %v5455
        %v6200 = vpack.c.b16 %v5460, %v5456
        %v6201 = vpack.c.b16 %v5461, %v5457
        %v6202 = vpack.c.b16 %v5466, %v5462
        %v6203 = vpack.c.b16 %v5467, %v5463
        %v6204 = vpack.c.b16 %v5468, %v5464
        %v6205 = vpack.c.b16 %v5469, %v5465
        %v6206 = vpack.c.b16 %v5474, %v5470
        %v6207 = vpack.c.b16 %v5475, %v5471
        %v6208 = vpack.c.b16 %v5476, %v5472
        %v6209 = vpack.c.b16 %v5477, %v5473
        %v6210 = vpack.c.b16 %v5482, %v5478
        %v6211 = vpack.c.b16 %v5483, %v5479
        %v6212 = vpack.c.b16 %v5484, %v5480
        %v6213 = vpack.c.b16 %v5485, %v5481
        %v6214 = vpack.c.b16 %v5490, %v5486
        %v6215 = vpack.c.b16 %v5491, %v5487
        %v6216 = vpack.c.b16 %v5492, %v5488
        %v6217 = vpack.c.b16 %v5493, %v5489
        %v6218 = vpack.c.b16 %v5498, %v5494
        %v6219 = vpack.c.b16 %v5499, %v5495
        %v6220 = vpack.c.b16 %v5500, %v5496
        %v6221 = vpack.c.b16 %v5501, %v5497
        %v6222 = vpack.c.b16 %v5506, %v5502
        %v6223 = vpack.c.b16 %v5507, %v5503
        %v6224 = vpack.c.b16 %v5508, %v5504
        %v6225 = vpack.c.b16 %v5509, %v5505
        %v6226 = vpack.c.b16 %v5514, %v5510
        %v6227 = vpack.c.b16 %v5515, %v5511
        %v6228 = vpack.c.b16 %v5516, %v5512
        %v6229 = vpack.c.b16 %v5517, %v5513
        %v6230 = vpack.c.b16 %v5522, %v5518
        %v6231 = vpack.c.b16 %v5523, %v5519
        %v6232 = vpack.c.b16 %v5524, %v5520
        %v6233 = vpack.c.b16 %v5525, %v5521
        %v6234 = vpack.c.b16 %v5530, %v5526
        %v6235 = vpack.c.b16 %v5531, %v5527
        %v6236 = vpack.c.b16 %v5532, %v5528
        %v6237 = vpack.c.b16 %v5533, %v5529
        %v6238 = vpack.c.b16 %v5538, %v5534
        %v6239 = vpack.c.b16 %v5539, %v5535
        %v6240 = vpack.c.b16 %v5540, %v5536
        %v6241 = vpack.c.b16 %v5541, %v5537
        %v6242 = vpack.c.b16 %v5546, %v5542
        %v6243 = vpack.c.b16 %v5547, %v5543
        %v6244 = vpack.c.b16 %v5548, %v5544
        %v6245 = vpack.c.b16 %v5549, %v5545
        %v6246 = vpack.c.b16 %v5554, %v5550
        %v6247 = vpack.c.b16 %v5555, %v5551
        %v6248 = vpack.c.b16 %v5556, %v5552
        %v6249 = vpack.c.b16 %v5557, %v5553
        %v6250 = vpack.c.b16 %v5562, %v5558
        %v6251 = vpack.c.b16 %v5563, %v5559
        %v6252 = vpack.c.b16 %v5564, %v5560
        %v6253 = vpack.c.b16 %v5565, %v5561
        %v6254 = vpack.c.b16 %v5570, %v5566
        %v6255 = vpack.c.b16 %v5571, %v5567
        %v6256 = vpack.c.b16 %v5572, %v5568
        %v6257 = vpack.c.b16 %v5573, %v5569
        %v6258 = vpack.c.b16 %v5578, %v5574
        %v6259 = vpack.c.b16 %v5579, %v5575
        %v6260 = vpack.c.b16 %v5580, %v5576
        %v6261 = vpack.c.b16 %v5581, %v5577
        %v6262 = vpack.c.b16 %v5586, %v5582
        %v6263 = vpack.c.b16 %v5587, %v5583
        %v6264 = vpack.c.b16 %v5588, %v5584
        %v6265 = vpack.c.b16 %v5589, %v5585
        %v6266 = vpack.c.b16 %v5594, %v5590
        %v6267 = vpack.c.b16 %v5595, %v5591
        %v6268 = vpack.c.b16 %v5596, %v5592
        %v6269 = vpack.c.b16 %v5597, %v5593
        %v6270 = vpack.c.b16 %v5602, %v5598
        %v6271 = vpack.c.b16 %v5603, %v5599
        %v6272 = vpack.c.b16 %v5604, %v5600
        %v6273 = vpack.c.b16 %v5605, %v5601
        %v6274 = vpack.c.b16 %v5610, %v5606
        %v6275 = vpack.c.b16 %v5611, %v5607
        %v6276 = vpack.c.b16 %v5612, %v5608
        %v6277 = vpack.c.b16 %v5613, %v5609
        %v6278 = vpack.c.b16 %v5618, %v5614
        %v6279 = vpack.c.b16 %v5619, %v5615
        %v6280 = vpack.c.b16 %v5620, %v5616
        %v6281 = vpack.c.b16 %v5621, %v5617
        %v6282 = vpack.c.b16 %v5626, %v5622
        %v6283 = vpack.c.b16 %v5627, %v5623
        %v6284 = vpack.c.b16 %v5628, %v5624
        %v6285 = vpack.c.b16 %v5629, %v5625
        %v6286 = vpack.c.b16 %v5634, %v5630
        %v6287 = vpack.c.b16 %v5635, %v5631
        %v6288 = vpack.c.b16 %v5636, %v5632
        %v6289 = vpack.c.b16 %v5637, %v5633
        %v6290 = vpack.c.b16 %v5642, %v5638
        %v6291 = vpack.c.b16 %v5643, %v5639
        %v6292 = vpack.c.b16 %v5644, %v5640
        %v6293 = vpack.c.b16 %v5645, %v5641
        %v6294 = vpack.c.b16 %v5650, %v5646
        %v6295 = vpack.c.b16 %v5651, %v5647
        %v6296 = vpack.c.b16 %v5652, %v5648
        %v6297 = vpack.c.b16 %v5653, %v5649
        %v6298 = vpack.c.b16 %v5658, %v5654
        %v6299 = vpack.c.b16 %v5659, %v5655
        %v6300 = vpack.c.b16 %v5660, %v5656
        %v6301 = vpack.c.b16 %v5661, %v5657
        %v6302 = vpack.c.b16 %v5666, %v5662
        %v6303 = vpack.c.b16 %v5667, %v5663
        %v6304 = vpack.c.b16 %v5668, %v5664
        %v6305 = vpack.c.b16 %v5669, %v5665
        %v6306 = vpack.c.b16 %v5674, %v5670
        %v6307 = vpack.c.b16 %v5675, %v5671
        %v6308 = vpack.c.b16 %v5676, %v5672
        %v6309 = vpack.c.b16 %v5677, %v5673
        %v6310 = vpack.c.b16 %v5682, %v5678
        %v6311 = vpack.c.b16 %v5683, %v5679
        %v6312 = vpack.c.b16 %v5684, %v5680
        %v6313 = vpack.c.b16 %v5685, %v5681
        %v6314 = vpack.c.b16 %v5690, %v5686
        %v6315 = vpack.c.b16 %v5691, %v5687
        %v6316 = vpack.c.b16 %v5692, %v5688
        %v6317 = vpack.c.b16 %v5693, %v5689
        %v6318 = vpack.c.b16 %v5698, %v5694
        %v6319 = vpack.c.b16 %v5699, %v5695
        %v6320 = vpack.c.b16 %v5700, %v5696
        %v6321 = vpack.c.b16 %v5701, %v5697
        %v6322 = vpack.c.b16 %v5706, %v5702
        %v6323 = vpack.c.b16 %v5707, %v5703
        %v6324 = vpack.c.b16 %v5708, %v5704
        %v6325 = vpack.c.b16 %v5709, %v5705
        %v6326 = vpack.c.b16 %v5714, %v5710
        %v6327 = vpack.c.b16 %v5715, %v5711
        %v6328 = vpack.c.b16 %v5716, %v5712
        %v6329 = vpack.c.b16 %v5717, %v5713
        %v6330 = vpack.c.b16 %v5722, %v5718
        %v6331 = vpack.c.b16 %v5723, %v5719
        %v6332 = vpack.c.b16 %v5724, %v5720
        %v6333 = vpack.c.b16 %v5725, %v5721
        %v6334 = vpack.c.b16 %v5730, %v5726
        %v6335 = vpack.c.b16 %v5731, %v5727
        %v6336 = vpack.c.b16 %v5732, %v5728
        %v6337 = vpack.c.b16 %v5733, %v5729
        %v6338 = vpack.c.b16 %v5738, %v5734
        %v6339 = vpack.c.b16 %v5739, %v5735
        %v6340 = vpack.c.b16 %v5740, %v5736
        %v6341 = vpack.c.b16 %v5741, %v5737
        %v6342 = vpack.c.b16 %v5746, %v5742
        %v6343 = vpack.c.b16 %v5747, %v5743
        %v6344 = vpack.c.b16 %v5748, %v5744
        %v6345 = vpack.c.b16 %v5749, %v5745
        %v6346 = vpack.c.b16 %v5754, %v5750
        %v6347 = vpack.c.b16 %v5755, %v5751
        %v6348 = vpack.c.b16 %v5756, %v5752
        %v6349 = vpack.c.b16 %v5757, %v5753
        %v6350 = vpack.c.b16 %v5762, %v5758
        %v6351 = vpack.c.b16 %v5763, %v5759
        %v6352 = vpack.c.b16 %v5764, %v5760
        %v6353 = vpack.c.b16 %v5765, %v5761
        %v6354 = vpack.c.b16 %v5770, %v5766
        %v6355 = vpack.c.b16 %v5771, %v5767
        %v6356 = vpack.c.b16 %v5772, %v5768
        %v6357 = vpack.c.b16 %v5773, %v5769
        %v6358 = vpack.c.b16 %v5778, %v5774
        %v6359 = vpack.c.b16 %v5779, %v5775
        %v6360 = vpack.c.b16 %v5780, %v5776
        %v6361 = vpack.c.b16 %v5781, %v5777
        %v6362 = vpack.c.b16 %v5786, %v5782
        %v6363 = vpack.c.b16 %v5787, %v5783
        %v6364 = vpack.c.b16 %v5788, %v5784
        %v6365 = vpack.c.b16 %v5789, %v5785
        %v6366 = vpack.c.b16 %v5794, %v5790
        %v6367 = vpack.c.b16 %v5795, %v5791
        %v6368 = vpack.c.b16 %v5796, %v5792
        %v6369 = vpack.c.b16 %v5797, %v5793
        %v6370 = vpack.c.b16 %v5802, %v5798
        %v6371 = vpack.c.b16 %v5803, %v5799
        %v6372 = vpack.c.b16 %v5804, %v5800
        %v6373 = vpack.c.b16 %v5805, %v5801
        %v6374 = vpack.c.b16 %v5810, %v5806
        %v6375 = vpack.c.b16 %v5811, %v5807
        %v6376 = vpack.c.b16 %v5812, %v5808
        %v6377 = vpack.c.b16 %v5813, %v5809
        %v6378 = vpack.c.b16 %v5818, %v5814
        %v6379 = vpack.c.b16 %v5819, %v5815
        %v6380 = vpack.c.b16 %v5820, %v5816
        %v6381 = vpack.c.b16 %v5821, %v5817
        %v6382 = vpack.c.b16 %v5826, %v5822
        %v6383 = vpack.c.b16 %v5827, %v5823
        %v6384 = vpack.c.b16 %v5828, %v5824
        %v6385 = vpack.c.b16 %v5829, %v5825
        %v6386 = vpack.c.b16 %v5834, %v5830
        %v6387 = vpack.c.b16 %v5835, %v5831
        %v6388 = vpack.c.b16 %v5836, %v5832
        %v6389 = vpack.c.b16 %v5837, %v5833
        %v6390 = vpack.c.b16 %v5842, %v5838
        %v6391 = vpack.c.b16 %v5843, %v5839
        %v6392 = vpack.c.b16 %v5844, %v5840
        %v6393 = vpack.c.b16 %v5845, %v5841
        %v6394 = vpack.c.b16 %v5850, %v5846
        %v6395 = vpack.c.b16 %v5851, %v5847
        %v6396 = vpack.c.b16 %v5852, %v5848
        %v6397 = vpack.c.b16 %v5853, %v5849
        %v6398 = vpack.c.b16 %v5858, %v5854
        %v6399 = vpack.c.b16 %v5859, %v5855
        %v6400 = vpack.c.b16 %v5860, %v5856
        %v6401 = vpack.c.b16 %v5861, %v5857
        %v6402 = vpack.c.b16 %v5866, %v5862
        %v6403 = vpack.c.b16 %v5867, %v5863
        %v6404 = vpack.c.b16 %v5868, %v5864
        %v6405 = vpack.c.b16 %v5869, %v5865
        %v6406 = vpack.c.b16 %v5874, %v5870
        %v6407 = vpack.c.b16 %v5875, %v5871
        %v6408 = vpack.c.b16 %v5876, %v5872
        %v6409 = vpack.c.b16 %v5877, %v5873
        %v6410 = vpack.c.b16 %v5882, %v5878
        %v6411 = vpack.c.b16 %v5883, %v5879
        %v6412 = vpack.c.b16 %v5884, %v5880
        %v6413 = vpack.c.b16 %v5885, %v5881
        %v6414 = vpack.c.b16 %v5890, %v5886
        %v6415 = vpack.c.b16 %v5891, %v5887
        %v6416 = vpack.c.b16 %v5892, %v5888
        %v6417 = vpack.c.b16 %v5893, %v5889
        %v6418 = vpack.c.b16 %v5898, %v5894
        %v6419 = vpack.c.b16 %v5899, %v5895
        %v6420 = vpack.c.b16 %v5900, %v5896
        %v6421 = vpack.c.b16 %v5901, %v5897
        %v6422 = vpack.c.b16 %v5906, %v5902
        %v6423 = vpack.c.b16 %v5907, %v5903
        %v6424 = vpack.c.b16 %v5908, %v5904
        %v6425 = vpack.c.b16 %v5909, %v5905
        %v6426 = vpack.c.b16 %v5914, %v5910
        %v6427 = vpack.c.b16 %v5915, %v5911
        %v6428 = vpack.c.b16 %v5916, %v5912
        %v6429 = vpack.c.b16 %v5917, %v5913
        %v6943 = vlaneseq
        %v6944 = vshrl.u32 %v6943, 7
        %v6945 = vsub.s32 0, %v6944
        %v6946 = vrot.slane %v4381, %v6945
        %v6947 = vlaneseq
        %v6948 = vshrl.u32 %v6947, 7
        %v6949 = vsub.s32 1, %v6948
        %v6950 = vrot.slane %v4381, %v6949
        %v6951 = vlaneseq
        %v6952 = vshrl.u32 %v6951, 7
        %v6953 = vsub.s32 2, %v6952
        %v6954 = vrot.slane %v4381, %v6953
        %v6955 = vlaneseq
        %v6956 = vshrl.u32 %v6955, 7
        %v6957 = vsub.s32 3, %v6956
        %v6958 = vrot.slane %v4381, %v6957
        %6963 = vmatprep.subr.bf16.mxu0 %v5919
        %6964 = vmatpush1.bf16.msra.mxu0 %v5918
        %6965 = vmatprep.subr.bf16.mxu0 %v5923
        %6966 = vmatpush1.bf16.msra.mxu0 %v5922
        %6967 = vmatprep.subr.bf16.mxu0 %v5927
        %6968 = vmatpush1.bf16.msra.mxu0 %v5926
        %6969 = vmatprep.subr.bf16.mxu0 %v5931
        %6970 = vmatpush1.bf16.msra.mxu0 %v5930
        %6971 = vmatprep.subr.bf16.mxu0 %v5935
        %6972 = vmatpush1.bf16.msra.mxu0 %v5934
        %6973 = vmatprep.subr.bf16.mxu0 %v5939
        %6974 = vmatpush1.bf16.msra.mxu0 %v5938
        %6975 = vmatprep.subr.bf16.mxu0 %v5943
        %6976 = vmatpush1.bf16.msra.mxu0 %v5942
        %6977 = vmatprep.subr.bf16.mxu0 %v5947
        %6978 = vmatpush1.bf16.msra.mxu0 %v5946
        %6979 = vmatprep.subr.bf16.mxu0 %v5951
        %6980 = vmatpush1.bf16.msra.mxu0 %v5950
        %6981 = vmatprep.subr.bf16.mxu0 %v5955
        %6982 = vmatpush1.bf16.msra.mxu0 %v5954
        %6983 = vmatprep.subr.bf16.mxu0 %v5959
        %6984 = vmatpush1.bf16.msra.mxu0 %v5958
        %6985 = vmatprep.subr.bf16.mxu0 %v5963
        %6986 = vmatpush1.bf16.msra.mxu0 %v5962
        %6987 = vmatprep.subr.bf16.mxu0 %v5967
        %6988 = vmatpush1.bf16.msra.mxu0 %v5966
        %6989 = vmatprep.subr.bf16.mxu0 %v5971
        %6990 = vmatpush1.bf16.msra.mxu0 %v5970
        %6991 = vmatprep.subr.bf16.mxu0 %v5975
        %6992 = vmatpush1.bf16.msra.mxu0 %v5974
        %6993 = vmatprep.subr.bf16.mxu0 %v5979
        %6994 = vmatpush1.bf16.msra.mxu0 %v5978
        %6995 = vmatprep.mubr.bf16.mxu0 %v3842
        %6996 = vmatmul.mubr.bf16.gmra.mrb[0].mxu0 %v3786
        %v6997 = vpop.f32.mrb[0].mxu0
        %v6998 = vadd.f32 %v6946, %v6997
        %v6999 = vpop.f32.mrb[0].mxu0
        %v7000 = vadd.f32 %v6950, %v6999
        %v7001 = vpop.f32.mrb[0].mxu0
        %v7002 = vpop.f32.mrb[0].mxu0
        %7003 = vdwg.mxu0
        %7004 = vmatprep.subr.bf16.mxu0 %v5983
        %7005 = vmatpush1.bf16.msra.mxu0 %v5982
        %7006 = vmatprep.subr.bf16.mxu0 %v5987
        %7007 = vmatpush1.bf16.msra.mxu0 %v5986
        %7008 = vmatprep.subr.bf16.mxu0 %v5991
        %7009 = vmatpush1.bf16.msra.mxu0 %v5990
        %7010 = vmatprep.subr.bf16.mxu0 %v5995
        %7011 = vmatpush1.bf16.msra.mxu0 %v5994
        %7012 = vmatprep.subr.bf16.mxu0 %v5999
        %7013 = vmatpush1.bf16.msra.mxu0 %v5998
        %7014 = vmatprep.subr.bf16.mxu0 %v6003
        %7015 = vmatpush1.bf16.msra.mxu0 %v6002
        %7016 = vmatprep.subr.bf16.mxu0 %v6007
        %7017 = vmatpush1.bf16.msra.mxu0 %v6006
        %7018 = vmatprep.subr.bf16.mxu0 %v6011
        %7019 = vmatpush1.bf16.msra.mxu0 %v6010
        %7020 = vmatprep.subr.bf16.mxu0 %v6015
        %7021 = vmatpush1.bf16.msra.mxu0 %v6014
        %7022 = vmatprep.subr.bf16.mxu0 %v6019
        %7023 = vmatpush1.bf16.msra.mxu0 %v6018
        %7024 = vmatprep.subr.bf16.mxu0 %v6023
        %7025 = vmatpush1.bf16.msra.mxu0 %v6022
        %7026 = vmatprep.subr.bf16.mxu0 %v6027
        %7027 = vmatpush1.bf16.msra.mxu0 %v6026
        %7028 = vmatprep.subr.bf16.mxu0 %v6031
        %7029 = vmatpush1.bf16.msra.mxu0 %v6030
        %7030 = vmatprep.subr.bf16.mxu0 %v6035
        %7031 = vmatpush1.bf16.msra.mxu0 %v6034
        %7032 = vmatprep.subr.bf16.mxu0 %v6039
        %7033 = vmatpush1.bf16.msra.mxu0 %v6038
        %7034 = vmatprep.subr.bf16.mxu0 %v6043
        %7035 = vmatpush1.bf16.msra.mxu0 %v6042
        %7036 = vmatprep.mubr.bf16.mxu0 %v3846
        %7037 = vmatmul.mubr.bf16.gmra.mrb[0].mxu0 %v3844
        %v7038 = vpop.f32.mrb[0].mxu0
        %v7039 = vadd.f32 %v6998, %v7038
        %v7040 = vpop.f32.mrb[0].mxu0
        %v7041 = vadd.f32 %v7000, %v7040
        %v7042 = vpop.f32.mrb[0].mxu0
        %v7043 = vpop.f32.mrb[0].mxu0
        %7044 = vdwg.mxu0
        %7045 = vmatprep.subr.bf16.mxu0 %v6047
        %7046 = vmatpush1.bf16.msra.mxu0 %v6046
        %7047 = vmatprep.subr.bf16.mxu0 %v6051
        %7048 = vmatpush1.bf16.msra.mxu0 %v6050
        %7049 = vmatprep.subr.bf16.mxu0 %v6055
        %7050 = vmatpush1.bf16.msra.mxu0 %v6054
        %7051 = vmatprep.subr.bf16.mxu0 %v6059
        %7052 = vmatpush1.bf16.msra.mxu0 %v6058
        %7053 = vmatprep.subr.bf16.mxu0 %v6063
        %7054 = vmatpush1.bf16.msra.mxu0 %v6062
        %7055 = vmatprep.subr.bf16.mxu0 %v6067
        %7056 = vmatpush1.bf16.msra.mxu0 %v6066
        %7057 = vmatprep.subr.bf16.mxu0 %v6071
        %7058 = vmatpush1.bf16.msra.mxu0 %v6070
        %7059 = vmatprep.subr.bf16.mxu0 %v6075
        %7060 = vmatpush1.bf16.msra.mxu0 %v6074
        %7061 = vmatprep.subr.bf16.mxu0 %v6079
        %7062 = vmatpush1.bf16.msra.mxu0 %v6078
        %7063 = vmatprep.subr.bf16.mxu0 %v6083
        %7064 = vmatpush1.bf16.msra.mxu0 %v6082
        %7065 = vmatprep.subr.bf16.mxu0 %v6087
        %7066 = vmatpush1.bf16.msra.mxu0 %v6086
        %7067 = vmatprep.subr.bf16.mxu0 %v6091
        %7068 = vmatpush1.bf16.msra.mxu0 %v6090
        %7069 = vmatprep.subr.bf16.mxu0 %v6095
        %7070 = vmatpush1.bf16.msra.mxu0 %v6094
        %7071 = vmatprep.subr.bf16.mxu0 %v6099
        %7072 = vmatpush1.bf16.msra.mxu0 %v6098
        %7073 = vmatprep.subr.bf16.mxu0 %v6103
        %7074 = vmatpush1.bf16.msra.mxu0 %v6102
        %7075 = vmatprep.subr.bf16.mxu0 %v6107
        %7076 = vmatpush1.bf16.msra.mxu0 %v6106
        %7077 = vmatprep.mubr.bf16.mxu0 %v3849
        %7078 = vmatmul.mubr.bf16.gmra.mrb[0].mxu0 %v3807
        %v7079 = vpop.f32.mrb[0].mxu0
        %v7080 = vadd.f32 %v7039, %v7079
        %v7081 = vpop.f32.mrb[0].mxu0
        %v7082 = vadd.f32 %v7041, %v7081
        %v7083 = vpop.f32.mrb[0].mxu0
        %v7084 = vpop.f32.mrb[0].mxu0
        %7085 = vdwg.mxu0
        %7086 = vmatprep.subr.bf16.mxu0 %v6111
        %7087 = vmatpush1.bf16.msra.mxu0 %v6110
        %7088 = vmatprep.subr.bf16.mxu0 %v6115
        %7089 = vmatpush1.bf16.msra.mxu0 %v6114
        %7090 = vmatprep.subr.bf16.mxu0 %v6119
        %7091 = vmatpush1.bf16.msra.mxu0 %v6118
        %7092 = vmatprep.subr.bf16.mxu0 %v6123
        %7093 = vmatpush1.bf16.msra.mxu0 %v6122
        %7094 = vmatprep.subr.bf16.mxu0 %v6127
        %7095 = vmatpush1.bf16.msra.mxu0 %v6126
        %7096 = vmatprep.subr.bf16.mxu0 %v6131
        %7097 = vmatpush1.bf16.msra.mxu0 %v6130
        %7098 = vmatprep.subr.bf16.mxu0 %v6135
        %7099 = vmatpush1.bf16.msra.mxu0 %v6134
        %7100 = vmatprep.subr.bf16.mxu0 %v6139
        %7101 = vmatpush1.bf16.msra.mxu0 %v6138
        %7102 = vmatprep.subr.bf16.mxu0 %v6143
        %7103 = vmatpush1.bf16.msra.mxu0 %v6142
        %7104 = vmatprep.subr.bf16.mxu0 %v6147
        %7105 = vmatpush1.bf16.msra.mxu0 %v6146
        %7106 = vmatprep.subr.bf16.mxu0 %v6151
        %7107 = vmatpush1.bf16.msra.mxu0 %v6150
        %7108 = vmatprep.subr.bf16.mxu0 %v6155
        %7109 = vmatpush1.bf16.msra.mxu0 %v6154
        %7110 = vmatprep.subr.bf16.mxu0 %v6159
        %7111 = vmatpush1.bf16.msra.mxu0 %v6158
        %7112 = vmatprep.subr.bf16.mxu0 %v6163
        %7113 = vmatpush1.bf16.msra.mxu0 %v6162
        %7114 = vmatprep.subr.bf16.mxu0 %v6167
        %7115 = vmatpush1.bf16.msra.mxu0 %v6166
        %7116 = vmatprep.subr.bf16.mxu0 %v6171
        %7117 = vmatpush1.bf16.msra.mxu0 %v6170
        %7118 = vmatprep.mubr.bf16.mxu0 %v3853
        %7119 = vmatmul.mubr.bf16.gmra.mrb[0].mxu0 %v3851
        %v7120 = vpop.f32.mrb[0].mxu0
        %v7121 = vadd.f32 %v7080, %v7120
        %v7122 = vpop.f32.mrb[0].mxu0
        %v7123 = vadd.f32 %v7082, %v7122
        %v7124 = vpop.f32.mrb[0].mxu0
        %v7125 = vpop.f32.mrb[0].mxu0
        %7126 = vdwg.mxu0
        %7127 = vmatprep.subr.bf16.mxu0 %v6175
        %7128 = vmatpush1.bf16.msra.mxu0 %v6174
        %7129 = vmatprep.subr.bf16.mxu0 %v6179
        %7130 = vmatpush1.bf16.msra.mxu0 %v6178
        %7131 = vmatprep.subr.bf16.mxu0 %v6183
        %7132 = vmatpush1.bf16.msra.mxu0 %v6182
        %7133 = vmatprep.subr.bf16.mxu0 %v6187
        %7134 = vmatpush1.bf16.msra.mxu0 %v6186
        %7135 = vmatprep.subr.bf16.mxu0 %v6191
        %7136 = vmatpush1.bf16.msra.mxu0 %v6190
        %7137 = vmatprep.subr.bf16.mxu0 %v6195
        %7138 = vmatpush1.bf16.msra.mxu0 %v6194
        %7139 = vmatprep.subr.bf16.mxu0 %v6199
        %7140 = vmatpush1.bf16.msra.mxu0 %v6198
        %7141 = vmatprep.subr.bf16.mxu0 %v6203
        %7142 = vmatpush1.bf16.msra.mxu0 %v6202
        %7143 = vmatprep.subr.bf16.mxu0 %v6207
        %7144 = vmatpush1.bf16.msra.mxu0 %v6206
        %7145 = vmatprep.subr.bf16.mxu0 %v6211
        %7146 = vmatpush1.bf16.msra.mxu0 %v6210
        %7147 = vmatprep.subr.bf16.mxu0 %v6215
        %7148 = vmatpush1.bf16.msra.mxu0 %v6214
        %7149 = vmatprep.subr.bf16.mxu0 %v6219
        %7150 = vmatpush1.bf16.msra.mxu0 %v6218
        %7151 = vmatprep.subr.bf16.mxu0 %v6223
        %7152 = vmatpush1.bf16.msra.mxu0 %v6222
        %7153 = vmatprep.subr.bf16.mxu0 %v6227
        %7154 = vmatpush1.bf16.msra.mxu0 %v6226
        %7155 = vmatprep.subr.bf16.mxu0 %v6231
        %7156 = vmatpush1.bf16.msra.mxu0 %v6230
        %7157 = vmatprep.subr.bf16.mxu0 %v6235
        %7158 = vmatpush1.bf16.msra.mxu0 %v6234
        %7159 = vmatprep.mubr.bf16.mxu0 %v3856
        %7160 = vmatmul.mubr.bf16.gmra.mrb[0].mxu0 %v3822
        %v7161 = vpop.f32.mrb[0].mxu0
        %v7162 = vadd.f32 %v7121, %v7161
        %v7163 = vpop.f32.mrb[0].mxu0
        %v7164 = vadd.f32 %v7123, %v7163
        %v7165 = vpop.f32.mrb[0].mxu0
        %v7166 = vpop.f32.mrb[0].mxu0
        %7167 = vdwg.mxu0
        %7168 = vmatprep.subr.bf16.mxu0 %v6239
        %7169 = vmatpush1.bf16.msra.mxu0 %v6238
        %7170 = vmatprep.subr.bf16.mxu0 %v6243
        %7171 = vmatpush1.bf16.msra.mxu0 %v6242
        %7172 = vmatprep.subr.bf16.mxu0 %v6247
        %7173 = vmatpush1.bf16.msra.mxu0 %v6246
        %7174 = vmatprep.subr.bf16.mxu0 %v6251
        %7175 = vmatpush1.bf16.msra.mxu0 %v6250
        %7176 = vmatprep.subr.bf16.mxu0 %v6255
        %7177 = vmatpush1.bf16.msra.mxu0 %v6254
        %7178 = vmatprep.subr.bf16.mxu0 %v6259
        %7179 = vmatpush1.bf16.msra.mxu0 %v6258
        %7180 = vmatprep.subr.bf16.mxu0 %v6263
        %7181 = vmatpush1.bf16.msra.mxu0 %v6262
        %7182 = vmatprep.subr.bf16.mxu0 %v6267
        %7183 = vmatpush1.bf16.msra.mxu0 %v6266
        %7184 = vmatprep.subr.bf16.mxu0 %v6271
        %7185 = vmatpush1.bf16.msra.mxu0 %v6270
        %7186 = vmatprep.subr.bf16.mxu0 %v6275
        %7187 = vmatpush1.bf16.msra.mxu0 %v6274
        %7188 = vmatprep.subr.bf16.mxu0 %v6279
        %7189 = vmatpush1.bf16.msra.mxu0 %v6278
        %7190 = vmatprep.subr.bf16.mxu0 %v6283
        %7191 = vmatpush1.bf16.msra.mxu0 %v6282
        %7192 = vmatprep.subr.bf16.mxu0 %v6287
        %7193 = vmatpush1.bf16.msra.mxu0 %v6286
        %7194 = vmatprep.subr.bf16.mxu0 %v6291
        %7195 = vmatpush1.bf16.msra.mxu0 %v6290
        %7196 = vmatprep.subr.bf16.mxu0 %v6295
        %7197 = vmatpush1.bf16.msra.mxu0 %v6294
        %7198 = vmatprep.subr.bf16.mxu0 %v6299
        %7199 = vmatpush1.bf16.msra.mxu0 %v6298
        %7200 = vmatprep.mubr.bf16.mxu0 %v3860
        %7201 = vmatmul.mubr.bf16.gmra.mrb[0].mxu0 %v3858
        %v7202 = vpop.f32.mrb[0].mxu0
        %v7203 = vadd.f32 %v7162, %v7202
        %v7204 = vpop.f32.mrb[0].mxu0
        %v7205 = vadd.f32 %v7164, %v7204
        %v7206 = vpop.f32.mrb[0].mxu0
        %v7207 = vpop.f32.mrb[0].mxu0
        %7208 = vdwg.mxu0
        %7209 = vmatprep.subr.bf16.mxu0 %v6303
        %7210 = vmatpush1.bf16.msra.mxu0 %v6302
        %7211 = vmatprep.subr.bf16.mxu0 %v6307
        %7212 = vmatpush1.bf16.msra.mxu0 %v6306
        %7213 = vmatprep.subr.bf16.mxu0 %v6311
        %7214 = vmatpush1.bf16.msra.mxu0 %v6310
        %7215 = vmatprep.subr.bf16.mxu0 %v6315
        %7216 = vmatpush1.bf16.msra.mxu0 %v6314
        %7217 = vmatprep.subr.bf16.mxu0 %v6319
        %7218 = vmatpush1.bf16.msra.mxu0 %v6318
        %7219 = vmatprep.subr.bf16.mxu0 %v6323
        %7220 = vmatpush1.bf16.msra.mxu0 %v6322
        %7221 = vmatprep.subr.bf16.mxu0 %v6327
        %7222 = vmatpush1.bf16.msra.mxu0 %v6326
        %7223 = vmatprep.subr.bf16.mxu0 %v6331
        %7224 = vmatpush1.bf16.msra.mxu0 %v6330
        %7225 = vmatprep.subr.bf16.mxu0 %v6335
        %7226 = vmatpush1.bf16.msra.mxu0 %v6334
        %7227 = vmatprep.subr.bf16.mxu0 %v6339
        %7228 = vmatpush1.bf16.msra.mxu0 %v6338
        %7229 = vmatprep.subr.bf16.mxu0 %v6343
        %7230 = vmatpush1.bf16.msra.mxu0 %v6342
        %7231 = vmatprep.subr.bf16.mxu0 %v6347
        %7232 = vmatpush1.bf16.msra.mxu0 %v6346
        %7233 = vmatprep.subr.bf16.mxu0 %v6351
        %7234 = vmatpush1.bf16.msra.mxu0 %v6350
        %7235 = vmatprep.subr.bf16.mxu0 %v6355
        %7236 = vmatpush1.bf16.msra.mxu0 %v6354
        %7237 = vmatprep.subr.bf16.mxu0 %v6359
        %7238 = vmatpush1.bf16.msra.mxu0 %v6358
        %7239 = vmatprep.subr.bf16.mxu0 %v6363
        %7240 = vmatpush1.bf16.msra.mxu0 %v6362
        %7241 = vmatprep.mubr.bf16.mxu0 %v3863
        %7242 = vmatmul.mubr.bf16.gmra.mrb[0].mxu0 %v3837
        %v7243 = vpop.f32.mrb[0].mxu0
        %v7244 = vadd.f32 %v7203, %v7243
        %v7245 = vpop.f32.mrb[0].mxu0
        %v7246 = vadd.f32 %v7205, %v7245
        %v7247 = vpop.f32.mrb[0].mxu0
        %v7248 = vpop.f32.mrb[0].mxu0
        %7249 = vdwg.mxu0
        %7250 = vmatprep.subr.bf16.mxu0 %v6367
        %7251 = vmatpush1.bf16.msra.mxu0 %v6366
        %7252 = vmatprep.subr.bf16.mxu0 %v6371
        %7253 = vmatpush1.bf16.msra.mxu0 %v6370
        %7254 = vmatprep.subr.bf16.mxu0 %v6375
        %7255 = vmatpush1.bf16.msra.mxu0 %v6374
        %7256 = vmatprep.subr.bf16.mxu0 %v6379
        %7257 = vmatpush1.bf16.msra.mxu0 %v6378
        %7258 = vmatprep.subr.bf16.mxu0 %v6383
        %7259 = vmatpush1.bf16.msra.mxu0 %v6382
        %7260 = vmatprep.subr.bf16.mxu0 %v6387
        %7261 = vmatpush1.bf16.msra.mxu0 %v6386
        %7262 = vmatprep.subr.bf16.mxu0 %v6391
        %7263 = vmatpush1.bf16.msra.mxu0 %v6390
        %7264 = vmatprep.subr.bf16.mxu0 %v6395
        %7265 = vmatpush1.bf16.msra.mxu0 %v6394
        %7266 = vmatprep.subr.bf16.mxu0 %v6399
        %7267 = vmatpush1.bf16.msra.mxu0 %v6398
        %7268 = vmatprep.subr.bf16.mxu0 %v6403
        %7269 = vmatpush1.bf16.msra.mxu0 %v6402
        %7270 = vmatprep.subr.bf16.mxu0 %v6407
        %7271 = vmatpush1.bf16.msra.mxu0 %v6406
        %7272 = vmatprep.subr.bf16.mxu0 %v6411
        %7273 = vmatpush1.bf16.msra.mxu0 %v6410
        %7274 = vmatprep.subr.bf16.mxu0 %v6415
        %7275 = vmatpush1.bf16.msra.mxu0 %v6414
        %7276 = vmatprep.subr.bf16.mxu0 %v6419
        %7277 = vmatpush1.bf16.msra.mxu0 %v6418
        %7278 = vmatprep.subr.bf16.mxu0 %v6423
        %7279 = vmatpush1.bf16.msra.mxu0 %v6422
        %7280 = vmatprep.subr.bf16.mxu0 %v6427
        %7281 = vmatpush1.bf16.msra.mxu0 %v6426
        %7282 = vmatprep.mubr.bf16.mxu0 %v3867
        %7283 = vmatmul.mubr.bf16.gmra.mrb[0].mxu0 %v3865
        %v7284 = vpop.f32.mrb[0].mxu0
        %v7285 = vadd.f32 %v7244, %v7284
        %v7286 = vpop.f32.mrb[0].mxu0
        %v7287 = vadd.f32 %v7246, %v7286
        %v7288 = vpop.f32.mrb[0].mxu0
        %v7289 = vpop.f32.mrb[0].mxu0
        %7290 = vdwg.mxu0
        %7291 = vmatprep.subr.bf16.mxu0 %v5921
        %7292 = vmatpush1.bf16.msra.mxu0 %v5920
        %7293 = vmatprep.subr.bf16.mxu0 %v5925
        %7294 = vmatpush1.bf16.msra.mxu0 %v5924
        %7295 = vmatprep.subr.bf16.mxu0 %v5929
        %7296 = vmatpush1.bf16.msra.mxu0 %v5928
        %7297 = vmatprep.subr.bf16.mxu0 %v5933
        %7298 = vmatpush1.bf16.msra.mxu0 %v5932
        %7299 = vmatprep.subr.bf16.mxu0 %v5937
        %7300 = vmatpush1.bf16.msra.mxu0 %v5936
        %7301 = vmatprep.subr.bf16.mxu0 %v5941
        %7302 = vmatpush1.bf16.msra.mxu0 %v5940
        %7303 = vmatprep.subr.bf16.mxu0 %v5945
        %7304 = vmatpush1.bf16.msra.mxu0 %v5944
        %7305 = vmatprep.subr.bf16.mxu0 %v5949
        %7306 = vmatpush1.bf16.msra.mxu0 %v5948
        %7307 = vmatprep.subr.bf16.mxu0 %v5953
        %7308 = vmatpush1.bf16.msra.mxu0 %v5952
        %7309 = vmatprep.subr.bf16.mxu0 %v5957
        %7310 = vmatpush1.bf16.msra.mxu0 %v5956
        %7311 = vmatprep.subr.bf16.mxu0 %v5961
        %7312 = vmatpush1.bf16.msra.mxu0 %v5960
        %7313 = vmatprep.subr.bf16.mxu0 %v5965
        %7314 = vmatpush1.bf16.msra.mxu0 %v5964
        %7315 = vmatprep.subr.bf16.mxu0 %v5969
        %7316 = vmatpush1.bf16.msra.mxu0 %v5968
        %7317 = vmatprep.subr.bf16.mxu0 %v5973
        %7318 = vmatpush1.bf16.msra.mxu0 %v5972
        %7319 = vmatprep.subr.bf16.mxu0 %v5977
        %7320 = vmatpush1.bf16.msra.mxu0 %v5976
        %7321 = vmatprep.subr.bf16.mxu0 %v5981
        %7322 = vmatpush1.bf16.msra.mxu0 %v5980
        %7323 = vmatprep.mubr.bf16.mxu0 %v3842
        %7324 = vmatmul.mubr.bf16.gmra.mrb[0].mxu0 %v3786
        %v7325 = vpop.f32.mrb[0].mxu0
        %v7326 = vadd.f32 %v6954, %v7325
        %v7327 = vpop.f32.mrb[0].mxu0
        %v7328 = vadd.f32 %v6958, %v7327
        %v7329 = vpop.f32.mrb[0].mxu0
        %v7330 = vpop.f32.mrb[0].mxu0
        %7331 = vdwg.mxu0
        %7332 = vmatprep.subr.bf16.mxu0 %v5985
        %7333 = vmatpush1.bf16.msra.mxu0 %v5984
        %7334 = vmatprep.subr.bf16.mxu0 %v5989
        %7335 = vmatpush1.bf16.msra.mxu0 %v5988
        %7336 = vmatprep.subr.bf16.mxu0 %v5993
        %7337 = vmatpush1.bf16.msra.mxu0 %v5992
        %7338 = vmatprep.subr.bf16.mxu0 %v5997
        %7339 = vmatpush1.bf16.msra.mxu0 %v5996
        %7340 = vmatprep.subr.bf16.mxu0 %v6001
        %7341 = vmatpush1.bf16.msra.mxu0 %v6000
        %7342 = vmatprep.subr.bf16.mxu0 %v6005
        %7343 = vmatpush1.bf16.msra.mxu0 %v6004
        %7344 = vmatprep.subr.bf16.mxu0 %v6009
        %7345 = vmatpush1.bf16.msra.mxu0 %v6008
        %7346 = vmatprep.subr.bf16.mxu0 %v6013
        %7347 = vmatpush1.bf16.msra.mxu0 %v6012
        %7348 = vmatprep.subr.bf16.mxu0 %v6017
        %7349 = vmatpush1.bf16.msra.mxu0 %v6016
        %7350 = vmatprep.subr.bf16.mxu0 %v6021
        %7351 = vmatpush1.bf16.msra.mxu0 %v6020
        %7352 = vmatprep.subr.bf16.mxu0 %v6025
        %7353 = vmatpush1.bf16.msra.mxu0 %v6024
        %7354 = vmatprep.subr.bf16.mxu0 %v6029
        %7355 = vmatpush1.bf16.msra.mxu0 %v6028
        %7356 = vmatprep.subr.bf16.mxu0 %v6033
        %7357 = vmatpush1.bf16.msra.mxu0 %v6032
        %7358 = vmatprep.subr.bf16.mxu0 %v6037
        %7359 = vmatpush1.bf16.msra.mxu0 %v6036
        %7360 = vmatprep.subr.bf16.mxu0 %v6041
        %7361 = vmatpush1.bf16.msra.mxu0 %v6040
        %7362 = vmatprep.subr.bf16.mxu0 %v6045
        %7363 = vmatpush1.bf16.msra.mxu0 %v6044
        %7364 = vmatprep.mubr.bf16.mxu0 %v3846
        %7365 = vmatmul.mubr.bf16.gmra.mrb[0].mxu0 %v3844
        %v7366 = vpop.f32.mrb[0].mxu0
        %v7367 = vadd.f32 %v7326, %v7366
        %v7368 = vpop.f32.mrb[0].mxu0
        %v7369 = vadd.f32 %v7328, %v7368
        %v7370 = vpop.f32.mrb[0].mxu0
        %v7371 = vpop.f32.mrb[0].mxu0
        %7372 = vdwg.mxu0
        %7373 = vmatprep.subr.bf16.mxu0 %v6049
        %7374 = vmatpush1.bf16.msra.mxu0 %v6048
        %7375 = vmatprep.subr.bf16.mxu0 %v6053
        %7376 = vmatpush1.bf16.msra.mxu0 %v6052
        %7377 = vmatprep.subr.bf16.mxu0 %v6057
        %7378 = vmatpush1.bf16.msra.mxu0 %v6056
        %7379 = vmatprep.subr.bf16.mxu0 %v6061
        %7380 = vmatpush1.bf16.msra.mxu0 %v6060
        %7381 = vmatprep.subr.bf16.mxu0 %v6065
        %7382 = vmatpush1.bf16.msra.mxu0 %v6064
        %7383 = vmatprep.subr.bf16.mxu0 %v6069
        %7384 = vmatpush1.bf16.msra.mxu0 %v6068
        %7385 = vmatprep.subr.bf16.mxu0 %v6073
        %7386 = vmatpush1.bf16.msra.mxu0 %v6072
        %7387 = vmatprep.subr.bf16.mxu0 %v6077
        %7388 = vmatpush1.bf16.msra.mxu0 %v6076
        %7389 = vmatprep.subr.bf16.mxu0 %v6081
        %7390 = vmatpush1.bf16.msra.mxu0 %v6080
        %7391 = vmatprep.subr.bf16.mxu0 %v6085
        %7392 = vmatpush1.bf16.msra.mxu0 %v6084
        %7393 = vmatprep.subr.bf16.mxu0 %v6089
        %7394 = vmatpush1.bf16.msra.mxu0 %v6088
        %7395 = vmatprep.subr.bf16.mxu0 %v6093
        %7396 = vmatpush1.bf16.msra.mxu0 %v6092
        %7397 = vmatprep.subr.bf16.mxu0 %v6097
        %7398 = vmatpush1.bf16.msra.mxu0 %v6096
        %7399 = vmatprep.subr.bf16.mxu0 %v6101
        %7400 = vmatpush1.bf16.msra.mxu0 %v6100
        %7401 = vmatprep.subr.bf16.mxu0 %v6105
        %7402 = vmatpush1.bf16.msra.mxu0 %v6104
        %7403 = vmatprep.subr.bf16.mxu0 %v6109
        %7404 = vmatpush1.bf16.msra.mxu0 %v6108
        %7405 = vmatprep.mubr.bf16.mxu0 %v3849
        %7406 = vmatmul.mubr.bf16.gmra.mrb[0].mxu0 %v3807
        %v7407 = vpop.f32.mrb[0].mxu0
        %v7408 = vadd.f32 %v7367, %v7407
        %v7409 = vpop.f32.mrb[0].mxu0
        %v7410 = vadd.f32 %v7369, %v7409
        %v7411 = vpop.f32.mrb[0].mxu0
        %v7412 = vpop.f32.mrb[0].mxu0
        %7413 = vdwg.mxu0
        %7414 = vmatprep.subr.bf16.mxu0 %v6113
        %7415 = vmatpush1.bf16.msra.mxu0 %v6112
        %7416 = vmatprep.subr.bf16.mxu0 %v6117
        %7417 = vmatpush1.bf16.msra.mxu0 %v6116
        %7418 = vmatprep.subr.bf16.mxu0 %v6121
        %7419 = vmatpush1.bf16.msra.mxu0 %v6120
        %7420 = vmatprep.subr.bf16.mxu0 %v6125
        %7421 = vmatpush1.bf16.msra.mxu0 %v6124
        %7422 = vmatprep.subr.bf16.mxu0 %v6129
        %7423 = vmatpush1.bf16.msra.mxu0 %v6128
        %7424 = vmatprep.subr.bf16.mxu0 %v6133
        %7425 = vmatpush1.bf16.msra.mxu0 %v6132
        %7426 = vmatprep.subr.bf16.mxu0 %v6137
        %7427 = vmatpush1.bf16.msra.mxu0 %v6136
        %7428 = vmatprep.subr.bf16.mxu0 %v6141
        %7429 = vmatpush1.bf16.msra.mxu0 %v6140
        %7430 = vmatprep.subr.bf16.mxu0 %v6145
        %7431 = vmatpush1.bf16.msra.mxu0 %v6144
        %7432 = vmatprep.subr.bf16.mxu0 %v6149
        %7433 = vmatpush1.bf16.msra.mxu0 %v6148
        %7434 = vmatprep.subr.bf16.mxu0 %v6153
        %7435 = vmatpush1.bf16.msra.mxu0 %v6152
        %7436 = vmatprep.subr.bf16.mxu0 %v6157
        %7437 = vmatpush1.bf16.msra.mxu0 %v6156
        %7438 = vmatprep.subr.bf16.mxu0 %v6161
        %7439 = vmatpush1.bf16.msra.mxu0 %v6160
        %7440 = vmatprep.subr.bf16.mxu0 %v6165
        %7441 = vmatpush1.bf16.msra.mxu0 %v6164
        %7442 = vmatprep.subr.bf16.mxu0 %v6169
        %7443 = vmatpush1.bf16.msra.mxu0 %v6168
        %7444 = vmatprep.subr.bf16.mxu0 %v6173
        %7445 = vmatpush1.bf16.msra.mxu0 %v6172
        %7446 = vmatprep.mubr.bf16.mxu0 %v3853
        %7447 = vmatmul.mubr.bf16.gmra.mrb[0].mxu0 %v3851
        %v7448 = vpop.f32.mrb[0].mxu0
        %v7449 = vadd.f32 %v7408, %v7448
        %v7450 = vpop.f32.mrb[0].mxu0
        %v7451 = vadd.f32 %v7410, %v7450
        %v7452 = vpop.f32.mrb[0].mxu0
        %v7453 = vpop.f32.mrb[0].mxu0
        %7454 = vdwg.mxu0
        %7455 = vmatprep.subr.bf16.mxu0 %v6177
        %7456 = vmatpush1.bf16.msra.mxu0 %v6176
        %7457 = vmatprep.subr.bf16.mxu0 %v6181
        %7458 = vmatpush1.bf16.msra.mxu0 %v6180
        %7459 = vmatprep.subr.bf16.mxu0 %v6185
        %7460 = vmatpush1.bf16.msra.mxu0 %v6184
        %7461 = vmatprep.subr.bf16.mxu0 %v6189
        %7462 = vmatpush1.bf16.msra.mxu0 %v6188
        %7463 = vmatprep.subr.bf16.mxu0 %v6193
        %7464 = vmatpush1.bf16.msra.mxu0 %v6192
        %7465 = vmatprep.subr.bf16.mxu0 %v6197
        %7466 = vmatpush1.bf16.msra.mxu0 %v6196
        %7467 = vmatprep.subr.bf16.mxu0 %v6201
        %7468 = vmatpush1.bf16.msra.mxu0 %v6200
        %7469 = vmatprep.subr.bf16.mxu0 %v6205
        %7470 = vmatpush1.bf16.msra.mxu0 %v6204
        %7471 = vmatprep.subr.bf16.mxu0 %v6209
        %7472 = vmatpush1.bf16.msra.mxu0 %v6208
        %7473 = vmatprep.subr.bf16.mxu0 %v6213
        %7474 = vmatpush1.bf16.msra.mxu0 %v6212
        %7475 = vmatprep.subr.bf16.mxu0 %v6217
        %7476 = vmatpush1.bf16.msra.mxu0 %v6216
        %7477 = vmatprep.subr.bf16.mxu0 %v6221
        %7478 = vmatpush1.bf16.msra.mxu0 %v6220
        %7479 = vmatprep.subr.bf16.mxu0 %v6225
        %7480 = vmatpush1.bf16.msra.mxu0 %v6224
        %7481 = vmatprep.subr.bf16.mxu0 %v6229
        %7482 = vmatpush1.bf16.msra.mxu0 %v6228
        %7483 = vmatprep.subr.bf16.mxu0 %v6233
        %7484 = vmatpush1.bf16.msra.mxu0 %v6232
        %7485 = vmatprep.subr.bf16.mxu0 %v6237
        %7486 = vmatpush1.bf16.msra.mxu0 %v6236
        %7487 = vmatprep.mubr.bf16.mxu0 %v3856
        %7488 = vmatmul.mubr.bf16.gmra.mrb[0].mxu0 %v3822
        %v7489 = vpop.f32.mrb[0].mxu0
        %v7490 = vadd.f32 %v7449, %v7489
        %v7491 = vpop.f32.mrb[0].mxu0
        %v7492 = vadd.f32 %v7451, %v7491
        %v7493 = vpop.f32.mrb[0].mxu0
        %v7494 = vpop.f32.mrb[0].mxu0
        %7495 = vdwg.mxu0
        %7496 = vmatprep.subr.bf16.mxu0 %v6241
        %7497 = vmatpush1.bf16.msra.mxu0 %v6240
        %7498 = vmatprep.subr.bf16.mxu0 %v6245
        %7499 = vmatpush1.bf16.msra.mxu0 %v6244
        %7500 = vmatprep.subr.bf16.mxu0 %v6249
        %7501 = vmatpush1.bf16.msra.mxu0 %v6248
        %7502 = vmatprep.subr.bf16.mxu0 %v6253
        %7503 = vmatpush1.bf16.msra.mxu0 %v6252
        %7504 = vmatprep.subr.bf16.mxu0 %v6257
        %7505 = vmatpush1.bf16.msra.mxu0 %v6256
        %7506 = vmatprep.subr.bf16.mxu0 %v6261
        %7507 = vmatpush1.bf16.msra.mxu0 %v6260
        %7508 = vmatprep.subr.bf16.mxu0 %v6265
        %7509 = vmatpush1.bf16.msra.mxu0 %v6264
        %7510 = vmatprep.subr.bf16.mxu0 %v6269
        %7511 = vmatpush1.bf16.msra.mxu0 %v6268
        %7512 = vmatprep.subr.bf16.mxu0 %v6273
        %7513 = vmatpush1.bf16.msra.mxu0 %v6272
        %7514 = vmatprep.subr.bf16.mxu0 %v6277
        %7515 = vmatpush1.bf16.msra.mxu0 %v6276
        %7516 = vmatprep.subr.bf16.mxu0 %v6281
        %7517 = vmatpush1.bf16.msra.mxu0 %v6280
        %7518 = vmatprep.subr.bf16.mxu0 %v6285
        %7519 = vmatpush1.bf16.msra.mxu0 %v6284
        %7520 = vmatprep.subr.bf16.mxu0 %v6289
        %7521 = vmatpush1.bf16.msra.mxu0 %v6288
        %7522 = vmatprep.subr.bf16.mxu0 %v6293
        %7523 = vmatpush1.bf16.msra.mxu0 %v6292
        %7524 = vmatprep.subr.bf16.mxu0 %v6297
        %7525 = vmatpush1.bf16.msra.mxu0 %v6296
        %7526 = vmatprep.subr.bf16.mxu0 %v6301
        %7527 = vmatpush1.bf16.msra.mxu0 %v6300
        %7528 = vmatprep.mubr.bf16.mxu0 %v3860
        %7529 = vmatmul.mubr.bf16.gmra.mrb[0].mxu0 %v3858
        %v7530 = vpop.f32.mrb[0].mxu0
        %v7531 = vadd.f32 %v7490, %v7530
        %v7532 = vpop.f32.mrb[0].mxu0
        %v7533 = vadd.f32 %v7492, %v7532
        %v7534 = vpop.f32.mrb[0].mxu0
        %v7535 = vpop.f32.mrb[0].mxu0
        %7536 = vdwg.mxu0
        %7537 = vmatprep.subr.bf16.mxu0 %v6305
        %7538 = vmatpush1.bf16.msra.mxu0 %v6304
        %7539 = vmatprep.subr.bf16.mxu0 %v6309
        %7540 = vmatpush1.bf16.msra.mxu0 %v6308
        %7541 = vmatprep.subr.bf16.mxu0 %v6313
        %7542 = vmatpush1.bf16.msra.mxu0 %v6312
        %7543 = vmatprep.subr.bf16.mxu0 %v6317
        %7544 = vmatpush1.bf16.msra.mxu0 %v6316
        %7545 = vmatprep.subr.bf16.mxu0 %v6321
        %7546 = vmatpush1.bf16.msra.mxu0 %v6320
        %7547 = vmatprep.subr.bf16.mxu0 %v6325
        %7548 = vmatpush1.bf16.msra.mxu0 %v6324
        %7549 = vmatprep.subr.bf16.mxu0 %v6329
        %7550 = vmatpush1.bf16.msra.mxu0 %v6328
        %7551 = vmatprep.subr.bf16.mxu0 %v6333
        %7552 = vmatpush1.bf16.msra.mxu0 %v6332
        %7553 = vmatprep.subr.bf16.mxu0 %v6337
        %7554 = vmatpush1.bf16.msra.mxu0 %v6336
        %7555 = vmatprep.subr.bf16.mxu0 %v6341
        %7556 = vmatpush1.bf16.msra.mxu0 %v6340
        %7557 = vmatprep.subr.bf16.mxu0 %v6345
        %7558 = vmatpush1.bf16.msra.mxu0 %v6344
        %7559 = vmatprep.subr.bf16.mxu0 %v6349
        %7560 = vmatpush1.bf16.msra.mxu0 %v6348
        %7561 = vmatprep.subr.bf16.mxu0 %v6353
        %7562 = vmatpush1.bf16.msra.mxu0 %v6352
        %7563 = vmatprep.subr.bf16.mxu0 %v6357
        %7564 = vmatpush1.bf16.msra.mxu0 %v6356
        %7565 = vmatprep.subr.bf16.mxu0 %v6361
        %7566 = vmatpush1.bf16.msra.mxu0 %v6360
        %7567 = vmatprep.subr.bf16.mxu0 %v6365
        %7568 = vmatpush1.bf16.msra.mxu0 %v6364
        %7569 = vmatprep.mubr.bf16.mxu0 %v3863
        %7570 = vmatmul.mubr.bf16.gmra.mrb[0].mxu0 %v3837
        %v7571 = vpop.f32.mrb[0].mxu0
        %v7572 = vadd.f32 %v7531, %v7571
        %v7573 = vpop.f32.mrb[0].mxu0
        %v7574 = vadd.f32 %v7533, %v7573
        %v7575 = vpop.f32.mrb[0].mxu0
        %v7576 = vpop.f32.mrb[0].mxu0
        %7577 = vdwg.mxu0
        %7578 = vmatprep.subr.bf16.mxu0 %v6369
        %7579 = vmatpush1.bf16.msra.mxu0 %v6368
        %7580 = vmatprep.subr.bf16.mxu0 %v6373
        %7581 = vmatpush1.bf16.msra.mxu0 %v6372
        %7582 = vmatprep.subr.bf16.mxu0 %v6377
        %7583 = vmatpush1.bf16.msra.mxu0 %v6376
        %7584 = vmatprep.subr.bf16.mxu0 %v6381
        %7585 = vmatpush1.bf16.msra.mxu0 %v6380
        %7586 = vmatprep.subr.bf16.mxu0 %v6385
        %7587 = vmatpush1.bf16.msra.mxu0 %v6384
        %7588 = vmatprep.subr.bf16.mxu0 %v6389
        %7589 = vmatpush1.bf16.msra.mxu0 %v6388
        %7590 = vmatprep.subr.bf16.mxu0 %v6393
        %7591 = vmatpush1.bf16.msra.mxu0 %v6392
        %7592 = vmatprep.subr.bf16.mxu0 %v6397
        %7593 = vmatpush1.bf16.msra.mxu0 %v6396
        %7594 = vmatprep.subr.bf16.mxu0 %v6401
        %7595 = vmatpush1.bf16.msra.mxu0 %v6400
        %7596 = vmatprep.subr.bf16.mxu0 %v6405
        %7597 = vmatpush1.bf16.msra.mxu0 %v6404
        %7598 = vmatprep.subr.bf16.mxu0 %v6409
        %7599 = vmatpush1.bf16.msra.mxu0 %v6408
        %7600 = vmatprep.subr.bf16.mxu0 %v6413
        %7601 = vmatpush1.bf16.msra.mxu0 %v6412
        %7602 = vmatprep.subr.bf16.mxu0 %v6417
        %7603 = vmatpush1.bf16.msra.mxu0 %v6416
        %7604 = vmatprep.subr.bf16.mxu0 %v6421
        %7605 = vmatpush1.bf16.msra.mxu0 %v6420
        %7606 = vmatprep.subr.bf16.mxu0 %v6425
        %7607 = vmatpush1.bf16.msra.mxu0 %v6424
        %7608 = vmatprep.subr.bf16.mxu0 %v6429
        %7609 = vmatpush1.bf16.msra.mxu0 %v6428
        %7610 = vmatprep.mubr.bf16.mxu0 %v3867
        %7611 = vmatmul.mubr.bf16.gmra.mrb[0].mxu0 %v3865
        %v7612 = vpop.f32.mrb[0].mxu0
        %v7613 = vadd.f32 %v7572, %v7612
        %v7614 = vpop.f32.mrb[0].mxu0
        %v7615 = vadd.f32 %v7574, %v7614
        %v7616 = vpop.f32.mrb[0].mxu0
        %v7617 = vpop.f32.mrb[0].mxu0
        %7618 = vdwg.mxu0
        %v7619 = vmax.f32 %v7285, 0.0
        %v7620 = vmax.f32 %v7287, 0.0
        %v7621 = vmax.f32 %v7613, 0.0
        %v7622 = vmax.f32 %v7615, 0.0
        %v7623 = vpack.c.bf16 %v7619, %v7619
        %v7624 = vpack.c.bf16 %v7620, %v7620
        %v7625 = vpack.c.bf16 %v7621, %v7621
        %v7626 = vpack.c.bf16 %v7622, %v7622
        %v7627 = vld [vmem:[%s7] sm:$0xf]
        %v7628 = vld [vmem:[%s7 + $0x4] sm:$0xf]
        %v7629 = vld [vmem:[%s7 + $0x8] sm:$0xf]
        %v7630 = vld [vmem:[%s7 + $0xc] sm:$0xf]
        %v7631 = vld [vmem:[%s7 + $0x10] sm:$0xf]
        %v7632 = vld [vmem:[%s7 + $0x14] sm:$0xf]
        %v7633 = vld [vmem:[%s7 + $0x18] sm:$0xf]
        %v7634 = vld [vmem:[%s7 + $0x1c] sm:$0xf]
        %v7635 = vld [vmem:[%s7 + $0x20] sm:$0xf]
        %v7636 = vld [vmem:[%s7 + $0x24] sm:$0xf]
        %v7637 = vld [vmem:[%s7 + $0x28] sm:$0xf]
        %v7638 = vld [vmem:[%s7 + $0x2c] sm:$0xf]
        %v7639 = vld [vmem:[%s7 + $0x30] sm:$0xf]
        %v7640 = vld [vmem:[%s7 + $0x34] sm:$0xf]
        %v7641 = vld [vmem:[%s7 + $0x38] sm:$0xf]
        %v7642 = vld [vmem:[%s7 + $0x3c] sm:$0xf]
        %v7643 = vld [vmem:[%s7 + $0x40] sm:$0xf]
        %v7644 = vld [vmem:[%s7 + $0x44] sm:$0xf]
        %v7645 = vld [vmem:[%s7 + $0x48] sm:$0xf]
        %v7646 = vld [vmem:[%s7 + $0x4c] sm:$0xf]
        %v7647 = vld [vmem:[%s7 + $0x50] sm:$0xf]
        %v7648 = vld [vmem:[%s7 + $0x54] sm:$0xf]
        %v7649 = vld [vmem:[%s7 + $0x58] sm:$0xf]
        %v7650 = vld [vmem:[%s7 + $0x5c] sm:$0xf]
        %v7651 = vld [vmem:[%s7 + $0x60] sm:$0xf]
        %v7652 = vld [vmem:[%s7 + $0x64] sm:$0xf]
        %v7653 = vld [vmem:[%s7 + $0x68] sm:$0xf]
        %v7654 = vld [vmem:[%s7 + $0x6c] sm:$0xf]
        %v7655 = vld [vmem:[%s7 + $0x70] sm:$0xf]
        %v7656 = vld [vmem:[%s7 + $0x74] sm:$0xf]
        %v7657 = vld [vmem:[%s7 + $0x78] sm:$0xf]
        %v7658 = vld [vmem:[%s7 + $0x7c] sm:$0xf]
        %v7659 = vld [vmem:[%s7 + $0x80] sm:$0xf]
        %v7660 = vld [vmem:[%s7 + $0x84] sm:$0xf]
        %v7661 = vld [vmem:[%s7 + $0x88] sm:$0xf]
        %v7662 = vld [vmem:[%s7 + $0x8c] sm:$0xf]
        %v7663 = vld [vmem:[%s7 + $0x90] sm:$0xf]
        %v7664 = vld [vmem:[%s7 + $0x94] sm:$0xf]
        %v7665 = vld [vmem:[%s7 + $0x98] sm:$0xf]
        %v7666 = vld [vmem:[%s7 + $0x9c] sm:$0xf]
        %v7667 = vld [vmem:[%s7 + $0xa0] sm:$0xf]
        %v7668 = vld [vmem:[%s7 + $0xa4] sm:$0xf]
        %v7669 = vld [vmem:[%s7 + $0xa8] sm:$0xf]
        %v7670 = vld [vmem:[%s7 + $0xac] sm:$0xf]
        %v7671 = vld [vmem:[%s7 + $0xb0] sm:$0xf]
        %v7672 = vld [vmem:[%s7 + $0xb4] sm:$0xf]
        %v7673 = vld [vmem:[%s7 + $0xb8] sm:$0xf]
        %v7674 = vld [vmem:[%s7 + $0xbc] sm:$0xf]
        %v7675 = vld [vmem:[%s7 + $0xc0] sm:$0xf]
        %v7676 = vld [vmem:[%s7 + $0xc4] sm:$0xf]
        %v7677 = vld [vmem:[%s7 + $0xc8] sm:$0xf]
        %v7678 = vld [vmem:[%s7 + $0xcc] sm:$0xf]
        %v7679 = vld [vmem:[%s7 + $0xd0] sm:$0xf]
        %v7680 = vld [vmem:[%s7 + $0xd4] sm:$0xf]
        %v7681 = vld [vmem:[%s7 + $0xd8] sm:$0xf]
        %v7682 = vld [vmem:[%s7 + $0xdc] sm:$0xf]
        %v7683 = vld [vmem:[%s7 + $0xe0] sm:$0xf]
        %v7684 = vld [vmem:[%s7 + $0xe4] sm:$0xf]
        %v7685 = vld [vmem:[%s7 + $0xe8] sm:$0xf]
        %v7686 = vld [vmem:[%s7 + $0xec] sm:$0xf]
        %v7687 = vld [vmem:[%s7 + $0xf0] sm:$0xf]
        %v7688 = vld [vmem:[%s7 + $0xf4] sm:$0xf]
        %v7689 = vld [vmem:[%s7 + $0xf8] sm:$0xf]
        %v7690 = vld [vmem:[%s7 + $0xfc] sm:$0xf]
        %v7691 = vld [vmem:[%s8] sm:$0x1]
        %v7756 = vunpack.c.l.b16 %v7627
        %v7757 = vunpack.c.l.b16 %v7628
        %v7758 = vunpack.c.l.b16 %v7629
        %v7759 = vunpack.c.l.b16 %v7630
        %v7760 = vunpack.c.l.b16 %v7631
        %v7761 = vunpack.c.l.b16 %v7632
        %v7762 = vunpack.c.l.b16 %v7633
        %v7763 = vunpack.c.l.b16 %v7634
        %v7764 = vunpack.c.l.b16 %v7635
        %v7765 = vunpack.c.l.b16 %v7636
        %v7766 = vunpack.c.l.b16 %v7637
        %v7767 = vunpack.c.l.b16 %v7638
        %v7768 = vunpack.c.l.b16 %v7639
        %v7769 = vunpack.c.l.b16 %v7640
        %v7770 = vunpack.c.l.b16 %v7641
        %v7771 = vunpack.c.l.b16 %v7642
        %v7772 = vunpack.c.l.b16 %v7643
        %v7773 = vunpack.c.l.b16 %v7644
        %v7774 = vunpack.c.l.b16 %v7645
        %v7775 = vunpack.c.l.b16 %v7646
        %v7776 = vunpack.c.l.b16 %v7647
        %v7777 = vunpack.c.l.b16 %v7648
        %v7778 = vunpack.c.l.b16 %v7649
        %v7779 = vunpack.c.l.b16 %v7650
        %v7780 = vunpack.c.l.b16 %v7651
        %v7781 = vunpack.c.l.b16 %v7652
        %v7782 = vunpack.c.l.b16 %v7653
        %v7783 = vunpack.c.l.b16 %v7654
        %v7784 = vunpack.c.l.b16 %v7655
        %v7785 = vunpack.c.l.b16 %v7656
        %v7786 = vunpack.c.l.b16 %v7657
        %v7787 = vunpack.c.l.b16 %v7658
        %v7788 = vunpack.c.l.b16 %v7659
        %v7789 = vunpack.c.l.b16 %v7660
        %v7790 = vunpack.c.l.b16 %v7661
        %v7791 = vunpack.c.l.b16 %v7662
        %v7792 = vunpack.c.l.b16 %v7663
        %v7793 = vunpack.c.l.b16 %v7664
        %v7794 = vunpack.c.l.b16 %v7665
        %v7795 = vunpack.c.l.b16 %v7666
        %v7796 = vunpack.c.l.b16 %v7667
        %v7797 = vunpack.c.l.b16 %v7668
        %v7798 = vunpack.c.l.b16 %v7669
        %v7799 = vunpack.c.l.b16 %v7670
        %v7800 = vunpack.c.l.b16 %v7671
        %v7801 = vunpack.c.l.b16 %v7672
        %v7802 = vunpack.c.l.b16 %v7673
        %v7803 = vunpack.c.l.b16 %v7674
        %v7804 = vunpack.c.l.b16 %v7675
        %v7805 = vunpack.c.l.b16 %v7676
        %v7806 = vunpack.c.l.b16 %v7677
        %v7807 = vunpack.c.l.b16 %v7678
        %v7808 = vunpack.c.l.b16 %v7679
        %v7809 = vunpack.c.l.b16 %v7680
        %v7810 = vunpack.c.l.b16 %v7681
        %v7811 = vunpack.c.l.b16 %v7682
        %v7812 = vunpack.c.l.b16 %v7683
        %v7813 = vunpack.c.l.b16 %v7684
        %v7814 = vunpack.c.l.b16 %v7685
        %v7815 = vunpack.c.l.b16 %v7686
        %v7816 = vunpack.c.l.b16 %v7687
        %v7817 = vunpack.c.l.b16 %v7688
        %v7818 = vunpack.c.l.b16 %v7689
        %v7819 = vunpack.c.l.b16 %v7690
        %v7820 = vpack.c.b16 %v7757, %v7756
        %v7821 = vpack.c.b16 %v7759, %v7758
        %v7822 = vpack.c.b16 %v7761, %v7760
        %v7823 = vpack.c.b16 %v7763, %v7762
        %v7824 = vpack.c.b16 %v7765, %v7764
        %v7825 = vpack.c.b16 %v7767, %v7766
        %v7826 = vpack.c.b16 %v7769, %v7768
        %v7827 = vpack.c.b16 %v7771, %v7770
        %v7828 = vpack.c.b16 %v7773, %v7772
        %v7829 = vpack.c.b16 %v7775, %v7774
        %v7830 = vpack.c.b16 %v7777, %v7776
        %v7831 = vpack.c.b16 %v7779, %v7778
        %v7832 = vpack.c.b16 %v7781, %v7780
        %v7833 = vpack.c.b16 %v7783, %v7782
        %v7834 = vpack.c.b16 %v7785, %v7784
        %v7835 = vpack.c.b16 %v7787, %v7786
        %v7836 = vpack.c.b16 %v7789, %v7788
        %v7837 = vpack.c.b16 %v7791, %v7790
        %v7838 = vpack.c.b16 %v7793, %v7792
        %v7839 = vpack.c.b16 %v7795, %v7794
        %v7840 = vpack.c.b16 %v7797, %v7796
        %v7841 = vpack.c.b16 %v7799, %v7798
        %v7842 = vpack.c.b16 %v7801, %v7800
        %v7843 = vpack.c.b16 %v7803, %v7802
        %v7844 = vpack.c.b16 %v7805, %v7804
        %v7845 = vpack.c.b16 %v7807, %v7806
        %v7846 = vpack.c.b16 %v7809, %v7808
        %v7847 = vpack.c.b16 %v7811, %v7810
        %v7848 = vpack.c.b16 %v7813, %v7812
        %v7849 = vpack.c.b16 %v7815, %v7814
        %v7850 = vpack.c.b16 %v7817, %v7816
        %v7851 = vpack.c.b16 %v7819, %v7818
        %7884 = vmatprep.subr.bf16.mxu0 0
        %7885 = vmatpush1.bf16.msra.mxu0 %v7820
        %7886 = vmatprep.subr.bf16.mxu0 0
        %7887 = vmatpush1.bf16.msra.mxu0 %v7821
        %7888 = vmatprep.subr.bf16.mxu0 0
        %7889 = vmatpush1.bf16.msra.mxu0 %v7822
        %7890 = vmatprep.subr.bf16.mxu0 0
        %7891 = vmatpush1.bf16.msra.mxu0 %v7823
        %7892 = vmatprep.subr.bf16.mxu0 0
        %7893 = vmatpush1.bf16.msra.mxu0 %v7824
        %7894 = vmatprep.subr.bf16.mxu0 0
        %7895 = vmatpush1.bf16.msra.mxu0 %v7825
        %7896 = vmatprep.subr.bf16.mxu0 0
        %7897 = vmatpush1.bf16.msra.mxu0 %v7826
        %7898 = vmatprep.subr.bf16.mxu0 0
        %7899 = vmatpush1.bf16.msra.mxu0 %v7827
        %7900 = vmatprep.subr.bf16.mxu0 0
        %7901 = vmatpush1.bf16.msra.mxu0 %v7828
        %7902 = vmatprep.subr.bf16.mxu0 0
        %7903 = vmatpush1.bf16.msra.mxu0 %v7829
        %7904 = vmatprep.subr.bf16.mxu0 0
        %7905 = vmatpush1.bf16.msra.mxu0 %v7830
        %7906 = vmatprep.subr.bf16.mxu0 0
        %7907 = vmatpush1.bf16.msra.mxu0 %v7831
        %7908 = vmatprep.subr.bf16.mxu0 0
        %7909 = vmatpush1.bf16.msra.mxu0 %v7832
        %7910 = vmatprep.subr.bf16.mxu0 0
        %7911 = vmatpush1.bf16.msra.mxu0 %v7833
        %7912 = vmatprep.subr.bf16.mxu0 0
        %7913 = vmatpush1.bf16.msra.mxu0 %v7834
        %7914 = vmatprep.subr.bf16.mxu0 0
        %7915 = vmatpush1.bf16.msra.mxu0 %v7835
        %7916 = vmatprep.mubr.bf16.mxu0 %v7624
        %7917 = vmatmul.mubr.bf16.gmra.mrb[0].mxu0 %v7623
        %v7918 = vpop.f32.mrb[0].mxu0
        %v7919 = vadd.f32 %v7691, %v7918
        %v7920 = vpop.f32.mrb[0].mxu0
        %v7921 = vpop.f32.mrb[0].mxu0
        %v7922 = vpop.f32.mrb[0].mxu0
        %7923 = vdwg.mxu0
        %7924 = vmatprep.subr.bf16.mxu0 0
        %7925 = vmatpush1.bf16.msra.mxu0 %v7836
        %7926 = vmatprep.subr.bf16.mxu0 0
        %7927 = vmatpush1.bf16.msra.mxu0 %v7837
        %7928 = vmatprep.subr.bf16.mxu0 0
        %7929 = vmatpush1.bf16.msra.mxu0 %v7838
        %7930 = vmatprep.subr.bf16.mxu0 0
        %7931 = vmatpush1.bf16.msra.mxu0 %v7839
        %7932 = vmatprep.subr.bf16.mxu0 0
        %7933 = vmatpush1.bf16.msra.mxu0 %v7840
        %7934 = vmatprep.subr.bf16.mxu0 0
        %7935 = vmatpush1.bf16.msra.mxu0 %v7841
        %7936 = vmatprep.subr.bf16.mxu0 0
        %7937 = vmatpush1.bf16.msra.mxu0 %v7842
        %7938 = vmatprep.subr.bf16.mxu0 0
        %7939 = vmatpush1.bf16.msra.mxu0 %v7843
        %7940 = vmatprep.subr.bf16.mxu0 0
        %7941 = vmatpush1.bf16.msra.mxu0 %v7844
        %7942 = vmatprep.subr.bf16.mxu0 0
        %7943 = vmatpush1.bf16.msra.mxu0 %v7845
        %7944 = vmatprep.subr.bf16.mxu0 0
        %7945 = vmatpush1.bf16.msra.mxu0 %v7846
        %7946 = vmatprep.subr.bf16.mxu0 0
        %7947 = vmatpush1.bf16.msra.mxu0 %v7847
        %7948 = vmatprep.subr.bf16.mxu0 0
        %7949 = vmatpush1.bf16.msra.mxu0 %v7848
        %7950 = vmatprep.subr.bf16.mxu0 0
        %7951 = vmatpush1.bf16.msra.mxu0 %v7849
        %7952 = vmatprep.subr.bf16.mxu0 0
        %7953 = vmatpush1.bf16.msra.mxu0 %v7850
        %7954 = vmatprep.subr.bf16.mxu0 0
        %7955 = vmatpush1.bf16.msra.mxu0 %v7851
        %7956 = vmatprep.mubr.bf16.mxu0 %v7626
        %7957 = vmatmul.mubr.bf16.gmra.mrb[0].mxu0 %v7625
        %v7958 = vpop.f32.mrb[0].mxu0
        %v7959 = vadd.f32 %v7919, %v7958
        %v7960 = vpop.f32.mrb[0].mxu0
        %v7961 = vpop.f32.mrb[0].mxu0
        %v7962 = vpop.f32.mrb[0].mxu0
        %7963 = vdwg.mxu0
        %7964 = vst [vmem:[%s325] sm:$0x1] %v7959
        %s7965 = sand.u32 %s225, 1
        %s7966 = scalar_lea.sflag [#allocation3], %s7965
        %s7967 = sand.u32 %s225, 1
        %s7968 = scalar_lea.vmem [#allocation2], %s7967
        // Predicated region
        $region57: #{lenet_forward.1} parent=55 // pred_check
          %p7969 = pneg %p235
        $region58: #{lenet_forward.1} parent=55 // pred_check_branch
          %7971 = sbr.rel (%p7969) target = $region60
        $region59: #{lenet_forward.1} parent=55 // pred_region
          %s7973 = ssub.s32 16, 16
          %7974 = vsyncadd %s7966, %s7973
          %s7975 = smul.addr %s23, 16
          %s7976 = scalar_lea.hbm %s9, %s7975
          %s7978 = sshll.u32 %s7968, 4
          %s7979 = int_to_ptr.vmem [resolvable:$true] %s7978
          %7981 = dma.vmem_to_hbm [thread:$0]  %s7979, 16, %s7976, %s7966
        $region60: #{lenet_forward.1} parent=55 // pred_fallthru
          _
      $region56: #{lenet_forward.1} parent=5 // pred_fallthru
        _
      %p7982 = scmp.le.s32.totalorder 2, %s18
      // Predicated region
      $region61: #{lenet_forward.1} parent=5 // pred_check
        %p7983 = pneg %p7982
      $region62: #{lenet_forward.1} parent=5 // pred_check_branch
        %7985 = sbr.rel (%p7983) target = $region64
      $region63: #{lenet_forward.1} parent=5 // pred_region
        %s7986 = ssub.s32 %s18, 2
        // Predicated region
        $region65: #{lenet_forward.1} parent=63 // pred_check
          %p7987 = pneg %p241
        $region66: #{lenet_forward.1} parent=63 // pred_check_branch
          %7989 = sbr.rel (%p7987) target = $region68
        $region67: #{lenet_forward.1} parent=63 // pred_region
          %s7990 = sand.u32 %s226, 1
          %s7991 = scalar_lea.sflag [#allocation3], %s7990
          %s7992 = sand.u32 %s226, 1
          %s7993 = scalar_lea.vmem [#allocation2], %s7992
          %7994 = dma.done %s7991, 16
        $region68: #{lenet_forward.1} parent=63 // pred_fallthru
          _
      $region64: #{lenet_forward.1} parent=5 // pred_fallthru
        _
    $region6: #{lenet_forward.1} parent=1 // loop_footer
      %s22 = sadd.s32 1, %s18
    $region7: #{lenet_forward.1} parent=1 // loop_footer_branch
      %17 = sbr.rel target = $region3
    $region8: #{lenet_forward.1} parent=1 // loop_exit
      _
    %7995 = vsyncpa [#allocation3], 1
    %s7996 = scalar_lea.sflag [#allocation3], 1
    %7997 = vsyncpa %s7996, 1

</llo_original>
